<compile_context>
chip_gen: v7x
topology: tpu7x:2x2x1
jax: 0.10.0
libtpu: 0.0.40
codegen_flags: <defaults>
</compile_context>

<pallas_src>
import functools

import jax
import jax.numpy as jnp
from jax.experimental import pallas as pl
from jax.experimental.pallas import tpu as pltpu


# ----------------------------- conv (+stats) kernel -------------------------------

def _conv3x3_kernel(*refs, has_affine, pre_relu):
    """One image per grid step: (prev-BN affine [+ReLU]) -> im2col strip ->
    3 deep matmuls (K = 3*Cin, f32 accumulation) -> bf16 output + per-image BN stats."""
    if has_affine:
        (x_ref, w_ref, scale_ref, shift_ref,
         y_ref, sum_ref, ssq_ref, strip_ref) = refs
    else:
        x_ref, w_ref, y_ref, sum_ref, ssq_ref, strip_ref = refs
        scale_ref = shift_ref = None

    _, H, W, Cin = x_ref.shape
    Cout = y_ref.shape[-1]
    M = H * W

    # Previous layer's BatchNorm (+ReLU) folded in as a per-channel affine.  conv1
    # uses has_affine=False so this whole VALU block disappears for the first conv.
    if has_affine:
        z = x_ref[0].astype(jnp.float32) * scale_ref[...] + shift_ref[...]
        if pre_relu:
            z = jnp.maximum(z, 0.0)
        z = z.astype(jnp.bfloat16)
    else:
        z = x_ref[0].astype(jnp.bfloat16)
    z = z.reshape(M, Cin)            # (H, W, C) -> (H*W, C): layout-free merge

    # ---- build the im2col strip (fully re-initialized each step: parallel-safe).
    # strip[(h+1)*W + w, dj*Cin + c] = z[h, w + dj - 1, c], zero outside the image.
    strip_ref[0:W, :] = jnp.zeros((W, 3 * Cin), jnp.bfloat16)                      # h = -1
    strip_ref[(H + 1) * W:(H + 2) * W, :] = jnp.zeros((W, 3 * Cin), jnp.bfloat16)  # h = H
    strip_ref[W:W + M, Cin:2 * Cin] = z                                            # dj = 1

    # Width (dj) shifts: read the centre column group at a +/-1 row offset (the extra
    # row falls into the zero-pad rows), then mask rows that crossed a w boundary.
    w_idx = jax.lax.broadcasted_iota(jnp.int32, (M, 1), 0) % W
    left = strip_ref[W - 1:W - 1 + M, Cin:2 * Cin]        # z[h, w-1, :] (unmasked)
    right = strip_ref[W + 1:W + 1 + M, Cin:2 * Cin]       # z[h, w+1, :] (unmasked)
    strip_ref[W:W + M, 0:Cin] = jnp.where(w_idx != 0, left, 0)                 # dj = 0
    strip_ref[W:W + M, 2 * Cin:3 * Cin] = jnp.where(w_idx != W - 1, right, 0)  # dj = 2

    # ---- 3 deep matmuls; kernel-height taps are 8-aligned sublane windows (views).
    acc = jnp.zeros((M, Cout), jnp.float32)
    for di in range(3):
        acc = acc + jnp.dot(strip_ref[di * W:di * W + M, :], w_ref[di],
                            preferred_element_type=jnp.float32)
    # Conv bias intentionally omitted: it is exactly absorbed by the train-mode
    # BatchNorm that always follows (mean absorbs it, variance unchanged).

    y_bf = acc.astype(y_ref.dtype)
    y_ref[0] = y_bf.reshape(H, W, Cout)

    # Per-image BN statistics of exactly the (bf16-rounded) values the next stage
    # reads back; reduced over the batch in the wrapper so the grid stays parallel.
    yf = y_bf.astype(jnp.float32)
    sum_ref[0] = jnp.sum(yf, axis=0, keepdims=True)
    ssq_ref[0] = jnp.sum(yf * yf, axis=0, keepdims=True)


def conv3x3_stats(x, w_mat, scale=None, shift=None, *, pre_relu=False,
                  out_dtype=jnp.bfloat16):
    """x: (N,H,W,Cin); w_mat: (3, 3*Cin, Cout) bf16; scale/shift: optional (C,) f32
    per-channel affine (the previous BatchNorm [+ReLU]) applied before the conv.
    Returns (y, per_image_channel_sum (N,1,Cout), per_image_channel_sumsq)."""
    N, H, W, Cin = x.shape
    Cout = w_mat.shape[-1]
    has_affine = scale is not None
    kern = functools.partial(_conv3x3_kernel, has_affine=has_affine,
                             pre_relu=pre_relu)

    in_specs = [
        pl.BlockSpec((1, H, W, Cin), lambda n: (n, 0, 0, 0)),
        # Weights resident in VMEM (constant index map).  NOTE: could be
        # single-buffered (pipeline_mode=pl.Buffered(1)) to save VMEM at large C.
        pl.BlockSpec((3, 3 * Cin, Cout), lambda n: (0, 0, 0)),
    ]
    args = [x, w_mat]
    if has_affine:
        in_specs += [pl.BlockSpec((1, Cin), lambda n: (0, 0)),
                     pl.BlockSpec((1, Cin), lambda n: (0, 0))]
        args += [scale.reshape(1, Cin).astype(jnp.float32),
                 shift.reshape(1, Cin).astype(jnp.float32)]

    return pl.pallas_call(
        kern,
        out_shape=(jax.ShapeDtypeStruct((N, H, W, Cout), out_dtype),
                   jax.ShapeDtypeStruct((N, 1, Cout), jnp.float32),
                   jax.ShapeDtypeStruct((N, 1, Cout), jnp.float32)),
        grid_spec=pltpu.PrefetchScalarGridSpec(
            num_scalar_prefetch=0,
            grid=(N,),
            in_specs=in_specs,
            out_specs=(pl.BlockSpec((1, H, W, Cout), lambda n: (n, 0, 0, 0)),
                       pl.BlockSpec((1, 1, Cout), lambda n: (n, 0, 0)),
                       pl.BlockSpec((1, 1, Cout), lambda n: (n, 0, 0))),
            scratch_shapes=[pltpu.VMEM(((H + 2) * W, 3 * Cin), jnp.bfloat16)],
        ),
        # Per-image outputs only (no grid-carried accumulators) -> batch axis is
        # parallel (v7x: shards across both TensorCores; harmless on v5e/v6e).
        compiler_params=pltpu.CompilerParams(
            dimension_semantics=("parallel",),
            vmem_limit_bytes=64 * 1024 * 1024),
    )(*args)


# ---------------------------- residual + BN2 kernel --------------------------------

def _residual_bn_kernel(x_ref, y_ref, scale_ref, shift_ref, o_ref):
    y = y_ref[0].astype(jnp.float32)
    o_ref[0] = x_ref[0].astype(jnp.float32) + y * scale_ref[...] + shift_ref[...]


def residual_bn_add(x, y, scale, shift):
    """out = x + (y * scale + shift): BatchNorm2 folded into the residual add.
    Presented lane-dense as (N, H, W*C) so the trailing dim is a multiple of 128."""
    N, H, W, C = x.shape
    xr = x.reshape(N, H, W * C)
    yr = y.reshape(N, H, W * C)
    scale_t = jnp.tile(scale.reshape(1, C).astype(jnp.float32), (1, W))  # (1, W*C)
    shift_t = jnp.tile(shift.reshape(1, C).astype(jnp.float32), (1, W))
    out = pl.pallas_call(
        _residual_bn_kernel,
        out_shape=jax.ShapeDtypeStruct((N, H, W * C), jnp.float32),
        grid_spec=pltpu.PrefetchScalarGridSpec(
            num_scalar_prefetch=0,
            grid=(N,),
            in_specs=[pl.BlockSpec((1, H, W * C), lambda n: (n, 0, 0)),
                      pl.BlockSpec((1, H, W * C), lambda n: (n, 0, 0)),
                      pl.BlockSpec((1, W * C), lambda n: (0, 0)),
                      pl.BlockSpec((1, W * C), lambda n: (0, 0))],
            out_specs=pl.BlockSpec((1, H, W * C), lambda n: (n, 0, 0)),
        ),
        compiler_params=pltpu.CompilerParams(
            dimension_semantics=("parallel",),
            vmem_limit_bytes=64 * 1024 * 1024),
    )(xr, yr, scale_t, shift_t)
    return out.reshape(N, H, W, C)


# ------------------------------- module forward ------------------------------------

def fold_bn(sums, ssqs, gamma, beta, count, eps):
    """Fold train-mode BatchNorm into a per-channel (scale, shift)."""
    s = jnp.sum(sums, axis=(0, 1))       # reduce per-image partial stats -> (C,)
    q = jnp.sum(ssqs, axis=(0, 1))
    mean = s / count
    # NOTE: E[x^2]-E[x]^2 in f32 is fine at these magnitudes/sample counts; a
    # centered/two-pass form would be safer for very large images.
    var = jnp.maximum(q / count - mean * mean, 0.0)
    scale = gamma * jax.lax.rsqrt(var + eps)
    shift = beta - mean * scale
    return scale, shift


def resnet_block_forward(params, x_nchw, eps=1e-5):
    x = jnp.transpose(x_nchw, (0, 2, 3, 1))          # NCHW -> NHWC (boundary only)
    N, H, W, C = x.shape
    cnt = float(N * H * W)

    # (di, dj*Cin, Cout): one deep contraction axis per kernel row for the MXU.
    w1 = params["w1"].reshape(3, 3 * C, C)
    w2 = params["w2"].reshape(3, 3 * C, C)

    # conv1 (+ BN1 statistics).  Conv bias omitted: exactly absorbed by BN1.
    y1, s1, q1 = conv3x3_stats(x, w1, pre_relu=False)
    scale1, shift1 = fold_bn(s1, q1, params["g1"], params["be1"], cnt, eps)

    # conv2 with BN1 + ReLU fused as its input pre-activation (+ BN2 statistics).
    y2, s2, q2 = conv3x3_stats(y1, w2, scale1, shift1, pre_relu=True)
    scale2, shift2 = fold_bn(s2, q2, params["g2"], params["be2"], cnt, eps)

    # BN2 folded into the residual add (lane-dense layout).
    out = residual_bn_add(x, y2, scale2, shift2)
    return jnp.transpose(out, (0, 3, 1, 2))          # NHWC -> NCHW


# --------------------------------- parameters ---------------------------------------

def init_params(key, dim, use_bias=True):
    k1, k2, kb1, kb2 = jax.random.split(key, 4)

    def wgt(k):   # (3, 3, Cin, Cout) HWIO, bf16 for the MXU
        w = 0.1 * jax.random.normal(k, (3, 3, dim, dim), jnp.float32)
        return w.astype(jnp.bfloat16)

    def bias(k):  # kept for the reference; the kernels drop it (absorbed by BN)
        if use_bias:
            return 0.1 * jax.random.normal(k, (dim,), jnp.float32)
        return jnp.zeros((dim,), jnp.float32)

    return dict(
        w1=wgt(k1), b1=bias(kb1),
        g1=jnp.ones((dim,), jnp.float32), be1=jnp.zeros((dim,), jnp.float32),
        w2=wgt(k2), b2=bias(kb2),
        g2=jnp.ones((dim,), jnp.float32), be2=jnp.zeros((dim,), jnp.float32),
    )


# ------------------------------ pure-JAX reference ----------------------------------

def reference_forward(params, x_nchw, eps=1e-5):
    x = jnp.transpose(x_nchw, (0, 2, 3, 1)).astype(jnp.float32)

    def conv(h, w, b):
        return jax.lax.conv_general_dilated(
            h, w.astype(jnp.float32), window_strides=(1, 1), padding="SAME",
            dimension_numbers=("NHWC", "HWIO", "NHWC"),
            precision=jax.lax.Precision.HIGHEST) + b

    def bn(h, g, be):
        m = jnp.mean(h, axis=(0, 1, 2))
        v = jnp.mean(jnp.square(h - m), axis=(0, 1, 2))
        return (h - m) * jax.lax.rsqrt(v + eps) * g + be

    y = conv(x, params["w1"], params["b1"])    # bias included: BN makes it a no-op
    y = jax.nn.relu(bn(y, params["g1"], params["be1"]))
    y = conv(y, params["w2"], params["b2"])
    y = bn(y, params["g2"], params["be2"])
    return jnp.transpose(x + y, (0, 3, 1, 2))


# ------------------------------------- main ------------------------------------------

if __name__ == "__main__":
    dim, B, H, W = 128, 2, 16, 16     # small ResnetBlock config (lane-aligned channels)

    kp, kx = jax.random.split(jax.random.PRNGKey(0))
    params = init_params(kp, dim, use_bias=True)
    x = jax.random.normal(kx, (B, dim, H, W), jnp.float32)

    fwd = jax.jit(resnet_block_forward)
    out = jax.block_until_ready(fwd(params, x))

    assert out.shape == (B, dim, H, W), out.shape
    assert bool(jnp.all(jnp.isfinite(out)))

    # Numerical check vs. a pure-f32 XLA reference.  bf16 MXU operands and bf16
    # inter-layer activations give ~1e-2 absolute deviations at these magnitudes.
    ref = jax.block_until_ready(reference_forward(params, x))
    err = jnp.abs(out - ref)
    max_err = float(jnp.max(err))
    mean_err = float(jnp.mean(err))
    assert max_err < 0.15 and mean_err < 0.02, (max_err, mean_err)

    print("KERNEL_OK")
</pallas_src>

<mosaic_0001>
module attributes {stable_mosaic.version = 11 : i64} {
  func.func @_conv3x3_kernel(%arg0: i32, %arg1: memref<1x16x16x128xf32, #tpu.memory_space<vmem>>, %arg2: memref<3x384x128xbf16, #tpu.memory_space<vmem>>, %arg3: memref<1x16x16x128xbf16, #tpu.memory_space<vmem>>, %arg4: memref<1x1x128xf32, #tpu.memory_space<vmem>>, %arg5: memref<1x1x128xf32, #tpu.memory_space<vmem>>, %arg6: memref<288x384xbf16, #tpu.memory_space<vmem>>) attributes {dimension_semantics = [#tpu.dimension_semantics<parallel>], iteration_bounds = array<i64: 2>, scalar_prefetch = 0 : i64, scratch_operands = 1 : i64, tpu.core_type = #tpu.core_type<tc>, window_params = [{transform_indices = @transform_0, window_bounds = array<i64: 1, 16, 16, 128>}, {pipeline_mode = #tpu.pipeline_mode<synchronous>, transform_indices = @transform_1, window_bounds = array<i64: 3, 384, 128>}, {transform_indices = @transform_2, window_bounds = array<i64: 1, 16, 16, 128>}, {transform_indices = @transform_3, window_bounds = array<i64: 1, 1, 128>}, {transform_indices = @transform_4, window_bounds = array<i64: 1, 1, 128>}]} {
    %c0 = arith.constant 0 : index
    %c0_0 = arith.constant 0 : index
    %c0_1 = arith.constant 0 : index
    %c0_2 = arith.constant 0 : index
    %0 = vector.load %arg1[%c0, %c0_0, %c0_1, %c0_2] : memref<1x16x16x128xf32, #tpu.memory_space<vmem>>, vector<1x16x16x128xf32>
    %1 = vector.shape_cast %0 : vector<1x16x16x128xf32> to vector<16x16x128xf32>
    %2 = arith.truncf %1 : vector<16x16x128xf32> to vector<16x16x128xbf16>
    %3 = vector.shape_cast %2 : vector<16x16x128xbf16> to vector<256x128xbf16>
    %cst = arith.constant 0.000000e+00 : bf16
    %4 = vector.broadcast %cst : bf16 to vector<16x384xbf16>
    %c0_3 = arith.constant 0 : index
    %c0_4 = arith.constant 0 : index
    %5 = vector.load %arg6[%c0_3, %c0_4] : memref<288x384xbf16, #tpu.memory_space<vmem>>, vector<16x384xbf16>
    tpu.vector_store %arg6[%c0_3, %c0_4], %4 {strides = array<i32>} : memref<288x384xbf16, #tpu.memory_space<vmem>>, vector<16x384xbf16>,
    %cst_5 = arith.constant 0.000000e+00 : bf16
    %6 = vector.broadcast %cst_5 : bf16 to vector<16x384xbf16>
    %c272 = arith.constant 272 : index
    %c0_6 = arith.constant 0 : index
    %7 = vector.load %arg6[%c272, %c0_6] : memref<288x384xbf16, #tpu.memory_space<vmem>>, vector<16x384xbf16>
    tpu.vector_store %arg6[%c272, %c0_6], %6 {strides = array<i32>} : memref<288x384xbf16, #tpu.memory_space<vmem>>, vector<16x384xbf16>,
    %c16 = arith.constant 16 : index
    %c128 = arith.constant 128 : index
    %8 = vector.load %arg6[%c16, %c128] : memref<288x384xbf16, #tpu.memory_space<vmem>>, vector<256x128xbf16>
    tpu.vector_store %arg6[%c16, %c128], %3 {strides = array<i32>} : memref<288x384xbf16, #tpu.memory_space<vmem>>, vector<256x128xbf16>,
    %9 = tpu.iota {dimensions = array<i32: 0>} : vector<256x1xi32>
    %c16_i32 = arith.constant 16 : i32
    %c0_i32 = arith.constant 0 : i32
    %10 = arith.cmpi eq, %c16_i32, %c0_i32 : i32
    %c1_i32 = arith.constant 1 : i32
    %11 = arith.select %10, %c1_i32, %c16_i32 : i32
    %12 = vector.broadcast %11 : i32 to vector<256x1xi32>
    %13 = arith.remsi %9, %12 : vector<256x1xi32>
    %c0_i32_7 = arith.constant 0 : i32
    %14 = vector.broadcast %c0_i32_7 : i32 to vector<256x1xi32>
    %15 = arith.cmpi ne, %13, %14 : vector<256x1xi32>
    %c0_i32_8 = arith.constant 0 : i32
    %16 = vector.broadcast %c0_i32_8 : i32 to vector<256x1xi32>
    %17 = arith.cmpi slt, %13, %16 : vector<256x1xi32>
    %c0_i32_9 = arith.constant 0 : i32
    %18 = arith.cmpi slt, %11, %c0_i32_9 : i32
    %19 = vector.broadcast %18 : i1 to vector<256x1xi1>
    %20 = vector.broadcast %19 : vector<256x1xi1> to vector<256x1xi1>
    %21 = arith.xori %17, %20 : vector<256x1xi1>
    %22 = arith.andi %21, %15 : vector<256x1xi1>
    %23 = vector.broadcast %11 : i32 to vector<256x1xi32>
    %24 = arith.addi %13, %23 : vector<256x1xi32>
    %25 = arith.select %22, %24, %13 : vector<256x1xi1>, vector<256x1xi32>
    %c15 = arith.constant 15 : index
    %c128_10 = arith.constant 128 : index
    %26 = vector.load %arg6[%c15, %c128_10] : memref<288x384xbf16, #tpu.memory_space<vmem>>, vector<256x128xbf16>
    %c17 = arith.constant 17 : index
    %c128_11 = arith.constant 128 : index
    %27 = vector.load %arg6[%c17, %c128_11] : memref<288x384xbf16, #tpu.memory_space<vmem>>, vector<256x128xbf16>
    %c0_i32_12 = arith.constant 0 : i32
    %28 = vector.broadcast %c0_i32_12 : i32 to vector<256x1xi32>
    %29 = arith.cmpi ne, %25, %28 : vector<256x1xi32>
    %c0_i32_13 = arith.constant 0 : i32
    %30 = arith.sitofp %c0_i32_13 : i32 to bf16
    %31 = vector.shape_cast %29 : vector<256x1xi1> to vector<256x1xi1>
    %32 = vector.broadcast %31 : vector<256x1xi1> to vector<256x128xi1>
    %33 = vector.broadcast %30 : bf16 to vector<256x128xbf16>
    %34 = arith.select %32, %26, %33 : vector<256x128xi1>, vector<256x128xbf16>
    %c16_14 = arith.constant 16 : index
    %c0_15 = arith.constant 0 : index
    %35 = vector.load %arg6[%c16_14, %c0_15] : memref<288x384xbf16, #tpu.memory_space<vmem>>, vector<256x128xbf16>
    tpu.vector_store %arg6[%c16_14, %c0_15], %34 {strides = array<i32>} : memref<288x384xbf16, #tpu.memory_space<vmem>>, vector<256x128xbf16>,
    %c15_i32 = arith.constant 15 : i32
    %36 = vector.broadcast %c15_i32 : i32 to vector<256x1xi32>
    %37 = arith.cmpi ne, %25, %36 : vector<256x1xi32>
    %c0_i32_16 = arith.constant 0 : i32
    %38 = arith.sitofp %c0_i32_16 : i32 to bf16
    %39 = vector.shape_cast %37 : vector<256x1xi1> to vector<256x1xi1>
    %40 = vector.broadcast %39 : vector<256x1xi1> to vector<256x128xi1>
    %41 = vector.broadcast %38 : bf16 to vector<256x128xbf16>
    %42 = arith.select %40, %27, %41 : vector<256x128xi1>, vector<256x128xbf16>
    %c16_17 = arith.constant 16 : index
    %c256 = arith.constant 256 : index
    %43 = vector.load %arg6[%c16_17, %c256] : memref<288x384xbf16, #tpu.memory_space<vmem>>, vector<256x128xbf16>
    tpu.vector_store %arg6[%c16_17, %c256], %42 {strides = array<i32>} : memref<288x384xbf16, #tpu.memory_space<vmem>>, vector<256x128xbf16>,
    %cst_18 = arith.constant 0.000000e+00 : f32
    %44 = vector.broadcast %cst_18 : f32 to vector<256x128xf32>
    %c0_19 = arith.constant 0 : index
    %c0_20 = arith.constant 0 : index
    %45 = vector.load %arg6[%c0_19, %c0_20] : memref<288x384xbf16, #tpu.memory_space<vmem>>, vector<256x384xbf16>
    %c0_21 = arith.constant 0 : index
    %c0_22 = arith.constant 0 : index
    %c0_23 = arith.constant 0 : index
    %46 = vector.load %arg2[%c0_21, %c0_22, %c0_23] : memref<3x384x128xbf16, #tpu.memory_space<vmem>>, vector<1x384x128xbf16>
    %47 = vector.shape_cast %46 : vector<1x384x128xbf16> to vector<384x128xbf16>
    %cst_24 = arith.constant dense<0.000000e+00> : vector<256x128xf32>
    %48 = tpu.matmul %45, %47, %cst_24 {dimension_numbers = #tpu.dot_dimension_numbers<[1], [0], [0], [1], [0, 0, 1, 1], [], []>} : vector<256x384xbf16>, vector<384x128xbf16>, vector<256x128xf32> -> vector<256x128xf32>
    %49 = arith.addf %44, %48 : vector<256x128xf32>
    %c16_25 = arith.constant 16 : index
    %c0_26 = arith.constant 0 : index
    %50 = vector.load %arg6[%c16_25, %c0_26] : memref<288x384xbf16, #tpu.memory_space<vmem>>, vector<256x384xbf16>
    %c1 = arith.constant 1 : index
    %c0_27 = arith.constant 0 : index
    %c0_28 = arith.constant 0 : index
    %51 = vector.load %arg2[%c1, %c0_27, %c0_28] : memref<3x384x128xbf16, #tpu.memory_space<vmem>>, vector<1x384x128xbf16>
    %52 = vector.shape_cast %51 : vector<1x384x128xbf16> to vector<384x128xbf16>
    %cst_29 = arith.constant dense<0.000000e+00> : vector<256x128xf32>
    %53 = tpu.matmul %50, %52, %cst_29 {dimension_numbers = #tpu.dot_dimension_numbers<[1], [0], [0], [1], [0, 0, 1, 1], [], []>} : vector<256x384xbf16>, vector<384x128xbf16>, vector<256x128xf32> -> vector<256x128xf32>
    %54 = arith.addf %49, %53 : vector<256x128xf32>
    %c32 = arith.constant 32 : index
    %c0_30 = arith.constant 0 : index
    %55 = vector.load %arg6[%c32, %c0_30] : memref<288x384xbf16, #tpu.memory_space<vmem>>, vector<256x384xbf16>
    %c2 = arith.constant 2 : index
    %c0_31 = arith.constant 0 : index
    %c0_32 = arith.constant 0 : index
    %56 = vector.load %arg2[%c2, %c0_31, %c0_32] : memref<3x384x128xbf16, #tpu.memory_space<vmem>>, vector<1x384x128xbf16>
    %57 = vector.shape_cast %56 : vector<1x384x128xbf16> to vector<384x128xbf16>
    %cst_33 = arith.constant dense<0.000000e+00> : vector<256x128xf32>
    %58 = tpu.matmul %55, %57, %cst_33 {dimension_numbers = #tpu.dot_dimension_numbers<[1], [0], [0], [1], [0, 0, 1, 1], [], []>} : vector<256x384xbf16>, vector<384x128xbf16>, vector<256x128xf32> -> vector<256x128xf32>
    %59 = arith.addf %54, %58 : vector<256x128xf32>
    %60 = arith.truncf %59 : vector<256x128xf32> to vector<256x128xbf16>
    %61 = vector.shape_cast %60 : vector<256x128xbf16> to vector<16x16x128xbf16>
    %c0_34 = arith.constant 0 : index
    %c0_35 = arith.constant 0 : index
    %c0_36 = arith.constant 0 : index
    %c0_37 = arith.constant 0 : index
    %62 = vector.load %arg3[%c0_34, %c0_35, %c0_36, %c0_37] : memref<1x16x16x128xbf16, #tpu.memory_space<vmem>>, vector<1x16x16x128xbf16>
    %63 = vector.shape_cast %62 : vector<1x16x16x128xbf16> to vector<16x16x128xbf16>
    %64 = vector.shape_cast %61 : vector<16x16x128xbf16> to vector<1x16x16x128xbf16>
    tpu.vector_store %arg3[%c0_34, %c0_35, %c0_36, %c0_37], %64 {strides = array<i32>} : memref<1x16x16x128xbf16, #tpu.memory_space<vmem>>, vector<1x16x16x128xbf16>,
    %65 = arith.extf %60 : vector<256x128xbf16> to vector<256x128xf32>
    %cst_38 = arith.constant dense<0.000000e+00> : vector<128xf32>
    %66 = vector.multi_reduction <add>, %65, %cst_38 [0] : vector<256x128xf32> to vector<128xf32>
    %67 = vector.shape_cast %66 : vector<128xf32> to vector<1x128xf32>
    %c0_39 = arith.constant 0 : index
    %c0_40 = arith.constant 0 : index
    %c0_41 = arith.constant 0 : index
    %68 = vector.load %arg4[%c0_39, %c0_40, %c0_41] : memref<1x1x128xf32, #tpu.memory_space<vmem>>, vector<1x1x128xf32>
    %69 = vector.shape_cast %68 : vector<1x1x128xf32> to vector<1x128xf32>
    %70 = vector.shape_cast %67 : vector<1x128xf32> to vector<1x1x128xf32>
    tpu.vector_store %arg4[%c0_39, %c0_40, %c0_41], %70 {strides = array<i32>} : memref<1x1x128xf32, #tpu.memory_space<vmem>>, vector<1x1x128xf32>,
    %71 = arith.mulf %65, %65 : vector<256x128xf32>
    %cst_42 = arith.constant dense<0.000000e+00> : vector<128xf32>
    %72 = vector.multi_reduction <add>, %71, %cst_42 [0] : vector<256x128xf32> to vector<128xf32>
    %73 = vector.shape_cast %72 : vector<128xf32> to vector<1x128xf32>
    %c0_43 = arith.constant 0 : index
    %c0_44 = arith.constant 0 : index
    %c0_45 = arith.constant 0 : index
    %74 = vector.load %arg5[%c0_43, %c0_44, %c0_45] : memref<1x1x128xf32, #tpu.memory_space<vmem>>, vector<1x1x128xf32>
    %75 = vector.shape_cast %74 : vector<1x1x128xf32> to vector<1x128xf32>
    %76 = vector.shape_cast %73 : vector<1x128xf32> to vector<1x1x128xf32>
    tpu.vector_store %arg5[%c0_43, %c0_44, %c0_45], %76 {strides = array<i32>} : memref<1x1x128xf32, #tpu.memory_space<vmem>>, vector<1x1x128xf32>,
    return
  }
  func.func @transform_0(%arg0: i32) -> (i32, i32, i32, i32) {
    %c0_i32 = arith.constant 0 : i32
    %c0_i32_0 = arith.constant 0 : i32
    %c0_i32_1 = arith.constant 0 : i32
    %c0_i32_2 = arith.constant 0 : i32
    return %arg0, %c0_i32, %c0_i32_0, %c0_i32_1 : i32, i32, i32, i32
  }
  func.func @transform_1(%arg0: i32) -> (i32, i32, i32) {
    %c0_i32 = arith.constant 0 : i32
    %c0_i32_0 = arith.constant 0 : i32
    %c0_i32_1 = arith.constant 0 : i32
    %c0_i32_2 = arith.constant 0 : i32
    return %c0_i32, %c0_i32_0, %c0_i32_1 : i32, i32, i32
  }
  func.func @transform_2(%arg0: i32) -> (i32, i32, i32, i32) {
    %c0_i32 = arith.constant 0 : i32
    %c0_i32_0 = arith.constant 0 : i32
    %c0_i32_1 = arith.constant 0 : i32
    %c0_i32_2 = arith.constant 0 : i32
    return %arg0, %c0_i32, %c0_i32_0, %c0_i32_1 : i32, i32, i32, i32
  }
  func.func @transform_3(%arg0: i32) -> (i32, i32, i32) {
    %c0_i32 = arith.constant 0 : i32
    %c0_i32_0 = arith.constant 0 : i32
    %c0_i32_1 = arith.constant 0 : i32
    return %arg0, %c0_i32, %c0_i32_0 : i32, i32, i32
  }
  func.func @transform_4(%arg0: i32) -> (i32, i32, i32) {
    %c0_i32 = arith.constant 0 : i32
    %c0_i32_0 = arith.constant 0 : i32
    %c0_i32_1 = arith.constant 0 : i32
    return %arg0, %c0_i32, %c0_i32_0 : i32, i32, i32
  }
}

module attributes {stable_mosaic.version = 11 : i64} {
  func.func @_conv3x3_kernel(%arg0: i32, %arg1: memref<1x16x16x128xbf16, #tpu.memory_space<vmem>>, %arg2: memref<3x384x128xbf16, #tpu.memory_space<vmem>>, %arg3: memref<1x128xf32, #tpu.memory_space<vmem>>, %arg4: memref<1x128xf32, #tpu.memory_space<vmem>>, %arg5: memref<1x16x16x128xbf16, #tpu.memory_space<vmem>>, %arg6: memref<1x1x128xf32, #tpu.memory_space<vmem>>, %arg7: memref<1x1x128xf32, #tpu.memory_space<vmem>>, %arg8: memref<288x384xbf16, #tpu.memory_space<vmem>>) attributes {dimension_semantics = [#tpu.dimension_semantics<parallel>], iteration_bounds = array<i64: 2>, scalar_prefetch = 0 : i64, scratch_operands = 1 : i64, tpu.core_type = #tpu.core_type<tc>, window_params = [{transform_indices = @transform_0, window_bounds = array<i64: 1, 16, 16, 128>}, {pipeline_mode = #tpu.pipeline_mode<synchronous>, transform_indices = @transform_1, window_bounds = array<i64: 3, 384, 128>}, {pipeline_mode = #tpu.pipeline_mode<synchronous>, transform_indices = @transform_2, window_bounds = array<i64: 1, 128>}, {pipeline_mode = #tpu.pipeline_mode<synchronous>, transform_indices = @transform_3, window_bounds = array<i64: 1, 128>}, {transform_indices = @transform_4, window_bounds = array<i64: 1, 16, 16, 128>}, {transform_indices = @transform_5, window_bounds = array<i64: 1, 1, 128>}, {transform_indices = @transform_6, window_bounds = array<i64: 1, 1, 128>}]} {
    %c0 = arith.constant 0 : index
    %c0_0 = arith.constant 0 : index
    %c0_1 = arith.constant 0 : index
    %c0_2 = arith.constant 0 : index
    %0 = vector.load %arg1[%c0, %c0_0, %c0_1, %c0_2] : memref<1x16x16x128xbf16, #tpu.memory_space<vmem>>, vector<1x16x16x128xbf16>
    %1 = vector.shape_cast %0 : vector<1x16x16x128xbf16> to vector<16x16x128xbf16>
    %2 = arith.extf %1 : vector<16x16x128xbf16> to vector<16x16x128xf32>
    %c0_3 = arith.constant 0 : index
    %c0_4 = arith.constant 0 : index
    %3 = vector.load %arg3[%c0_3, %c0_4] : memref<1x128xf32, #tpu.memory_space<vmem>>, vector<1x128xf32>
    %4 = vector.shape_cast %3 : vector<1x128xf32> to vector<1x1x128xf32>
    %5 = vector.broadcast %4 : vector<1x1x128xf32> to vector<16x16x128xf32>
    %6 = arith.mulf %2, %5 : vector<16x16x128xf32>
    %c0_5 = arith.constant 0 : index
    %c0_6 = arith.constant 0 : index
    %7 = vector.load %arg4[%c0_5, %c0_6] : memref<1x128xf32, #tpu.memory_space<vmem>>, vector<1x128xf32>
    %8 = vector.shape_cast %7 : vector<1x128xf32> to vector<1x1x128xf32>
    %9 = vector.broadcast %8 : vector<1x1x128xf32> to vector<16x16x128xf32>
    %10 = arith.addf %6, %9 : vector<16x16x128xf32>
    %cst = arith.constant 0.000000e+00 : f32
    %11 = vector.broadcast %cst : f32 to vector<16x16x128xf32>
    %12 = arith.maximumf %10, %11 : vector<16x16x128xf32>
    %13 = arith.truncf %12 : vector<16x16x128xf32> to vector<16x16x128xbf16>
    %14 = vector.shape_cast %13 : vector<16x16x128xbf16> to vector<256x128xbf16>
    %cst_7 = arith.constant 0.000000e+00 : bf16
    %15 = vector.broadcast %cst_7 : bf16 to vector<16x384xbf16>
    %c0_8 = arith.constant 0 : index
    %c0_9 = arith.constant 0 : index
    %16 = vector.load %arg8[%c0_8, %c0_9] : memref<288x384xbf16, #tpu.memory_space<vmem>>, vector<16x384xbf16>
    tpu.vector_store %arg8[%c0_8, %c0_9], %15 {strides = array<i32>} : memref<288x384xbf16, #tpu.memory_space<vmem>>, vector<16x384xbf16>,
    %cst_10 = arith.constant 0.000000e+00 : bf16
    %17 = vector.broadcast %cst_10 : bf16 to vector<16x384xbf16>
    %c272 = arith.constant 272 : index
    %c0_11 = arith.constant 0 : index
    %18 = vector.load %arg8[%c272, %c0_11] : memref<288x384xbf16, #tpu.memory_space<vmem>>, vector<16x384xbf16>
    tpu.vector_store %arg8[%c272, %c0_11], %17 {strides = array<i32>} : memref<288x384xbf16, #tpu.memory_space<vmem>>, vector<16x384xbf16>,
    %c16 = arith.constant 16 : index
    %c128 = arith.constant 128 : index
    %19 = vector.load %arg8[%c16, %c128] : memref<288x384xbf16, #tpu.memory_space<vmem>>, vector<256x128xbf16>
    tpu.vector_store %arg8[%c16, %c128], %14 {strides = array<i32>} : memref<288x384xbf16, #tpu.memory_space<vmem>>, vector<256x128xbf16>,
    %20 = tpu.iota {dimensions = array<i32: 0>} : vector<256x1xi32>
    %c16_i32 = arith.constant 16 : i32
    %c0_i32 = arith.constant 0 : i32
    %21 = arith.cmpi eq, %c16_i32, %c0_i32 : i32
    %c1_i32 = arith.constant 1 : i32
    %22 = arith.select %21, %c1_i32, %c16_i32 : i32
    %23 = vector.broadcast %22 : i32 to vector<256x1xi32>
    %24 = arith.remsi %20, %23 : vector<256x1xi32>
    %c0_i32_12 = arith.constant 0 : i32
    %25 = vector.broadcast %c0_i32_12 : i32 to vector<256x1xi32>
    %26 = arith.cmpi ne, %24, %25 : vector<256x1xi32>
    %c0_i32_13 = arith.constant 0 : i32
    %27 = vector.broadcast %c0_i32_13 : i32 to vector<256x1xi32>
    %28 = arith.cmpi slt, %24, %27 : vector<256x1xi32>
    %c0_i32_14 = arith.constant 0 : i32
    %29 = arith.cmpi slt, %22, %c0_i32_14 : i32
    %30 = vector.broadcast %29 : i1 to vector<256x1xi1>
    %31 = vector.broadcast %30 : vector<256x1xi1> to vector<256x1xi1>
    %32 = arith.xori %28, %31 : vector<256x1xi1>
    %33 = arith.andi %32, %26 : vector<256x1xi1>
    %34 = vector.broadcast %22 : i32 to vector<256x1xi32>
    %35 = arith.addi %24, %34 : vector<256x1xi32>
    %36 = arith.select %33, %35, %24 : vector<256x1xi1>, vector<256x1xi32>
    %c15 = arith.constant 15 : index
    %c128_15 = arith.constant 128 : index
    %37 = vector.load %arg8[%c15, %c128_15] : memref<288x384xbf16, #tpu.memory_space<vmem>>, vector<256x128xbf16>
    %c17 = arith.constant 17 : index
    %c128_16 = arith.constant 128 : index
    %38 = vector.load %arg8[%c17, %c128_16] : memref<288x384xbf16, #tpu.memory_space<vmem>>, vector<256x128xbf16>
    %c0_i32_17 = arith.constant 0 : i32
    %39 = vector.broadcast %c0_i32_17 : i32 to vector<256x1xi32>
    %40 = arith.cmpi ne, %36, %39 : vector<256x1xi32>
    %c0_i32_18 = arith.constant 0 : i32
    %41 = arith.sitofp %c0_i32_18 : i32 to bf16
    %42 = vector.shape_cast %40 : vector<256x1xi1> to vector<256x1xi1>
    %43 = vector.broadcast %42 : vector<256x1xi1> to vector<256x128xi1>
    %44 = vector.broadcast %41 : bf16 to vector<256x128xbf16>
    %45 = arith.select %43, %37, %44 : vector<256x128xi1>, vector<256x128xbf16>
    %c16_19 = arith.constant 16 : index
    %c0_20 = arith.constant 0 : index
    %46 = vector.load %arg8[%c16_19, %c0_20] : memref<288x384xbf16, #tpu.memory_space<vmem>>, vector<256x128xbf16>
    tpu.vector_store %arg8[%c16_19, %c0_20], %45 {strides = array<i32>} : memref<288x384xbf16, #tpu.memory_space<vmem>>, vector<256x128xbf16>,
    %c15_i32 = arith.constant 15 : i32
    %47 = vector.broadcast %c15_i32 : i32 to vector<256x1xi32>
    %48 = arith.cmpi ne, %36, %47 : vector<256x1xi32>
    %c0_i32_21 = arith.constant 0 : i32
    %49 = arith.sitofp %c0_i32_21 : i32 to bf16
    %50 = vector.shape_cast %48 : vector<256x1xi1> to vector<256x1xi1>
    %51 = vector.broadcast %50 : vector<256x1xi1> to vector<256x128xi1>
    %52 = vector.broadcast %49 : bf16 to vector<256x128xbf16>
    %53 = arith.select %51, %38, %52 : vector<256x128xi1>, vector<256x128xbf16>
    %c16_22 = arith.constant 16 : index
    %c256 = arith.constant 256 : index
    %54 = vector.load %arg8[%c16_22, %c256] : memref<288x384xbf16, #tpu.memory_space<vmem>>, vector<256x128xbf16>
    tpu.vector_store %arg8[%c16_22, %c256], %53 {strides = array<i32>} : memref<288x384xbf16, #tpu.memory_space<vmem>>, vector<256x128xbf16>,
    %cst_23 = arith.constant 0.000000e+00 : f32
    %55 = vector.broadcast %cst_23 : f32 to vector<256x128xf32>
    %c0_24 = arith.constant 0 : index
    %c0_25 = arith.constant 0 : index
    %56 = vector.load %arg8[%c0_24, %c0_25] : memref<288x384xbf16, #tpu.memory_space<vmem>>, vector<256x384xbf16>
    %c0_26 = arith.constant 0 : index
    %c0_27 = arith.constant 0 : index
    %c0_28 = arith.constant 0 : index
    %57 = vector.load %arg2[%c0_26, %c0_27, %c0_28] : memref<3x384x128xbf16, #tpu.memory_space<vmem>>, vector<1x384x128xbf16>
    %58 = vector.shape_cast %57 : vector<1x384x128xbf16> to vector<384x128xbf16>
    %cst_29 = arith.constant dense<0.000000e+00> : vector<256x128xf32>
    %59 = tpu.matmul %56, %58, %cst_29 {dimension_numbers = #tpu.dot_dimension_numbers<[1], [0], [0], [1], [0, 0, 1, 1], [], []>} : vector<256x384xbf16>, vector<384x128xbf16>, vector<256x128xf32> -> vector<256x128xf32>
    %60 = arith.addf %55, %59 : vector<256x128xf32>
    %c16_30 = arith.constant 16 : index
    %c0_31 = arith.constant 0 : index
    %61 = vector.load %arg8[%c16_30, %c0_31] : memref<288x384xbf16, #tpu.memory_space<vmem>>, vector<256x384xbf16>
    %c1 = arith.constant 1 : index
    %c0_32 = arith.constant 0 : index
    %c0_33 = arith.constant 0 : index
    %62 = vector.load %arg2[%c1, %c0_32, %c0_33] : memref<3x384x128xbf16, #tpu.memory_space<vmem>>, vector<1x384x128xbf16>
    %63 = vector.shape_cast %62 : vector<1x384x128xbf16> to vector<384x128xbf16>
    %cst_34 = arith.constant dense<0.000000e+00> : vector<256x128xf32>
    %64 = tpu.matmul %61, %63, %cst_34 {dimension_numbers = #tpu.dot_dimension_numbers<[1], [0], [0], [1], [0, 0, 1, 1], [], []>} : vector<256x384xbf16>, vector<384x128xbf16>, vector<256x128xf32> -> vector<256x128xf32>
    %65 = arith.addf %60, %64 : vector<256x128xf32>
    %c32 = arith.constant 32 : index
    %c0_35 = arith.constant 0 : index
    %66 = vector.load %arg8[%c32, %c0_35] : memref<288x384xbf16, #tpu.memory_space<vmem>>, vector<256x384xbf16>
    %c2 = arith.constant 2 : index
    %c0_36 = arith.constant 0 : index
    %c0_37 = arith.constant 0 : index
    %67 = vector.load %arg2[%c2, %c0_36, %c0_37] : memref<3x384x128xbf16, #tpu.memory_space<vmem>>, vector<1x384x128xbf16>
    %68 = vector.shape_cast %67 : vector<1x384x128xbf16> to vector<384x128xbf16>
    %cst_38 = arith.constant dense<0.000000e+00> : vector<256x128xf32>
    %69 = tpu.matmul %66, %68, %cst_38 {dimension_numbers = #tpu.dot_dimension_numbers<[1], [0], [0], [1], [0, 0, 1, 1], [], []>} : vector<256x384xbf16>, vector<384x128xbf16>, vector<256x128xf32> -> vector<256x128xf32>
    %70 = arith.addf %65, %69 : vector<256x128xf32>
    %71 = arith.truncf %70 : vector<256x128xf32> to vector<256x128xbf16>
    %72 = vector.shape_cast %71 : vector<256x128xbf16> to vector<16x16x128xbf16>
    %c0_39 = arith.constant 0 : index
    %c0_40 = arith.constant 0 : index
    %c0_41 = arith.constant 0 : index
    %c0_42 = arith.constant 0 : index
    %73 = vector.load %arg5[%c0_39, %c0_40, %c0_41, %c0_42] : memref<1x16x16x128xbf16, #tpu.memory_space<vmem>>, vector<1x16x16x128xbf16>
    %74 = vector.shape_cast %73 : vector<1x16x16x128xbf16> to vector<16x16x128xbf16>
    %75 = vector.shape_cast %72 : vector<16x16x128xbf16> to vector<1x16x16x128xbf16>
    tpu.vector_store %arg5[%c0_39, %c0_40, %c0_41, %c0_42], %75 {strides = array<i32>} : memref<1x16x16x128xbf16, #tpu.memory_space<vmem>>, vector<1x16x16x128xbf16>,
    %76 = arith.extf %71 : vector<256x128xbf16> to vector<256x128xf32>
    %cst_43 = arith.constant dense<0.000000e+00> : vector<128xf32>
    %77 = vector.multi_reduction <add>, %76, %cst_43 [0] : vector<256x128xf32> to vector<128xf32>
    %78 = vector.shape_cast %77 : vector<128xf32> to vector<1x128xf32>
    %c0_44 = arith.constant 0 : index
    %c0_45 = arith.constant 0 : index
    %c0_46 = arith.constant 0 : index
    %79 = vector.load %arg6[%c0_44, %c0_45, %c0_46] : memref<1x1x128xf32, #tpu.memory_space<vmem>>, vector<1x1x128xf32>
    %80 = vector.shape_cast %79 : vector<1x1x128xf32> to vector<1x128xf32>
    %81 = vector.shape_cast %78 : vector<1x128xf32> to vector<1x1x128xf32>
    tpu.vector_store %arg6[%c0_44, %c0_45, %c0_46], %81 {strides = array<i32>} : memref<1x1x128xf32, #tpu.memory_space<vmem>>, vector<1x1x128xf32>,
    %82 = arith.mulf %76, %76 : vector<256x128xf32>
    %cst_47 = arith.constant dense<0.000000e+00> : vector<128xf32>
    %83 = vector.multi_reduction <add>, %82, %cst_47 [0] : vector<256x128xf32> to vector<128xf32>
    %84 = vector.shape_cast %83 : vector<128xf32> to vector<1x128xf32>
    %c0_48 = arith.constant 0 : index
    %c0_49 = arith.constant 0 : index
    %c0_50 = arith.constant 0 : index
    %85 = vector.load %arg7[%c0_48, %c0_49, %c0_50] : memref<1x1x128xf32, #tpu.memory_space<vmem>>, vector<1x1x128xf32>
    %86 = vector.shape_cast %85 : vector<1x1x128xf32> to vector<1x128xf32>
    %87 = vector.shape_cast %84 : vector<1x128xf32> to vector<1x1x128xf32>
    tpu.vector_store %arg7[%c0_48, %c0_49, %c0_50], %87 {strides = array<i32>} : memref<1x1x128xf32, #tpu.memory_space<vmem>>, vector<1x1x128xf32>,
    return
  }
  func.func @transform_0(%arg0: i32) -> (i32, i32, i32, i32) {
    %c0_i32 = arith.constant 0 : i32
    %c0_i32_0 = arith.constant 0 : i32
    %c0_i32_1 = arith.constant 0 : i32
    %c0_i32_2 = arith.constant 0 : i32
    return %arg0, %c0_i32, %c0_i32_0, %c0_i32_1 : i32, i32, i32, i32
  }
  func.func @transform_1(%arg0: i32) -> (i32, i32, i32) {
    %c0_i32 = arith.constant 0 : i32
    %c0_i32_0 = arith.constant 0 : i32
    %c0_i32_1 = arith.constant 0 : i32
    %c0_i32_2 = arith.constant 0 : i32
    return %c0_i32, %c0_i32_0, %c0_i32_1 : i32, i32, i32
  }
  func.func @transform_2(%arg0: i32) -> (i32, i32) {
    %c0_i32 = arith.constant 0 : i32
    %c0_i32_0 = arith.constant 0 : i32
    %c0_i32_1 = arith.constant 0 : i32
    return %c0_i32, %c0_i32_0 : i32, i32
  }
  func.func @transform_3(%arg0: i32) -> (i32, i32) {
    %c0_i32 = arith.constant 0 : i32
    %c0_i32_0 = arith.constant 0 : i32
    %c0_i32_1 = arith.constant 0 : i32
    return %c0_i32, %c0_i32_0 : i32, i32
  }
  func.func @transform_4(%arg0: i32) -> (i32, i32, i32, i32) {
    %c0_i32 = arith.constant 0 : i32
    %c0_i32_0 = arith.constant 0 : i32
    %c0_i32_1 = arith.constant 0 : i32
    %c0_i32_2 = arith.constant 0 : i32
    return %arg0, %c0_i32, %c0_i32_0, %c0_i32_1 : i32, i32, i32, i32
  }
  func.func @transform_5(%arg0: i32) -> (i32, i32, i32) {
    %c0_i32 = arith.constant 0 : i32
    %c0_i32_0 = arith.constant 0 : i32
    %c0_i32_1 = arith.constant 0 : i32
    return %arg0, %c0_i32, %c0_i32_0 : i32, i32, i32
  }
  func.func @transform_6(%arg0: i32) -> (i32, i32, i32) {
    %c0_i32 = arith.constant 0 : i32
    %c0_i32_0 = arith.constant 0 : i32
    %c0_i32_1 = arith.constant 0 : i32
    return %arg0, %c0_i32, %c0_i32_0 : i32, i32, i32
  }
}

module attributes {stable_mosaic.version = 11 : i64} {
  func.func @_residual_bn_kernel(%arg0: i32, %arg1: memref<1x16x2048xf32, #tpu.memory_space<vmem>>, %arg2: memref<1x16x2048xbf16, #tpu.memory_space<vmem>>, %arg3: memref<1x2048xf32, #tpu.memory_space<vmem>>, %arg4: memref<1x2048xf32, #tpu.memory_space<vmem>>, %arg5: memref<1x16x2048xf32, #tpu.memory_space<vmem>>) attributes {dimension_semantics = [#tpu.dimension_semantics<parallel>], iteration_bounds = array<i64: 2>, scalar_prefetch = 0 : i64, scratch_operands = 0 : i64, tpu.core_type = #tpu.core_type<tc>, window_params = [{transform_indices = @transform_0, window_bounds = array<i64: 1, 16, 2048>}, {transform_indices = @transform_1, window_bounds = array<i64: 1, 16, 2048>}, {pipeline_mode = #tpu.pipeline_mode<synchronous>, transform_indices = @transform_2, window_bounds = array<i64: 1, 2048>}, {pipeline_mode = #tpu.pipeline_mode<synchronous>, transform_indices = @transform_3, window_bounds = array<i64: 1, 2048>}, {transform_indices = @transform_4, window_bounds = array<i64: 1, 16, 2048>}]} {
    %c0 = arith.constant 0 : index
    %c0_0 = arith.constant 0 : index
    %c0_1 = arith.constant 0 : index
    %0 = vector.load %arg2[%c0, %c0_0, %c0_1] : memref<1x16x2048xbf16, #tpu.memory_space<vmem>>, vector<1x16x2048xbf16>
    %1 = vector.shape_cast %0 : vector<1x16x2048xbf16> to vector<16x2048xbf16>
    %2 = arith.extf %1 : vector<16x2048xbf16> to vector<16x2048xf32>
    %c0_2 = arith.constant 0 : index
    %c0_3 = arith.constant 0 : index
    %c0_4 = arith.constant 0 : index
    %3 = vector.load %arg1[%c0_2, %c0_3, %c0_4] : memref<1x16x2048xf32, #tpu.memory_space<vmem>>, vector<1x16x2048xf32>
    %4 = vector.shape_cast %3 : vector<1x16x2048xf32> to vector<16x2048xf32>
    %c0_5 = arith.constant 0 : index
    %c0_6 = arith.constant 0 : index
    %5 = vector.load %arg3[%c0_5, %c0_6] : memref<1x2048xf32, #tpu.memory_space<vmem>>, vector<1x2048xf32>
    %6 = vector.broadcast %5 : vector<1x2048xf32> to vector<16x2048xf32>
    %7 = arith.mulf %2, %6 : vector<16x2048xf32>
    %8 = arith.addf %4, %7 : vector<16x2048xf32>
    %c0_7 = arith.constant 0 : index
    %c0_8 = arith.constant 0 : index
    %9 = vector.load %arg4[%c0_7, %c0_8] : memref<1x2048xf32, #tpu.memory_space<vmem>>, vector<1x2048xf32>
    %10 = vector.broadcast %9 : vector<1x2048xf32> to vector<16x2048xf32>
    %11 = arith.addf %8, %10 : vector<16x2048xf32>
    %c0_9 = arith.constant 0 : index
    %c0_10 = arith.constant 0 : index
    %c0_11 = arith.constant 0 : index
    %12 = vector.load %arg5[%c0_9, %c0_10, %c0_11] : memref<1x16x2048xf32, #tpu.memory_space<vmem>>, vector<1x16x2048xf32>
    %13 = vector.shape_cast %12 : vector<1x16x2048xf32> to vector<16x2048xf32>
    %14 = vector.shape_cast %11 : vector<16x2048xf32> to vector<1x16x2048xf32>
    tpu.vector_store %arg5[%c0_9, %c0_10, %c0_11], %14 {strides = array<i32>} : memref<1x16x2048xf32, #tpu.memory_space<vmem>>, vector<1x16x2048xf32>,
    return
  }
  func.func @transform_0(%arg0: i32) -> (i32, i32, i32) {
    %c0_i32 = arith.constant 0 : i32
    %c0_i32_0 = arith.constant 0 : i32
    %c0_i32_1 = arith.constant 0 : i32
    return %arg0, %c0_i32, %c0_i32_0 : i32, i32, i32
  }
  func.func @transform_1(%arg0: i32) -> (i32, i32, i32) {
    %c0_i32 = arith.constant 0 : i32
    %c0_i32_0 = arith.constant 0 : i32
    %c0_i32_1 = arith.constant 0 : i32
    return %arg0, %c0_i32, %c0_i32_0 : i32, i32, i32
  }
  func.func @transform_2(%arg0: i32) -> (i32, i32) {
    %c0_i32 = arith.constant 0 : i32
    %c0_i32_0 = arith.constant 0 : i32
    %c0_i32_1 = arith.constant 0 : i32
    return %c0_i32, %c0_i32_0 : i32, i32
  }
  func.func @transform_3(%arg0: i32) -> (i32, i32) {
    %c0_i32 = arith.constant 0 : i32
    %c0_i32_0 = arith.constant 0 : i32
    %c0_i32_1 = arith.constant 0 : i32
    return %c0_i32, %c0_i32_0 : i32, i32
  }
  func.func @transform_4(%arg0: i32) -> (i32, i32, i32) {
    %c0_i32 = arith.constant 0 : i32
    %c0_i32_0 = arith.constant 0 : i32
    %c0_i32_1 = arith.constant 0 : i32
    return %arg0, %c0_i32, %c0_i32_0 : i32, i32, i32
  }
}

</mosaic_0001>

<llo_original>
// kernel: resnet_block_forward.5
$region0: #{resnet_block_forward.5}
  #allocation0 [shape = 'u32[]', space=smem, size = 0x4, offset = 0x4, fixed_abs, tag = 'smem constant byte address 0x4 - core index']
  #allocation1 [shape = 'u32[144,128]{1,0:T(1,128)}', space=vmem, size = 0x12000, scoped, tag = 'internal scratch']
  %s0 = inlined_call_operand.hbm [shape: f32[2,16,2048], index: 0, kind: input, shape index: {}]
  %s1 = inlined_call_operand.hbm [shape: bf16[2,16,2048], index: 1, kind: input, shape index: {}]
  %s2 = inlined_call_operand.hbm [shape: f32[1,2048], index: 2, kind: input, shape index: {}]
  %s3 = inlined_call_operand.hbm [shape: f32[1,2048], index: 3, kind: input, shape index: {}]
  %s4 = inlined_call_operand.hbm [shape: f32[2,16,2048], index: 4, kind: output, shape index: {}]
  %s5 = sld [smem:[#allocation0]]
  $region65: #{resnet_block_forward.5} parent=0
    _
  %s7 = ssub.s32 1, %s5
  %s8 = scalar_select 0, %s7, %s5
  $region1: #{resnet_block_forward.5} parent=0
    #allocation2 [shape = 'u8[262144]{0}', space=vmem, size = 0x40000, scoped, tag = 'input window, operand 0']
    #allocation3 [shape = 's32[2]{0}', space=sflag, size = 0x8, scoped, tag = 'scoped memory for resnet_block_forward.5']
    #allocation4 [shape = 's32[2]{0}', space=sflag, size = 0x8, scoped, tag = 'scoped memory for resnet_block_forward.5']
    #allocation5 [shape = 'u8[131072]{0}', space=vmem, size = 0x20000, scoped, tag = 'input window, operand 1']
    #allocation6 [shape = 's32[2]{0}', space=sflag, size = 0x8, scoped, tag = 'scoped memory for resnet_block_forward.5']
    #allocation7 [shape = 'u8[8192]{0}', space=vmem, size = 0x2000, scoped, tag = 'input window, operand 2, single buffered']
    #allocation8 [shape = 'u8[8192]{0}', space=vmem, size = 0x2000, scoped, tag = 'input window, operand 3, single buffered']
    #allocation9 [shape = 's32[1]{0}', space=sflag, size = 0x4, scoped, tag = 'scoped memory for resnet_block_forward.5']
    #allocation10 [shape = 'u8[262144]{0}', space=vmem, size = 0x40000, scoped, tag = 'output window, operand 0']
    %9 = vsyncpa [#allocation3], 0
    %s10 = scalar_lea.sflag [#allocation3], 1
    %11 = vsyncpa %s10, 0
    %12 = vsyncpa [#allocation6], 0
    %s13 = scalar_lea.sflag [#allocation6], 1
    %14 = vsyncpa %s13, 0
    %15 = vsyncpa [#allocation9], 0
    %16 = vsyncpa [#allocation4], 0
    %s17 = scalar_lea.sflag [#allocation4], 1
    %18 = vsyncpa %s17, 0
    loop: start=0, step=1, limit=4
    $region2: #{resnet_block_forward.5} parent=1 // loop_pre_header
      _
    $region3: #{resnet_block_forward.5} parent=1 // loop_header
      %s20 = sphi 0, %s24
      %p21 = scmp.ge.s32.totalorder %s20, 4
      %s30 = sphi 0, %s32
      %s33 = sphi 0, %s30
      %s34 = sphi 0, %s33
      %s50 = sphi 0, %s34
      %s56 = sphi 0, %s58
      %s59 = sphi 0, %s56
      %s60 = sphi 0, %s59
      %s76 = sphi 0, %s60
      %s80 = sphi 0, %s80
      %s82 = sphi 0, %s80
      %s83 = sphi 0, %s82
      %s97 = sphi 0, %s83
      %s101 = sphi 0, %s101
      %s103 = sphi 0, %s101
      %s104 = sphi 0, %s103
      %s118 = sphi 0, %s104
      %s124 = sphi 0, %s126
      %s127 = sphi 0, %s124
      %s128 = sphi 0, %s127
      %s144 = sphi 0, %s128
    $region4: #{resnet_block_forward.5} parent=1 // loop_header_branch
      %23 = sbr.rel (%p21) target = $region8
    $region5: #{resnet_block_forward.5} parent=1 // loop_body
      %s25 = ssub.s32 %s20, 1
      %s26 = ssub.s32 %s20, 2
      %s27 = sadd.s32 %s20, 1
      %s28 = ssub.s32 %s20, %s27
      %p29 = scmp.eq.s32.totalorder %s28, 0
      %s31 = sadd.s32 %s30, 1
      %s32 = scalar_select %p29, %s30, %s31
      %p35 = pneg %p29
      %p36 = scmp.eq.s32.totalorder %s20, 1
      %p37 = por %p35, %p36
      %p38 = scmp.ne.s32.totalorder %s30, %s33
      %p39 = scmp.eq.s32.totalorder %s20, 0
      %p40 = por %p38, %p39
      %p41 = scmp.ne.s32.totalorder %s30, %s33
      %p42 = scmp.eq.s32.totalorder %s25, 1
      %p43 = por %p41, %p42
      %p44 = scmp.ne.s32.totalorder %s33, %s34
      %p45 = scmp.eq.s32.totalorder %s25, 0
      %p46 = por %p44, %p45
      %p47 = scmp.ne.s32.totalorder %s33, %s34
      %p48 = scmp.eq.s32.totalorder %s26, 1
      %p49 = por %p47, %p48
      %p51 = scmp.ne.s32.totalorder %s34, %s50
      %p52 = scmp.eq.s32.totalorder %s26, 0
      %p53 = por %p51, %p52
      %s54 = ssub.s32 %s20, %s27
      %p55 = scmp.eq.s32.totalorder %s54, 0
      %s57 = sadd.s32 %s56, 1
      %s58 = scalar_select %p55, %s56, %s57
      %p61 = pneg %p55
      %p62 = scmp.eq.s32.totalorder %s20, 1
      %p63 = por %p61, %p62
      %p64 = scmp.ne.s32.totalorder %s56, %s59
      %p65 = scmp.eq.s32.totalorder %s20, 0
      %p66 = por %p64, %p65
      %p67 = scmp.ne.s32.totalorder %s56, %s59
      %p68 = scmp.eq.s32.totalorder %s25, 1
      %p69 = por %p67, %p68
      %p70 = scmp.ne.s32.totalorder %s59, %s60
      %p71 = scmp.eq.s32.totalorder %s25, 0
      %p72 = por %p70, %p71
      %p73 = scmp.ne.s32.totalorder %s59, %s60
      %p74 = scmp.eq.s32.totalorder %s26, 1
      %p75 = por %p73, %p74
      %p77 = scmp.ne.s32.totalorder %s60, %s76
      %p78 = scmp.eq.s32.totalorder %s26, 0
      %p79 = por %p77, %p78
      %s81 = sadd.s32 %s80, 1
      %p84 = scmp.eq.s32.totalorder %s20, 1
      %p85 = scmp.ne.s32.totalorder %s80, %s82
      %p86 = scmp.eq.s32.totalorder %s20, 0
      %p87 = por %p85, %p86
      %p88 = scmp.ne.s32.totalorder %s80, %s82
      %p89 = scmp.eq.s32.totalorder %s25, 1
      %p90 = por %p88, %p89
      %p91 = scmp.ne.s32.totalorder %s82, %s83
      %p92 = scmp.eq.s32.totalorder %s25, 0
      %p93 = por %p91, %p92
      %p94 = scmp.ne.s32.totalorder %s82, %s83
      %p95 = scmp.eq.s32.totalorder %s26, 1
      %p96 = por %p94, %p95
      %p98 = scmp.ne.s32.totalorder %s83, %s97
      %p99 = scmp.eq.s32.totalorder %s26, 0
      %p100 = por %p98, %p99
      %s102 = sadd.s32 %s101, 1
      %p105 = scmp.eq.s32.totalorder %s20, 1
      %p106 = scmp.ne.s32.totalorder %s101, %s103
      %p107 = scmp.eq.s32.totalorder %s20, 0
      %p108 = por %p106, %p107
      %p109 = scmp.ne.s32.totalorder %s101, %s103
      %p110 = scmp.eq.s32.totalorder %s25, 1
      %p111 = por %p109, %p110
      %p112 = scmp.ne.s32.totalorder %s103, %s104
      %p113 = scmp.eq.s32.totalorder %s25, 0
      %p114 = por %p112, %p113
      %p115 = scmp.ne.s32.totalorder %s103, %s104
      %p116 = scmp.eq.s32.totalorder %s26, 1
      %p117 = por %p115, %p116
      %p119 = scmp.ne.s32.totalorder %s104, %s118
      %p120 = scmp.eq.s32.totalorder %s26, 0
      %p121 = por %p119, %p120
      %s122 = ssub.s32 %s20, %s27
      %p123 = scmp.eq.s32.totalorder %s122, 0
      %s125 = sadd.s32 %s124, 1
      %s126 = scalar_select %p123, %s124, %s125
      %p129 = pneg %p123
      %p130 = scmp.eq.s32.totalorder %s20, 1
      %p131 = por %p129, %p130
      %p132 = scmp.ne.s32.totalorder %s124, %s127
      %p133 = scmp.eq.s32.totalorder %s20, 0
      %p134 = por %p132, %p133
      %p135 = scmp.ne.s32.totalorder %s124, %s127
      %p136 = scmp.eq.s32.totalorder %s25, 1
      %p137 = por %p135, %p136
      %p138 = scmp.ne.s32.totalorder %s127, %s128
      %p139 = scmp.eq.s32.totalorder %s25, 0
      %p140 = por %p138, %p139
      %p141 = scmp.ne.s32.totalorder %s127, %s128
      %p142 = scmp.eq.s32.totalorder %s26, 1
      %p143 = por %p141, %p142
      %p145 = scmp.ne.s32.totalorder %s128, %s144
      %p146 = scmp.eq.s32.totalorder %s26, 0
      %p147 = por %p145, %p146
      %p148 = scmp.le.s32.totalorder 1, %s20
      %p149 = scmp.lt.s32.totalorder %s20, 3
      %p150 = pnand %p148, %p149
      %p151 = pneg %p150
      // Predicated region
      $region9: #{resnet_block_forward.5} parent=5 // pred_check
        _
      $region10: #{resnet_block_forward.5} parent=5 // pred_check_branch
        %153 = sbr.rel (%p150) target = $region12
      $region11: #{resnet_block_forward.5} parent=5 // pred_region
        %s154 = ssub.s32 %s20, 1
        // Predicated region
        $region13: #{resnet_block_forward.5} parent=11 // pred_check
          %p155 = pneg %p93
        $region14: #{resnet_block_forward.5} parent=11 // pred_check_branch
          %157 = sbr.rel (%p155) target = $region16
        $region15: #{resnet_block_forward.5} parent=11 // pred_region
          %s159 = ssub.s32 256, 256
          %160 = vsyncadd [#allocation6], %s159
          %s162 = sshll.u32 [#allocation7], 4
          %s163 = int_to_ptr.vmem [resolvable:$true] %s162
          %165 = dma.hbm_to_vmem [thread:$0]  %s2, 256, %s163, [#allocation6]
        $region16: #{resnet_block_forward.5} parent=11 // pred_fallthru
          _
        // Predicated region
        $region17: #{resnet_block_forward.5} parent=11 // pred_check
          %p166 = pneg %p114
        $region18: #{resnet_block_forward.5} parent=11 // pred_check_branch
          %168 = sbr.rel (%p166) target = $region20
        $region19: #{resnet_block_forward.5} parent=11 // pred_region
          %s170 = ssub.s32 256, 256
          %171 = vsyncadd [#allocation9], %s170
          %s173 = sshll.u32 [#allocation8], 4
          %s174 = int_to_ptr.vmem [resolvable:$true] %s173
          %176 = dma.hbm_to_vmem [thread:$0]  %s3, 256, %s174, [#allocation9]
        $region20: #{resnet_block_forward.5} parent=11 // pred_fallthru
          _
      $region12: #{resnet_block_forward.5} parent=5 // pred_fallthru
        _
      %p177 = scmp.lt.s32.totalorder %s20, 2
      // Predicated region
      $region21: #{resnet_block_forward.5} parent=5 // pred_check
        %p178 = pneg %p177
      $region22: #{resnet_block_forward.5} parent=5 // pred_check_branch
        %180 = sbr.rel (%p178) target = $region24
      $region23: #{resnet_block_forward.5} parent=5 // pred_region
        // Predicated region
        $region25: #{resnet_block_forward.5} parent=23 // pred_check
          %p181 = pneg %p40
        $region26: #{resnet_block_forward.5} parent=23 // pred_check_branch
          %183 = sbr.rel (%p181) target = $region28
        $region27: #{resnet_block_forward.5} parent=23 // pred_region
          %s184 = sand.u32 %s30, 1
          %s185 = scalar_lea.sflag [#allocation3], %s184
          %s186 = sand.u32 %s30, 1
          %s187 = smul.addr %s186, 256
          %s188 = scalar_lea.vmem [#allocation2], %s187
          %s190 = ssub.s32 4096, 4096
          %191 = vsyncadd %s185, %s190
          %s192 = smul.addr %s20, 32
          %s193 = smul.addr %s192, 128
          %s194 = scalar_lea.hbm %s0, %s193
          %s195 = sshll.u32 %s188, 4
          %s196 = int_to_ptr.vmem [resolvable:$true] %s195
          %201 = dma.hbm_to_vmem [thread:$0]  %s194, 4096, %s196, %s185, 2048, 2048, 128
        $region28: #{resnet_block_forward.5} parent=23 // pred_fallthru
          _
        // Predicated region
        $region29: #{resnet_block_forward.5} parent=23 // pred_check
          %p202 = pneg %p66
        $region30: #{resnet_block_forward.5} parent=23 // pred_check_branch
          %204 = sbr.rel (%p202) target = $region32
        $region31: #{resnet_block_forward.5} parent=23 // pred_region
          %s205 = sand.u32 %s20, 1
          %s206 = scalar_lea.sflag [#allocation6], %s205
          %s207 = sand.u32 %s56, 1
          %s208 = smul.addr %s207, 128
          %s209 = scalar_lea.vmem [#allocation5], %s208
          %s211 = ssub.s32 2048, 2048
          %212 = vsyncadd %s206, %s211
          %s213 = smul.addr %s20, 32
          %s214 = smul.addr %s213, 64
          %s215 = scalar_lea.hbm %s1, %s214
          %s216 = sshll.u32 %s209, 4
          %s217 = int_to_ptr.vmem [resolvable:$true] %s216
          %222 = dma.hbm_to_vmem [thread:$0]  %s215, 2048, %s217, %s206, 1024, 1024, 64
        $region32: #{resnet_block_forward.5} parent=23 // pred_fallthru
          _
      $region24: #{resnet_block_forward.5} parent=5 // pred_fallthru
        _
      %p223 = scmp.le.s32.totalorder 1, %s20
      %p224 = scmp.lt.s32.totalorder %s20, 3
      %p225 = pnand %p223, %p224
      %p226 = pneg %p225
      // Predicated region
      $region33: #{resnet_block_forward.5} parent=5 // pred_check
        _
      $region34: #{resnet_block_forward.5} parent=5 // pred_check_branch
        %228 = sbr.rel (%p225) target = $region36
      $region35: #{resnet_block_forward.5} parent=5 // pred_region
        %s229 = ssub.s32 %s20, 1
        %s230 = sand.u32 %s33, 1
        %s231 = scalar_lea.sflag [#allocation3], %s230
        %s232 = sand.u32 %s33, 1
        %s233 = smul.addr %s232, 256
        %s234 = scalar_lea.vmem [#allocation2], %s233
        // Predicated region
        $region37: #{resnet_block_forward.5} parent=35 // pred_check
          %p235 = pneg %p46
        $region38: #{resnet_block_forward.5} parent=35 // pred_check_branch
          %237 = sbr.rel (%p235) target = $region40
        $region39: #{resnet_block_forward.5} parent=35 // pred_region
          %238 = dma.done %s231, 4096
        $region40: #{resnet_block_forward.5} parent=35 // pred_fallthru
          _
        %s239 = sand.u32 %s25, 1
        %s240 = scalar_lea.sflag [#allocation6], %s239
        %s241 = sand.u32 %s59, 1
        %s242 = smul.addr %s241, 128
        %s243 = scalar_lea.vmem [#allocation5], %s242
        // Predicated region
        $region41: #{resnet_block_forward.5} parent=35 // pred_check
          %p244 = pneg %p72
        $region42: #{resnet_block_forward.5} parent=35 // pred_check_branch
          %246 = sbr.rel (%p244) target = $region44
        $region43: #{resnet_block_forward.5} parent=35 // pred_region
          %247 = dma.done %s240, 2048
        $region44: #{resnet_block_forward.5} parent=35 // pred_fallthru
          _
        // Predicated region
        $region45: #{resnet_block_forward.5} parent=35 // pred_check
          %p248 = pneg %p93
        $region46: #{resnet_block_forward.5} parent=35 // pred_check_branch
          %250 = sbr.rel (%p248) target = $region48
        $region47: #{resnet_block_forward.5} parent=35 // pred_region
          %251 = dma.done [#allocation6], 256
        $region48: #{resnet_block_forward.5} parent=35 // pred_fallthru
          _
        // Predicated region
        $region49: #{resnet_block_forward.5} parent=35 // pred_check
          %p252 = pneg %p114
        $region50: #{resnet_block_forward.5} parent=35 // pred_check_branch
          %254 = sbr.rel (%p252) target = $region52
        $region51: #{resnet_block_forward.5} parent=35 // pred_region
          %255 = dma.done [#allocation9], 256
        $region52: #{resnet_block_forward.5} parent=35 // pred_fallthru
          _
        %s256 = sand.u32 %s33, 1
        %s257 = scalar_lea.sflag [#allocation3], %s256
        %s258 = sand.u32 %s33, 1
        %s259 = smul.addr %s258, 256
        %s260 = scalar_lea.vmem [#allocation2], %s259
        %p261 = pneg %p46
        %p262 = pneg %p43
        %s263 = sand.u32 %s25, 1
        %s264 = scalar_lea.sflag [#allocation6], %s263
        %s265 = sand.u32 %s59, 1
        %s266 = smul.addr %s265, 128
        %s267 = scalar_lea.vmem [#allocation5], %s266
        %p268 = pneg %p72
        %p269 = pneg %p69
        %p270 = pneg %p93
        %p271 = pneg %p90
        %p272 = pneg %p114
        %p273 = pneg %p111
        %p274 = pneg %p140
        %p275 = pneg %p137
        %s276 = sand.u32 %s127, 1
        %s277 = scalar_lea.sflag [#allocation4], %s276
        %s278 = sand.u32 %s127, 1
        %s279 = smul.addr %s278, 256
        %s280 = scalar_lea.vmem [#allocation10], %s279
        %v281 = vld [vmem:[%s243] sm:$0xff]
        %v282 = vld [vmem:[%s243 + $0x8] sm:$0xff]
        %v283 = vld [vmem:[%s243 + $0x10] sm:$0xff]
        %v284 = vld [vmem:[%s243 + $0x18] sm:$0xff]
        %v285 = vld [vmem:[%s243 + $0x20] sm:$0xff]
        %v286 = vld [vmem:[%s243 + $0x28] sm:$0xff]
        %v287 = vld [vmem:[%s243 + $0x30] sm:$0xff]
        %v288 = vld [vmem:[%s243 + $0x38] sm:$0xff]
        %v289 = vld [vmem:[%s243 + $0x40] sm:$0xff]
        %v290 = vld [vmem:[%s243 + $0x48] sm:$0xff]
        %v291 = vld [vmem:[%s243 + $0x50] sm:$0xff]
        %v292 = vld [vmem:[%s243 + $0x58] sm:$0xff]
        %v293 = vld [vmem:[%s243 + $0x60] sm:$0xff]
        %v294 = vld [vmem:[%s243 + $0x68] sm:$0xff]
        %v295 = vld [vmem:[%s243 + $0x70] sm:$0xff]
        %v296 = vld [vmem:[%s243 + $0x78] sm:$0xff]
        %v297 = vunpack.c.l.bf16 %v281
        %v298 = vunpack.c.h.bf16 %v281
        %v299 = vunpack.c.l.bf16 %v282
        %v300 = vunpack.c.h.bf16 %v282
        %v301 = vunpack.c.l.bf16 %v283
        %v302 = vunpack.c.h.bf16 %v283
        %v303 = vunpack.c.l.bf16 %v284
        %v304 = vunpack.c.h.bf16 %v284
        %v305 = vunpack.c.l.bf16 %v285
        %v306 = vunpack.c.h.bf16 %v285
        %v307 = vunpack.c.l.bf16 %v286
        %v308 = vunpack.c.h.bf16 %v286
        %v309 = vunpack.c.l.bf16 %v287
        %v310 = vunpack.c.h.bf16 %v287
        %v311 = vunpack.c.l.bf16 %v288
        %v312 = vunpack.c.h.bf16 %v288
        %v313 = vunpack.c.l.bf16 %v289
        %v314 = vunpack.c.h.bf16 %v289
        %v315 = vunpack.c.l.bf16 %v290
        %v316 = vunpack.c.h.bf16 %v290
        %v317 = vunpack.c.l.bf16 %v291
        %v318 = vunpack.c.h.bf16 %v291
        %v319 = vunpack.c.l.bf16 %v292
        %v320 = vunpack.c.h.bf16 %v292
        %v321 = vunpack.c.l.bf16 %v293
        %v322 = vunpack.c.h.bf16 %v293
        %v323 = vunpack.c.l.bf16 %v294
        %v324 = vunpack.c.h.bf16 %v294
        %v325 = vunpack.c.l.bf16 %v295
        %v326 = vunpack.c.h.bf16 %v295
        %v327 = vunpack.c.l.bf16 %v296
        %v328 = vunpack.c.h.bf16 %v296
        %v329 = vld [vmem:[%s234] sm:$0xff]
        %v330 = vld [vmem:[%s234 + $0x8] sm:$0xff]
        %v331 = vld [vmem:[%s234 + $0x10] sm:$0xff]
        %v332 = vld [vmem:[%s234 + $0x18] sm:$0xff]
        %v333 = vld [vmem:[%s234 + $0x20] sm:$0xff]
        %v334 = vld [vmem:[%s234 + $0x28] sm:$0xff]
        %v335 = vld [vmem:[%s234 + $0x30] sm:$0xff]
        %v336 = vld [vmem:[%s234 + $0x38] sm:$0xff]
        %v337 = vld [vmem:[%s234 + $0x40] sm:$0xff]
        %v338 = vld [vmem:[%s234 + $0x48] sm:$0xff]
        %v339 = vld [vmem:[%s234 + $0x50] sm:$0xff]
        %v340 = vld [vmem:[%s234 + $0x58] sm:$0xff]
        %v341 = vld [vmem:[%s234 + $0x60] sm:$0xff]
        %v342 = vld [vmem:[%s234 + $0x68] sm:$0xff]
        %v343 = vld [vmem:[%s234 + $0x70] sm:$0xff]
        %v344 = vld [vmem:[%s234 + $0x78] sm:$0xff]
        %v345 = vld [vmem:[%s234 + $0x80] sm:$0xff]
        %v346 = vld [vmem:[%s234 + $0x88] sm:$0xff]
        %v347 = vld [vmem:[%s234 + $0x90] sm:$0xff]
        %v348 = vld [vmem:[%s234 + $0x98] sm:$0xff]
        %v349 = vld [vmem:[%s234 + $0xa0] sm:$0xff]
        %v350 = vld [vmem:[%s234 + $0xa8] sm:$0xff]
        %v351 = vld [vmem:[%s234 + $0xb0] sm:$0xff]
        %v352 = vld [vmem:[%s234 + $0xb8] sm:$0xff]
        %v353 = vld [vmem:[%s234 + $0xc0] sm:$0xff]
        %v354 = vld [vmem:[%s234 + $0xc8] sm:$0xff]
        %v355 = vld [vmem:[%s234 + $0xd0] sm:$0xff]
        %v356 = vld [vmem:[%s234 + $0xd8] sm:$0xff]
        %v357 = vld [vmem:[%s234 + $0xe0] sm:$0xff]
        %v358 = vld [vmem:[%s234 + $0xe8] sm:$0xff]
        %v359 = vld [vmem:[%s234 + $0xf0] sm:$0xff]
        %v360 = vld [vmem:[%s234 + $0xf8] sm:$0xff]
        %v361 = vld [vmem:[#allocation7] sm:$0xff]
        %v362 = vld [vmem:[#allocation7 + $0x8] sm:$0xff]
        %v365 = vlaneseq
        %v366 = vshrl.u32 %v365, 7
        %v367 = vsub.s32 0, %v366
        %v368 = vrot.slane %v361, %v367
        %v369 = vlaneseq
        %v370 = vshrl.u32 %v369, 7
        %v371 = vsub.s32 1, %v370
        %v372 = vrot.slane %v361, %v371
        %v373 = vlaneseq
        %v374 = vshrl.u32 %v373, 7
        %v375 = vsub.s32 2, %v374
        %v376 = vrot.slane %v361, %v375
        %v377 = vlaneseq
        %v378 = vshrl.u32 %v377, 7
        %v379 = vsub.s32 3, %v378
        %v380 = vrot.slane %v361, %v379
        %v381 = vlaneseq
        %v382 = vshrl.u32 %v381, 7
        %v383 = vsub.s32 4, %v382
        %v384 = vrot.slane %v361, %v383
        %v385 = vlaneseq
        %v386 = vshrl.u32 %v385, 7
        %v387 = vsub.s32 5, %v386
        %v388 = vrot.slane %v361, %v387
        %v389 = vlaneseq
        %v390 = vshrl.u32 %v389, 7
        %v391 = vsub.s32 6, %v390
        %v392 = vrot.slane %v361, %v391
        %v393 = vlaneseq
        %v394 = vshrl.u32 %v393, 7
        %v395 = vsub.s32 7, %v394
        %v396 = vrot.slane %v361, %v395
        %v397 = vlaneseq
        %v398 = vshrl.u32 %v397, 7
        %v399 = vsub.s32 0, %v398
        %v400 = vrot.slane %v362, %v399
        %v401 = vlaneseq
        %v402 = vshrl.u32 %v401, 7
        %v403 = vsub.s32 1, %v402
        %v404 = vrot.slane %v362, %v403
        %v405 = vlaneseq
        %v406 = vshrl.u32 %v405, 7
        %v407 = vsub.s32 2, %v406
        %v408 = vrot.slane %v362, %v407
        %v409 = vlaneseq
        %v410 = vshrl.u32 %v409, 7
        %v411 = vsub.s32 3, %v410
        %v412 = vrot.slane %v362, %v411
        %v413 = vlaneseq
        %v414 = vshrl.u32 %v413, 7
        %v415 = vsub.s32 4, %v414
        %v416 = vrot.slane %v362, %v415
        %v417 = vlaneseq
        %v418 = vshrl.u32 %v417, 7
        %v419 = vsub.s32 5, %v418
        %v420 = vrot.slane %v362, %v419
        %v421 = vlaneseq
        %v422 = vshrl.u32 %v421, 7
        %v423 = vsub.s32 6, %v422
        %v424 = vrot.slane %v362, %v423
        %v425 = vlaneseq
        %v426 = vshrl.u32 %v425, 7
        %v427 = vsub.s32 7, %v426
        %v428 = vrot.slane %v362, %v427
        %v445 = vmul.f32 %v297, %v368
        %v446 = vmul.f32 %v298, %v372
        %v447 = vmul.f32 %v299, %v376
        %v448 = vmul.f32 %v300, %v380
        %v449 = vmul.f32 %v301, %v384
        %v450 = vmul.f32 %v302, %v388
        %v451 = vmul.f32 %v303, %v392
        %v452 = vmul.f32 %v304, %v396
        %v453 = vmul.f32 %v305, %v400
        %v454 = vmul.f32 %v306, %v404
        %v455 = vmul.f32 %v307, %v408
        %v456 = vmul.f32 %v308, %v412
        %v457 = vmul.f32 %v309, %v416
        %v458 = vmul.f32 %v310, %v420
        %v459 = vmul.f32 %v311, %v424
        %v460 = vmul.f32 %v312, %v428
        %v461 = vmul.f32 %v313, %v368
        %v462 = vmul.f32 %v314, %v372
        %v463 = vmul.f32 %v315, %v376
        %v464 = vmul.f32 %v316, %v380
        %v465 = vmul.f32 %v317, %v384
        %v466 = vmul.f32 %v318, %v388
        %v467 = vmul.f32 %v319, %v392
        %v468 = vmul.f32 %v320, %v396
        %v469 = vmul.f32 %v321, %v400
        %v470 = vmul.f32 %v322, %v404
        %v471 = vmul.f32 %v323, %v408
        %v472 = vmul.f32 %v324, %v412
        %v473 = vmul.f32 %v325, %v416
        %v474 = vmul.f32 %v326, %v420
        %v475 = vmul.f32 %v327, %v424
        %v476 = vmul.f32 %v328, %v428
        %v477 = vadd.f32 %v329, %v445
        %v478 = vadd.f32 %v330, %v446
        %v479 = vadd.f32 %v331, %v447
        %v480 = vadd.f32 %v332, %v448
        %v481 = vadd.f32 %v333, %v449
        %v482 = vadd.f32 %v334, %v450
        %v483 = vadd.f32 %v335, %v451
        %v484 = vadd.f32 %v336, %v452
        %v485 = vadd.f32 %v337, %v453
        %v486 = vadd.f32 %v338, %v454
        %v487 = vadd.f32 %v339, %v455
        %v488 = vadd.f32 %v340, %v456
        %v489 = vadd.f32 %v341, %v457
        %v490 = vadd.f32 %v342, %v458
        %v491 = vadd.f32 %v343, %v459
        %v492 = vadd.f32 %v344, %v460
        %v493 = vadd.f32 %v345, %v461
        %v494 = vadd.f32 %v346, %v462
        %v495 = vadd.f32 %v347, %v463
        %v496 = vadd.f32 %v348, %v464
        %v497 = vadd.f32 %v349, %v465
        %v498 = vadd.f32 %v350, %v466
        %v499 = vadd.f32 %v351, %v467
        %v500 = vadd.f32 %v352, %v468
        %v501 = vadd.f32 %v353, %v469
        %v502 = vadd.f32 %v354, %v470
        %v503 = vadd.f32 %v355, %v471
        %v504 = vadd.f32 %v356, %v472
        %v505 = vadd.f32 %v357, %v473
        %v506 = vadd.f32 %v358, %v474
        %v507 = vadd.f32 %v359, %v475
        %v508 = vadd.f32 %v360, %v476
        %v509 = vld [vmem:[#allocation8] sm:$0xff]
        %v510 = vld [vmem:[#allocation8 + $0x8] sm:$0xff]
        %v513 = vlaneseq
        %v514 = vshrl.u32 %v513, 7
        %v515 = vsub.s32 0, %v514
        %v516 = vrot.slane %v509, %v515
        %v517 = vlaneseq
        %v518 = vshrl.u32 %v517, 7
        %v519 = vsub.s32 1, %v518
        %v520 = vrot.slane %v509, %v519
        %v521 = vlaneseq
        %v522 = vshrl.u32 %v521, 7
        %v523 = vsub.s32 2, %v522
        %v524 = vrot.slane %v509, %v523
        %v525 = vlaneseq
        %v526 = vshrl.u32 %v525, 7
        %v527 = vsub.s32 3, %v526
        %v528 = vrot.slane %v509, %v527
        %v529 = vlaneseq
        %v530 = vshrl.u32 %v529, 7
        %v531 = vsub.s32 4, %v530
        %v532 = vrot.slane %v509, %v531
        %v533 = vlaneseq
        %v534 = vshrl.u32 %v533, 7
        %v535 = vsub.s32 5, %v534
        %v536 = vrot.slane %v509, %v535
        %v537 = vlaneseq
        %v538 = vshrl.u32 %v537, 7
        %v539 = vsub.s32 6, %v538
        %v540 = vrot.slane %v509, %v539
        %v541 = vlaneseq
        %v542 = vshrl.u32 %v541, 7
        %v543 = vsub.s32 7, %v542
        %v544 = vrot.slane %v509, %v543
        %v545 = vlaneseq
        %v546 = vshrl.u32 %v545, 7
        %v547 = vsub.s32 0, %v546
        %v548 = vrot.slane %v510, %v547
        %v549 = vlaneseq
        %v550 = vshrl.u32 %v549, 7
        %v551 = vsub.s32 1, %v550
        %v552 = vrot.slane %v510, %v551
        %v553 = vlaneseq
        %v554 = vshrl.u32 %v553, 7
        %v555 = vsub.s32 2, %v554
        %v556 = vrot.slane %v510, %v555
        %v557 = vlaneseq
        %v558 = vshrl.u32 %v557, 7
        %v559 = vsub.s32 3, %v558
        %v560 = vrot.slane %v510, %v559
        %v561 = vlaneseq
        %v562 = vshrl.u32 %v561, 7
        %v563 = vsub.s32 4, %v562
        %v564 = vrot.slane %v510, %v563
        %v565 = vlaneseq
        %v566 = vshrl.u32 %v565, 7
        %v567 = vsub.s32 5, %v566
        %v568 = vrot.slane %v510, %v567
        %v569 = vlaneseq
        %v570 = vshrl.u32 %v569, 7
        %v571 = vsub.s32 6, %v570
        %v572 = vrot.slane %v510, %v571
        %v573 = vlaneseq
        %v574 = vshrl.u32 %v573, 7
        %v575 = vsub.s32 7, %v574
        %v576 = vrot.slane %v510, %v575
        %v593 = vadd.f32 %v477, %v516
        %v594 = vadd.f32 %v478, %v520
        %v595 = vadd.f32 %v479, %v524
        %v596 = vadd.f32 %v480, %v528
        %v597 = vadd.f32 %v481, %v532
        %v598 = vadd.f32 %v482, %v536
        %v599 = vadd.f32 %v483, %v540
        %v600 = vadd.f32 %v484, %v544
        %v601 = vadd.f32 %v485, %v548
        %v602 = vadd.f32 %v486, %v552
        %v603 = vadd.f32 %v487, %v556
        %v604 = vadd.f32 %v488, %v560
        %v605 = vadd.f32 %v489, %v564
        %v606 = vadd.f32 %v490, %v568
        %v607 = vadd.f32 %v491, %v572
        %v608 = vadd.f32 %v492, %v576
        %v609 = vadd.f32 %v493, %v516
        %v610 = vadd.f32 %v494, %v520
        %v611 = vadd.f32 %v495, %v524
        %v612 = vadd.f32 %v496, %v528
        %v613 = vadd.f32 %v497, %v532
        %v614 = vadd.f32 %v498, %v536
        %v615 = vadd.f32 %v499, %v540
        %v616 = vadd.f32 %v500, %v544
        %v617 = vadd.f32 %v501, %v548
        %v618 = vadd.f32 %v502, %v552
        %v619 = vadd.f32 %v503, %v556
        %v620 = vadd.f32 %v504, %v560
        %v621 = vadd.f32 %v505, %v564
        %v622 = vadd.f32 %v506, %v568
        %v623 = vadd.f32 %v507, %v572
        %v624 = vadd.f32 %v508, %v576
        %625 = vst [vmem:[%s280] sm:$0xff] %v593
        %626 = vst [vmem:[%s280 + $0x8] sm:$0xff] %v594
        %627 = vst [vmem:[%s280 + $0x10] sm:$0xff] %v595
        %628 = vst [vmem:[%s280 + $0x18] sm:$0xff] %v596
        %629 = vst [vmem:[%s280 + $0x20] sm:$0xff] %v597
        %630 = vst [vmem:[%s280 + $0x28] sm:$0xff] %v598
        %631 = vst [vmem:[%s280 + $0x30] sm:$0xff] %v599
        %632 = vst [vmem:[%s280 + $0x38] sm:$0xff] %v600
        %633 = vst [vmem:[%s280 + $0x40] sm:$0xff] %v601
        %634 = vst [vmem:[%s280 + $0x48] sm:$0xff] %v602
        %635 = vst [vmem:[%s280 + $0x50] sm:$0xff] %v603
        %636 = vst [vmem:[%s280 + $0x58] sm:$0xff] %v604
        %637 = vst [vmem:[%s280 + $0x60] sm:$0xff] %v605
        %638 = vst [vmem:[%s280 + $0x68] sm:$0xff] %v606
        %639 = vst [vmem:[%s280 + $0x70] sm:$0xff] %v607
        %640 = vst [vmem:[%s280 + $0x78] sm:$0xff] %v608
        %641 = vst [vmem:[%s280 + $0x80] sm:$0xff] %v609
        %642 = vst [vmem:[%s280 + $0x88] sm:$0xff] %v610
        %643 = vst [vmem:[%s280 + $0x90] sm:$0xff] %v611
        %644 = vst [vmem:[%s280 + $0x98] sm:$0xff] %v612
        %645 = vst [vmem:[%s280 + $0xa0] sm:$0xff] %v613
        %646 = vst [vmem:[%s280 + $0xa8] sm:$0xff] %v614
        %647 = vst [vmem:[%s280 + $0xb0] sm:$0xff] %v615
        %648 = vst [vmem:[%s280 + $0xb8] sm:$0xff] %v616
        %649 = vst [vmem:[%s280 + $0xc0] sm:$0xff] %v617
        %650 = vst [vmem:[%s280 + $0xc8] sm:$0xff] %v618
        %651 = vst [vmem:[%s280 + $0xd0] sm:$0xff] %v619
        %652 = vst [vmem:[%s280 + $0xd8] sm:$0xff] %v620
        %653 = vst [vmem:[%s280 + $0xe0] sm:$0xff] %v621
        %654 = vst [vmem:[%s280 + $0xe8] sm:$0xff] %v622
        %655 = vst [vmem:[%s280 + $0xf0] sm:$0xff] %v623
        %656 = vst [vmem:[%s280 + $0xf8] sm:$0xff] %v624
        %s657 = sand.u32 %s127, 1
        %s658 = scalar_lea.sflag [#allocation4], %s657
        %s659 = sand.u32 %s127, 1
        %s660 = smul.addr %s659, 256
        %s661 = scalar_lea.vmem [#allocation10], %s660
        // Predicated region
        $region53: #{resnet_block_forward.5} parent=35 // pred_check
          %p662 = pneg %p137
        $region54: #{resnet_block_forward.5} parent=35 // pred_check_branch
          %664 = sbr.rel (%p662) target = $region56
        $region55: #{resnet_block_forward.5} parent=35 // pred_region
          %s666 = ssub.s32 4096, 4096
          %667 = vsyncadd %s658, %s666
          %s668 = smul.addr %s25, 32
          %s669 = smul.addr %s668, 128
          %s670 = scalar_lea.hbm %s4, %s669
          %s671 = sshll.u32 %s661, 4
          %s672 = int_to_ptr.vmem [resolvable:$true] %s671
          %677 = dma.vmem_to_hbm [thread:$0]  %s672, 4096, %s670, %s658, 2048, 2048, 128
        $region56: #{resnet_block_forward.5} parent=35 // pred_fallthru
          _
      $region36: #{resnet_block_forward.5} parent=5 // pred_fallthru
        _
      %p678 = scmp.le.s32.totalorder 2, %s20
      // Predicated region
      $region57: #{resnet_block_forward.5} parent=5 // pred_check
        %p679 = pneg %p678
      $region58: #{resnet_block_forward.5} parent=5 // pred_check_branch
        %681 = sbr.rel (%p679) target = $region60
      $region59: #{resnet_block_forward.5} parent=5 // pred_region
        %s682 = ssub.s32 %s20, 2
        // Predicated region
        $region61: #{resnet_block_forward.5} parent=59 // pred_check
          %p683 = pneg %p143
        $region62: #{resnet_block_forward.5} parent=59 // pred_check_branch
          %685 = sbr.rel (%p683) target = $region64
        $region63: #{resnet_block_forward.5} parent=59 // pred_region
          %s686 = sand.u32 %s128, 1
          %s687 = scalar_lea.sflag [#allocation4], %s686
          %s688 = sand.u32 %s128, 1
          %s689 = smul.addr %s688, 256
          %s690 = scalar_lea.vmem [#allocation10], %s689
          %691 = dma.done %s687, 4096
        $region64: #{resnet_block_forward.5} parent=59 // pred_fallthru
          _
      $region60: #{resnet_block_forward.5} parent=5 // pred_fallthru
        _
    $region6: #{resnet_block_forward.5} parent=1 // loop_footer
      %s24 = sadd.s32 1, %s20
    $region7: #{resnet_block_forward.5} parent=1 // loop_footer_branch
      %19 = sbr.rel target = $region3
    $region8: #{resnet_block_forward.5} parent=1 // loop_exit
      _
    %692 = vsyncpa [#allocation3], 1
    %s693 = scalar_lea.sflag [#allocation3], 1
    %694 = vsyncpa %s693, 1
    %695 = vsyncpa [#allocation6], 1
    %s696 = scalar_lea.sflag [#allocation6], 1
    %697 = vsyncpa %s696, 1
    %698 = vsyncpa [#allocation9], 1
    %699 = vsyncpa [#allocation4], 1
    %s700 = scalar_lea.sflag [#allocation4], 1
    %701 = vsyncpa %s700, 1

// kernel: resnet_block_forward.3
$region0: #{resnet_block_forward.3}
  #allocation0 [shape = 'u32[]', space=smem, size = 0x4, offset = 0x4, fixed_abs, tag = 'smem constant byte address 0x4 - core index']
  #allocation1 [shape = 'u32[144,128]{1,0:T(1,128)}', space=vmem, size = 0x12000, scoped, tag = 'internal scratch']
  #allocation2 [shape = 'bf16[288,384]{1,0:T(16,128)(2,1)}', space=vmem, size = 0x36000, scoped, tag = 'scratch operand']
  %s0 = inlined_call_operand.hbm [shape: f32[2,16,16,128], index: 0, kind: input, shape index: {}]
  %s1 = inlined_call_operand.hbm [shape: bf16[3,384,128], index: 1, kind: input, shape index: {}]
  %s2 = inlined_call_operand.hbm [shape: bf16[2,16,16,128], index: 2, kind: output, shape index: {0}]
  %s3 = inlined_call_operand.hbm [shape: f32[2,1,128], index: 3, kind: output, shape index: {1}]
  %s4 = inlined_call_operand.hbm [shape: f32[2,1,128], index: 4, kind: output, shape index: {2}]
  %5 = xla_tuple %s2, %s3, %s4
  %s6 = sld [smem:[#allocation0]]
  $region65: #{resnet_block_forward.3} parent=0
    _
  %s8 = ssub.s32 1, %s6
  %s9 = scalar_select 0, %s8, %s6
  $region1: #{resnet_block_forward.3} parent=0
    #allocation3 [shape = 'u8[262144]{0}', space=vmem, size = 0x40000, scoped, tag = 'input window, operand 0']
    #allocation4 [shape = 's32[2]{0}', space=sflag, size = 0x8, scoped, tag = 'scoped memory for resnet_block_forward.3']
    #allocation5 [shape = 's32[2]{0}', space=sflag, size = 0x8, scoped, tag = 'scoped memory for resnet_block_forward.3']
    #allocation6 [shape = 'u8[294912]{0}', space=vmem, size = 0x48000, scoped, tag = 'input window, operand 1, single buffered']
    #allocation7 [shape = 's32[1]{0}', space=sflag, size = 0x4, scoped, tag = 'scoped memory for resnet_block_forward.3']
    #allocation8 [shape = 'u8[131072]{0}', space=vmem, size = 0x20000, scoped, tag = 'output window, operand 0']
    #allocation9 [shape = 'u8[1024]{0}', space=vmem, size = 0x400, scoped, tag = 'output window, operand 1']
    #allocation10 [shape = 's32[2]{0}', space=sflag, size = 0x8, scoped, tag = 'scoped memory for resnet_block_forward.3']
    #allocation11 [shape = 'u8[1024]{0}', space=vmem, size = 0x400, scoped, tag = 'output window, operand 2']
    %10 = vsyncpa [#allocation4], 0
    %s11 = scalar_lea.sflag [#allocation4], 1
    %12 = vsyncpa %s11, 0
    %13 = vsyncpa [#allocation7], 0
    %14 = vsyncpa [#allocation5], 0
    %s15 = scalar_lea.sflag [#allocation5], 1
    %16 = vsyncpa %s15, 0
    %17 = vsyncpa [#allocation10], 0
    %s18 = scalar_lea.sflag [#allocation10], 1
    %19 = vsyncpa %s18, 0
    loop: start=0, step=1, limit=4
    $region2: #{resnet_block_forward.3} parent=1 // loop_pre_header
      _
    $region3: #{resnet_block_forward.3} parent=1 // loop_header
      %s21 = sphi 0, %s25
      %p22 = scmp.ge.s32.totalorder %s21, 4
      %s31 = sphi 0, %s33
      %s34 = sphi 0, %s31
      %s35 = sphi 0, %s34
      %s51 = sphi 0, %s35
      %s55 = sphi 0, %s55
      %s57 = sphi 0, %s55
      %s58 = sphi 0, %s57
      %s72 = sphi 0, %s58
      %s78 = sphi 0, %s80
      %s81 = sphi 0, %s78
      %s82 = sphi 0, %s81
      %s98 = sphi 0, %s82
      %s104 = sphi 0, %s106
      %s107 = sphi 0, %s104
      %s108 = sphi 0, %s107
      %s124 = sphi 0, %s108
      %s130 = sphi 0, %s132
      %s133 = sphi 0, %s130
      %s134 = sphi 0, %s133
      %s150 = sphi 0, %s134
    $region4: #{resnet_block_forward.3} parent=1 // loop_header_branch
      %24 = sbr.rel (%p22) target = $region8
    $region5: #{resnet_block_forward.3} parent=1 // loop_body
      %s26 = ssub.s32 %s21, 1
      %s27 = ssub.s32 %s21, 2
      %s28 = sadd.s32 %s21, 1
      %s29 = ssub.s32 %s21, %s28
      %p30 = scmp.eq.s32.totalorder %s29, 0
      %s32 = sadd.s32 %s31, 1
      %s33 = scalar_select %p30, %s31, %s32
      %p36 = pneg %p30
      %p37 = scmp.eq.s32.totalorder %s21, 1
      %p38 = por %p36, %p37
      %p39 = scmp.ne.s32.totalorder %s31, %s34
      %p40 = scmp.eq.s32.totalorder %s21, 0
      %p41 = por %p39, %p40
      %p42 = scmp.ne.s32.totalorder %s31, %s34
      %p43 = scmp.eq.s32.totalorder %s26, 1
      %p44 = por %p42, %p43
      %p45 = scmp.ne.s32.totalorder %s34, %s35
      %p46 = scmp.eq.s32.totalorder %s26, 0
      %p47 = por %p45, %p46
      %p48 = scmp.ne.s32.totalorder %s34, %s35
      %p49 = scmp.eq.s32.totalorder %s27, 1
      %p50 = por %p48, %p49
      %p52 = scmp.ne.s32.totalorder %s35, %s51
      %p53 = scmp.eq.s32.totalorder %s27, 0
      %p54 = por %p52, %p53
      %s56 = sadd.s32 %s55, 1
      %p59 = scmp.eq.s32.totalorder %s21, 1
      %p60 = scmp.ne.s32.totalorder %s55, %s57
      %p61 = scmp.eq.s32.totalorder %s21, 0
      %p62 = por %p60, %p61
      %p63 = scmp.ne.s32.totalorder %s55, %s57
      %p64 = scmp.eq.s32.totalorder %s26, 1
      %p65 = por %p63, %p64
      %p66 = scmp.ne.s32.totalorder %s57, %s58
      %p67 = scmp.eq.s32.totalorder %s26, 0
      %p68 = por %p66, %p67
      %p69 = scmp.ne.s32.totalorder %s57, %s58
      %p70 = scmp.eq.s32.totalorder %s27, 1
      %p71 = por %p69, %p70
      %p73 = scmp.ne.s32.totalorder %s58, %s72
      %p74 = scmp.eq.s32.totalorder %s27, 0
      %p75 = por %p73, %p74
      %s76 = ssub.s32 %s21, %s28
      %p77 = scmp.eq.s32.totalorder %s76, 0
      %s79 = sadd.s32 %s78, 1
      %s80 = scalar_select %p77, %s78, %s79
      %p83 = pneg %p77
      %p84 = scmp.eq.s32.totalorder %s21, 1
      %p85 = por %p83, %p84
      %p86 = scmp.ne.s32.totalorder %s78, %s81
      %p87 = scmp.eq.s32.totalorder %s21, 0
      %p88 = por %p86, %p87
      %p89 = scmp.ne.s32.totalorder %s78, %s81
      %p90 = scmp.eq.s32.totalorder %s26, 1
      %p91 = por %p89, %p90
      %p92 = scmp.ne.s32.totalorder %s81, %s82
      %p93 = scmp.eq.s32.totalorder %s26, 0
      %p94 = por %p92, %p93
      %p95 = scmp.ne.s32.totalorder %s81, %s82
      %p96 = scmp.eq.s32.totalorder %s27, 1
      %p97 = por %p95, %p96
      %p99 = scmp.ne.s32.totalorder %s82, %s98
      %p100 = scmp.eq.s32.totalorder %s27, 0
      %p101 = por %p99, %p100
      %s102 = ssub.s32 %s21, %s28
      %p103 = scmp.eq.s32.totalorder %s102, 0
      %s105 = sadd.s32 %s104, 1
      %s106 = scalar_select %p103, %s104, %s105
      %p109 = pneg %p103
      %p110 = scmp.eq.s32.totalorder %s21, 1
      %p111 = por %p109, %p110
      %p112 = scmp.ne.s32.totalorder %s104, %s107
      %p113 = scmp.eq.s32.totalorder %s21, 0
      %p114 = por %p112, %p113
      %p115 = scmp.ne.s32.totalorder %s104, %s107
      %p116 = scmp.eq.s32.totalorder %s26, 1
      %p117 = por %p115, %p116
      %p118 = scmp.ne.s32.totalorder %s107, %s108
      %p119 = scmp.eq.s32.totalorder %s26, 0
      %p120 = por %p118, %p119
      %p121 = scmp.ne.s32.totalorder %s107, %s108
      %p122 = scmp.eq.s32.totalorder %s27, 1
      %p123 = por %p121, %p122
      %p125 = scmp.ne.s32.totalorder %s108, %s124
      %p126 = scmp.eq.s32.totalorder %s27, 0
      %p127 = por %p125, %p126
      %s128 = ssub.s32 %s21, %s28
      %p129 = scmp.eq.s32.totalorder %s128, 0
      %s131 = sadd.s32 %s130, 1
      %s132 = scalar_select %p129, %s130, %s131
      %p135 = pneg %p129
      %p136 = scmp.eq.s32.totalorder %s21, 1
      %p137 = por %p135, %p136
      %p138 = scmp.ne.s32.totalorder %s130, %s133
      %p139 = scmp.eq.s32.totalorder %s21, 0
      %p140 = por %p138, %p139
      %p141 = scmp.ne.s32.totalorder %s130, %s133
      %p142 = scmp.eq.s32.totalorder %s26, 1
      %p143 = por %p141, %p142
      %p144 = scmp.ne.s32.totalorder %s133, %s134
      %p145 = scmp.eq.s32.totalorder %s26, 0
      %p146 = por %p144, %p145
      %p147 = scmp.ne.s32.totalorder %s133, %s134
      %p148 = scmp.eq.s32.totalorder %s27, 1
      %p149 = por %p147, %p148
      %p151 = scmp.ne.s32.totalorder %s134, %s150
      %p152 = scmp.eq.s32.totalorder %s27, 0
      %p153 = por %p151, %p152
      %p154 = scmp.le.s32.totalorder 1, %s21
      %p155 = scmp.lt.s32.totalorder %s21, 3
      %p156 = pnand %p154, %p155
      %p157 = pneg %p156
      // Predicated region
      $region9: #{resnet_block_forward.3} parent=5 // pred_check
        _
      $region10: #{resnet_block_forward.3} parent=5 // pred_check_branch
        %159 = sbr.rel (%p156) target = $region12
      $region11: #{resnet_block_forward.3} parent=5 // pred_region
        %s160 = ssub.s32 %s21, 1
        // Predicated region
        $region13: #{resnet_block_forward.3} parent=11 // pred_check
          %p161 = pneg %p68
        $region14: #{resnet_block_forward.3} parent=11 // pred_check_branch
          %163 = sbr.rel (%p161) target = $region16
        $region15: #{resnet_block_forward.3} parent=11 // pred_region
          %s165 = ssub.s32 9216, 9216
          %166 = vsyncadd [#allocation7], %s165
          %s167 = sshll.u32 [#allocation6], 4
          %s168 = int_to_ptr.vmem [resolvable:$true] %s167
          %173 = dma.hbm_to_vmem [thread:$0]  %s1, 9216, %s168, [#allocation7], 64, 64, 4
        $region16: #{resnet_block_forward.3} parent=11 // pred_fallthru
          _
      $region12: #{resnet_block_forward.3} parent=5 // pred_fallthru
        _
      %p174 = scmp.lt.s32.totalorder %s21, 2
      // Predicated region
      $region17: #{resnet_block_forward.3} parent=5 // pred_check
        %p175 = pneg %p174
      $region18: #{resnet_block_forward.3} parent=5 // pred_check_branch
        %177 = sbr.rel (%p175) target = $region20
      $region19: #{resnet_block_forward.3} parent=5 // pred_region
        // Predicated region
        $region21: #{resnet_block_forward.3} parent=19 // pred_check
          %p178 = pneg %p41
        $region22: #{resnet_block_forward.3} parent=19 // pred_check_branch
          %180 = sbr.rel (%p178) target = $region24
        $region23: #{resnet_block_forward.3} parent=19 // pred_region
          %s181 = sand.u32 %s31, 1
          %s182 = scalar_lea.sflag [#allocation4], %s181
          %s183 = sand.u32 %s31, 1
          %s184 = smul.addr %s183, 256
          %s185 = scalar_lea.vmem [#allocation3], %s184
          %s187 = ssub.s32 4096, 4096
          %188 = vsyncadd %s182, %s187
          %s189 = smul.addr %s21, 32
          %s190 = smul.addr %s189, 128
          %s191 = scalar_lea.hbm %s0, %s190
          %s192 = sshll.u32 %s185, 4
          %s193 = int_to_ptr.vmem [resolvable:$true] %s192
          %198 = dma.hbm_to_vmem [thread:$0]  %s191, 4096, %s193, %s182, 128, 128, 8
        $region24: #{resnet_block_forward.3} parent=19 // pred_fallthru
          _
      $region20: #{resnet_block_forward.3} parent=5 // pred_fallthru
        _
      %p199 = scmp.le.s32.totalorder 1, %s21
      %p200 = scmp.lt.s32.totalorder %s21, 3
      %p201 = pnand %p199, %p200
      %p202 = pneg %p201
      // Predicated region
      $region25: #{resnet_block_forward.3} parent=5 // pred_check
        _
      $region26: #{resnet_block_forward.3} parent=5 // pred_check_branch
        %204 = sbr.rel (%p201) target = $region28
      $region27: #{resnet_block_forward.3} parent=5 // pred_region
        %s205 = ssub.s32 %s21, 1
        %s206 = sand.u32 %s34, 1
        %s207 = scalar_lea.sflag [#allocation4], %s206
        %s208 = sand.u32 %s34, 1
        %s209 = smul.addr %s208, 256
        %s210 = scalar_lea.vmem [#allocation3], %s209
        // Predicated region
        $region29: #{resnet_block_forward.3} parent=27 // pred_check
          %p211 = pneg %p47
        $region30: #{resnet_block_forward.3} parent=27 // pred_check_branch
          %213 = sbr.rel (%p211) target = $region32
        $region31: #{resnet_block_forward.3} parent=27 // pred_region
          %214 = dma.done %s207, 4096
        $region32: #{resnet_block_forward.3} parent=27 // pred_fallthru
          _
        // Predicated region
        $region33: #{resnet_block_forward.3} parent=27 // pred_check
          %p215 = pneg %p68
        $region34: #{resnet_block_forward.3} parent=27 // pred_check_branch
          %217 = sbr.rel (%p215) target = $region36
        $region35: #{resnet_block_forward.3} parent=27 // pred_region
          %218 = dma.done [#allocation7], 9216
        $region36: #{resnet_block_forward.3} parent=27 // pred_fallthru
          _
        %s219 = sand.u32 %s34, 1
        %s220 = scalar_lea.sflag [#allocation4], %s219
        %s221 = sand.u32 %s34, 1
        %s222 = smul.addr %s221, 256
        %s223 = scalar_lea.vmem [#allocation3], %s222
        %p224 = pneg %p47
        %p225 = pneg %p44
        %p226 = pneg %p68
        %p227 = pneg %p65
        %p228 = pneg %p94
        %p229 = pneg %p91
        %s230 = sand.u32 %s81, 1
        %s231 = scalar_lea.sflag [#allocation5], %s230
        %s232 = sand.u32 %s81, 1
        %s233 = smul.addr %s232, 128
        %s234 = scalar_lea.vmem [#allocation8], %s233
        %p235 = pneg %p120
        %p236 = pneg %p117
        %s237 = sand.u32 %s26, 1
        %s238 = scalar_lea.sflag [#allocation10], %s237
        %s239 = sand.u32 %s107, 1
        %s240 = scalar_lea.vmem [#allocation9], %s239
        %p241 = pneg %p146
        %p242 = pneg %p143
        %s243 = sand.u32 %s26, 1
        %s244 = scalar_lea.sflag [#allocation10], %s243
        %s245 = sand.u32 %s133, 1
        %s246 = scalar_lea.vmem [#allocation11], %s245
        %v250 = vld [vmem:[%s210] sm:$0xff]
        %v251 = vld [vmem:[%s210 + $0x8] sm:$0xff]
        %v252 = vld [vmem:[%s210 + $0x10] sm:$0xff]
        %v253 = vld [vmem:[%s210 + $0x18] sm:$0xff]
        %v254 = vld [vmem:[%s210 + $0x20] sm:$0xff]
        %v255 = vld [vmem:[%s210 + $0x28] sm:$0xff]
        %v256 = vld [vmem:[%s210 + $0x30] sm:$0xff]
        %v257 = vld [vmem:[%s210 + $0x38] sm:$0xff]
        %v258 = vld [vmem:[%s210 + $0x40] sm:$0xff]
        %v259 = vld [vmem:[%s210 + $0x48] sm:$0xff]
        %v260 = vld [vmem:[%s210 + $0x50] sm:$0xff]
        %v261 = vld [vmem:[%s210 + $0x58] sm:$0xff]
        %v262 = vld [vmem:[%s210 + $0x60] sm:$0xff]
        %v263 = vld [vmem:[%s210 + $0x68] sm:$0xff]
        %v264 = vld [vmem:[%s210 + $0x70] sm:$0xff]
        %v265 = vld [vmem:[%s210 + $0x78] sm:$0xff]
        %v266 = vld [vmem:[%s210 + $0x80] sm:$0xff]
        %v267 = vld [vmem:[%s210 + $0x88] sm:$0xff]
        %v268 = vld [vmem:[%s210 + $0x90] sm:$0xff]
        %v269 = vld [vmem:[%s210 + $0x98] sm:$0xff]
        %v270 = vld [vmem:[%s210 + $0xa0] sm:$0xff]
        %v271 = vld [vmem:[%s210 + $0xa8] sm:$0xff]
        %v272 = vld [vmem:[%s210 + $0xb0] sm:$0xff]
        %v273 = vld [vmem:[%s210 + $0xb8] sm:$0xff]
        %v274 = vld [vmem:[%s210 + $0xc0] sm:$0xff]
        %v275 = vld [vmem:[%s210 + $0xc8] sm:$0xff]
        %v276 = vld [vmem:[%s210 + $0xd0] sm:$0xff]
        %v277 = vld [vmem:[%s210 + $0xd8] sm:$0xff]
        %v278 = vld [vmem:[%s210 + $0xe0] sm:$0xff]
        %v279 = vld [vmem:[%s210 + $0xe8] sm:$0xff]
        %v280 = vld [vmem:[%s210 + $0xf0] sm:$0xff]
        %v281 = vld [vmem:[%s210 + $0xf8] sm:$0xff]
        %v282 = vpack.c.bf16 %v251, %v250
        %v283 = vpack.c.bf16 %v253, %v252
        %v284 = vpack.c.bf16 %v255, %v254
        %v285 = vpack.c.bf16 %v257, %v256
        %v286 = vpack.c.bf16 %v259, %v258
        %v287 = vpack.c.bf16 %v261, %v260
        %v288 = vpack.c.bf16 %v263, %v262
        %v289 = vpack.c.bf16 %v265, %v264
        %v290 = vpack.c.bf16 %v267, %v266
        %v291 = vpack.c.bf16 %v269, %v268
        %v292 = vpack.c.bf16 %v271, %v270
        %v293 = vpack.c.bf16 %v273, %v272
        %v294 = vpack.c.bf16 %v275, %v274
        %v295 = vpack.c.bf16 %v277, %v276
        %v296 = vpack.c.bf16 %v279, %v278
        %v297 = vpack.c.bf16 %v281, %v280
        %298 = vst [vmem:[#allocation2] sm:$0xff] 0
        %299 = vst [vmem:[#allocation2 + $0x8] sm:$0xff] 0
        %300 = vst [vmem:[#allocation2 + $0x10] sm:$0xff] 0
        %301 = vst [vmem:[#allocation2 + $0x198] sm:$0xff] 0
        %302 = vst [vmem:[#allocation2 + $0x1a0] sm:$0xff] 0
        %303 = vst [vmem:[#allocation2 + $0x1a8] sm:$0xff] 0
        %304 = vst [vmem:[#allocation2 + $0x20] sm:$0xff] %v282
        %305 = vst [vmem:[#allocation2 + $0x38] sm:$0xff] %v283
        %306 = vst [vmem:[#allocation2 + $0x50] sm:$0xff] %v284
        %307 = vst [vmem:[#allocation2 + $0x68] sm:$0xff] %v285
        %308 = vst [vmem:[#allocation2 + $0x80] sm:$0xff] %v286
        %309 = vst [vmem:[#allocation2 + $0x98] sm:$0xff] %v287
        %310 = vst [vmem:[#allocation2 + $0xb0] sm:$0xff] %v288
        %311 = vst [vmem:[#allocation2 + $0xc8] sm:$0xff] %v289
        %312 = vst [vmem:[#allocation2 + $0xe0] sm:$0xff] %v290
        %313 = vst [vmem:[#allocation2 + $0xf8] sm:$0xff] %v291
        %314 = vst [vmem:[#allocation2 + $0x110] sm:$0xff] %v292
        %315 = vst [vmem:[#allocation2 + $0x128] sm:$0xff] %v293
        %316 = vst [vmem:[#allocation2 + $0x140] sm:$0xff] %v294
        %317 = vst [vmem:[#allocation2 + $0x158] sm:$0xff] %v295
        %318 = vst [vmem:[#allocation2 + $0x170] sm:$0xff] %v296
        %319 = vst [vmem:[#allocation2 + $0x188] sm:$0xff] %v297
        %v320 = vlaneseq
        %v321 = vshrl.u32 %v320, 7
        %v322 = vadd.s32 %v321, 8
        %v323 = vadd.s32 %v321, 16
        %v324 = vadd.s32 %v321, 24
        %v325 = vadd.s32 %v321, 32
        %v326 = vadd.s32 %v321, 40
        %v327 = vadd.s32 %v321, 48
        %v328 = vadd.s32 %v321, 56
        %v329 = vadd.s32 %v321, 64
        %v330 = vadd.s32 %v321, 72
        %v331 = vadd.s32 %v321, 80
        %v332 = vadd.s32 %v321, 88
        %v333 = vadd.s32 %v321, 96
        %v334 = vadd.s32 %v321, 104
        %v335 = vadd.s32 %v321, 112
        %v336 = vadd.s32 %v321, 120
        %v337 = vadd.s32 %v321, 128
        %v338 = vadd.s32 %v321, 136
        %v339 = vadd.s32 %v321, 144
        %v340 = vadd.s32 %v321, 152
        %v341 = vadd.s32 %v321, 160
        %v342 = vadd.s32 %v321, 168
        %v343 = vadd.s32 %v321, 176
        %v344 = vadd.s32 %v321, 184
        %v345 = vadd.s32 %v321, 192
        %v346 = vadd.s32 %v321, 200
        %v347 = vadd.s32 %v321, 208
        %v348 = vadd.s32 %v321, 216
        %v349 = vadd.s32 %v321, 224
        %v350 = vadd.s32 %v321, 232
        %v351 = vadd.s32 %v321, 240
        %v352 = vadd.s32 %v321, 248
        %vm353 = vcmp.lt.s32.totalorder %v321, 0
        %v354 = vsub.s32 0, %v321
        %v355 = vsel %vm353, %v354, %v321
        %v356 = vshrl.u32 %v355, 4
        %v357 = vand.u32 %v355, 15
        %v358 = vsub.s32 0, %v357
        %v359 = vsel %vm353, %v358, %v357
        %vm360 = vcmp.lt.s32.totalorder %v322, 0
        %v361 = vsub.s32 0, %v322
        %v362 = vsel %vm360, %v361, %v322
        %v363 = vshrl.u32 %v362, 4
        %v364 = vand.u32 %v362, 15
        %v365 = vsub.s32 0, %v364
        %v366 = vsel %vm360, %v365, %v364
        %vm367 = vcmp.lt.s32.totalorder %v323, 0
        %v368 = vsub.s32 0, %v323
        %v369 = vsel %vm367, %v368, %v323
        %v370 = vshrl.u32 %v369, 4
        %v371 = vand.u32 %v369, 15
        %v372 = vsub.s32 0, %v371
        %v373 = vsel %vm367, %v372, %v371
        %vm374 = vcmp.lt.s32.totalorder %v324, 0
        %v375 = vsub.s32 0, %v324
        %v376 = vsel %vm374, %v375, %v324
        %v377 = vshrl.u32 %v376, 4
        %v378 = vand.u32 %v376, 15
        %v379 = vsub.s32 0, %v378
        %v380 = vsel %vm374, %v379, %v378
        %vm381 = vcmp.lt.s32.totalorder %v325, 0
        %v382 = vsub.s32 0, %v325
        %v383 = vsel %vm381, %v382, %v325
        %v384 = vshrl.u32 %v383, 4
        %v385 = vand.u32 %v383, 15
        %v386 = vsub.s32 0, %v385
        %v387 = vsel %vm381, %v386, %v385
        %vm388 = vcmp.lt.s32.totalorder %v326, 0
        %v389 = vsub.s32 0, %v326
        %v390 = vsel %vm388, %v389, %v326
        %v391 = vshrl.u32 %v390, 4
        %v392 = vand.u32 %v390, 15
        %v393 = vsub.s32 0, %v392
        %v394 = vsel %vm388, %v393, %v392
        %vm395 = vcmp.lt.s32.totalorder %v327, 0
        %v396 = vsub.s32 0, %v327
        %v397 = vsel %vm395, %v396, %v327
        %v398 = vshrl.u32 %v397, 4
        %v399 = vand.u32 %v397, 15
        %v400 = vsub.s32 0, %v399
        %v401 = vsel %vm395, %v400, %v399
        %vm402 = vcmp.lt.s32.totalorder %v328, 0
        %v403 = vsub.s32 0, %v328
        %v404 = vsel %vm402, %v403, %v328
        %v405 = vshrl.u32 %v404, 4
        %v406 = vand.u32 %v404, 15
        %v407 = vsub.s32 0, %v406
        %v408 = vsel %vm402, %v407, %v406
        %vm409 = vcmp.lt.s32.totalorder %v329, 0
        %v410 = vsub.s32 0, %v329
        %v411 = vsel %vm409, %v410, %v329
        %v412 = vshrl.u32 %v411, 4
        %v413 = vand.u32 %v411, 15
        %v414 = vsub.s32 0, %v413
        %v415 = vsel %vm409, %v414, %v413
        %vm416 = vcmp.lt.s32.totalorder %v330, 0
        %v417 = vsub.s32 0, %v330
        %v418 = vsel %vm416, %v417, %v330
        %v419 = vshrl.u32 %v418, 4
        %v420 = vand.u32 %v418, 15
        %v421 = vsub.s32 0, %v420
        %v422 = vsel %vm416, %v421, %v420
        %vm423 = vcmp.lt.s32.totalorder %v331, 0
        %v424 = vsub.s32 0, %v331
        %v425 = vsel %vm423, %v424, %v331
        %v426 = vshrl.u32 %v425, 4
        %v427 = vand.u32 %v425, 15
        %v428 = vsub.s32 0, %v427
        %v429 = vsel %vm423, %v428, %v427
        %vm430 = vcmp.lt.s32.totalorder %v332, 0
        %v431 = vsub.s32 0, %v332
        %v432 = vsel %vm430, %v431, %v332
        %v433 = vshrl.u32 %v432, 4
        %v434 = vand.u32 %v432, 15
        %v435 = vsub.s32 0, %v434
        %v436 = vsel %vm430, %v435, %v434
        %vm437 = vcmp.lt.s32.totalorder %v333, 0
        %v438 = vsub.s32 0, %v333
        %v439 = vsel %vm437, %v438, %v333
        %v440 = vshrl.u32 %v439, 4
        %v441 = vand.u32 %v439, 15
        %v442 = vsub.s32 0, %v441
        %v443 = vsel %vm437, %v442, %v441
        %vm444 = vcmp.lt.s32.totalorder %v334, 0
        %v445 = vsub.s32 0, %v334
        %v446 = vsel %vm444, %v445, %v334
        %v447 = vshrl.u32 %v446, 4
        %v448 = vand.u32 %v446, 15
        %v449 = vsub.s32 0, %v448
        %v450 = vsel %vm444, %v449, %v448
        %vm451 = vcmp.lt.s32.totalorder %v335, 0
        %v452 = vsub.s32 0, %v335
        %v453 = vsel %vm451, %v452, %v335
        %v454 = vshrl.u32 %v453, 4
        %v455 = vand.u32 %v453, 15
        %v456 = vsub.s32 0, %v455
        %v457 = vsel %vm451, %v456, %v455
        %vm458 = vcmp.lt.s32.totalorder %v336, 0
        %v459 = vsub.s32 0, %v336
        %v460 = vsel %vm458, %v459, %v336
        %v461 = vshrl.u32 %v460, 4
        %v462 = vand.u32 %v460, 15
        %v463 = vsub.s32 0, %v462
        %v464 = vsel %vm458, %v463, %v462
        %vm465 = vcmp.lt.s32.totalorder %v337, 0
        %v466 = vsub.s32 0, %v337
        %v467 = vsel %vm465, %v466, %v337
        %v468 = vshrl.u32 %v467, 4
        %v469 = vand.u32 %v467, 15
        %v470 = vsub.s32 0, %v469
        %v471 = vsel %vm465, %v470, %v469
        %vm472 = vcmp.lt.s32.totalorder %v338, 0
        %v473 = vsub.s32 0, %v338
        %v474 = vsel %vm472, %v473, %v338
        %v475 = vshrl.u32 %v474, 4
        %v476 = vand.u32 %v474, 15
        %v477 = vsub.s32 0, %v476
        %v478 = vsel %vm472, %v477, %v476
        %vm479 = vcmp.lt.s32.totalorder %v339, 0
        %v480 = vsub.s32 0, %v339
        %v481 = vsel %vm479, %v480, %v339
        %v482 = vshrl.u32 %v481, 4
        %v483 = vand.u32 %v481, 15
        %v484 = vsub.s32 0, %v483
        %v485 = vsel %vm479, %v484, %v483
        %vm486 = vcmp.lt.s32.totalorder %v340, 0
        %v487 = vsub.s32 0, %v340
        %v488 = vsel %vm486, %v487, %v340
        %v489 = vshrl.u32 %v488, 4
        %v490 = vand.u32 %v488, 15
        %v491 = vsub.s32 0, %v490
        %v492 = vsel %vm486, %v491, %v490
        %vm493 = vcmp.lt.s32.totalorder %v341, 0
        %v494 = vsub.s32 0, %v341
        %v495 = vsel %vm493, %v494, %v341
        %v496 = vshrl.u32 %v495, 4
        %v497 = vand.u32 %v495, 15
        %v498 = vsub.s32 0, %v497
        %v499 = vsel %vm493, %v498, %v497
        %vm500 = vcmp.lt.s32.totalorder %v342, 0
        %v501 = vsub.s32 0, %v342
        %v502 = vsel %vm500, %v501, %v342
        %v503 = vshrl.u32 %v502, 4
        %v504 = vand.u32 %v502, 15
        %v505 = vsub.s32 0, %v504
        %v506 = vsel %vm500, %v505, %v504
        %vm507 = vcmp.lt.s32.totalorder %v343, 0
        %v508 = vsub.s32 0, %v343
        %v509 = vsel %vm507, %v508, %v343
        %v510 = vshrl.u32 %v509, 4
        %v511 = vand.u32 %v509, 15
        %v512 = vsub.s32 0, %v511
        %v513 = vsel %vm507, %v512, %v511
        %vm514 = vcmp.lt.s32.totalorder %v344, 0
        %v515 = vsub.s32 0, %v344
        %v516 = vsel %vm514, %v515, %v344
        %v517 = vshrl.u32 %v516, 4
        %v518 = vand.u32 %v516, 15
        %v519 = vsub.s32 0, %v518
        %v520 = vsel %vm514, %v519, %v518
        %vm521 = vcmp.lt.s32.totalorder %v345, 0
        %v522 = vsub.s32 0, %v345
        %v523 = vsel %vm521, %v522, %v345
        %v524 = vshrl.u32 %v523, 4
        %v525 = vand.u32 %v523, 15
        %v526 = vsub.s32 0, %v525
        %v527 = vsel %vm521, %v526, %v525
        %vm528 = vcmp.lt.s32.totalorder %v346, 0
        %v529 = vsub.s32 0, %v346
        %v530 = vsel %vm528, %v529, %v346
        %v531 = vshrl.u32 %v530, 4
        %v532 = vand.u32 %v530, 15
        %v533 = vsub.s32 0, %v532
        %v534 = vsel %vm528, %v533, %v532
        %vm535 = vcmp.lt.s32.totalorder %v347, 0
        %v536 = vsub.s32 0, %v347
        %v537 = vsel %vm535, %v536, %v347
        %v538 = vshrl.u32 %v537, 4
        %v539 = vand.u32 %v537, 15
        %v540 = vsub.s32 0, %v539
        %v541 = vsel %vm535, %v540, %v539
        %vm542 = vcmp.lt.s32.totalorder %v348, 0
        %v543 = vsub.s32 0, %v348
        %v544 = vsel %vm542, %v543, %v348
        %v545 = vshrl.u32 %v544, 4
        %v546 = vand.u32 %v544, 15
        %v547 = vsub.s32 0, %v546
        %v548 = vsel %vm542, %v547, %v546
        %vm549 = vcmp.lt.s32.totalorder %v349, 0
        %v550 = vsub.s32 0, %v349
        %v551 = vsel %vm549, %v550, %v349
        %v552 = vshrl.u32 %v551, 4
        %v553 = vand.u32 %v551, 15
        %v554 = vsub.s32 0, %v553
        %v555 = vsel %vm549, %v554, %v553
        %vm556 = vcmp.lt.s32.totalorder %v350, 0
        %v557 = vsub.s32 0, %v350
        %v558 = vsel %vm556, %v557, %v350
        %v559 = vshrl.u32 %v558, 4
        %v560 = vand.u32 %v558, 15
        %v561 = vsub.s32 0, %v560
        %v562 = vsel %vm556, %v561, %v560
        %vm563 = vcmp.lt.s32.totalorder %v351, 0
        %v564 = vsub.s32 0, %v351
        %v565 = vsel %vm563, %v564, %v351
        %v566 = vshrl.u32 %v565, 4
        %v567 = vand.u32 %v565, 15
        %v568 = vsub.s32 0, %v567
        %v569 = vsel %vm563, %v568, %v567
        %vm570 = vcmp.lt.s32.totalorder %v352, 0
        %v571 = vsub.s32 0, %v352
        %v572 = vsel %vm570, %v571, %v352
        %v573 = vshrl.u32 %v572, 4
        %v574 = vand.u32 %v572, 15
        %v575 = vsub.s32 0, %v574
        %v576 = vsel %vm570, %v575, %v574
        %vm577 = vcmp.ne.s32.totalorder %v359, 0
        %vm578 = vcmp.ne.s32.totalorder %v366, 0
        %vm579 = vcmp.ne.s32.totalorder %v373, 0
        %vm580 = vcmp.ne.s32.totalorder %v380, 0
        %vm581 = vcmp.ne.s32.totalorder %v387, 0
        %vm582 = vcmp.ne.s32.totalorder %v394, 0
        %vm583 = vcmp.ne.s32.totalorder %v401, 0
        %vm584 = vcmp.ne.s32.totalorder %v408, 0
        %vm585 = vcmp.ne.s32.totalorder %v415, 0
        %vm586 = vcmp.ne.s32.totalorder %v422, 0
        %vm587 = vcmp.ne.s32.totalorder %v429, 0
        %vm588 = vcmp.ne.s32.totalorder %v436, 0
        %vm589 = vcmp.ne.s32.totalorder %v443, 0
        %vm590 = vcmp.ne.s32.totalorder %v450, 0
        %vm591 = vcmp.ne.s32.totalorder %v457, 0
        %vm592 = vcmp.ne.s32.totalorder %v464, 0
        %vm593 = vcmp.ne.s32.totalorder %v471, 0
        %vm594 = vcmp.ne.s32.totalorder %v478, 0
        %vm595 = vcmp.ne.s32.totalorder %v485, 0
        %vm596 = vcmp.ne.s32.totalorder %v492, 0
        %vm597 = vcmp.ne.s32.totalorder %v499, 0
        %vm598 = vcmp.ne.s32.totalorder %v506, 0
        %vm599 = vcmp.ne.s32.totalorder %v513, 0
        %vm600 = vcmp.ne.s32.totalorder %v520, 0
        %vm601 = vcmp.ne.s32.totalorder %v527, 0
        %vm602 = vcmp.ne.s32.totalorder %v534, 0
        %vm603 = vcmp.ne.s32.totalorder %v541, 0
        %vm604 = vcmp.ne.s32.totalorder %v548, 0
        %vm605 = vcmp.ne.s32.totalorder %v555, 0
        %vm606 = vcmp.ne.s32.totalorder %v562, 0
        %vm607 = vcmp.ne.s32.totalorder %v569, 0
        %vm608 = vcmp.ne.s32.totalorder %v576, 0
        %vm609 = vcmp.lt.s32.totalorder %v359, 0
        %vm610 = vcmp.lt.s32.totalorder %v366, 0
        %vm611 = vcmp.lt.s32.totalorder %v373, 0
        %vm612 = vcmp.lt.s32.totalorder %v380, 0
        %vm613 = vcmp.lt.s32.totalorder %v387, 0
        %vm614 = vcmp.lt.s32.totalorder %v394, 0
        %vm615 = vcmp.lt.s32.totalorder %v401, 0
        %vm616 = vcmp.lt.s32.totalorder %v408, 0
        %vm617 = vcmp.lt.s32.totalorder %v415, 0
        %vm618 = vcmp.lt.s32.totalorder %v422, 0
        %vm619 = vcmp.lt.s32.totalorder %v429, 0
        %vm620 = vcmp.lt.s32.totalorder %v436, 0
        %vm621 = vcmp.lt.s32.totalorder %v443, 0
        %vm622 = vcmp.lt.s32.totalorder %v450, 0
        %vm623 = vcmp.lt.s32.totalorder %v457, 0
        %vm624 = vcmp.lt.s32.totalorder %v464, 0
        %vm625 = vcmp.lt.s32.totalorder %v471, 0
        %vm626 = vcmp.lt.s32.totalorder %v478, 0
        %vm627 = vcmp.lt.s32.totalorder %v485, 0
        %vm628 = vcmp.lt.s32.totalorder %v492, 0
        %vm629 = vcmp.lt.s32.totalorder %v499, 0
        %vm630 = vcmp.lt.s32.totalorder %v506, 0
        %vm631 = vcmp.lt.s32.totalorder %v513, 0
        %vm632 = vcmp.lt.s32.totalorder %v520, 0
        %vm633 = vcmp.lt.s32.totalorder %v527, 0
        %vm634 = vcmp.lt.s32.totalorder %v534, 0
        %vm635 = vcmp.lt.s32.totalorder %v541, 0
        %vm636 = vcmp.lt.s32.totalorder %v548, 0
        %vm637 = vcmp.lt.s32.totalorder %v555, 0
        %vm638 = vcmp.lt.s32.totalorder %v562, 0
        %vm639 = vcmp.lt.s32.totalorder %v569, 0
        %vm640 = vcmp.lt.s32.totalorder %v576, 0
        %vm641 = vmand %vm609, %vm577
        %vm642 = vmand %vm610, %vm578
        %vm643 = vmand %vm611, %vm579
        %vm644 = vmand %vm612, %vm580
        %vm645 = vmand %vm613, %vm581
        %vm646 = vmand %vm614, %vm582
        %vm647 = vmand %vm615, %vm583
        %vm648 = vmand %vm616, %vm584
        %vm649 = vmand %vm617, %vm585
        %vm650 = vmand %vm618, %vm586
        %vm651 = vmand %vm619, %vm587
        %vm652 = vmand %vm620, %vm588
        %vm653 = vmand %vm621, %vm589
        %vm654 = vmand %vm622, %vm590
        %vm655 = vmand %vm623, %vm591
        %vm656 = vmand %vm624, %vm592
        %vm657 = vmand %vm625, %vm593
        %vm658 = vmand %vm626, %vm594
        %vm659 = vmand %vm627, %vm595
        %vm660 = vmand %vm628, %vm596
        %vm661 = vmand %vm629, %vm597
        %vm662 = vmand %vm630, %vm598
        %vm663 = vmand %vm631, %vm599
        %vm664 = vmand %vm632, %vm600
        %vm665 = vmand %vm633, %vm601
        %vm666 = vmand %vm634, %vm602
        %vm667 = vmand %vm635, %vm603
        %vm668 = vmand %vm636, %vm604
        %vm669 = vmand %vm637, %vm605
        %vm670 = vmand %vm638, %vm606
        %vm671 = vmand %vm639, %vm607
        %vm672 = vmand %vm640, %vm608
        %v673 = vadd.s32 %v359, 16
        %v674 = vadd.s32 %v366, 16
        %v675 = vadd.s32 %v373, 16
        %v676 = vadd.s32 %v380, 16
        %v677 = vadd.s32 %v387, 16
        %v678 = vadd.s32 %v394, 16
        %v679 = vadd.s32 %v401, 16
        %v680 = vadd.s32 %v408, 16
        %v681 = vadd.s32 %v415, 16
        %v682 = vadd.s32 %v422, 16
        %v683 = vadd.s32 %v429, 16
        %v684 = vadd.s32 %v436, 16
        %v685 = vadd.s32 %v443, 16
        %v686 = vadd.s32 %v450, 16
        %v687 = vadd.s32 %v457, 16
        %v688 = vadd.s32 %v464, 16
        %v689 = vadd.s32 %v471, 16
        %v690 = vadd.s32 %v478, 16
        %v691 = vadd.s32 %v485, 16
        %v692 = vadd.s32 %v492, 16
        %v693 = vadd.s32 %v499, 16
        %v694 = vadd.s32 %v506, 16
        %v695 = vadd.s32 %v513, 16
        %v696 = vadd.s32 %v520, 16
        %v697 = vadd.s32 %v527, 16
        %v698 = vadd.s32 %v534, 16
        %v699 = vadd.s32 %v541, 16
        %v700 = vadd.s32 %v548, 16
        %v701 = vadd.s32 %v555, 16
        %v702 = vadd.s32 %v562, 16
        %v703 = vadd.s32 %v569, 16
        %v704 = vadd.s32 %v576, 16
        %v705 = vsel %vm641, %v673, %v359
        %v706 = vsel %vm642, %v674, %v366
        %v707 = vsel %vm643, %v675, %v373
        %v708 = vsel %vm644, %v676, %v380
        %v709 = vsel %vm645, %v677, %v387
        %v710 = vsel %vm646, %v678, %v394
        %v711 = vsel %vm647, %v679, %v401
        %v712 = vsel %vm648, %v680, %v408
        %v713 = vsel %vm649, %v681, %v415
        %v714 = vsel %vm650, %v682, %v422
        %v715 = vsel %vm651, %v683, %v429
        %v716 = vsel %vm652, %v684, %v436
        %v717 = vsel %vm653, %v685, %v443
        %v718 = vsel %vm654, %v686, %v450
        %v719 = vsel %vm655, %v687, %v457
        %v720 = vsel %vm656, %v688, %v464
        %v721 = vsel %vm657, %v689, %v471
        %v722 = vsel %vm658, %v690, %v478
        %v723 = vsel %vm659, %v691, %v485
        %v724 = vsel %vm660, %v692, %v492
        %v725 = vsel %vm661, %v693, %v499
        %v726 = vsel %vm662, %v694, %v506
        %v727 = vsel %vm663, %v695, %v513
        %v728 = vsel %vm664, %v696, %v520
        %v729 = vsel %vm665, %v697, %v527
        %v730 = vsel %vm666, %v698, %v534
        %v731 = vsel %vm667, %v699, %v541
        %v732 = vsel %vm668, %v700, %v548
        %v733 = vsel %vm669, %v701, %v555
        %v734 = vsel %vm670, %v702, %v562
        %v735 = vsel %vm671, %v703, %v569
        %v736 = vsel %vm672, %v704, %v576
        %v737 = vld [vmem:[#allocation2 + $0x8] sm:$0x80]
        %v738 = vld [vmem:[#allocation2 + $0x20] sm:$0xff]
        %v739 = vld [vmem:[#allocation2 + $0x38] sm:$0xff]
        %v740 = vld [vmem:[#allocation2 + $0x50] sm:$0xff]
        %v741 = vld [vmem:[#allocation2 + $0x68] sm:$0xff]
        %v742 = vld [vmem:[#allocation2 + $0x80] sm:$0xff]
        %v743 = vld [vmem:[#allocation2 + $0x98] sm:$0xff]
        %v744 = vld [vmem:[#allocation2 + $0xb0] sm:$0xff]
        %v745 = vld [vmem:[#allocation2 + $0xc8] sm:$0xff]
        %v746 = vld [vmem:[#allocation2 + $0xe0] sm:$0xff]
        %v747 = vld [vmem:[#allocation2 + $0xf8] sm:$0xff]
        %v748 = vld [vmem:[#allocation2 + $0x110] sm:$0xff]
        %v749 = vld [vmem:[#allocation2 + $0x128] sm:$0xff]
        %v750 = vld [vmem:[#allocation2 + $0x140] sm:$0xff]
        %v751 = vld [vmem:[#allocation2 + $0x158] sm:$0xff]
        %v752 = vld [vmem:[#allocation2 + $0x170] sm:$0xff]
        %v753 = vld [vmem:[#allocation2 + $0x188] sm:$0xff]
        %v754 = vld [vmem:[#allocation2 + $0x1a0] sm:$0x1]
        %vm755 = vcmp.ne.s32.totalorder %v705, 0
        %vm756 = vcmp.ne.s32.totalorder %v706, 0
        %vm757 = vcmp.ne.s32.totalorder %v707, 0
        %vm758 = vcmp.ne.s32.totalorder %v708, 0
        %vm759 = vcmp.ne.s32.totalorder %v709, 0
        %vm760 = vcmp.ne.s32.totalorder %v710, 0
        %vm761 = vcmp.ne.s32.totalorder %v711, 0
        %vm762 = vcmp.ne.s32.totalorder %v712, 0
        %vm763 = vcmp.ne.s32.totalorder %v713, 0
        %vm764 = vcmp.ne.s32.totalorder %v714, 0
        %vm765 = vcmp.ne.s32.totalorder %v715, 0
        %vm766 = vcmp.ne.s32.totalorder %v716, 0
        %vm767 = vcmp.ne.s32.totalorder %v717, 0
        %vm768 = vcmp.ne.s32.totalorder %v718, 0
        %vm769 = vcmp.ne.s32.totalorder %v719, 0
        %vm770 = vcmp.ne.s32.totalorder %v720, 0
        %vm771 = vcmp.ne.s32.totalorder %v721, 0
        %vm772 = vcmp.ne.s32.totalorder %v722, 0
        %vm773 = vcmp.ne.s32.totalorder %v723, 0
        %vm774 = vcmp.ne.s32.totalorder %v724, 0
        %vm775 = vcmp.ne.s32.totalorder %v725, 0
        %vm776 = vcmp.ne.s32.totalorder %v726, 0
        %vm777 = vcmp.ne.s32.totalorder %v727, 0
        %vm778 = vcmp.ne.s32.totalorder %v728, 0
        %vm779 = vcmp.ne.s32.totalorder %v729, 0
        %vm780 = vcmp.ne.s32.totalorder %v730, 0
        %vm781 = vcmp.ne.s32.totalorder %v731, 0
        %vm782 = vcmp.ne.s32.totalorder %v732, 0
        %vm783 = vcmp.ne.s32.totalorder %v733, 0
        %vm784 = vcmp.ne.s32.totalorder %v734, 0
        %vm785 = vcmp.ne.s32.totalorder %v735, 0
        %vm786 = vcmp.ne.s32.totalorder %v736, 0
        %v787 = vsel %vm755, 1, 0
        %v788 = vsel %vm756, 1, 0
        %v789 = vsel %vm757, 1, 0
        %v790 = vsel %vm758, 1, 0
        %v791 = vsel %vm759, 1, 0
        %v792 = vsel %vm760, 1, 0
        %v793 = vsel %vm761, 1, 0
        %v794 = vsel %vm762, 1, 0
        %v795 = vsel %vm763, 1, 0
        %v796 = vsel %vm764, 1, 0
        %v797 = vsel %vm765, 1, 0
        %v798 = vsel %vm766, 1, 0
        %v799 = vsel %vm767, 1, 0
        %v800 = vsel %vm768, 1, 0
        %v801 = vsel %vm769, 1, 0
        %v802 = vsel %vm770, 1, 0
        %v803 = vsel %vm771, 1, 0
        %v804 = vsel %vm772, 1, 0
        %v805 = vsel %vm773, 1, 0
        %v806 = vsel %vm774, 1, 0
        %v807 = vsel %vm775, 1, 0
        %v808 = vsel %vm776, 1, 0
        %v809 = vsel %vm777, 1, 0
        %v810 = vsel %vm778, 1, 0
        %v811 = vsel %vm779, 1, 0
        %v812 = vsel %vm780, 1, 0
        %v813 = vsel %vm781, 1, 0
        %v814 = vsel %vm782, 1, 0
        %v815 = vsel %vm783, 1, 0
        %v816 = vsel %vm784, 1, 0
        %v817 = vsel %vm785, 1, 0
        %v818 = vsel %vm786, 1, 0
        %vm819 = vcmp.eq.s32.totalorder %v787, 1
        %vm820 = vcmp.eq.s32.totalorder %v788, 1
        %vm821 = vcmp.eq.s32.totalorder %v789, 1
        %vm822 = vcmp.eq.s32.totalorder %v790, 1
        %vm823 = vcmp.eq.s32.totalorder %v791, 1
        %vm824 = vcmp.eq.s32.totalorder %v792, 1
        %vm825 = vcmp.eq.s32.totalorder %v793, 1
        %vm826 = vcmp.eq.s32.totalorder %v794, 1
        %vm827 = vcmp.eq.s32.totalorder %v795, 1
        %vm828 = vcmp.eq.s32.totalorder %v796, 1
        %vm829 = vcmp.eq.s32.totalorder %v797, 1
        %vm830 = vcmp.eq.s32.totalorder %v798, 1
        %vm831 = vcmp.eq.s32.totalorder %v799, 1
        %vm832 = vcmp.eq.s32.totalorder %v800, 1
        %vm833 = vcmp.eq.s32.totalorder %v801, 1
        %vm834 = vcmp.eq.s32.totalorder %v802, 1
        %vm835 = vcmp.eq.s32.totalorder %v803, 1
        %vm836 = vcmp.eq.s32.totalorder %v804, 1
        %vm837 = vcmp.eq.s32.totalorder %v805, 1
        %vm838 = vcmp.eq.s32.totalorder %v806, 1
        %vm839 = vcmp.eq.s32.totalorder %v807, 1
        %vm840 = vcmp.eq.s32.totalorder %v808, 1
        %vm841 = vcmp.eq.s32.totalorder %v809, 1
        %vm842 = vcmp.eq.s32.totalorder %v810, 1
        %vm843 = vcmp.eq.s32.totalorder %v811, 1
        %vm844 = vcmp.eq.s32.totalorder %v812, 1
        %vm845 = vcmp.eq.s32.totalorder %v813, 1
        %vm846 = vcmp.eq.s32.totalorder %v814, 1
        %vm847 = vcmp.eq.s32.totalorder %v815, 1
        %vm848 = vcmp.eq.s32.totalorder %v816, 1
        %vm849 = vcmp.eq.s32.totalorder %v817, 1
        %vm850 = vcmp.eq.s32.totalorder %v818, 1
        %vm851 = vmpackc.low %vm819, %vm819
        %vm852 = vmpackc.low %vm820, %vm820
        %vm853 = vmpackc.low %vm821, %vm821
        %vm854 = vmpackc.low %vm822, %vm822
        %vm855 = vmpackc.low %vm823, %vm823
        %vm856 = vmpackc.low %vm824, %vm824
        %vm857 = vmpackc.low %vm825, %vm825
        %vm858 = vmpackc.low %vm826, %vm826
        %vm859 = vmpackc.low %vm827, %vm827
        %vm860 = vmpackc.low %vm828, %vm828
        %vm861 = vmpackc.low %vm829, %vm829
        %vm862 = vmpackc.low %vm830, %vm830
        %vm863 = vmpackc.low %vm831, %vm831
        %vm864 = vmpackc.low %vm832, %vm832
        %vm865 = vmpackc.low %vm833, %vm833
        %vm866 = vmpackc.low %vm834, %vm834
        %vm867 = vmpackc.low %vm835, %vm835
        %vm868 = vmpackc.low %vm836, %vm836
        %vm869 = vmpackc.low %vm837, %vm837
        %vm870 = vmpackc.low %vm838, %vm838
        %vm871 = vmpackc.low %vm839, %vm839
        %vm872 = vmpackc.low %vm840, %vm840
        %vm873 = vmpackc.low %vm841, %vm841
        %vm874 = vmpackc.low %vm842, %vm842
        %vm875 = vmpackc.low %vm843, %vm843
        %vm876 = vmpackc.low %vm844, %vm844
        %vm877 = vmpackc.low %vm845, %vm845
        %vm878 = vmpackc.low %vm846, %vm846
        %vm879 = vmpackc.low %vm847, %vm847
        %vm880 = vmpackc.low %vm848, %vm848
        %vm881 = vmpackc.low %vm849, %vm849
        %vm882 = vmpackc.low %vm850, %vm850
        %v883 = vsel %vm851, 65537, 0
        %v884 = vsel %vm852, 65537, 0
        %v885 = vsel %vm853, 65537, 0
        %v886 = vsel %vm854, 65537, 0
        %v887 = vsel %vm855, 65537, 0
        %v888 = vsel %vm856, 65537, 0
        %v889 = vsel %vm857, 65537, 0
        %v890 = vsel %vm858, 65537, 0
        %v891 = vsel %vm859, 65537, 0
        %v892 = vsel %vm860, 65537, 0
        %v893 = vsel %vm861, 65537, 0
        %v894 = vsel %vm862, 65537, 0
        %v895 = vsel %vm863, 65537, 0
        %v896 = vsel %vm864, 65537, 0
        %v897 = vsel %vm865, 65537, 0
        %v898 = vsel %vm866, 65537, 0
        %v899 = vsel %vm867, 65537, 0
        %v900 = vsel %vm868, 65537, 0
        %v901 = vsel %vm869, 65537, 0
        %v902 = vsel %vm870, 65537, 0
        %v903 = vsel %vm871, 65537, 0
        %v904 = vsel %vm872, 65537, 0
        %v905 = vsel %vm873, 65537, 0
        %v906 = vsel %vm874, 65537, 0
        %v907 = vsel %vm875, 65537, 0
        %v908 = vsel %vm876, 65537, 0
        %v909 = vsel %vm877, 65537, 0
        %v910 = vsel %vm878, 65537, 0
        %v911 = vsel %vm879, 65537, 0
        %v912 = vsel %vm880, 65537, 0
        %v913 = vsel %vm881, 65537, 0
        %v914 = vsel %vm882, 65537, 0
        %v915 = vunpack.c.l.b16 %v883
        %v916 = vunpack.c.l.b16 %v884
        %v917 = vunpack.c.l.b16 %v885
        %v918 = vunpack.c.l.b16 %v886
        %v919 = vunpack.c.l.b16 %v887
        %v920 = vunpack.c.l.b16 %v888
        %v921 = vunpack.c.l.b16 %v889
        %v922 = vunpack.c.l.b16 %v890
        %v923 = vunpack.c.l.b16 %v891
        %v924 = vunpack.c.l.b16 %v892
        %v925 = vunpack.c.l.b16 %v893
        %v926 = vunpack.c.l.b16 %v894
        %v927 = vunpack.c.l.b16 %v895
        %v928 = vunpack.c.l.b16 %v896
        %v929 = vunpack.c.l.b16 %v897
        %v930 = vunpack.c.l.b16 %v898
        %v931 = vunpack.c.l.b16 %v899
        %v932 = vunpack.c.l.b16 %v900
        %v933 = vunpack.c.l.b16 %v901
        %v934 = vunpack.c.l.b16 %v902
        %v935 = vunpack.c.l.b16 %v903
        %v936 = vunpack.c.l.b16 %v904
        %v937 = vunpack.c.l.b16 %v905
        %v938 = vunpack.c.l.b16 %v906
        %v939 = vunpack.c.l.b16 %v907
        %v940 = vunpack.c.l.b16 %v908
        %v941 = vunpack.c.l.b16 %v909
        %v942 = vunpack.c.l.b16 %v910
        %v943 = vunpack.c.l.b16 %v911
        %v944 = vunpack.c.l.b16 %v912
        %v945 = vunpack.c.l.b16 %v913
        %v946 = vunpack.c.l.b16 %v914
        %v947 = vpack.c.b16 %v916, %v915
        %v948 = vpack.c.b16 %v918, %v917
        %v949 = vpack.c.b16 %v920, %v919
        %v950 = vpack.c.b16 %v922, %v921
        %v951 = vpack.c.b16 %v924, %v923
        %v952 = vpack.c.b16 %v926, %v925
        %v953 = vpack.c.b16 %v928, %v927
        %v954 = vpack.c.b16 %v930, %v929
        %v955 = vpack.c.b16 %v932, %v931
        %v956 = vpack.c.b16 %v934, %v933
        %v957 = vpack.c.b16 %v936, %v935
        %v958 = vpack.c.b16 %v938, %v937
        %v959 = vpack.c.b16 %v940, %v939
        %v960 = vpack.c.b16 %v942, %v941
        %v961 = vpack.c.b16 %v944, %v943
        %v962 = vpack.c.b16 %v946, %v945
        %vm963 = vsmask.f32 7424
        %v965 = vshll.u32 %v947, 16
        %v967 = vrot.slane %v965, 1
        %v968 = vshrl.u32 %v947, 16
        %v970 = vor.u32 %v968, %v967
        %v972 = vshll.u32 %v948, 16
        %v974 = vrot.slane %v972, 1
        %v975 = vsel %vm963, %v970, %v974
        %v976 = vshrl.u32 %v948, 16
        %v978 = vor.u32 %v976, %v974
        %v980 = vshll.u32 %v949, 16
        %v982 = vrot.slane %v980, 1
        %v983 = vsel %vm963, %v978, %v982
        %v984 = vshrl.u32 %v949, 16
        %v986 = vor.u32 %v984, %v982
        %v988 = vshll.u32 %v950, 16
        %v990 = vrot.slane %v988, 1
        %v991 = vsel %vm963, %v986, %v990
        %v992 = vshrl.u32 %v950, 16
        %v994 = vor.u32 %v992, %v990
        %v996 = vshll.u32 %v951, 16
        %v998 = vrot.slane %v996, 1
        %v999 = vsel %vm963, %v994, %v998
        %v1000 = vshrl.u32 %v951, 16
        %v1002 = vor.u32 %v1000, %v998
        %v1004 = vshll.u32 %v952, 16
        %v1006 = vrot.slane %v1004, 1
        %v1007 = vsel %vm963, %v1002, %v1006
        %v1008 = vshrl.u32 %v952, 16
        %v1010 = vor.u32 %v1008, %v1006
        %v1012 = vshll.u32 %v953, 16
        %v1014 = vrot.slane %v1012, 1
        %v1015 = vsel %vm963, %v1010, %v1014
        %v1016 = vshrl.u32 %v953, 16
        %v1018 = vor.u32 %v1016, %v1014
        %v1020 = vshll.u32 %v954, 16
        %v1022 = vrot.slane %v1020, 1
        %v1023 = vsel %vm963, %v1018, %v1022
        %v1024 = vshrl.u32 %v954, 16
        %v1026 = vor.u32 %v1024, %v1022
        %v1028 = vshll.u32 %v955, 16
        %v1030 = vrot.slane %v1028, 1
        %v1031 = vsel %vm963, %v1026, %v1030
        %v1032 = vshrl.u32 %v955, 16
        %v1034 = vor.u32 %v1032, %v1030
        %v1036 = vshll.u32 %v956, 16
        %v1038 = vrot.slane %v1036, 1
        %v1039 = vsel %vm963, %v1034, %v1038
        %v1040 = vshrl.u32 %v956, 16
        %v1042 = vor.u32 %v1040, %v1038
        %v1044 = vshll.u32 %v957, 16
        %v1046 = vrot.slane %v1044, 1
        %v1047 = vsel %vm963, %v1042, %v1046
        %v1048 = vshrl.u32 %v957, 16
        %v1050 = vor.u32 %v1048, %v1046
        %v1052 = vshll.u32 %v958, 16
        %v1054 = vrot.slane %v1052, 1
        %v1055 = vsel %vm963, %v1050, %v1054
        %v1056 = vshrl.u32 %v958, 16
        %v1058 = vor.u32 %v1056, %v1054
        %v1060 = vshll.u32 %v959, 16
        %v1062 = vrot.slane %v1060, 1
        %v1063 = vsel %vm963, %v1058, %v1062
        %v1064 = vshrl.u32 %v959, 16
        %v1066 = vor.u32 %v1064, %v1062
        %v1068 = vshll.u32 %v960, 16
        %v1070 = vrot.slane %v1068, 1
        %v1071 = vsel %vm963, %v1066, %v1070
        %v1072 = vshrl.u32 %v960, 16
        %v1074 = vor.u32 %v1072, %v1070
        %v1076 = vshll.u32 %v961, 16
        %v1078 = vrot.slane %v1076, 1
        %v1079 = vsel %vm963, %v1074, %v1078
        %v1080 = vshrl.u32 %v961, 16
        %v1082 = vor.u32 %v1080, %v1078
        %v1084 = vshll.u32 %v962, 16
        %v1086 = vrot.slane %v1084, 1
        %v1087 = vsel %vm963, %v1082, %v1086
        %v1088 = vshrl.u32 %v962, 16
        %v1090 = vor.u32 %v1088, %v1086
        %vm1091 = vcmp.ne.s16.totalorder %v967, 0
        %vm1092 = vcmp.ne.s16.totalorder %v975, 0
        %vm1093 = vcmp.ne.s16.totalorder %v983, 0
        %vm1094 = vcmp.ne.s16.totalorder %v991, 0
        %vm1095 = vcmp.ne.s16.totalorder %v999, 0
        %vm1096 = vcmp.ne.s16.totalorder %v1007, 0
        %vm1097 = vcmp.ne.s16.totalorder %v1015, 0
        %vm1098 = vcmp.ne.s16.totalorder %v1023, 0
        %vm1099 = vcmp.ne.s16.totalorder %v1031, 0
        %vm1100 = vcmp.ne.s16.totalorder %v1039, 0
        %vm1101 = vcmp.ne.s16.totalorder %v1047, 0
        %vm1102 = vcmp.ne.s16.totalorder %v1055, 0
        %vm1103 = vcmp.ne.s16.totalorder %v1063, 0
        %vm1104 = vcmp.ne.s16.totalorder %v1071, 0
        %vm1105 = vcmp.ne.s16.totalorder %v1079, 0
        %vm1106 = vcmp.ne.s16.totalorder %v1087, 0
        %vm1107 = vcmp.ne.s16.totalorder %v1090, 0
        %v1108 = vsel %vm1091, %v737, 0
        %v1109 = vsel %vm1092, %v738, 0
        %v1110 = vsel %vm1093, %v739, 0
        %v1111 = vsel %vm1094, %v740, 0
        %v1112 = vsel %vm1095, %v741, 0
        %v1113 = vsel %vm1096, %v742, 0
        %v1114 = vsel %vm1097, %v743, 0
        %v1115 = vsel %vm1098, %v744, 0
        %v1116 = vsel %vm1099, %v745, 0
        %v1117 = vsel %vm1100, %v746, 0
        %v1118 = vsel %vm1101, %v747, 0
        %v1119 = vsel %vm1102, %v748, 0
        %v1120 = vsel %vm1103, %v749, 0
        %v1121 = vsel %vm1104, %v750, 0
        %v1122 = vsel %vm1105, %v751, 0
        %v1123 = vsel %vm1106, %v752, 0
        %v1124 = vsel %vm1107, %v753, 0
        %vm1125 = vsmask.f32 256
        %v1127 = vshrl.u32 %v1108, 16
        %v1129 = vrot.slane %v1127, 7
        %v1131 = vshrl.u32 %v1109, 16
        %v1133 = vrot.slane %v1131, 7
        %v1134 = vshll.u32 %v1109, 16
        %v1136 = vor.u32 %v1133, %v1134
        %v1137 = vsel %vm1125, %v1129, %v1136
        %v1139 = vshrl.u32 %v1110, 16
        %v1141 = vrot.slane %v1139, 7
        %v1142 = vshll.u32 %v1110, 16
        %v1144 = vor.u32 %v1141, %v1142
        %v1145 = vsel %vm1125, %v1133, %v1144
        %v1147 = vshrl.u32 %v1111, 16
        %v1149 = vrot.slane %v1147, 7
        %v1150 = vshll.u32 %v1111, 16
        %v1152 = vor.u32 %v1149, %v1150
        %v1153 = vsel %vm1125, %v1141, %v1152
        %v1155 = vshrl.u32 %v1112, 16
        %v1157 = vrot.slane %v1155, 7
        %v1158 = vshll.u32 %v1112, 16
        %v1160 = vor.u32 %v1157, %v1158
        %v1161 = vsel %vm1125, %v1149, %v1160
        %v1163 = vshrl.u32 %v1113, 16
        %v1165 = vrot.slane %v1163, 7
        %v1166 = vshll.u32 %v1113, 16
        %v1168 = vor.u32 %v1165, %v1166
        %v1169 = vsel %vm1125, %v1157, %v1168
        %v1171 = vshrl.u32 %v1114, 16
        %v1173 = vrot.slane %v1171, 7
        %v1174 = vshll.u32 %v1114, 16
        %v1176 = vor.u32 %v1173, %v1174
        %v1177 = vsel %vm1125, %v1165, %v1176
        %v1179 = vshrl.u32 %v1115, 16
        %v1181 = vrot.slane %v1179, 7
        %v1182 = vshll.u32 %v1115, 16
        %v1184 = vor.u32 %v1181, %v1182
        %v1185 = vsel %vm1125, %v1173, %v1184
        %v1187 = vshrl.u32 %v1116, 16
        %v1189 = vrot.slane %v1187, 7
        %v1190 = vshll.u32 %v1116, 16
        %v1192 = vor.u32 %v1189, %v1190
        %v1193 = vsel %vm1125, %v1181, %v1192
        %v1195 = vshrl.u32 %v1117, 16
        %v1197 = vrot.slane %v1195, 7
        %v1198 = vshll.u32 %v1117, 16
        %v1200 = vor.u32 %v1197, %v1198
        %v1201 = vsel %vm1125, %v1189, %v1200
        %v1203 = vshrl.u32 %v1118, 16
        %v1205 = vrot.slane %v1203, 7
        %v1206 = vshll.u32 %v1118, 16
        %v1208 = vor.u32 %v1205, %v1206
        %v1209 = vsel %vm1125, %v1197, %v1208
        %v1211 = vshrl.u32 %v1119, 16
        %v1213 = vrot.slane %v1211, 7
        %v1214 = vshll.u32 %v1119, 16
        %v1216 = vor.u32 %v1213, %v1214
        %v1217 = vsel %vm1125, %v1205, %v1216
        %v1219 = vshrl.u32 %v1120, 16
        %v1221 = vrot.slane %v1219, 7
        %v1222 = vshll.u32 %v1120, 16
        %v1224 = vor.u32 %v1221, %v1222
        %v1225 = vsel %vm1125, %v1213, %v1224
        %v1227 = vshrl.u32 %v1121, 16
        %v1229 = vrot.slane %v1227, 7
        %v1230 = vshll.u32 %v1121, 16
        %v1232 = vor.u32 %v1229, %v1230
        %v1233 = vsel %vm1125, %v1221, %v1232
        %v1235 = vshrl.u32 %v1122, 16
        %v1237 = vrot.slane %v1235, 7
        %v1238 = vshll.u32 %v1122, 16
        %v1240 = vor.u32 %v1237, %v1238
        %v1241 = vsel %vm1125, %v1229, %v1240
        %v1243 = vshrl.u32 %v1123, 16
        %v1245 = vrot.slane %v1243, 7
        %v1246 = vshll.u32 %v1123, 16
        %v1248 = vor.u32 %v1245, %v1246
        %v1249 = vsel %vm1125, %v1237, %v1248
        %v1251 = vshrl.u32 %v1124, 16
        %v1253 = vrot.slane %v1251, 7
        %v1254 = vshll.u32 %v1124, 16
        %v1256 = vor.u32 %v1253, %v1254
        %v1257 = vsel %vm1125, %v1245, %v1256
        %1274 = vst [vmem:[#allocation2 + $0x18] sm:$0xff] %v1137
        %1275 = vst [vmem:[#allocation2 + $0x30] sm:$0xff] %v1145
        %1276 = vst [vmem:[#allocation2 + $0x48] sm:$0xff] %v1153
        %1277 = vst [vmem:[#allocation2 + $0x60] sm:$0xff] %v1161
        %1278 = vst [vmem:[#allocation2 + $0x78] sm:$0xff] %v1169
        %1279 = vst [vmem:[#allocation2 + $0x90] sm:$0xff] %v1177
        %1280 = vst [vmem:[#allocation2 + $0xa8] sm:$0xff] %v1185
        %1281 = vst [vmem:[#allocation2 + $0xc0] sm:$0xff] %v1193
        %1282 = vst [vmem:[#allocation2 + $0xd8] sm:$0xff] %v1201
        %1283 = vst [vmem:[#allocation2 + $0xf0] sm:$0xff] %v1209
        %1284 = vst [vmem:[#allocation2 + $0x108] sm:$0xff] %v1217
        %1285 = vst [vmem:[#allocation2 + $0x120] sm:$0xff] %v1225
        %1286 = vst [vmem:[#allocation2 + $0x138] sm:$0xff] %v1233
        %1287 = vst [vmem:[#allocation2 + $0x150] sm:$0xff] %v1241
        %1288 = vst [vmem:[#allocation2 + $0x168] sm:$0xff] %v1249
        %1289 = vst [vmem:[#allocation2 + $0x180] sm:$0xff] %v1257
        %vm1290 = vcmp.ne.s32.totalorder %v705, 15
        %vm1291 = vcmp.ne.s32.totalorder %v706, 15
        %vm1292 = vcmp.ne.s32.totalorder %v707, 15
        %vm1293 = vcmp.ne.s32.totalorder %v708, 15
        %vm1294 = vcmp.ne.s32.totalorder %v709, 15
        %vm1295 = vcmp.ne.s32.totalorder %v710, 15
        %vm1296 = vcmp.ne.s32.totalorder %v711, 15
        %vm1297 = vcmp.ne.s32.totalorder %v712, 15
        %vm1298 = vcmp.ne.s32.totalorder %v713, 15
        %vm1299 = vcmp.ne.s32.totalorder %v714, 15
        %vm1300 = vcmp.ne.s32.totalorder %v715, 15
        %vm1301 = vcmp.ne.s32.totalorder %v716, 15
        %vm1302 = vcmp.ne.s32.totalorder %v717, 15
        %vm1303 = vcmp.ne.s32.totalorder %v718, 15
        %vm1304 = vcmp.ne.s32.totalorder %v719, 15
        %vm1305 = vcmp.ne.s32.totalorder %v720, 15
        %vm1306 = vcmp.ne.s32.totalorder %v721, 15
        %vm1307 = vcmp.ne.s32.totalorder %v722, 15
        %vm1308 = vcmp.ne.s32.totalorder %v723, 15
        %vm1309 = vcmp.ne.s32.totalorder %v724, 15
        %vm1310 = vcmp.ne.s32.totalorder %v725, 15
        %vm1311 = vcmp.ne.s32.totalorder %v726, 15
        %vm1312 = vcmp.ne.s32.totalorder %v727, 15
        %vm1313 = vcmp.ne.s32.totalorder %v728, 15
        %vm1314 = vcmp.ne.s32.totalorder %v729, 15
        %vm1315 = vcmp.ne.s32.totalorder %v730, 15
        %vm1316 = vcmp.ne.s32.totalorder %v731, 15
        %vm1317 = vcmp.ne.s32.totalorder %v732, 15
        %vm1318 = vcmp.ne.s32.totalorder %v733, 15
        %vm1319 = vcmp.ne.s32.totalorder %v734, 15
        %vm1320 = vcmp.ne.s32.totalorder %v735, 15
        %vm1321 = vcmp.ne.s32.totalorder %v736, 15
        %v1322 = vsel %vm1290, 1, 0
        %v1323 = vsel %vm1291, 1, 0
        %v1324 = vsel %vm1292, 1, 0
        %v1325 = vsel %vm1293, 1, 0
        %v1326 = vsel %vm1294, 1, 0
        %v1327 = vsel %vm1295, 1, 0
        %v1328 = vsel %vm1296, 1, 0
        %v1329 = vsel %vm1297, 1, 0
        %v1330 = vsel %vm1298, 1, 0
        %v1331 = vsel %vm1299, 1, 0
        %v1332 = vsel %vm1300, 1, 0
        %v1333 = vsel %vm1301, 1, 0
        %v1334 = vsel %vm1302, 1, 0
        %v1335 = vsel %vm1303, 1, 0
        %v1336 = vsel %vm1304, 1, 0
        %v1337 = vsel %vm1305, 1, 0
        %v1338 = vsel %vm1306, 1, 0
        %v1339 = vsel %vm1307, 1, 0
        %v1340 = vsel %vm1308, 1, 0
        %v1341 = vsel %vm1309, 1, 0
        %v1342 = vsel %vm1310, 1, 0
        %v1343 = vsel %vm1311, 1, 0
        %v1344 = vsel %vm1312, 1, 0
        %v1345 = vsel %vm1313, 1, 0
        %v1346 = vsel %vm1314, 1, 0
        %v1347 = vsel %vm1315, 1, 0
        %v1348 = vsel %vm1316, 1, 0
        %v1349 = vsel %vm1317, 1, 0
        %v1350 = vsel %vm1318, 1, 0
        %v1351 = vsel %vm1319, 1, 0
        %v1352 = vsel %vm1320, 1, 0
        %v1353 = vsel %vm1321, 1, 0
        %vm1354 = vcmp.eq.s32.totalorder %v1322, 1
        %vm1355 = vcmp.eq.s32.totalorder %v1323, 1
        %vm1356 = vcmp.eq.s32.totalorder %v1324, 1
        %vm1357 = vcmp.eq.s32.totalorder %v1325, 1
        %vm1358 = vcmp.eq.s32.totalorder %v1326, 1
        %vm1359 = vcmp.eq.s32.totalorder %v1327, 1
        %vm1360 = vcmp.eq.s32.totalorder %v1328, 1
        %vm1361 = vcmp.eq.s32.totalorder %v1329, 1
        %vm1362 = vcmp.eq.s32.totalorder %v1330, 1
        %vm1363 = vcmp.eq.s32.totalorder %v1331, 1
        %vm1364 = vcmp.eq.s32.totalorder %v1332, 1
        %vm1365 = vcmp.eq.s32.totalorder %v1333, 1
        %vm1366 = vcmp.eq.s32.totalorder %v1334, 1
        %vm1367 = vcmp.eq.s32.totalorder %v1335, 1
        %vm1368 = vcmp.eq.s32.totalorder %v1336, 1
        %vm1369 = vcmp.eq.s32.totalorder %v1337, 1
        %vm1370 = vcmp.eq.s32.totalorder %v1338, 1
        %vm1371 = vcmp.eq.s32.totalorder %v1339, 1
        %vm1372 = vcmp.eq.s32.totalorder %v1340, 1
        %vm1373 = vcmp.eq.s32.totalorder %v1341, 1
        %vm1374 = vcmp.eq.s32.totalorder %v1342, 1
        %vm1375 = vcmp.eq.s32.totalorder %v1343, 1
        %vm1376 = vcmp.eq.s32.totalorder %v1344, 1
        %vm1377 = vcmp.eq.s32.totalorder %v1345, 1
        %vm1378 = vcmp.eq.s32.totalorder %v1346, 1
        %vm1379 = vcmp.eq.s32.totalorder %v1347, 1
        %vm1380 = vcmp.eq.s32.totalorder %v1348, 1
        %vm1381 = vcmp.eq.s32.totalorder %v1349, 1
        %vm1382 = vcmp.eq.s32.totalorder %v1350, 1
        %vm1383 = vcmp.eq.s32.totalorder %v1351, 1
        %vm1384 = vcmp.eq.s32.totalorder %v1352, 1
        %vm1385 = vcmp.eq.s32.totalorder %v1353, 1
        %vm1386 = vmpackc.low %vm1354, %vm1354
        %vm1387 = vmpackc.low %vm1355, %vm1355
        %vm1388 = vmpackc.low %vm1356, %vm1356
        %vm1389 = vmpackc.low %vm1357, %vm1357
        %vm1390 = vmpackc.low %vm1358, %vm1358
        %vm1391 = vmpackc.low %vm1359, %vm1359
        %vm1392 = vmpackc.low %vm1360, %vm1360
        %vm1393 = vmpackc.low %vm1361, %vm1361
        %vm1394 = vmpackc.low %vm1362, %vm1362
        %vm1395 = vmpackc.low %vm1363, %vm1363
        %vm1396 = vmpackc.low %vm1364, %vm1364
        %vm1397 = vmpackc.low %vm1365, %vm1365
        %vm1398 = vmpackc.low %vm1366, %vm1366
        %vm1399 = vmpackc.low %vm1367, %vm1367
        %vm1400 = vmpackc.low %vm1368, %vm1368
        %vm1401 = vmpackc.low %vm1369, %vm1369
        %vm1402 = vmpackc.low %vm1370, %vm1370
        %vm1403 = vmpackc.low %vm1371, %vm1371
        %vm1404 = vmpackc.low %vm1372, %vm1372
        %vm1405 = vmpackc.low %vm1373, %vm1373
        %vm1406 = vmpackc.low %vm1374, %vm1374
        %vm1407 = vmpackc.low %vm1375, %vm1375
        %vm1408 = vmpackc.low %vm1376, %vm1376
        %vm1409 = vmpackc.low %vm1377, %vm1377
        %vm1410 = vmpackc.low %vm1378, %vm1378
        %vm1411 = vmpackc.low %vm1379, %vm1379
        %vm1412 = vmpackc.low %vm1380, %vm1380
        %vm1413 = vmpackc.low %vm1381, %vm1381
        %vm1414 = vmpackc.low %vm1382, %vm1382
        %vm1415 = vmpackc.low %vm1383, %vm1383
        %vm1416 = vmpackc.low %vm1384, %vm1384
        %vm1417 = vmpackc.low %vm1385, %vm1385
        %v1418 = vsel %vm1386, 65537, 0
        %v1419 = vsel %vm1387, 65537, 0
        %v1420 = vsel %vm1388, 65537, 0
        %v1421 = vsel %vm1389, 65537, 0
        %v1422 = vsel %vm1390, 65537, 0
        %v1423 = vsel %vm1391, 65537, 0
        %v1424 = vsel %vm1392, 65537, 0
        %v1425 = vsel %vm1393, 65537, 0
        %v1426 = vsel %vm1394, 65537, 0
        %v1427 = vsel %vm1395, 65537, 0
        %v1428 = vsel %vm1396, 65537, 0
        %v1429 = vsel %vm1397, 65537, 0
        %v1430 = vsel %vm1398, 65537, 0
        %v1431 = vsel %vm1399, 65537, 0
        %v1432 = vsel %vm1400, 65537, 0
        %v1433 = vsel %vm1401, 65537, 0
        %v1434 = vsel %vm1402, 65537, 0
        %v1435 = vsel %vm1403, 65537, 0
        %v1436 = vsel %vm1404, 65537, 0
        %v1437 = vsel %vm1405, 65537, 0
        %v1438 = vsel %vm1406, 65537, 0
        %v1439 = vsel %vm1407, 65537, 0
        %v1440 = vsel %vm1408, 65537, 0
        %v1441 = vsel %vm1409, 65537, 0
        %v1442 = vsel %vm1410, 65537, 0
        %v1443 = vsel %vm1411, 65537, 0
        %v1444 = vsel %vm1412, 65537, 0
        %v1445 = vsel %vm1413, 65537, 0
        %v1446 = vsel %vm1414, 65537, 0
        %v1447 = vsel %vm1415, 65537, 0
        %v1448 = vsel %vm1416, 65537, 0
        %v1449 = vsel %vm1417, 65537, 0
        %v1450 = vunpack.c.l.b16 %v1418
        %v1451 = vunpack.c.l.b16 %v1419
        %v1452 = vunpack.c.l.b16 %v1420
        %v1453 = vunpack.c.l.b16 %v1421
        %v1454 = vunpack.c.l.b16 %v1422
        %v1455 = vunpack.c.l.b16 %v1423
        %v1456 = vunpack.c.l.b16 %v1424
        %v1457 = vunpack.c.l.b16 %v1425
        %v1458 = vunpack.c.l.b16 %v1426
        %v1459 = vunpack.c.l.b16 %v1427
        %v1460 = vunpack.c.l.b16 %v1428
        %v1461 = vunpack.c.l.b16 %v1429
        %v1462 = vunpack.c.l.b16 %v1430
        %v1463 = vunpack.c.l.b16 %v1431
        %v1464 = vunpack.c.l.b16 %v1432
        %v1465 = vunpack.c.l.b16 %v1433
        %v1466 = vunpack.c.l.b16 %v1434
        %v1467 = vunpack.c.l.b16 %v1435
        %v1468 = vunpack.c.l.b16 %v1436
        %v1469 = vunpack.c.l.b16 %v1437
        %v1470 = vunpack.c.l.b16 %v1438
        %v1471 = vunpack.c.l.b16 %v1439
        %v1472 = vunpack.c.l.b16 %v1440
        %v1473 = vunpack.c.l.b16 %v1441
        %v1474 = vunpack.c.l.b16 %v1442
        %v1475 = vunpack.c.l.b16 %v1443
        %v1476 = vunpack.c.l.b16 %v1444
        %v1477 = vunpack.c.l.b16 %v1445
        %v1478 = vunpack.c.l.b16 %v1446
        %v1479 = vunpack.c.l.b16 %v1447
        %v1480 = vunpack.c.l.b16 %v1448
        %v1481 = vunpack.c.l.b16 %v1449
        %v1482 = vpack.c.b16 %v1451, %v1450
        %v1483 = vpack.c.b16 %v1453, %v1452
        %v1484 = vpack.c.b16 %v1455, %v1454
        %v1485 = vpack.c.b16 %v1457, %v1456
        %v1486 = vpack.c.b16 %v1459, %v1458
        %v1487 = vpack.c.b16 %v1461, %v1460
        %v1488 = vpack.c.b16 %v1463, %v1462
        %v1489 = vpack.c.b16 %v1465, %v1464
        %v1490 = vpack.c.b16 %v1467, %v1466
        %v1491 = vpack.c.b16 %v1469, %v1468
        %v1492 = vpack.c.b16 %v1471, %v1470
        %v1493 = vpack.c.b16 %v1473, %v1472
        %v1494 = vpack.c.b16 %v1475, %v1474
        %v1495 = vpack.c.b16 %v1477, %v1476
        %v1496 = vpack.c.b16 %v1479, %v1478
        %v1497 = vpack.c.b16 %v1481, %v1480
        %v1499 = vshrl.u32 %v1482, 16
        %v1501 = vrot.slane %v1499, 7
        %v1502 = vshll.u32 %v1482, 16
        %v1504 = vor.u32 %v1501, %v1502
        %v1506 = vshrl.u32 %v1483, 16
        %v1508 = vrot.slane %v1506, 7
        %v1509 = vshll.u32 %v1483, 16
        %v1511 = vor.u32 %v1508, %v1509
        %v1512 = vsel %vm1125, %v1501, %v1511
        %v1514 = vshrl.u32 %v1484, 16
        %v1516 = vrot.slane %v1514, 7
        %v1517 = vshll.u32 %v1484, 16
        %v1519 = vor.u32 %v1516, %v1517
        %v1520 = vsel %vm1125, %v1508, %v1519
        %v1522 = vshrl.u32 %v1485, 16
        %v1524 = vrot.slane %v1522, 7
        %v1525 = vshll.u32 %v1485, 16
        %v1527 = vor.u32 %v1524, %v1525
        %v1528 = vsel %vm1125, %v1516, %v1527
        %v1530 = vshrl.u32 %v1486, 16
        %v1532 = vrot.slane %v1530, 7
        %v1533 = vshll.u32 %v1486, 16
        %v1535 = vor.u32 %v1532, %v1533
        %v1536 = vsel %vm1125, %v1524, %v1535
        %v1538 = vshrl.u32 %v1487, 16
        %v1540 = vrot.slane %v1538, 7
        %v1541 = vshll.u32 %v1487, 16
        %v1543 = vor.u32 %v1540, %v1541
        %v1544 = vsel %vm1125, %v1532, %v1543
        %v1546 = vshrl.u32 %v1488, 16
        %v1548 = vrot.slane %v1546, 7
        %v1549 = vshll.u32 %v1488, 16
        %v1551 = vor.u32 %v1548, %v1549
        %v1552 = vsel %vm1125, %v1540, %v1551
        %v1554 = vshrl.u32 %v1489, 16
        %v1556 = vrot.slane %v1554, 7
        %v1557 = vshll.u32 %v1489, 16
        %v1559 = vor.u32 %v1556, %v1557
        %v1560 = vsel %vm1125, %v1548, %v1559
        %v1562 = vshrl.u32 %v1490, 16
        %v1564 = vrot.slane %v1562, 7
        %v1565 = vshll.u32 %v1490, 16
        %v1567 = vor.u32 %v1564, %v1565
        %v1568 = vsel %vm1125, %v1556, %v1567
        %v1570 = vshrl.u32 %v1491, 16
        %v1572 = vrot.slane %v1570, 7
        %v1573 = vshll.u32 %v1491, 16
        %v1575 = vor.u32 %v1572, %v1573
        %v1576 = vsel %vm1125, %v1564, %v1575
        %v1578 = vshrl.u32 %v1492, 16
        %v1580 = vrot.slane %v1578, 7
        %v1581 = vshll.u32 %v1492, 16
        %v1583 = vor.u32 %v1580, %v1581
        %v1584 = vsel %vm1125, %v1572, %v1583
        %v1586 = vshrl.u32 %v1493, 16
        %v1588 = vrot.slane %v1586, 7
        %v1589 = vshll.u32 %v1493, 16
        %v1591 = vor.u32 %v1588, %v1589
        %v1592 = vsel %vm1125, %v1580, %v1591
        %v1594 = vshrl.u32 %v1494, 16
        %v1596 = vrot.slane %v1594, 7
        %v1597 = vshll.u32 %v1494, 16
        %v1599 = vor.u32 %v1596, %v1597
        %v1600 = vsel %vm1125, %v1588, %v1599
        %v1602 = vshrl.u32 %v1495, 16
        %v1604 = vrot.slane %v1602, 7
        %v1605 = vshll.u32 %v1495, 16
        %v1607 = vor.u32 %v1604, %v1605
        %v1608 = vsel %vm1125, %v1596, %v1607
        %v1610 = vshrl.u32 %v1496, 16
        %v1612 = vrot.slane %v1610, 7
        %v1613 = vshll.u32 %v1496, 16
        %v1615 = vor.u32 %v1612, %v1613
        %v1616 = vsel %vm1125, %v1604, %v1615
        %v1618 = vshrl.u32 %v1497, 16
        %v1620 = vrot.slane %v1618, 7
        %v1621 = vshll.u32 %v1497, 16
        %v1623 = vor.u32 %v1620, %v1621
        %v1624 = vsel %vm1125, %v1612, %v1623
        %vm1625 = vcmp.ne.s16.totalorder %v1504, 0
        %vm1626 = vcmp.ne.s16.totalorder %v1512, 0
        %vm1627 = vcmp.ne.s16.totalorder %v1520, 0
        %vm1628 = vcmp.ne.s16.totalorder %v1528, 0
        %vm1629 = vcmp.ne.s16.totalorder %v1536, 0
        %vm1630 = vcmp.ne.s16.totalorder %v1544, 0
        %vm1631 = vcmp.ne.s16.totalorder %v1552, 0
        %vm1632 = vcmp.ne.s16.totalorder %v1560, 0
        %vm1633 = vcmp.ne.s16.totalorder %v1568, 0
        %vm1634 = vcmp.ne.s16.totalorder %v1576, 0
        %vm1635 = vcmp.ne.s16.totalorder %v1584, 0
        %vm1636 = vcmp.ne.s16.totalorder %v1592, 0
        %vm1637 = vcmp.ne.s16.totalorder %v1600, 0
        %vm1638 = vcmp.ne.s16.totalorder %v1608, 0
        %vm1639 = vcmp.ne.s16.totalorder %v1616, 0
        %vm1640 = vcmp.ne.s16.totalorder %v1624, 0
        %vm1641 = vcmp.ne.s16.totalorder %v1620, 0
        %v1642 = vsel %vm1625, %v738, 0
        %v1643 = vsel %vm1626, %v739, 0
        %v1644 = vsel %vm1627, %v740, 0
        %v1645 = vsel %vm1628, %v741, 0
        %v1646 = vsel %vm1629, %v742, 0
        %v1647 = vsel %vm1630, %v743, 0
        %v1648 = vsel %vm1631, %v744, 0
        %v1649 = vsel %vm1632, %v745, 0
        %v1650 = vsel %vm1633, %v746, 0
        %v1651 = vsel %vm1634, %v747, 0
        %v1652 = vsel %vm1635, %v748, 0
        %v1653 = vsel %vm1636, %v749, 0
        %v1654 = vsel %vm1637, %v750, 0
        %v1655 = vsel %vm1638, %v751, 0
        %v1656 = vsel %vm1639, %v752, 0
        %v1657 = vsel %vm1640, %v753, 0
        %v1658 = vsel %vm1641, %v754, 0
        %v1660 = vshrl.u32 %v1642, 16
        %v1662 = vshll.u32 %v1642, 16
        %v1664 = vrot.slane %v1662, 1
        %v1665 = vor.u32 %v1660, %v1664
        %v1667 = vshll.u32 %v1643, 16
        %v1669 = vrot.slane %v1667, 1
        %v1670 = vsel %vm963, %v1665, %v1669
        %v1671 = vshrl.u32 %v1643, 16
        %v1673 = vor.u32 %v1671, %v1669
        %v1675 = vshll.u32 %v1644, 16
        %v1677 = vrot.slane %v1675, 1
        %v1678 = vsel %vm963, %v1673, %v1677
        %v1679 = vshrl.u32 %v1644, 16
        %v1681 = vor.u32 %v1679, %v1677
        %v1683 = vshll.u32 %v1645, 16
        %v1685 = vrot.slane %v1683, 1
        %v1686 = vsel %vm963, %v1681, %v1685
        %v1687 = vshrl.u32 %v1645, 16
        %v1689 = vor.u32 %v1687, %v1685
        %v1691 = vshll.u32 %v1646, 16
        %v1693 = vrot.slane %v1691, 1
        %v1694 = vsel %vm963, %v1689, %v1693
        %v1695 = vshrl.u32 %v1646, 16
        %v1697 = vor.u32 %v1695, %v1693
        %v1699 = vshll.u32 %v1647, 16
        %v1701 = vrot.slane %v1699, 1
        %v1702 = vsel %vm963, %v1697, %v1701
        %v1703 = vshrl.u32 %v1647, 16
        %v1705 = vor.u32 %v1703, %v1701
        %v1707 = vshll.u32 %v1648, 16
        %v1709 = vrot.slane %v1707, 1
        %v1710 = vsel %vm963, %v1705, %v1709
        %v1711 = vshrl.u32 %v1648, 16
        %v1713 = vor.u32 %v1711, %v1709
        %v1715 = vshll.u32 %v1649, 16
        %v1717 = vrot.slane %v1715, 1
        %v1718 = vsel %vm963, %v1713, %v1717
        %v1719 = vshrl.u32 %v1649, 16
        %v1721 = vor.u32 %v1719, %v1717
        %v1723 = vshll.u32 %v1650, 16
        %v1725 = vrot.slane %v1723, 1
        %v1726 = vsel %vm963, %v1721, %v1725
        %v1727 = vshrl.u32 %v1650, 16
        %v1729 = vor.u32 %v1727, %v1725
        %v1731 = vshll.u32 %v1651, 16
        %v1733 = vrot.slane %v1731, 1
        %v1734 = vsel %vm963, %v1729, %v1733
        %v1735 = vshrl.u32 %v1651, 16
        %v1737 = vor.u32 %v1735, %v1733
        %v1739 = vshll.u32 %v1652, 16
        %v1741 = vrot.slane %v1739, 1
        %v1742 = vsel %vm963, %v1737, %v1741
        %v1743 = vshrl.u32 %v1652, 16
        %v1745 = vor.u32 %v1743, %v1741
        %v1747 = vshll.u32 %v1653, 16
        %v1749 = vrot.slane %v1747, 1
        %v1750 = vsel %vm963, %v1745, %v1749
        %v1751 = vshrl.u32 %v1653, 16
        %v1753 = vor.u32 %v1751, %v1749
        %v1755 = vshll.u32 %v1654, 16
        %v1757 = vrot.slane %v1755, 1
        %v1758 = vsel %vm963, %v1753, %v1757
        %v1759 = vshrl.u32 %v1654, 16
        %v1761 = vor.u32 %v1759, %v1757
        %v1763 = vshll.u32 %v1655, 16
        %v1765 = vrot.slane %v1763, 1
        %v1766 = vsel %vm963, %v1761, %v1765
        %v1767 = vshrl.u32 %v1655, 16
        %v1769 = vor.u32 %v1767, %v1765
        %v1771 = vshll.u32 %v1656, 16
        %v1773 = vrot.slane %v1771, 1
        %v1774 = vsel %vm963, %v1769, %v1773
        %v1775 = vshrl.u32 %v1656, 16
        %v1777 = vor.u32 %v1775, %v1773
        %v1779 = vshll.u32 %v1657, 16
        %v1781 = vrot.slane %v1779, 1
        %v1782 = vsel %vm963, %v1777, %v1781
        %v1783 = vshrl.u32 %v1657, 16
        %v1785 = vor.u32 %v1783, %v1781
        %v1787 = vshll.u32 %v1658, 16
        %v1789 = vrot.slane %v1787, 1
        %v1790 = vsel %vm963, %v1785, %v1789
        %1807 = vst [vmem:[#allocation2 + $0x28] sm:$0xff] %v1670
        %1808 = vst [vmem:[#allocation2 + $0x40] sm:$0xff] %v1678
        %1809 = vst [vmem:[#allocation2 + $0x58] sm:$0xff] %v1686
        %1810 = vst [vmem:[#allocation2 + $0x70] sm:$0xff] %v1694
        %1811 = vst [vmem:[#allocation2 + $0x88] sm:$0xff] %v1702
        %1812 = vst [vmem:[#allocation2 + $0xa0] sm:$0xff] %v1710
        %1813 = vst [vmem:[#allocation2 + $0xb8] sm:$0xff] %v1718
        %1814 = vst [vmem:[#allocation2 + $0xd0] sm:$0xff] %v1726
        %1815 = vst [vmem:[#allocation2 + $0xe8] sm:$0xff] %v1734
        %1816 = vst [vmem:[#allocation2 + $0x100] sm:$0xff] %v1742
        %1817 = vst [vmem:[#allocation2 + $0x118] sm:$0xff] %v1750
        %1818 = vst [vmem:[#allocation2 + $0x130] sm:$0xff] %v1758
        %1819 = vst [vmem:[#allocation2 + $0x148] sm:$0xff] %v1766
        %1820 = vst [vmem:[#allocation2 + $0x160] sm:$0xff] %v1774
        %1821 = vst [vmem:[#allocation2 + $0x178] sm:$0xff] %v1782
        %1822 = vst [vmem:[#allocation2 + $0x190] sm:$0xff] %v1790
        %v1823 = vld [vmem:[#allocation2] sm:$0xff]
        %v1824 = vld [vmem:[#allocation2 + $0x8] sm:$0xff]
        %v1825 = vld [vmem:[#allocation2 + $0x10] sm:$0xff]
        %v1826 = vld [vmem:[#allocation2 + $0x18] sm:$0xff]
        %v1827 = vld [vmem:[#allocation2 + $0x20] sm:$0xff]
        %v1828 = vld [vmem:[#allocation2 + $0x28] sm:$0xff]
        %v1829 = vld [vmem:[#allocation2 + $0x30] sm:$0xff]
        %v1830 = vld [vmem:[#allocation2 + $0x38] sm:$0xff]
        %v1831 = vld [vmem:[#allocation2 + $0x40] sm:$0xff]
        %v1832 = vld [vmem:[#allocation2 + $0x48] sm:$0xff]
        %v1833 = vld [vmem:[#allocation2 + $0x50] sm:$0xff]
        %v1834 = vld [vmem:[#allocation2 + $0x58] sm:$0xff]
        %v1835 = vld [vmem:[#allocation2 + $0x60] sm:$0xff]
        %v1836 = vld [vmem:[#allocation2 + $0x68] sm:$0xff]
        %v1837 = vld [vmem:[#allocation2 + $0x70] sm:$0xff]
        %v1838 = vld [vmem:[#allocation2 + $0x78] sm:$0xff]
        %v1839 = vld [vmem:[#allocation2 + $0x80] sm:$0xff]
        %v1840 = vld [vmem:[#allocation2 + $0x88] sm:$0xff]
        %v1841 = vld [vmem:[#allocation2 + $0x90] sm:$0xff]
        %v1842 = vld [vmem:[#allocation2 + $0x98] sm:$0xff]
        %v1843 = vld [vmem:[#allocation2 + $0xa0] sm:$0xff]
        %v1844 = vld [vmem:[#allocation2 + $0xa8] sm:$0xff]
        %v1845 = vld [vmem:[#allocation2 + $0xb0] sm:$0xff]
        %v1846 = vld [vmem:[#allocation2 + $0xb8] sm:$0xff]
        %v1847 = vld [vmem:[#allocation2 + $0xc0] sm:$0xff]
        %v1848 = vld [vmem:[#allocation2 + $0xc8] sm:$0xff]
        %v1849 = vld [vmem:[#allocation2 + $0xd0] sm:$0xff]
        %v1850 = vld [vmem:[#allocation2 + $0xd8] sm:$0xff]
        %v1851 = vld [vmem:[#allocation2 + $0xe0] sm:$0xff]
        %v1852 = vld [vmem:[#allocation2 + $0xe8] sm:$0xff]
        %v1853 = vld [vmem:[#allocation2 + $0xf0] sm:$0xff]
        %v1854 = vld [vmem:[#allocation2 + $0xf8] sm:$0xff]
        %v1855 = vld [vmem:[#allocation2 + $0x100] sm:$0xff]
        %v1856 = vld [vmem:[#allocation2 + $0x108] sm:$0xff]
        %v1857 = vld [vmem:[#allocation2 + $0x110] sm:$0xff]
        %v1858 = vld [vmem:[#allocation2 + $0x118] sm:$0xff]
        %v1859 = vld [vmem:[#allocation2 + $0x120] sm:$0xff]
        %v1860 = vld [vmem:[#allocation2 + $0x128] sm:$0xff]
        %v1861 = vld [vmem:[#allocation2 + $0x130] sm:$0xff]
        %v1862 = vld [vmem:[#allocation2 + $0x138] sm:$0xff]
        %v1863 = vld [vmem:[#allocation2 + $0x140] sm:$0xff]
        %v1864 = vld [vmem:[#allocation2 + $0x148] sm:$0xff]
        %v1865 = vld [vmem:[#allocation2 + $0x150] sm:$0xff]
        %v1866 = vld [vmem:[#allocation2 + $0x158] sm:$0xff]
        %v1867 = vld [vmem:[#allocation2 + $0x160] sm:$0xff]
        %v1868 = vld [vmem:[#allocation2 + $0x168] sm:$0xff]
        %v1869 = vld [vmem:[#allocation2 + $0x170] sm:$0xff]
        %v1870 = vld [vmem:[#allocation2 + $0x178] sm:$0xff]
        %v1871 = vld [vmem:[#allocation6] sm:$0xf]
        %v1872 = vld [vmem:[#allocation6 + $0x4] sm:$0xf]
        %v1873 = vld [vmem:[#allocation6 + $0x8] sm:$0xf]
        %v1874 = vld [vmem:[#allocation6 + $0xc] sm:$0xf]
        %v1875 = vld [vmem:[#allocation6 + $0x10] sm:$0xf]
        %v1876 = vld [vmem:[#allocation6 + $0x14] sm:$0xf]
        %v1877 = vld [vmem:[#allocation6 + $0x18] sm:$0xf]
        %v1878 = vld [vmem:[#allocation6 + $0x1c] sm:$0xf]
        %v1879 = vld [vmem:[#allocation6 + $0x20] sm:$0xf]
        %v1880 = vld [vmem:[#allocation6 + $0x24] sm:$0xf]
        %v1881 = vld [vmem:[#allocation6 + $0x28] sm:$0xf]
        %v1882 = vld [vmem:[#allocation6 + $0x2c] sm:$0xf]
        %v1883 = vld [vmem:[#allocation6 + $0x30] sm:$0xf]
        %v1884 = vld [vmem:[#allocation6 + $0x34] sm:$0xf]
        %v1885 = vld [vmem:[#allocation6 + $0x38] sm:$0xf]
        %v1886 = vld [vmem:[#allocation6 + $0x3c] sm:$0xf]
        %v1887 = vld [vmem:[#allocation6 + $0x40] sm:$0xf]
        %v1888 = vld [vmem:[#allocation6 + $0x44] sm:$0xf]
        %v1889 = vld [vmem:[#allocation6 + $0x48] sm:$0xf]
        %v1890 = vld [vmem:[#allocation6 + $0x4c] sm:$0xf]
        %v1891 = vld [vmem:[#allocation6 + $0x50] sm:$0xf]
        %v1892 = vld [vmem:[#allocation6 + $0x54] sm:$0xf]
        %v1893 = vld [vmem:[#allocation6 + $0x58] sm:$0xf]
        %v1894 = vld [vmem:[#allocation6 + $0x5c] sm:$0xf]
        %v1895 = vld [vmem:[#allocation6 + $0x60] sm:$0xf]
        %v1896 = vld [vmem:[#allocation6 + $0x64] sm:$0xf]
        %v1897 = vld [vmem:[#allocation6 + $0x68] sm:$0xf]
        %v1898 = vld [vmem:[#allocation6 + $0x6c] sm:$0xf]
        %v1899 = vld [vmem:[#allocation6 + $0x70] sm:$0xf]
        %v1900 = vld [vmem:[#allocation6 + $0x74] sm:$0xf]
        %v1901 = vld [vmem:[#allocation6 + $0x78] sm:$0xf]
        %v1902 = vld [vmem:[#allocation6 + $0x7c] sm:$0xf]
        %v1903 = vld [vmem:[#allocation6 + $0x80] sm:$0xf]
        %v1904 = vld [vmem:[#allocation6 + $0x84] sm:$0xf]
        %v1905 = vld [vmem:[#allocation6 + $0x88] sm:$0xf]
        %v1906 = vld [vmem:[#allocation6 + $0x8c] sm:$0xf]
        %v1907 = vld [vmem:[#allocation6 + $0x90] sm:$0xf]
        %v1908 = vld [vmem:[#allocation6 + $0x94] sm:$0xf]
        %v1909 = vld [vmem:[#allocation6 + $0x98] sm:$0xf]
        %v1910 = vld [vmem:[#allocation6 + $0x9c] sm:$0xf]
        %v1911 = vld [vmem:[#allocation6 + $0xa0] sm:$0xf]
        %v1912 = vld [vmem:[#allocation6 + $0xa4] sm:$0xf]
        %v1913 = vld [vmem:[#allocation6 + $0xa8] sm:$0xf]
        %v1914 = vld [vmem:[#allocation6 + $0xac] sm:$0xf]
        %v1915 = vld [vmem:[#allocation6 + $0xb0] sm:$0xf]
        %v1916 = vld [vmem:[#allocation6 + $0xb4] sm:$0xf]
        %v1917 = vld [vmem:[#allocation6 + $0xb8] sm:$0xf]
        %v1918 = vld [vmem:[#allocation6 + $0xbc] sm:$0xf]
        %v1919 = vld [vmem:[#allocation2 + $0x180] sm:$0xff]
        %v1920 = vld [vmem:[#allocation2 + $0x188] sm:$0xff]
        %v1921 = vld [vmem:[#allocation2 + $0x190] sm:$0xff]
        %s1922 = scalar_lea.vmem [#allocation6], 192
        %v1923 = vld [vmem:[%s1922] sm:$0xf]
        %v1924 = vld [vmem:[%s1922 + $0x4] sm:$0xf]
        %v1925 = vld [vmem:[%s1922 + $0x8] sm:$0xf]
        %v1926 = vld [vmem:[%s1922 + $0xc] sm:$0xf]
        %v1927 = vld [vmem:[%s1922 + $0x10] sm:$0xf]
        %v1928 = vld [vmem:[%s1922 + $0x14] sm:$0xf]
        %v1929 = vld [vmem:[%s1922 + $0x18] sm:$0xf]
        %v1930 = vld [vmem:[%s1922 + $0x1c] sm:$0xf]
        %v1931 = vld [vmem:[%s1922 + $0x20] sm:$0xf]
        %v1932 = vld [vmem:[%s1922 + $0x24] sm:$0xf]
        %v1933 = vld [vmem:[%s1922 + $0x28] sm:$0xf]
        %v1934 = vld [vmem:[%s1922 + $0x2c] sm:$0xf]
        %v1935 = vld [vmem:[%s1922 + $0x30] sm:$0xf]
        %v1936 = vld [vmem:[%s1922 + $0x34] sm:$0xf]
        %v1937 = vld [vmem:[%s1922 + $0x38] sm:$0xf]
        %v1938 = vld [vmem:[%s1922 + $0x3c] sm:$0xf]
        %v1939 = vld [vmem:[%s1922 + $0x40] sm:$0xf]
        %v1940 = vld [vmem:[%s1922 + $0x44] sm:$0xf]
        %v1941 = vld [vmem:[%s1922 + $0x48] sm:$0xf]
        %v1942 = vld [vmem:[%s1922 + $0x4c] sm:$0xf]
        %v1943 = vld [vmem:[%s1922 + $0x50] sm:$0xf]
        %v1944 = vld [vmem:[%s1922 + $0x54] sm:$0xf]
        %v1945 = vld [vmem:[%s1922 + $0x58] sm:$0xf]
        %v1946 = vld [vmem:[%s1922 + $0x5c] sm:$0xf]
        %v1947 = vld [vmem:[%s1922 + $0x60] sm:$0xf]
        %v1948 = vld [vmem:[%s1922 + $0x64] sm:$0xf]
        %v1949 = vld [vmem:[%s1922 + $0x68] sm:$0xf]
        %v1950 = vld [vmem:[%s1922 + $0x6c] sm:$0xf]
        %v1951 = vld [vmem:[%s1922 + $0x70] sm:$0xf]
        %v1952 = vld [vmem:[%s1922 + $0x74] sm:$0xf]
        %v1953 = vld [vmem:[%s1922 + $0x78] sm:$0xf]
        %v1954 = vld [vmem:[%s1922 + $0x7c] sm:$0xf]
        %v1955 = vld [vmem:[%s1922 + $0x80] sm:$0xf]
        %v1956 = vld [vmem:[%s1922 + $0x84] sm:$0xf]
        %v1957 = vld [vmem:[%s1922 + $0x88] sm:$0xf]
        %v1958 = vld [vmem:[%s1922 + $0x8c] sm:$0xf]
        %v1959 = vld [vmem:[%s1922 + $0x90] sm:$0xf]
        %v1960 = vld [vmem:[%s1922 + $0x94] sm:$0xf]
        %v1961 = vld [vmem:[%s1922 + $0x98] sm:$0xf]
        %v1962 = vld [vmem:[%s1922 + $0x9c] sm:$0xf]
        %v1963 = vld [vmem:[%s1922 + $0xa0] sm:$0xf]
        %v1964 = vld [vmem:[%s1922 + $0xa4] sm:$0xf]
        %v1965 = vld [vmem:[%s1922 + $0xa8] sm:$0xf]
        %v1966 = vld [vmem:[%s1922 + $0xac] sm:$0xf]
        %v1967 = vld [vmem:[%s1922 + $0xb0] sm:$0xf]
        %v1968 = vld [vmem:[%s1922 + $0xb4] sm:$0xf]
        %v1969 = vld [vmem:[%s1922 + $0xb8] sm:$0xf]
        %v1970 = vld [vmem:[%s1922 + $0xbc] sm:$0xf]
        %v2019 = vunpack.c.l.b16 %v1923
        %v2020 = vunpack.c.l.b16 %v1924
        %v2021 = vunpack.c.l.b16 %v1925
        %v2022 = vunpack.c.l.b16 %v1926
        %v2023 = vunpack.c.l.b16 %v1927
        %v2024 = vunpack.c.l.b16 %v1928
        %v2025 = vunpack.c.l.b16 %v1929
        %v2026 = vunpack.c.l.b16 %v1930
        %v2027 = vunpack.c.l.b16 %v1931
        %v2028 = vunpack.c.l.b16 %v1932
        %v2029 = vunpack.c.l.b16 %v1933
        %v2030 = vunpack.c.l.b16 %v1934
        %v2031 = vunpack.c.l.b16 %v1935
        %v2032 = vunpack.c.l.b16 %v1936
        %v2033 = vunpack.c.l.b16 %v1937
        %v2034 = vunpack.c.l.b16 %v1938
        %v2035 = vunpack.c.l.b16 %v1939
        %v2036 = vunpack.c.l.b16 %v1940
        %v2037 = vunpack.c.l.b16 %v1941
        %v2038 = vunpack.c.l.b16 %v1942
        %v2039 = vunpack.c.l.b16 %v1943
        %v2040 = vunpack.c.l.b16 %v1944
        %v2041 = vunpack.c.l.b16 %v1945
        %v2042 = vunpack.c.l.b16 %v1946
        %v2043 = vunpack.c.l.b16 %v1947
        %v2044 = vunpack.c.l.b16 %v1948
        %v2045 = vunpack.c.l.b16 %v1949
        %v2046 = vunpack.c.l.b16 %v1950
        %v2047 = vunpack.c.l.b16 %v1951
        %v2048 = vunpack.c.l.b16 %v1952
        %v2049 = vunpack.c.l.b16 %v1953
        %v2050 = vunpack.c.l.b16 %v1954
        %v2051 = vunpack.c.l.b16 %v1955
        %v2052 = vunpack.c.l.b16 %v1956
        %v2053 = vunpack.c.l.b16 %v1957
        %v2054 = vunpack.c.l.b16 %v1958
        %v2055 = vunpack.c.l.b16 %v1959
        %v2056 = vunpack.c.l.b16 %v1960
        %v2057 = vunpack.c.l.b16 %v1961
        %v2058 = vunpack.c.l.b16 %v1962
        %v2059 = vunpack.c.l.b16 %v1963
        %v2060 = vunpack.c.l.b16 %v1964
        %v2061 = vunpack.c.l.b16 %v1965
        %v2062 = vunpack.c.l.b16 %v1966
        %v2063 = vunpack.c.l.b16 %v1967
        %v2064 = vunpack.c.l.b16 %v1968
        %v2065 = vunpack.c.l.b16 %v1969
        %v2066 = vunpack.c.l.b16 %v1970
        %v2067 = vpack.c.b16 %v2020, %v2019
        %v2068 = vpack.c.b16 %v2022, %v2021
        %v2069 = vpack.c.b16 %v2024, %v2023
        %v2070 = vpack.c.b16 %v2026, %v2025
        %v2071 = vpack.c.b16 %v2028, %v2027
        %v2072 = vpack.c.b16 %v2030, %v2029
        %v2073 = vpack.c.b16 %v2032, %v2031
        %v2074 = vpack.c.b16 %v2034, %v2033
        %v2075 = vpack.c.b16 %v2036, %v2035
        %v2076 = vpack.c.b16 %v2038, %v2037
        %v2077 = vpack.c.b16 %v2040, %v2039
        %v2078 = vpack.c.b16 %v2042, %v2041
        %v2079 = vpack.c.b16 %v2044, %v2043
        %v2080 = vpack.c.b16 %v2046, %v2045
        %v2081 = vpack.c.b16 %v2048, %v2047
        %v2082 = vpack.c.b16 %v2050, %v2049
        %v2083 = vpack.c.b16 %v2052, %v2051
        %v2084 = vpack.c.b16 %v2054, %v2053
        %v2085 = vpack.c.b16 %v2056, %v2055
        %v2086 = vpack.c.b16 %v2058, %v2057
        %v2087 = vpack.c.b16 %v2060, %v2059
        %v2088 = vpack.c.b16 %v2062, %v2061
        %v2089 = vpack.c.b16 %v2064, %v2063
        %v2090 = vpack.c.b16 %v2066, %v2065
        %2115 = vmatprep.subr.bf16.mxu0 0
        %2116 = vmatpush1.bf16.msra.mxu0 %v2067
        %2117 = vmatprep.subr.bf16.mxu0 0
        %2118 = vmatpush1.bf16.msra.mxu0 %v2068
        %2119 = vmatprep.subr.bf16.mxu0 0
        %2120 = vmatpush1.bf16.msra.mxu0 %v2069
        %2121 = vmatprep.subr.bf16.mxu0 0
        %2122 = vmatpush1.bf16.msra.mxu0 %v2070
        %2123 = vmatprep.subr.bf16.mxu0 0
        %2124 = vmatpush1.bf16.msra.mxu0 %v2071
        %2125 = vmatprep.subr.bf16.mxu0 0
        %2126 = vmatpush1.bf16.msra.mxu0 %v2072
        %2127 = vmatprep.subr.bf16.mxu0 0
        %2128 = vmatpush1.bf16.msra.mxu0 %v2073
        %2129 = vmatprep.subr.bf16.mxu0 0
        %2130 = vmatpush1.bf16.msra.mxu0 %v2074
        %2131 = vmatprep.subr.bf16.mxu0 0
        %2132 = vmatpush1.bf16.msra.mxu0 %v2075
        %2133 = vmatprep.subr.bf16.mxu0 0
        %2134 = vmatpush1.bf16.msra.mxu0 %v2076
        %2135 = vmatprep.subr.bf16.mxu0 0
        %2136 = vmatpush1.bf16.msra.mxu0 %v2077
        %2137 = vmatprep.subr.bf16.mxu0 0
        %2138 = vmatpush1.bf16.msra.mxu0 %v2078
        %2139 = vmatprep.subr.bf16.mxu0 0
        %2140 = vmatpush1.bf16.msra.mxu0 %v2079
        %2141 = vmatprep.subr.bf16.mxu0 0
        %2142 = vmatpush1.bf16.msra.mxu0 %v2080
        %2143 = vmatprep.subr.bf16.mxu0 0
        %2144 = vmatpush1.bf16.msra.mxu0 %v2081
        %2145 = vmatprep.subr.bf16.mxu0 0
        %2146 = vmatpush1.bf16.msra.mxu0 %v2082
        %2147 = vmatprep.mubr.bf16.mxu0 %v1827
        %2148 = vmatmul.mubr.bf16.gmra.mrb[0].mxu0 %v1826
        %v2149 = vpop.f32.mrb[0].mxu0
        %v2150 = vadd.f32 0.0, %v2149
        %v2151 = vpop.f32.mrb[0].mxu0
        %v2152 = vpop.f32.mrb[0].mxu0
        %v2153 = vadd.f32 0.0, %v2152
        %v2154 = vpop.f32.mrb[0].mxu0
        %2155 = vmatprep.mubr.bf16.mxu0 %v1830
        %2156 = vmatmul.mubr.bf16.gmra.mrb[0].mxu0 %v1829
        %v2157 = vpop.f32.mrb[0].mxu0
        %v2158 = vadd.f32 0.0, %v2157
        %v2159 = vpop.f32.mrb[0].mxu0
        %v2160 = vpop.f32.mrb[0].mxu0
        %v2161 = vadd.f32 0.0, %v2160
        %v2162 = vpop.f32.mrb[0].mxu0
        %2163 = vmatprep.mubr.bf16.mxu0 %v1833
        %2164 = vmatmul.mubr.bf16.gmra.mrb[0].mxu0 %v1832
        %v2165 = vpop.f32.mrb[0].mxu0
        %v2166 = vadd.f32 0.0, %v2165
        %v2167 = vpop.f32.mrb[0].mxu0
        %v2168 = vpop.f32.mrb[0].mxu0
        %v2169 = vadd.f32 0.0, %v2168
        %v2170 = vpop.f32.mrb[0].mxu0
        %2171 = vmatprep.mubr.bf16.mxu0 %v1836
        %2172 = vmatmul.mubr.bf16.gmra.mrb[0].mxu0 %v1835
        %v2173 = vpop.f32.mrb[0].mxu0
        %v2174 = vadd.f32 0.0, %v2173
        %v2175 = vpop.f32.mrb[0].mxu0
        %v2176 = vpop.f32.mrb[0].mxu0
        %v2177 = vadd.f32 0.0, %v2176
        %v2178 = vpop.f32.mrb[0].mxu0
        %2179 = vmatprep.mubr.bf16.mxu0 %v1839
        %2180 = vmatmul.mubr.bf16.gmra.mrb[0].mxu0 %v1838
        %v2181 = vpop.f32.mrb[0].mxu0
        %v2182 = vadd.f32 0.0, %v2181
        %v2183 = vpop.f32.mrb[0].mxu0
        %v2184 = vpop.f32.mrb[0].mxu0
        %v2185 = vadd.f32 0.0, %v2184
        %v2186 = vpop.f32.mrb[0].mxu0
        %2187 = vmatprep.mubr.bf16.mxu0 %v1842
        %2188 = vmatmul.mubr.bf16.gmra.mrb[0].mxu0 %v1841
        %v2189 = vpop.f32.mrb[0].mxu0
        %v2190 = vadd.f32 0.0, %v2189
        %v2191 = vpop.f32.mrb[0].mxu0
        %v2192 = vpop.f32.mrb[0].mxu0
        %v2193 = vadd.f32 0.0, %v2192
        %v2194 = vpop.f32.mrb[0].mxu0
        %2195 = vmatprep.mubr.bf16.mxu0 %v1845
        %2196 = vmatmul.mubr.bf16.gmra.mrb[0].mxu0 %v1844
        %v2197 = vpop.f32.mrb[0].mxu0
        %v2198 = vadd.f32 0.0, %v2197
        %v2199 = vpop.f32.mrb[0].mxu0
        %v2200 = vpop.f32.mrb[0].mxu0
        %v2201 = vadd.f32 0.0, %v2200
        %v2202 = vpop.f32.mrb[0].mxu0
        %2203 = vmatprep.mubr.bf16.mxu0 %v1848
        %2204 = vmatmul.mubr.bf16.gmra.mrb[0].mxu0 %v1847
        %v2205 = vpop.f32.mrb[0].mxu0
        %v2206 = vadd.f32 0.0, %v2205
        %v2207 = vpop.f32.mrb[0].mxu0
        %v2208 = vpop.f32.mrb[0].mxu0
        %v2209 = vadd.f32 0.0, %v2208
        %v2210 = vpop.f32.mrb[0].mxu0
        %2211 = vmatprep.mubr.bf16.mxu0 %v1851
        %2212 = vmatmul.mubr.bf16.gmra.mrb[0].mxu0 %v1850
        %v2213 = vpop.f32.mrb[0].mxu0
        %v2214 = vadd.f32 0.0, %v2213
        %v2215 = vpop.f32.mrb[0].mxu0
        %v2216 = vpop.f32.mrb[0].mxu0
        %v2217 = vadd.f32 0.0, %v2216
        %v2218 = vpop.f32.mrb[0].mxu0
        %2219 = vmatprep.mubr.bf16.mxu0 %v1854
        %2220 = vmatmul.mubr.bf16.gmra.mrb[0].mxu0 %v1853
        %v2221 = vpop.f32.mrb[0].mxu0
        %v2222 = vadd.f32 0.0, %v2221
        %v2223 = vpop.f32.mrb[0].mxu0
        %v2224 = vpop.f32.mrb[0].mxu0
        %v2225 = vadd.f32 0.0, %v2224
        %v2226 = vpop.f32.mrb[0].mxu0
        %2227 = vmatprep.mubr.bf16.mxu0 %v1857
        %2228 = vmatmul.mubr.bf16.gmra.mrb[0].mxu0 %v1856
        %v2229 = vpop.f32.mrb[0].mxu0
        %v2230 = vadd.f32 0.0, %v2229
        %v2231 = vpop.f32.mrb[0].mxu0
        %v2232 = vpop.f32.mrb[0].mxu0
        %v2233 = vadd.f32 0.0, %v2232
        %v2234 = vpop.f32.mrb[0].mxu0
        %2235 = vmatprep.mubr.bf16.mxu0 %v1860
        %2236 = vmatmul.mubr.bf16.gmra.mrb[0].mxu0 %v1859
        %v2237 = vpop.f32.mrb[0].mxu0
        %v2238 = vadd.f32 0.0, %v2237
        %v2239 = vpop.f32.mrb[0].mxu0
        %v2240 = vpop.f32.mrb[0].mxu0
        %v2241 = vadd.f32 0.0, %v2240
        %v2242 = vpop.f32.mrb[0].mxu0
        %2243 = vmatprep.mubr.bf16.mxu0 %v1863
        %2244 = vmatmul.mubr.bf16.gmra.mrb[0].mxu0 %v1862
        %v2245 = vpop.f32.mrb[0].mxu0
        %v2246 = vadd.f32 0.0, %v2245
        %v2247 = vpop.f32.mrb[0].mxu0
        %v2248 = vpop.f32.mrb[0].mxu0
        %v2249 = vadd.f32 0.0, %v2248
        %v2250 = vpop.f32.mrb[0].mxu0
        %2251 = vmatprep.mubr.bf16.mxu0 %v1866
        %2252 = vmatmul.mubr.bf16.gmra.mrb[0].mxu0 %v1865
        %v2253 = vpop.f32.mrb[0].mxu0
        %v2254 = vadd.f32 0.0, %v2253
        %v2255 = vpop.f32.mrb[0].mxu0
        %v2256 = vpop.f32.mrb[0].mxu0
        %v2257 = vadd.f32 0.0, %v2256
        %v2258 = vpop.f32.mrb[0].mxu0
        %2259 = vmatprep.mubr.bf16.mxu0 %v1869
        %2260 = vmatmul.mubr.bf16.gmra.mrb[0].mxu0 %v1868
        %v2261 = vpop.f32.mrb[0].mxu0
        %v2262 = vadd.f32 0.0, %v2261
        %v2263 = vpop.f32.mrb[0].mxu0
        %v2264 = vpop.f32.mrb[0].mxu0
        %v2265 = vadd.f32 0.0, %v2264
        %v2266 = vpop.f32.mrb[0].mxu0
        %2267 = vmatprep.mubr.bf16.mxu0 %v1920
        %2268 = vmatmul.mubr.bf16.gmra.mrb[0].mxu0 %v1919
        %v2269 = vpop.f32.mrb[0].mxu0
        %v2270 = vadd.f32 0.0, %v2269
        %v2271 = vpop.f32.mrb[0].mxu0
        %v2272 = vpop.f32.mrb[0].mxu0
        %v2273 = vadd.f32 0.0, %v2272
        %v2274 = vpop.f32.mrb[0].mxu0
        %2275 = vdwg.mxu0
        %2276 = vmatprep.subr.bf16.mxu0 0
        %2277 = vmatpush1.bf16.msra.mxu0 %v2083
        %2278 = vmatprep.subr.bf16.mxu0 0
        %2279 = vmatpush1.bf16.msra.mxu0 %v2084
        %2280 = vmatprep.subr.bf16.mxu0 0
        %2281 = vmatpush1.bf16.msra.mxu0 %v2085
        %2282 = vmatprep.subr.bf16.mxu0 0
        %2283 = vmatpush1.bf16.msra.mxu0 %v2086
        %2284 = vmatprep.subr.bf16.mxu0 0
        %2285 = vmatpush1.bf16.msra.mxu0 %v2087
        %2286 = vmatprep.subr.bf16.mxu0 0
        %2287 = vmatpush1.bf16.msra.mxu0 %v2088
        %2288 = vmatprep.subr.bf16.mxu0 0
        %2289 = vmatpush1.bf16.msra.mxu0 %v2089
        %2290 = vmatprep.subr.bf16.mxu0 0
        %2291 = vmatpush1.bf16.msra.mxu0 %v2090
        %2292 = vmatprep.subr.bf16.mxu0 0
        %2293 = vmatpush1.bf16.msra.mxu0 0
        %2294 = vmatprep.subr.bf16.mxu0 0
        %2295 = vmatpush1.bf16.msra.mxu0 0
        %2296 = vmatprep.subr.bf16.mxu0 0
        %2297 = vmatpush1.bf16.msra.mxu0 0
        %2298 = vmatprep.subr.bf16.mxu0 0
        %2299 = vmatpush1.bf16.msra.mxu0 0
        %2300 = vmatprep.subr.bf16.mxu0 0
        %2301 = vmatpush1.bf16.msra.mxu0 0
        %2302 = vmatprep.subr.bf16.mxu0 0
        %2303 = vmatpush1.bf16.msra.mxu0 0
        %2304 = vmatprep.subr.bf16.mxu0 0
        %2305 = vmatpush1.bf16.msra.mxu0 0
        %2306 = vmatprep.subr.bf16.mxu0 0
        %2307 = vmatpush1.bf16.msra.mxu0 0
        %2308 = vmatprep.mubr.bf16.mxu0 0
        %2309 = vmatmul.mubr.bf16.gmra.mrb[0].mxu0 %v1828
        %v2310 = vpop.f32.mrb[0].mxu0
        %v2311 = vadd.f32 %v2150, %v2310
        %v2312 = vpop.f32.mrb[0].mxu0
        %v2313 = vpop.f32.mrb[0].mxu0
        %v2314 = vadd.f32 %v2153, %v2313
        %v2315 = vpop.f32.mrb[0].mxu0
        %2316 = vmatprep.mubr.bf16.mxu0 0
        %2317 = vmatmul.mubr.bf16.gmra.mrb[0].mxu0 %v1831
        %v2318 = vpop.f32.mrb[0].mxu0
        %v2319 = vadd.f32 %v2158, %v2318
        %v2320 = vpop.f32.mrb[0].mxu0
        %v2321 = vpop.f32.mrb[0].mxu0
        %v2322 = vadd.f32 %v2161, %v2321
        %v2323 = vpop.f32.mrb[0].mxu0
        %2324 = vmatprep.mubr.bf16.mxu0 0
        %2325 = vmatmul.mubr.bf16.gmra.mrb[0].mxu0 %v1834
        %v2326 = vpop.f32.mrb[0].mxu0
        %v2327 = vadd.f32 %v2166, %v2326
        %v2328 = vpop.f32.mrb[0].mxu0
        %v2329 = vpop.f32.mrb[0].mxu0
        %v2330 = vadd.f32 %v2169, %v2329
        %v2331 = vpop.f32.mrb[0].mxu0
        %2332 = vmatprep.mubr.bf16.mxu0 0
        %2333 = vmatmul.mubr.bf16.gmra.mrb[0].mxu0 %v1837
        %v2334 = vpop.f32.mrb[0].mxu0
        %v2335 = vadd.f32 %v2174, %v2334
        %v2336 = vpop.f32.mrb[0].mxu0
        %v2337 = vpop.f32.mrb[0].mxu0
        %v2338 = vadd.f32 %v2177, %v2337
        %v2339 = vpop.f32.mrb[0].mxu0
        %2340 = vmatprep.mubr.bf16.mxu0 0
        %2341 = vmatmul.mubr.bf16.gmra.mrb[0].mxu0 %v1840
        %v2342 = vpop.f32.mrb[0].mxu0
        %v2343 = vadd.f32 %v2182, %v2342
        %v2344 = vpop.f32.mrb[0].mxu0
        %v2345 = vpop.f32.mrb[0].mxu0
        %v2346 = vadd.f32 %v2185, %v2345
        %v2347 = vpop.f32.mrb[0].mxu0
        %2348 = vmatprep.mubr.bf16.mxu0 0
        %2349 = vmatmul.mubr.bf16.gmra.mrb[0].mxu0 %v1843
        %v2350 = vpop.f32.mrb[0].mxu0
        %v2351 = vadd.f32 %v2190, %v2350
        %v2352 = vpop.f32.mrb[0].mxu0
        %v2353 = vpop.f32.mrb[0].mxu0
        %v2354 = vadd.f32 %v2193, %v2353
        %v2355 = vpop.f32.mrb[0].mxu0
        %2356 = vmatprep.mubr.bf16.mxu0 0
        %2357 = vmatmul.mubr.bf16.gmra.mrb[0].mxu0 %v1846
        %v2358 = vpop.f32.mrb[0].mxu0
        %v2359 = vadd.f32 %v2198, %v2358
        %v2360 = vpop.f32.mrb[0].mxu0
        %v2361 = vpop.f32.mrb[0].mxu0
        %v2362 = vadd.f32 %v2201, %v2361
        %v2363 = vpop.f32.mrb[0].mxu0
        %2364 = vmatprep.mubr.bf16.mxu0 0
        %2365 = vmatmul.mubr.bf16.gmra.mrb[0].mxu0 %v1849
        %v2366 = vpop.f32.mrb[0].mxu0
        %v2367 = vadd.f32 %v2206, %v2366
        %v2368 = vpop.f32.mrb[0].mxu0
        %v2369 = vpop.f32.mrb[0].mxu0
        %v2370 = vadd.f32 %v2209, %v2369
        %v2371 = vpop.f32.mrb[0].mxu0
        %2372 = vmatprep.mubr.bf16.mxu0 0
        %2373 = vmatmul.mubr.bf16.gmra.mrb[0].mxu0 %v1852
        %v2374 = vpop.f32.mrb[0].mxu0
        %v2375 = vadd.f32 %v2214, %v2374
        %v2376 = vpop.f32.mrb[0].mxu0
        %v2377 = vpop.f32.mrb[0].mxu0
        %v2378 = vadd.f32 %v2217, %v2377
        %v2379 = vpop.f32.mrb[0].mxu0
        %2380 = vmatprep.mubr.bf16.mxu0 0
        %2381 = vmatmul.mubr.bf16.gmra.mrb[0].mxu0 %v1855
        %v2382 = vpop.f32.mrb[0].mxu0
        %v2383 = vadd.f32 %v2222, %v2382
        %v2384 = vpop.f32.mrb[0].mxu0
        %v2385 = vpop.f32.mrb[0].mxu0
        %v2386 = vadd.f32 %v2225, %v2385
        %v2387 = vpop.f32.mrb[0].mxu0
        %2388 = vmatprep.mubr.bf16.mxu0 0
        %2389 = vmatmul.mubr.bf16.gmra.mrb[0].mxu0 %v1858
        %v2390 = vpop.f32.mrb[0].mxu0
        %v2391 = vadd.f32 %v2230, %v2390
        %v2392 = vpop.f32.mrb[0].mxu0
        %v2393 = vpop.f32.mrb[0].mxu0
        %v2394 = vadd.f32 %v2233, %v2393
        %v2395 = vpop.f32.mrb[0].mxu0
        %2396 = vmatprep.mubr.bf16.mxu0 0
        %2397 = vmatmul.mubr.bf16.gmra.mrb[0].mxu0 %v1861
        %v2398 = vpop.f32.mrb[0].mxu0
        %v2399 = vadd.f32 %v2238, %v2398
        %v2400 = vpop.f32.mrb[0].mxu0
        %v2401 = vpop.f32.mrb[0].mxu0
        %v2402 = vadd.f32 %v2241, %v2401
        %v2403 = vpop.f32.mrb[0].mxu0
        %2404 = vmatprep.mubr.bf16.mxu0 0
        %2405 = vmatmul.mubr.bf16.gmra.mrb[0].mxu0 %v1864
        %v2406 = vpop.f32.mrb[0].mxu0
        %v2407 = vadd.f32 %v2246, %v2406
        %v2408 = vpop.f32.mrb[0].mxu0
        %v2409 = vpop.f32.mrb[0].mxu0
        %v2410 = vadd.f32 %v2249, %v2409
        %v2411 = vpop.f32.mrb[0].mxu0
        %2412 = vmatprep.mubr.bf16.mxu0 0
        %2413 = vmatmul.mubr.bf16.gmra.mrb[0].mxu0 %v1867
        %v2414 = vpop.f32.mrb[0].mxu0
        %v2415 = vadd.f32 %v2254, %v2414
        %v2416 = vpop.f32.mrb[0].mxu0
        %v2417 = vpop.f32.mrb[0].mxu0
        %v2418 = vadd.f32 %v2257, %v2417
        %v2419 = vpop.f32.mrb[0].mxu0
        %2420 = vmatprep.mubr.bf16.mxu0 0
        %2421 = vmatmul.mubr.bf16.gmra.mrb[0].mxu0 %v1870
        %v2422 = vpop.f32.mrb[0].mxu0
        %v2423 = vadd.f32 %v2262, %v2422
        %v2424 = vpop.f32.mrb[0].mxu0
        %v2425 = vpop.f32.mrb[0].mxu0
        %v2426 = vadd.f32 %v2265, %v2425
        %v2427 = vpop.f32.mrb[0].mxu0
        %2428 = vmatprep.mubr.bf16.mxu0 0
        %2429 = vmatmul.mubr.bf16.gmra.mrb[0].mxu0 %v1921
        %v2430 = vpop.f32.mrb[0].mxu0
        %v2431 = vadd.f32 %v2270, %v2430
        %v2432 = vpop.f32.mrb[0].mxu0
        %v2433 = vpop.f32.mrb[0].mxu0
        %v2434 = vadd.f32 %v2273, %v2433
        %v2435 = vpop.f32.mrb[0].mxu0
        %2436 = vdwg.mxu0
        %v2485 = vunpack.c.l.b16 %v1871
        %v2486 = vunpack.c.l.b16 %v1872
        %v2487 = vunpack.c.l.b16 %v1873
        %v2488 = vunpack.c.l.b16 %v1874
        %v2489 = vunpack.c.l.b16 %v1875
        %v2490 = vunpack.c.l.b16 %v1876
        %v2491 = vunpack.c.l.b16 %v1877
        %v2492 = vunpack.c.l.b16 %v1878
        %v2493 = vunpack.c.l.b16 %v1879
        %v2494 = vunpack.c.l.b16 %v1880
        %v2495 = vunpack.c.l.b16 %v1881
        %v2496 = vunpack.c.l.b16 %v1882
        %v2497 = vunpack.c.l.b16 %v1883
        %v2498 = vunpack.c.l.b16 %v1884
        %v2499 = vunpack.c.l.b16 %v1885
        %v2500 = vunpack.c.l.b16 %v1886
        %v2501 = vunpack.c.l.b16 %v1887
        %v2502 = vunpack.c.l.b16 %v1888
        %v2503 = vunpack.c.l.b16 %v1889
        %v2504 = vunpack.c.l.b16 %v1890
        %v2505 = vunpack.c.l.b16 %v1891
        %v2506 = vunpack.c.l.b16 %v1892
        %v2507 = vunpack.c.l.b16 %v1893
        %v2508 = vunpack.c.l.b16 %v1894
        %v2509 = vunpack.c.l.b16 %v1895
        %v2510 = vunpack.c.l.b16 %v1896
        %v2511 = vunpack.c.l.b16 %v1897
        %v2512 = vunpack.c.l.b16 %v1898
        %v2513 = vunpack.c.l.b16 %v1899
        %v2514 = vunpack.c.l.b16 %v1900
        %v2515 = vunpack.c.l.b16 %v1901
        %v2516 = vunpack.c.l.b16 %v1902
        %v2517 = vunpack.c.l.b16 %v1903
        %v2518 = vunpack.c.l.b16 %v1904
        %v2519 = vunpack.c.l.b16 %v1905
        %v2520 = vunpack.c.l.b16 %v1906
        %v2521 = vunpack.c.l.b16 %v1907
        %v2522 = vunpack.c.l.b16 %v1908
        %v2523 = vunpack.c.l.b16 %v1909
        %v2524 = vunpack.c.l.b16 %v1910
        %v2525 = vunpack.c.l.b16 %v1911
        %v2526 = vunpack.c.l.b16 %v1912
        %v2527 = vunpack.c.l.b16 %v1913
        %v2528 = vunpack.c.l.b16 %v1914
        %v2529 = vunpack.c.l.b16 %v1915
        %v2530 = vunpack.c.l.b16 %v1916
        %v2531 = vunpack.c.l.b16 %v1917
        %v2532 = vunpack.c.l.b16 %v1918
        %v2533 = vpack.c.b16 %v2486, %v2485
        %v2534 = vpack.c.b16 %v2488, %v2487
        %v2535 = vpack.c.b16 %v2490, %v2489
        %v2536 = vpack.c.b16 %v2492, %v2491
        %v2537 = vpack.c.b16 %v2494, %v2493
        %v2538 = vpack.c.b16 %v2496, %v2495
        %v2539 = vpack.c.b16 %v2498, %v2497
        %v2540 = vpack.c.b16 %v2500, %v2499
        %v2541 = vpack.c.b16 %v2502, %v2501
        %v2542 = vpack.c.b16 %v2504, %v2503
        %v2543 = vpack.c.b16 %v2506, %v2505
        %v2544 = vpack.c.b16 %v2508, %v2507
        %v2545 = vpack.c.b16 %v2510, %v2509
        %v2546 = vpack.c.b16 %v2512, %v2511
        %v2547 = vpack.c.b16 %v2514, %v2513
        %v2548 = vpack.c.b16 %v2516, %v2515
        %v2549 = vpack.c.b16 %v2518, %v2517
        %v2550 = vpack.c.b16 %v2520, %v2519
        %v2551 = vpack.c.b16 %v2522, %v2521
        %v2552 = vpack.c.b16 %v2524, %v2523
        %v2553 = vpack.c.b16 %v2526, %v2525
        %v2554 = vpack.c.b16 %v2528, %v2527
        %v2555 = vpack.c.b16 %v2530, %v2529
        %v2556 = vpack.c.b16 %v2532, %v2531
        %2581 = vmatprep.subr.bf16.mxu0 0
        %2582 = vmatpush1.bf16.msra.mxu0 %v2533
        %2583 = vmatprep.subr.bf16.mxu0 0
        %2584 = vmatpush1.bf16.msra.mxu0 %v2534
        %2585 = vmatprep.subr.bf16.mxu0 0
        %2586 = vmatpush1.bf16.msra.mxu0 %v2535
        %2587 = vmatprep.subr.bf16.mxu0 0
        %2588 = vmatpush1.bf16.msra.mxu0 %v2536
        %2589 = vmatprep.subr.bf16.mxu0 0
        %2590 = vmatpush1.bf16.msra.mxu0 %v2537
        %2591 = vmatprep.subr.bf16.mxu0 0
        %2592 = vmatpush1.bf16.msra.mxu0 %v2538
        %2593 = vmatprep.subr.bf16.mxu0 0
        %2594 = vmatpush1.bf16.msra.mxu0 %v2539
        %2595 = vmatprep.subr.bf16.mxu0 0
        %2596 = vmatpush1.bf16.msra.mxu0 %v2540
        %2597 = vmatprep.subr.bf16.mxu0 0
        %2598 = vmatpush1.bf16.msra.mxu0 %v2541
        %2599 = vmatprep.subr.bf16.mxu0 0
        %2600 = vmatpush1.bf16.msra.mxu0 %v2542
        %2601 = vmatprep.subr.bf16.mxu0 0
        %2602 = vmatpush1.bf16.msra.mxu0 %v2543
        %2603 = vmatprep.subr.bf16.mxu0 0
        %2604 = vmatpush1.bf16.msra.mxu0 %v2544
        %2605 = vmatprep.subr.bf16.mxu0 0
        %2606 = vmatpush1.bf16.msra.mxu0 %v2545
        %2607 = vmatprep.subr.bf16.mxu0 0
        %2608 = vmatpush1.bf16.msra.mxu0 %v2546
        %2609 = vmatprep.subr.bf16.mxu0 0
        %2610 = vmatpush1.bf16.msra.mxu0 %v2547
        %2611 = vmatprep.subr.bf16.mxu0 0
        %2612 = vmatpush1.bf16.msra.mxu0 %v2548
        %2613 = vmatprep.mubr.bf16.mxu0 %v1824
        %2614 = vmatmul.mubr.bf16.gmra.mrb[0].mxu0 %v1823
        %v2615 = vpop.f32.mrb[0].mxu0
        %v2616 = vadd.f32 %v2311, %v2615
        %v2617 = vpop.f32.mrb[0].mxu0
        %v2618 = vpop.f32.mrb[0].mxu0
        %v2619 = vadd.f32 %v2314, %v2618
        %v2620 = vpop.f32.mrb[0].mxu0
        %2621 = vmatprep.mubr.bf16.mxu0 %v1827
        %2622 = vmatmul.mubr.bf16.gmra.mrb[0].mxu0 %v1826
        %v2623 = vpop.f32.mrb[0].mxu0
        %v2624 = vadd.f32 %v2319, %v2623
        %v2625 = vpop.f32.mrb[0].mxu0
        %v2626 = vpop.f32.mrb[0].mxu0
        %v2627 = vadd.f32 %v2322, %v2626
        %v2628 = vpop.f32.mrb[0].mxu0
        %2629 = vmatprep.mubr.bf16.mxu0 %v1830
        %2630 = vmatmul.mubr.bf16.gmra.mrb[0].mxu0 %v1829
        %v2631 = vpop.f32.mrb[0].mxu0
        %v2632 = vadd.f32 %v2327, %v2631
        %v2633 = vpop.f32.mrb[0].mxu0
        %v2634 = vpop.f32.mrb[0].mxu0
        %v2635 = vadd.f32 %v2330, %v2634
        %v2636 = vpop.f32.mrb[0].mxu0
        %2637 = vmatprep.mubr.bf16.mxu0 %v1833
        %2638 = vmatmul.mubr.bf16.gmra.mrb[0].mxu0 %v1832
        %v2639 = vpop.f32.mrb[0].mxu0
        %v2640 = vadd.f32 %v2335, %v2639
        %v2641 = vpop.f32.mrb[0].mxu0
        %v2642 = vpop.f32.mrb[0].mxu0
        %v2643 = vadd.f32 %v2338, %v2642
        %v2644 = vpop.f32.mrb[0].mxu0
        %2645 = vmatprep.mubr.bf16.mxu0 %v1836
        %2646 = vmatmul.mubr.bf16.gmra.mrb[0].mxu0 %v1835
        %v2647 = vpop.f32.mrb[0].mxu0
        %v2648 = vadd.f32 %v2343, %v2647
        %v2649 = vpop.f32.mrb[0].mxu0
        %v2650 = vpop.f32.mrb[0].mxu0
        %v2651 = vadd.f32 %v2346, %v2650
        %v2652 = vpop.f32.mrb[0].mxu0
        %2653 = vmatprep.mubr.bf16.mxu0 %v1839
        %2654 = vmatmul.mubr.bf16.gmra.mrb[0].mxu0 %v1838
        %v2655 = vpop.f32.mrb[0].mxu0
        %v2656 = vadd.f32 %v2351, %v2655
        %v2657 = vpop.f32.mrb[0].mxu0
        %v2658 = vpop.f32.mrb[0].mxu0
        %v2659 = vadd.f32 %v2354, %v2658
        %v2660 = vpop.f32.mrb[0].mxu0
        %2661 = vmatprep.mubr.bf16.mxu0 %v1842
        %2662 = vmatmul.mubr.bf16.gmra.mrb[0].mxu0 %v1841
        %v2663 = vpop.f32.mrb[0].mxu0
        %v2664 = vadd.f32 %v2359, %v2663
        %v2665 = vpop.f32.mrb[0].mxu0
        %v2666 = vpop.f32.mrb[0].mxu0
        %v2667 = vadd.f32 %v2362, %v2666
        %v2668 = vpop.f32.mrb[0].mxu0
        %2669 = vmatprep.mubr.bf16.mxu0 %v1845
        %2670 = vmatmul.mubr.bf16.gmra.mrb[0].mxu0 %v1844
        %v2671 = vpop.f32.mrb[0].mxu0
        %v2672 = vadd.f32 %v2367, %v2671
        %v2673 = vpop.f32.mrb[0].mxu0
        %v2674 = vpop.f32.mrb[0].mxu0
        %v2675 = vadd.f32 %v2370, %v2674
        %v2676 = vpop.f32.mrb[0].mxu0
        %2677 = vmatprep.mubr.bf16.mxu0 %v1848
        %2678 = vmatmul.mubr.bf16.gmra.mrb[0].mxu0 %v1847
        %v2679 = vpop.f32.mrb[0].mxu0
        %v2680 = vadd.f32 %v2375, %v2679
        %v2681 = vpop.f32.mrb[0].mxu0
        %v2682 = vpop.f32.mrb[0].mxu0
        %v2683 = vadd.f32 %v2378, %v2682
        %v2684 = vpop.f32.mrb[0].mxu0
        %2685 = vmatprep.mubr.bf16.mxu0 %v1851
        %2686 = vmatmul.mubr.bf16.gmra.mrb[0].mxu0 %v1850
        %v2687 = vpop.f32.mrb[0].mxu0
        %v2688 = vadd.f32 %v2383, %v2687
        %v2689 = vpop.f32.mrb[0].mxu0
        %v2690 = vpop.f32.mrb[0].mxu0
        %v2691 = vadd.f32 %v2386, %v2690
        %v2692 = vpop.f32.mrb[0].mxu0
        %2693 = vmatprep.mubr.bf16.mxu0 %v1854
        %2694 = vmatmul.mubr.bf16.gmra.mrb[0].mxu0 %v1853
        %v2695 = vpop.f32.mrb[0].mxu0
        %v2696 = vadd.f32 %v2391, %v2695
        %v2697 = vpop.f32.mrb[0].mxu0
        %v2698 = vpop.f32.mrb[0].mxu0
        %v2699 = vadd.f32 %v2394, %v2698
        %v2700 = vpop.f32.mrb[0].mxu0
        %2701 = vmatprep.mubr.bf16.mxu0 %v1857
        %2702 = vmatmul.mubr.bf16.gmra.mrb[0].mxu0 %v1856
        %v2703 = vpop.f32.mrb[0].mxu0
        %v2704 = vadd.f32 %v2399, %v2703
        %v2705 = vpop.f32.mrb[0].mxu0
        %v2706 = vpop.f32.mrb[0].mxu0
        %v2707 = vadd.f32 %v2402, %v2706
        %v2708 = vpop.f32.mrb[0].mxu0
        %2709 = vmatprep.mubr.bf16.mxu0 %v1860
        %2710 = vmatmul.mubr.bf16.gmra.mrb[0].mxu0 %v1859
        %v2711 = vpop.f32.mrb[0].mxu0
        %v2712 = vadd.f32 %v2407, %v2711
        %v2713 = vpop.f32.mrb[0].mxu0
        %v2714 = vpop.f32.mrb[0].mxu0
        %v2715 = vadd.f32 %v2410, %v2714
        %v2716 = vpop.f32.mrb[0].mxu0
        %2717 = vmatprep.mubr.bf16.mxu0 %v1863
        %2718 = vmatmul.mubr.bf16.gmra.mrb[0].mxu0 %v1862
        %v2719 = vpop.f32.mrb[0].mxu0
        %v2720 = vadd.f32 %v2415, %v2719
        %v2721 = vpop.f32.mrb[0].mxu0
        %v2722 = vpop.f32.mrb[0].mxu0
        %v2723 = vadd.f32 %v2418, %v2722
        %v2724 = vpop.f32.mrb[0].mxu0
        %2725 = vmatprep.mubr.bf16.mxu0 %v1866
        %2726 = vmatmul.mubr.bf16.gmra.mrb[0].mxu0 %v1865
        %v2727 = vpop.f32.mrb[0].mxu0
        %v2728 = vadd.f32 %v2423, %v2727
        %v2729 = vpop.f32.mrb[0].mxu0
        %v2730 = vpop.f32.mrb[0].mxu0
        %v2731 = vadd.f32 %v2426, %v2730
        %v2732 = vpop.f32.mrb[0].mxu0
        %2733 = vmatprep.mubr.bf16.mxu0 %v1869
        %2734 = vmatmul.mubr.bf16.gmra.mrb[0].mxu0 %v1868
        %v2735 = vpop.f32.mrb[0].mxu0
        %v2736 = vadd.f32 %v2431, %v2735
        %v2737 = vpop.f32.mrb[0].mxu0
        %v2738 = vpop.f32.mrb[0].mxu0
        %v2739 = vadd.f32 %v2434, %v2738
        %v2740 = vpop.f32.mrb[0].mxu0
        %2741 = vdwg.mxu0
        %2742 = vmatprep.subr.bf16.mxu0 0
        %2743 = vmatpush1.bf16.msra.mxu0 %v2549
        %2744 = vmatprep.subr.bf16.mxu0 0
        %2745 = vmatpush1.bf16.msra.mxu0 %v2550
        %2746 = vmatprep.subr.bf16.mxu0 0
        %2747 = vmatpush1.bf16.msra.mxu0 %v2551
        %2748 = vmatprep.subr.bf16.mxu0 0
        %2749 = vmatpush1.bf16.msra.mxu0 %v2552
        %2750 = vmatprep.subr.bf16.mxu0 0
        %2751 = vmatpush1.bf16.msra.mxu0 %v2553
        %2752 = vmatprep.subr.bf16.mxu0 0
        %2753 = vmatpush1.bf16.msra.mxu0 %v2554
        %2754 = vmatprep.subr.bf16.mxu0 0
        %2755 = vmatpush1.bf16.msra.mxu0 %v2555
        %2756 = vmatprep.subr.bf16.mxu0 0
        %2757 = vmatpush1.bf16.msra.mxu0 %v2556
        %2758 = vmatprep.subr.bf16.mxu0 0
        %2759 = vmatpush1.bf16.msra.mxu0 0
        %2760 = vmatprep.subr.bf16.mxu0 0
        %2761 = vmatpush1.bf16.msra.mxu0 0
        %2762 = vmatprep.subr.bf16.mxu0 0
        %2763 = vmatpush1.bf16.msra.mxu0 0
        %2764 = vmatprep.subr.bf16.mxu0 0
        %2765 = vmatpush1.bf16.msra.mxu0 0
        %2766 = vmatprep.subr.bf16.mxu0 0
        %2767 = vmatpush1.bf16.msra.mxu0 0
        %2768 = vmatprep.subr.bf16.mxu0 0
        %2769 = vmatpush1.bf16.msra.mxu0 0
        %2770 = vmatprep.subr.bf16.mxu0 0
        %2771 = vmatpush1.bf16.msra.mxu0 0
        %2772 = vmatprep.subr.bf16.mxu0 0
        %2773 = vmatpush1.bf16.msra.mxu0 0
        %2774 = vmatprep.mubr.bf16.mxu0 0
        %2775 = vmatmul.mubr.bf16.gmra.mrb[0].mxu0 %v1825
        %v2776 = vpop.f32.mrb[0].mxu0
        %v2777 = vadd.f32 %v2616, %v2776
        %v2778 = vpop.f32.mrb[0].mxu0
        %v2779 = vpop.f32.mrb[0].mxu0
        %v2780 = vadd.f32 %v2619, %v2779
        %v2781 = vpop.f32.mrb[0].mxu0
        %2782 = vmatprep.mubr.bf16.mxu0 0
        %2783 = vmatmul.mubr.bf16.gmra.mrb[0].mxu0 %v1828
        %v2784 = vpop.f32.mrb[0].mxu0
        %v2785 = vadd.f32 %v2624, %v2784
        %v2786 = vpop.f32.mrb[0].mxu0
        %v2787 = vpop.f32.mrb[0].mxu0
        %v2788 = vadd.f32 %v2627, %v2787
        %v2789 = vpop.f32.mrb[0].mxu0
        %2790 = vmatprep.mubr.bf16.mxu0 0
        %2791 = vmatmul.mubr.bf16.gmra.mrb[0].mxu0 %v1831
        %v2792 = vpop.f32.mrb[0].mxu0
        %v2793 = vadd.f32 %v2632, %v2792
        %v2794 = vpop.f32.mrb[0].mxu0
        %v2795 = vpop.f32.mrb[0].mxu0
        %v2796 = vadd.f32 %v2635, %v2795
        %v2797 = vpop.f32.mrb[0].mxu0
        %2798 = vmatprep.mubr.bf16.mxu0 0
        %2799 = vmatmul.mubr.bf16.gmra.mrb[0].mxu0 %v1834
        %v2800 = vpop.f32.mrb[0].mxu0
        %v2801 = vadd.f32 %v2640, %v2800
        %v2802 = vpop.f32.mrb[0].mxu0
        %v2803 = vpop.f32.mrb[0].mxu0
        %v2804 = vadd.f32 %v2643, %v2803
        %v2805 = vpop.f32.mrb[0].mxu0
        %2806 = vmatprep.mubr.bf16.mxu0 0
        %2807 = vmatmul.mubr.bf16.gmra.mrb[0].mxu0 %v1837
        %v2808 = vpop.f32.mrb[0].mxu0
        %v2809 = vadd.f32 %v2648, %v2808
        %v2810 = vpop.f32.mrb[0].mxu0
        %v2811 = vpop.f32.mrb[0].mxu0
        %v2812 = vadd.f32 %v2651, %v2811
        %v2813 = vpop.f32.mrb[0].mxu0
        %2814 = vmatprep.mubr.bf16.mxu0 0
        %2815 = vmatmul.mubr.bf16.gmra.mrb[0].mxu0 %v1840
        %v2816 = vpop.f32.mrb[0].mxu0
        %v2817 = vadd.f32 %v2656, %v2816
        %v2818 = vpop.f32.mrb[0].mxu0
        %v2819 = vpop.f32.mrb[0].mxu0
        %v2820 = vadd.f32 %v2659, %v2819
        %v2821 = vpop.f32.mrb[0].mxu0
        %2822 = vmatprep.mubr.bf16.mxu0 0
        %2823 = vmatmul.mubr.bf16.gmra.mrb[0].mxu0 %v1843
        %v2824 = vpop.f32.mrb[0].mxu0
        %v2825 = vadd.f32 %v2664, %v2824
        %v2826 = vpop.f32.mrb[0].mxu0
        %v2827 = vpop.f32.mrb[0].mxu0
        %v2828 = vadd.f32 %v2667, %v2827
        %v2829 = vpop.f32.mrb[0].mxu0
        %2830 = vmatprep.mubr.bf16.mxu0 0
        %2831 = vmatmul.mubr.bf16.gmra.mrb[0].mxu0 %v1846
        %v2832 = vpop.f32.mrb[0].mxu0
        %v2833 = vadd.f32 %v2672, %v2832
        %v2834 = vpop.f32.mrb[0].mxu0
        %v2835 = vpop.f32.mrb[0].mxu0
        %v2836 = vadd.f32 %v2675, %v2835
        %v2837 = vpop.f32.mrb[0].mxu0
        %2838 = vmatprep.mubr.bf16.mxu0 0
        %2839 = vmatmul.mubr.bf16.gmra.mrb[0].mxu0 %v1849
        %v2840 = vpop.f32.mrb[0].mxu0
        %v2841 = vadd.f32 %v2680, %v2840
        %v2842 = vpop.f32.mrb[0].mxu0
        %v2843 = vpop.f32.mrb[0].mxu0
        %v2844 = vadd.f32 %v2683, %v2843
        %v2845 = vpop.f32.mrb[0].mxu0
        %2846 = vmatprep.mubr.bf16.mxu0 0
        %2847 = vmatmul.mubr.bf16.gmra.mrb[0].mxu0 %v1852
        %v2848 = vpop.f32.mrb[0].mxu0
        %v2849 = vadd.f32 %v2688, %v2848
        %v2850 = vpop.f32.mrb[0].mxu0
        %v2851 = vpop.f32.mrb[0].mxu0
        %v2852 = vadd.f32 %v2691, %v2851
        %v2853 = vpop.f32.mrb[0].mxu0
        %2854 = vmatprep.mubr.bf16.mxu0 0
        %2855 = vmatmul.mubr.bf16.gmra.mrb[0].mxu0 %v1855
        %v2856 = vpop.f32.mrb[0].mxu0
        %v2857 = vadd.f32 %v2696, %v2856
        %v2858 = vpop.f32.mrb[0].mxu0
        %v2859 = vpop.f32.mrb[0].mxu0
        %v2860 = vadd.f32 %v2699, %v2859
        %v2861 = vpop.f32.mrb[0].mxu0
        %2862 = vmatprep.mubr.bf16.mxu0 0
        %2863 = vmatmul.mubr.bf16.gmra.mrb[0].mxu0 %v1858
        %v2864 = vpop.f32.mrb[0].mxu0
        %v2865 = vadd.f32 %v2704, %v2864
        %v2866 = vpop.f32.mrb[0].mxu0
        %v2867 = vpop.f32.mrb[0].mxu0
        %v2868 = vadd.f32 %v2707, %v2867
        %v2869 = vpop.f32.mrb[0].mxu0
        %2870 = vmatprep.mubr.bf16.mxu0 0
        %2871 = vmatmul.mubr.bf16.gmra.mrb[0].mxu0 %v1861
        %v2872 = vpop.f32.mrb[0].mxu0
        %v2873 = vadd.f32 %v2712, %v2872
        %v2874 = vpop.f32.mrb[0].mxu0
        %v2875 = vpop.f32.mrb[0].mxu0
        %v2876 = vadd.f32 %v2715, %v2875
        %v2877 = vpop.f32.mrb[0].mxu0
        %2878 = vmatprep.mubr.bf16.mxu0 0
        %2879 = vmatmul.mubr.bf16.gmra.mrb[0].mxu0 %v1864
        %v2880 = vpop.f32.mrb[0].mxu0
        %v2881 = vadd.f32 %v2720, %v2880
        %v2882 = vpop.f32.mrb[0].mxu0
        %v2883 = vpop.f32.mrb[0].mxu0
        %v2884 = vadd.f32 %v2723, %v2883
        %v2885 = vpop.f32.mrb[0].mxu0
        %2886 = vmatprep.mubr.bf16.mxu0 0
        %2887 = vmatmul.mubr.bf16.gmra.mrb[0].mxu0 %v1867
        %v2888 = vpop.f32.mrb[0].mxu0
        %v2889 = vadd.f32 %v2728, %v2888
        %v2890 = vpop.f32.mrb[0].mxu0
        %v2891 = vpop.f32.mrb[0].mxu0
        %v2892 = vadd.f32 %v2731, %v2891
        %v2893 = vpop.f32.mrb[0].mxu0
        %2894 = vmatprep.mubr.bf16.mxu0 0
        %2895 = vmatmul.mubr.bf16.gmra.mrb[0].mxu0 %v1870
        %v2896 = vpop.f32.mrb[0].mxu0
        %v2897 = vadd.f32 %v2736, %v2896
        %v2898 = vpop.f32.mrb[0].mxu0
        %v2899 = vpop.f32.mrb[0].mxu0
        %v2900 = vadd.f32 %v2739, %v2899
        %v2901 = vpop.f32.mrb[0].mxu0
        %2902 = vdwg.mxu0
        %v2903 = vld [vmem:[#allocation2 + $0x30] sm:$0xff]
        %v2904 = vld [vmem:[#allocation2 + $0x38] sm:$0xff]
        %v2905 = vld [vmem:[#allocation2 + $0x40] sm:$0xff]
        %v2906 = vld [vmem:[#allocation2 + $0x48] sm:$0xff]
        %v2907 = vld [vmem:[#allocation2 + $0x50] sm:$0xff]
        %v2908 = vld [vmem:[#allocation2 + $0x58] sm:$0xff]
        %v2909 = vld [vmem:[#allocation2 + $0x60] sm:$0xff]
        %v2910 = vld [vmem:[#allocation2 + $0x68] sm:$0xff]
        %v2911 = vld [vmem:[#allocation2 + $0x70] sm:$0xff]
        %v2912 = vld [vmem:[#allocation2 + $0x78] sm:$0xff]
        %v2913 = vld [vmem:[#allocation2 + $0x80] sm:$0xff]
        %v2914 = vld [vmem:[#allocation2 + $0x88] sm:$0xff]
        %v2915 = vld [vmem:[#allocation2 + $0x90] sm:$0xff]
        %v2916 = vld [vmem:[#allocation2 + $0x98] sm:$0xff]
        %v2917 = vld [vmem:[#allocation2 + $0xa0] sm:$0xff]
        %v2918 = vld [vmem:[#allocation2 + $0xa8] sm:$0xff]
        %v2919 = vld [vmem:[#allocation2 + $0xb0] sm:$0xff]
        %v2920 = vld [vmem:[#allocation2 + $0xb8] sm:$0xff]
        %v2921 = vld [vmem:[#allocation2 + $0xc0] sm:$0xff]
        %v2922 = vld [vmem:[#allocation2 + $0xc8] sm:$0xff]
        %v2923 = vld [vmem:[#allocation2 + $0xd0] sm:$0xff]
        %v2924 = vld [vmem:[#allocation2 + $0xd8] sm:$0xff]
        %v2925 = vld [vmem:[#allocation2 + $0xe0] sm:$0xff]
        %v2926 = vld [vmem:[#allocation2 + $0xe8] sm:$0xff]
        %v2927 = vld [vmem:[#allocation2 + $0xf0] sm:$0xff]
        %v2928 = vld [vmem:[#allocation2 + $0xf8] sm:$0xff]
        %v2929 = vld [vmem:[#allocation2 + $0x100] sm:$0xff]
        %v2930 = vld [vmem:[#allocation2 + $0x108] sm:$0xff]
        %v2931 = vld [vmem:[#allocation2 + $0x110] sm:$0xff]
        %v2932 = vld [vmem:[#allocation2 + $0x118] sm:$0xff]
        %v2933 = vld [vmem:[#allocation2 + $0x120] sm:$0xff]
        %v2934 = vld [vmem:[#allocation2 + $0x128] sm:$0xff]
        %v2935 = vld [vmem:[#allocation2 + $0x130] sm:$0xff]
        %v2936 = vld [vmem:[#allocation2 + $0x138] sm:$0xff]
        %v2937 = vld [vmem:[#allocation2 + $0x140] sm:$0xff]
        %v2938 = vld [vmem:[#allocation2 + $0x148] sm:$0xff]
        %v2939 = vld [vmem:[#allocation2 + $0x150] sm:$0xff]
        %v2940 = vld [vmem:[#allocation2 + $0x158] sm:$0xff]
        %v2941 = vld [vmem:[#allocation2 + $0x160] sm:$0xff]
        %v2942 = vld [vmem:[#allocation2 + $0x168] sm:$0xff]
        %v2943 = vld [vmem:[#allocation2 + $0x170] sm:$0xff]
        %v2944 = vld [vmem:[#allocation2 + $0x178] sm:$0xff]
        %v2945 = vld [vmem:[#allocation2 + $0x180] sm:$0xff]
        %v2946 = vld [vmem:[#allocation2 + $0x188] sm:$0xff]
        %v2947 = vld [vmem:[#allocation2 + $0x190] sm:$0xff]
        %v2948 = vld [vmem:[#allocation2 + $0x198] sm:$0xff]
        %v2949 = vld [vmem:[#allocation2 + $0x1a0] sm:$0xff]
        %v2950 = vld [vmem:[#allocation2 + $0x1a8] sm:$0xff]
        %s2951 = scalar_lea.vmem [#allocation6], 384
        %v2952 = vld [vmem:[%s2951] sm:$0xf]
        %v2953 = vld [vmem:[%s2951 + $0x4] sm:$0xf]
        %v2954 = vld [vmem:[%s2951 + $0x8] sm:$0xf]
        %v2955 = vld [vmem:[%s2951 + $0xc] sm:$0xf]
        %v2956 = vld [vmem:[%s2951 + $0x10] sm:$0xf]
        %v2957 = vld [vmem:[%s2951 + $0x14] sm:$0xf]
        %v2958 = vld [vmem:[%s2951 + $0x18] sm:$0xf]
        %v2959 = vld [vmem:[%s2951 + $0x1c] sm:$0xf]
        %v2960 = vld [vmem:[%s2951 + $0x20] sm:$0xf]
        %v2961 = vld [vmem:[%s2951 + $0x24] sm:$0xf]
        %v2962 = vld [vmem:[%s2951 + $0x28] sm:$0xf]
        %v2963 = vld [vmem:[%s2951 + $0x2c] sm:$0xf]
        %v2964 = vld [vmem:[%s2951 + $0x30] sm:$0xf]
        %v2965 = vld [vmem:[%s2951 + $0x34] sm:$0xf]
        %v2966 = vld [vmem:[%s2951 + $0x38] sm:$0xf]
        %v2967 = vld [vmem:[%s2951 + $0x3c] sm:$0xf]
        %v2968 = vld [vmem:[%s2951 + $0x40] sm:$0xf]
        %v2969 = vld [vmem:[%s2951 + $0x44] sm:$0xf]
        %v2970 = vld [vmem:[%s2951 + $0x48] sm:$0xf]
        %v2971 = vld [vmem:[%s2951 + $0x4c] sm:$0xf]
        %v2972 = vld [vmem:[%s2951 + $0x50] sm:$0xf]
        %v2973 = vld [vmem:[%s2951 + $0x54] sm:$0xf]
        %v2974 = vld [vmem:[%s2951 + $0x58] sm:$0xf]
        %v2975 = vld [vmem:[%s2951 + $0x5c] sm:$0xf]
        %v2976 = vld [vmem:[%s2951 + $0x60] sm:$0xf]
        %v2977 = vld [vmem:[%s2951 + $0x64] sm:$0xf]
        %v2978 = vld [vmem:[%s2951 + $0x68] sm:$0xf]
        %v2979 = vld [vmem:[%s2951 + $0x6c] sm:$0xf]
        %v2980 = vld [vmem:[%s2951 + $0x70] sm:$0xf]
        %v2981 = vld [vmem:[%s2951 + $0x74] sm:$0xf]
        %v2982 = vld [vmem:[%s2951 + $0x78] sm:$0xf]
        %v2983 = vld [vmem:[%s2951 + $0x7c] sm:$0xf]
        %v2984 = vld [vmem:[%s2951 + $0x80] sm:$0xf]
        %v2985 = vld [vmem:[%s2951 + $0x84] sm:$0xf]
        %v2986 = vld [vmem:[%s2951 + $0x88] sm:$0xf]
        %v2987 = vld [vmem:[%s2951 + $0x8c] sm:$0xf]
        %v2988 = vld [vmem:[%s2951 + $0x90] sm:$0xf]
        %v2989 = vld [vmem:[%s2951 + $0x94] sm:$0xf]
        %v2990 = vld [vmem:[%s2951 + $0x98] sm:$0xf]
        %v2991 = vld [vmem:[%s2951 + $0x9c] sm:$0xf]
        %v2992 = vld [vmem:[%s2951 + $0xa0] sm:$0xf]
        %v2993 = vld [vmem:[%s2951 + $0xa4] sm:$0xf]
        %v2994 = vld [vmem:[%s2951 + $0xa8] sm:$0xf]
        %v2995 = vld [vmem:[%s2951 + $0xac] sm:$0xf]
        %v2996 = vld [vmem:[%s2951 + $0xb0] sm:$0xf]
        %v2997 = vld [vmem:[%s2951 + $0xb4] sm:$0xf]
        %v2998 = vld [vmem:[%s2951 + $0xb8] sm:$0xf]
        %v2999 = vld [vmem:[%s2951 + $0xbc] sm:$0xf]
        %v3048 = vunpack.c.l.b16 %v2952
        %v3049 = vunpack.c.l.b16 %v2953
        %v3050 = vunpack.c.l.b16 %v2954
        %v3051 = vunpack.c.l.b16 %v2955
        %v3052 = vunpack.c.l.b16 %v2956
        %v3053 = vunpack.c.l.b16 %v2957
        %v3054 = vunpack.c.l.b16 %v2958
        %v3055 = vunpack.c.l.b16 %v2959
        %v3056 = vunpack.c.l.b16 %v2960
        %v3057 = vunpack.c.l.b16 %v2961
        %v3058 = vunpack.c.l.b16 %v2962
        %v3059 = vunpack.c.l.b16 %v2963
        %v3060 = vunpack.c.l.b16 %v2964
        %v3061 = vunpack.c.l.b16 %v2965
        %v3062 = vunpack.c.l.b16 %v2966
        %v3063 = vunpack.c.l.b16 %v2967
        %v3064 = vunpack.c.l.b16 %v2968
        %v3065 = vunpack.c.l.b16 %v2969
        %v3066 = vunpack.c.l.b16 %v2970
        %v3067 = vunpack.c.l.b16 %v2971
        %v3068 = vunpack.c.l.b16 %v2972
        %v3069 = vunpack.c.l.b16 %v2973
        %v3070 = vunpack.c.l.b16 %v2974
        %v3071 = vunpack.c.l.b16 %v2975
        %v3072 = vunpack.c.l.b16 %v2976
        %v3073 = vunpack.c.l.b16 %v2977
        %v3074 = vunpack.c.l.b16 %v2978
        %v3075 = vunpack.c.l.b16 %v2979
        %v3076 = vunpack.c.l.b16 %v2980
        %v3077 = vunpack.c.l.b16 %v2981
        %v3078 = vunpack.c.l.b16 %v2982
        %v3079 = vunpack.c.l.b16 %v2983
        %v3080 = vunpack.c.l.b16 %v2984
        %v3081 = vunpack.c.l.b16 %v2985
        %v3082 = vunpack.c.l.b16 %v2986
        %v3083 = vunpack.c.l.b16 %v2987
        %v3084 = vunpack.c.l.b16 %v2988
        %v3085 = vunpack.c.l.b16 %v2989
        %v3086 = vunpack.c.l.b16 %v2990
        %v3087 = vunpack.c.l.b16 %v2991
        %v3088 = vunpack.c.l.b16 %v2992
        %v3089 = vunpack.c.l.b16 %v2993
        %v3090 = vunpack.c.l.b16 %v2994
        %v3091 = vunpack.c.l.b16 %v2995
        %v3092 = vunpack.c.l.b16 %v2996
        %v3093 = vunpack.c.l.b16 %v2997
        %v3094 = vunpack.c.l.b16 %v2998
        %v3095 = vunpack.c.l.b16 %v2999
        %v3096 = vpack.c.b16 %v3049, %v3048
        %v3097 = vpack.c.b16 %v3051, %v3050
        %v3098 = vpack.c.b16 %v3053, %v3052
        %v3099 = vpack.c.b16 %v3055, %v3054
        %v3100 = vpack.c.b16 %v3057, %v3056
        %v3101 = vpack.c.b16 %v3059, %v3058
        %v3102 = vpack.c.b16 %v3061, %v3060
        %v3103 = vpack.c.b16 %v3063, %v3062
        %v3104 = vpack.c.b16 %v3065, %v3064
        %v3105 = vpack.c.b16 %v3067, %v3066
        %v3106 = vpack.c.b16 %v3069, %v3068
        %v3107 = vpack.c.b16 %v3071, %v3070
        %v3108 = vpack.c.b16 %v3073, %v3072
        %v3109 = vpack.c.b16 %v3075, %v3074
        %v3110 = vpack.c.b16 %v3077, %v3076
        %v3111 = vpack.c.b16 %v3079, %v3078
        %v3112 = vpack.c.b16 %v3081, %v3080
        %v3113 = vpack.c.b16 %v3083, %v3082
        %v3114 = vpack.c.b16 %v3085, %v3084
        %v3115 = vpack.c.b16 %v3087, %v3086
        %v3116 = vpack.c.b16 %v3089, %v3088
        %v3117 = vpack.c.b16 %v3091, %v3090
        %v3118 = vpack.c.b16 %v3093, %v3092
        %v3119 = vpack.c.b16 %v3095, %v3094
        %3144 = vmatprep.subr.bf16.mxu0 0
        %3145 = vmatpush1.bf16.msra.mxu0 %v3096
        %3146 = vmatprep.subr.bf16.mxu0 0
        %3147 = vmatpush1.bf16.msra.mxu0 %v3097
        %3148 = vmatprep.subr.bf16.mxu0 0
        %3149 = vmatpush1.bf16.msra.mxu0 %v3098
        %3150 = vmatprep.subr.bf16.mxu0 0
        %3151 = vmatpush1.bf16.msra.mxu0 %v3099
        %3152 = vmatprep.subr.bf16.mxu0 0
        %3153 = vmatpush1.bf16.msra.mxu0 %v3100
        %3154 = vmatprep.subr.bf16.mxu0 0
        %3155 = vmatpush1.bf16.msra.mxu0 %v3101
        %3156 = vmatprep.subr.bf16.mxu0 0
        %3157 = vmatpush1.bf16.msra.mxu0 %v3102
        %3158 = vmatprep.subr.bf16.mxu0 0
        %3159 = vmatpush1.bf16.msra.mxu0 %v3103
        %3160 = vmatprep.subr.bf16.mxu0 0
        %3161 = vmatpush1.bf16.msra.mxu0 %v3104
        %3162 = vmatprep.subr.bf16.mxu0 0
        %3163 = vmatpush1.bf16.msra.mxu0 %v3105
        %3164 = vmatprep.subr.bf16.mxu0 0
        %3165 = vmatpush1.bf16.msra.mxu0 %v3106
        %3166 = vmatprep.subr.bf16.mxu0 0
        %3167 = vmatpush1.bf16.msra.mxu0 %v3107
        %3168 = vmatprep.subr.bf16.mxu0 0
        %3169 = vmatpush1.bf16.msra.mxu0 %v3108
        %3170 = vmatprep.subr.bf16.mxu0 0
        %3171 = vmatpush1.bf16.msra.mxu0 %v3109
        %3172 = vmatprep.subr.bf16.mxu0 0
        %3173 = vmatpush1.bf16.msra.mxu0 %v3110
        %3174 = vmatprep.subr.bf16.mxu0 0
        %3175 = vmatpush1.bf16.msra.mxu0 %v3111
        %3176 = vmatprep.mubr.bf16.mxu0 %v2904
        %3177 = vmatmul.mubr.bf16.gmra.mrb[0].mxu0 %v2903
        %v3178 = vpop.f32.mrb[0].mxu0
        %v3179 = vadd.f32 0.0, %v3178
        %v3180 = vpop.f32.mrb[0].mxu0
        %v3181 = vpop.f32.mrb[0].mxu0
        %v3182 = vadd.f32 0.0, %v3181
        %v3183 = vpop.f32.mrb[0].mxu0
        %3184 = vmatprep.mubr.bf16.mxu0 %v2907
        %3185 = vmatmul.mubr.bf16.gmra.mrb[0].mxu0 %v2906
        %v3186 = vpop.f32.mrb[0].mxu0
        %v3187 = vadd.f32 0.0, %v3186
        %v3188 = vpop.f32.mrb[0].mxu0
        %v3189 = vpop.f32.mrb[0].mxu0
        %v3190 = vadd.f32 0.0, %v3189
        %v3191 = vpop.f32.mrb[0].mxu0
        %3192 = vmatprep.mubr.bf16.mxu0 %v2910
        %3193 = vmatmul.mubr.bf16.gmra.mrb[0].mxu0 %v2909
        %v3194 = vpop.f32.mrb[0].mxu0
        %v3195 = vadd.f32 0.0, %v3194
        %v3196 = vpop.f32.mrb[0].mxu0
        %v3197 = vpop.f32.mrb[0].mxu0
        %v3198 = vadd.f32 0.0, %v3197
        %v3199 = vpop.f32.mrb[0].mxu0
        %3200 = vmatprep.mubr.bf16.mxu0 %v2913
        %3201 = vmatmul.mubr.bf16.gmra.mrb[0].mxu0 %v2912
        %v3202 = vpop.f32.mrb[0].mxu0
        %v3203 = vadd.f32 0.0, %v3202
        %v3204 = vpop.f32.mrb[0].mxu0
        %v3205 = vpop.f32.mrb[0].mxu0
        %v3206 = vadd.f32 0.0, %v3205
        %v3207 = vpop.f32.mrb[0].mxu0
        %3208 = vmatprep.mubr.bf16.mxu0 %v2916
        %3209 = vmatmul.mubr.bf16.gmra.mrb[0].mxu0 %v2915
        %v3210 = vpop.f32.mrb[0].mxu0
        %v3211 = vadd.f32 0.0, %v3210
        %v3212 = vpop.f32.mrb[0].mxu0
        %v3213 = vpop.f32.mrb[0].mxu0
        %v3214 = vadd.f32 0.0, %v3213
        %v3215 = vpop.f32.mrb[0].mxu0
        %3216 = vmatprep.mubr.bf16.mxu0 %v2919
        %3217 = vmatmul.mubr.bf16.gmra.mrb[0].mxu0 %v2918
        %v3218 = vpop.f32.mrb[0].mxu0
        %v3219 = vadd.f32 0.0, %v3218
        %v3220 = vpop.f32.mrb[0].mxu0
        %v3221 = vpop.f32.mrb[0].mxu0
        %v3222 = vadd.f32 0.0, %v3221
        %v3223 = vpop.f32.mrb[0].mxu0
        %3224 = vmatprep.mubr.bf16.mxu0 %v2922
        %3225 = vmatmul.mubr.bf16.gmra.mrb[0].mxu0 %v2921
        %v3226 = vpop.f32.mrb[0].mxu0
        %v3227 = vadd.f32 0.0, %v3226
        %v3228 = vpop.f32.mrb[0].mxu0
        %v3229 = vpop.f32.mrb[0].mxu0
        %v3230 = vadd.f32 0.0, %v3229
        %v3231 = vpop.f32.mrb[0].mxu0
        %3232 = vmatprep.mubr.bf16.mxu0 %v2925
        %3233 = vmatmul.mubr.bf16.gmra.mrb[0].mxu0 %v2924
        %v3234 = vpop.f32.mrb[0].mxu0
        %v3235 = vadd.f32 0.0, %v3234
        %v3236 = vpop.f32.mrb[0].mxu0
        %v3237 = vpop.f32.mrb[0].mxu0
        %v3238 = vadd.f32 0.0, %v3237
        %v3239 = vpop.f32.mrb[0].mxu0
        %3240 = vmatprep.mubr.bf16.mxu0 %v2928
        %3241 = vmatmul.mubr.bf16.gmra.mrb[0].mxu0 %v2927
        %v3242 = vpop.f32.mrb[0].mxu0
        %v3243 = vadd.f32 0.0, %v3242
        %v3244 = vpop.f32.mrb[0].mxu0
        %v3245 = vpop.f32.mrb[0].mxu0
        %v3246 = vadd.f32 0.0, %v3245
        %v3247 = vpop.f32.mrb[0].mxu0
        %3248 = vmatprep.mubr.bf16.mxu0 %v2931
        %3249 = vmatmul.mubr.bf16.gmra.mrb[0].mxu0 %v2930
        %v3250 = vpop.f32.mrb[0].mxu0
        %v3251 = vadd.f32 0.0, %v3250
        %v3252 = vpop.f32.mrb[0].mxu0
        %v3253 = vpop.f32.mrb[0].mxu0
        %v3254 = vadd.f32 0.0, %v3253
        %v3255 = vpop.f32.mrb[0].mxu0
        %3256 = vmatprep.mubr.bf16.mxu0 %v2934
        %3257 = vmatmul.mubr.bf16.gmra.mrb[0].mxu0 %v2933
        %v3258 = vpop.f32.mrb[0].mxu0
        %v3259 = vadd.f32 0.0, %v3258
        %v3260 = vpop.f32.mrb[0].mxu0
        %v3261 = vpop.f32.mrb[0].mxu0
        %v3262 = vadd.f32 0.0, %v3261
        %v3263 = vpop.f32.mrb[0].mxu0
        %3264 = vmatprep.mubr.bf16.mxu0 %v2937
        %3265 = vmatmul.mubr.bf16.gmra.mrb[0].mxu0 %v2936
        %v3266 = vpop.f32.mrb[0].mxu0
        %v3267 = vadd.f32 0.0, %v3266
        %v3268 = vpop.f32.mrb[0].mxu0
        %v3269 = vpop.f32.mrb[0].mxu0
        %v3270 = vadd.f32 0.0, %v3269
        %v3271 = vpop.f32.mrb[0].mxu0
        %3272 = vmatprep.mubr.bf16.mxu0 %v2940
        %3273 = vmatmul.mubr.bf16.gmra.mrb[0].mxu0 %v2939
        %v3274 = vpop.f32.mrb[0].mxu0
        %v3275 = vadd.f32 0.0, %v3274
        %v3276 = vpop.f32.mrb[0].mxu0
        %v3277 = vpop.f32.mrb[0].mxu0
        %v3278 = vadd.f32 0.0, %v3277
        %v3279 = vpop.f32.mrb[0].mxu0
        %3280 = vmatprep.mubr.bf16.mxu0 %v2943
        %3281 = vmatmul.mubr.bf16.gmra.mrb[0].mxu0 %v2942
        %v3282 = vpop.f32.mrb[0].mxu0
        %v3283 = vadd.f32 0.0, %v3282
        %v3284 = vpop.f32.mrb[0].mxu0
        %v3285 = vpop.f32.mrb[0].mxu0
        %v3286 = vadd.f32 0.0, %v3285
        %v3287 = vpop.f32.mrb[0].mxu0
        %3288 = vmatprep.mubr.bf16.mxu0 %v2946
        %3289 = vmatmul.mubr.bf16.gmra.mrb[0].mxu0 %v2945
        %v3290 = vpop.f32.mrb[0].mxu0
        %v3291 = vadd.f32 0.0, %v3290
        %v3292 = vpop.f32.mrb[0].mxu0
        %v3293 = vpop.f32.mrb[0].mxu0
        %v3294 = vadd.f32 0.0, %v3293
        %v3295 = vpop.f32.mrb[0].mxu0
        %3296 = vmatprep.mubr.bf16.mxu0 %v2949
        %3297 = vmatmul.mubr.bf16.gmra.mrb[0].mxu0 %v2948
        %v3298 = vpop.f32.mrb[0].mxu0
        %v3299 = vadd.f32 0.0, %v3298
        %v3300 = vpop.f32.mrb[0].mxu0
        %v3301 = vpop.f32.mrb[0].mxu0
        %v3302 = vadd.f32 0.0, %v3301
        %v3303 = vpop.f32.mrb[0].mxu0
        %3304 = vdwg.mxu0
        %3305 = vmatprep.subr.bf16.mxu0 0
        %3306 = vmatpush1.bf16.msra.mxu0 %v3112
        %3307 = vmatprep.subr.bf16.mxu0 0
        %3308 = vmatpush1.bf16.msra.mxu0 %v3113
        %3309 = vmatprep.subr.bf16.mxu0 0
        %3310 = vmatpush1.bf16.msra.mxu0 %v3114
        %3311 = vmatprep.subr.bf16.mxu0 0
        %3312 = vmatpush1.bf16.msra.mxu0 %v3115
        %3313 = vmatprep.subr.bf16.mxu0 0
        %3314 = vmatpush1.bf16.msra.mxu0 %v3116
        %3315 = vmatprep.subr.bf16.mxu0 0
        %3316 = vmatpush1.bf16.msra.mxu0 %v3117
        %3317 = vmatprep.subr.bf16.mxu0 0
        %3318 = vmatpush1.bf16.msra.mxu0 %v3118
        %3319 = vmatprep.subr.bf16.mxu0 0
        %3320 = vmatpush1.bf16.msra.mxu0 %v3119
        %3321 = vmatprep.subr.bf16.mxu0 0
        %3322 = vmatpush1.bf16.msra.mxu0 0
        %3323 = vmatprep.subr.bf16.mxu0 0
        %3324 = vmatpush1.bf16.msra.mxu0 0
        %3325 = vmatprep.subr.bf16.mxu0 0
        %3326 = vmatpush1.bf16.msra.mxu0 0
        %3327 = vmatprep.subr.bf16.mxu0 0
        %3328 = vmatpush1.bf16.msra.mxu0 0
        %3329 = vmatprep.subr.bf16.mxu0 0
        %3330 = vmatpush1.bf16.msra.mxu0 0
        %3331 = vmatprep.subr.bf16.mxu0 0
        %3332 = vmatpush1.bf16.msra.mxu0 0
        %3333 = vmatprep.subr.bf16.mxu0 0
        %3334 = vmatpush1.bf16.msra.mxu0 0
        %3335 = vmatprep.subr.bf16.mxu0 0
        %3336 = vmatpush1.bf16.msra.mxu0 0
        %3337 = vmatprep.mubr.bf16.mxu0 0
        %3338 = vmatmul.mubr.bf16.gmra.mrb[0].mxu0 %v2905
        %v3339 = vpop.f32.mrb[0].mxu0
        %v3340 = vadd.f32 %v3179, %v3339
        %v3341 = vpop.f32.mrb[0].mxu0
        %v3342 = vpop.f32.mrb[0].mxu0
        %v3343 = vadd.f32 %v3182, %v3342
        %v3344 = vpop.f32.mrb[0].mxu0
        %3345 = vmatprep.mubr.bf16.mxu0 0
        %3346 = vmatmul.mubr.bf16.gmra.mrb[0].mxu0 %v2908
        %v3347 = vpop.f32.mrb[0].mxu0
        %v3348 = vadd.f32 %v3187, %v3347
        %v3349 = vpop.f32.mrb[0].mxu0
        %v3350 = vpop.f32.mrb[0].mxu0
        %v3351 = vadd.f32 %v3190, %v3350
        %v3352 = vpop.f32.mrb[0].mxu0
        %3353 = vmatprep.mubr.bf16.mxu0 0
        %3354 = vmatmul.mubr.bf16.gmra.mrb[0].mxu0 %v2911
        %v3355 = vpop.f32.mrb[0].mxu0
        %v3356 = vadd.f32 %v3195, %v3355
        %v3357 = vpop.f32.mrb[0].mxu0
        %v3358 = vpop.f32.mrb[0].mxu0
        %v3359 = vadd.f32 %v3198, %v3358
        %v3360 = vpop.f32.mrb[0].mxu0
        %3361 = vmatprep.mubr.bf16.mxu0 0
        %3362 = vmatmul.mubr.bf16.gmra.mrb[0].mxu0 %v2914
        %v3363 = vpop.f32.mrb[0].mxu0
        %v3364 = vadd.f32 %v3203, %v3363
        %v3365 = vpop.f32.mrb[0].mxu0
        %v3366 = vpop.f32.mrb[0].mxu0
        %v3367 = vadd.f32 %v3206, %v3366
        %v3368 = vpop.f32.mrb[0].mxu0
        %3369 = vmatprep.mubr.bf16.mxu0 0
        %3370 = vmatmul.mubr.bf16.gmra.mrb[0].mxu0 %v2917
        %v3371 = vpop.f32.mrb[0].mxu0
        %v3372 = vadd.f32 %v3211, %v3371
        %v3373 = vpop.f32.mrb[0].mxu0
        %v3374 = vpop.f32.mrb[0].mxu0
        %v3375 = vadd.f32 %v3214, %v3374
        %v3376 = vpop.f32.mrb[0].mxu0
        %3377 = vmatprep.mubr.bf16.mxu0 0
        %3378 = vmatmul.mubr.bf16.gmra.mrb[0].mxu0 %v2920
        %v3379 = vpop.f32.mrb[0].mxu0
        %v3380 = vadd.f32 %v3219, %v3379
        %v3381 = vpop.f32.mrb[0].mxu0
        %v3382 = vpop.f32.mrb[0].mxu0
        %v3383 = vadd.f32 %v3222, %v3382
        %v3384 = vpop.f32.mrb[0].mxu0
        %3385 = vmatprep.mubr.bf16.mxu0 0
        %3386 = vmatmul.mubr.bf16.gmra.mrb[0].mxu0 %v2923
        %v3387 = vpop.f32.mrb[0].mxu0
        %v3388 = vadd.f32 %v3227, %v3387
        %v3389 = vpop.f32.mrb[0].mxu0
        %v3390 = vpop.f32.mrb[0].mxu0
        %v3391 = vadd.f32 %v3230, %v3390
        %v3392 = vpop.f32.mrb[0].mxu0
        %3393 = vmatprep.mubr.bf16.mxu0 0
        %3394 = vmatmul.mubr.bf16.gmra.mrb[0].mxu0 %v2926
        %v3395 = vpop.f32.mrb[0].mxu0
        %v3396 = vadd.f32 %v3235, %v3395
        %v3397 = vpop.f32.mrb[0].mxu0
        %v3398 = vpop.f32.mrb[0].mxu0
        %v3399 = vadd.f32 %v3238, %v3398
        %v3400 = vpop.f32.mrb[0].mxu0
        %3401 = vmatprep.mubr.bf16.mxu0 0
        %3402 = vmatmul.mubr.bf16.gmra.mrb[0].mxu0 %v2929
        %v3403 = vpop.f32.mrb[0].mxu0
        %v3404 = vadd.f32 %v3243, %v3403
        %v3405 = vpop.f32.mrb[0].mxu0
        %v3406 = vpop.f32.mrb[0].mxu0
        %v3407 = vadd.f32 %v3246, %v3406
        %v3408 = vpop.f32.mrb[0].mxu0
        %3409 = vmatprep.mubr.bf16.mxu0 0
        %3410 = vmatmul.mubr.bf16.gmra.mrb[0].mxu0 %v2932
        %v3411 = vpop.f32.mrb[0].mxu0
        %v3412 = vadd.f32 %v3251, %v3411
        %v3413 = vpop.f32.mrb[0].mxu0
        %v3414 = vpop.f32.mrb[0].mxu0
        %v3415 = vadd.f32 %v3254, %v3414
        %v3416 = vpop.f32.mrb[0].mxu0
        %3417 = vmatprep.mubr.bf16.mxu0 0
        %3418 = vmatmul.mubr.bf16.gmra.mrb[0].mxu0 %v2935
        %v3419 = vpop.f32.mrb[0].mxu0
        %v3420 = vadd.f32 %v3259, %v3419
        %v3421 = vpop.f32.mrb[0].mxu0
        %v3422 = vpop.f32.mrb[0].mxu0
        %v3423 = vadd.f32 %v3262, %v3422
        %v3424 = vpop.f32.mrb[0].mxu0
        %3425 = vmatprep.mubr.bf16.mxu0 0
        %3426 = vmatmul.mubr.bf16.gmra.mrb[0].mxu0 %v2938
        %v3427 = vpop.f32.mrb[0].mxu0
        %v3428 = vadd.f32 %v3267, %v3427
        %v3429 = vpop.f32.mrb[0].mxu0
        %v3430 = vpop.f32.mrb[0].mxu0
        %v3431 = vadd.f32 %v3270, %v3430
        %v3432 = vpop.f32.mrb[0].mxu0
        %3433 = vmatprep.mubr.bf16.mxu0 0
        %3434 = vmatmul.mubr.bf16.gmra.mrb[0].mxu0 %v2941
        %v3435 = vpop.f32.mrb[0].mxu0
        %v3436 = vadd.f32 %v3275, %v3435
        %v3437 = vpop.f32.mrb[0].mxu0
        %v3438 = vpop.f32.mrb[0].mxu0
        %v3439 = vadd.f32 %v3278, %v3438
        %v3440 = vpop.f32.mrb[0].mxu0
        %3441 = vmatprep.mubr.bf16.mxu0 0
        %3442 = vmatmul.mubr.bf16.gmra.mrb[0].mxu0 %v2944
        %v3443 = vpop.f32.mrb[0].mxu0
        %v3444 = vadd.f32 %v3283, %v3443
        %v3445 = vpop.f32.mrb[0].mxu0
        %v3446 = vpop.f32.mrb[0].mxu0
        %v3447 = vadd.f32 %v3286, %v3446
        %v3448 = vpop.f32.mrb[0].mxu0
        %3449 = vmatprep.mubr.bf16.mxu0 0
        %3450 = vmatmul.mubr.bf16.gmra.mrb[0].mxu0 %v2947
        %v3451 = vpop.f32.mrb[0].mxu0
        %v3452 = vadd.f32 %v3291, %v3451
        %v3453 = vpop.f32.mrb[0].mxu0
        %v3454 = vpop.f32.mrb[0].mxu0
        %v3455 = vadd.f32 %v3294, %v3454
        %v3456 = vpop.f32.mrb[0].mxu0
        %3457 = vmatprep.mubr.bf16.mxu0 0
        %3458 = vmatmul.mubr.bf16.gmra.mrb[0].mxu0 %v2950
        %v3459 = vpop.f32.mrb[0].mxu0
        %v3460 = vadd.f32 %v3299, %v3459
        %v3461 = vpop.f32.mrb[0].mxu0
        %v3462 = vpop.f32.mrb[0].mxu0
        %v3463 = vadd.f32 %v3302, %v3462
        %v3464 = vpop.f32.mrb[0].mxu0
        %3465 = vdwg.mxu0
        %v3466 = vadd.f32 %v2777, %v3340
        %v3467 = vadd.f32 %v2780, %v3343
        %v3468 = vadd.f32 %v2785, %v3348
        %v3469 = vadd.f32 %v2788, %v3351
        %v3470 = vadd.f32 %v2793, %v3356
        %v3471 = vadd.f32 %v2796, %v3359
        %v3472 = vadd.f32 %v2801, %v3364
        %v3473 = vadd.f32 %v2804, %v3367
        %v3474 = vadd.f32 %v2809, %v3372
        %v3475 = vadd.f32 %v2812, %v3375
        %v3476 = vadd.f32 %v2817, %v3380
        %v3477 = vadd.f32 %v2820, %v3383
        %v3478 = vadd.f32 %v2825, %v3388
        %v3479 = vadd.f32 %v2828, %v3391
        %v3480 = vadd.f32 %v2833, %v3396
        %v3481 = vadd.f32 %v2836, %v3399
        %v3482 = vadd.f32 %v2841, %v3404
        %v3483 = vadd.f32 %v2844, %v3407
        %v3484 = vadd.f32 %v2849, %v3412
        %v3485 = vadd.f32 %v2852, %v3415
        %v3486 = vadd.f32 %v2857, %v3420
        %v3487 = vadd.f32 %v2860, %v3423
        %v3488 = vadd.f32 %v2865, %v3428
        %v3489 = vadd.f32 %v2868, %v3431
        %v3490 = vadd.f32 %v2873, %v3436
        %v3491 = vadd.f32 %v2876, %v3439
        %v3492 = vadd.f32 %v2881, %v3444
        %v3493 = vadd.f32 %v2884, %v3447
        %v3494 = vadd.f32 %v2889, %v3452
        %v3495 = vadd.f32 %v2892, %v3455
        %v3496 = vadd.f32 %v2897, %v3460
        %v3497 = vadd.f32 %v2900, %v3463
        %v3498 = vpack.c.bf16 %v3467, %v3466
        %v3499 = vpack.c.bf16 %v3469, %v3468
        %v3500 = vpack.c.bf16 %v3471, %v3470
        %v3501 = vpack.c.bf16 %v3473, %v3472
        %v3502 = vpack.c.bf16 %v3475, %v3474
        %v3503 = vpack.c.bf16 %v3477, %v3476
        %v3504 = vpack.c.bf16 %v3479, %v3478
        %v3505 = vpack.c.bf16 %v3481, %v3480
        %v3506 = vpack.c.bf16 %v3483, %v3482
        %v3507 = vpack.c.bf16 %v3485, %v3484
        %v3508 = vpack.c.bf16 %v3487, %v3486
        %v3509 = vpack.c.bf16 %v3489, %v3488
        %v3510 = vpack.c.bf16 %v3491, %v3490
        %v3511 = vpack.c.bf16 %v3493, %v3492
        %v3512 = vpack.c.bf16 %v3495, %v3494
        %v3513 = vpack.c.bf16 %v3497, %v3496
        %v3530 = vunpack.c.l.b16 %v3498
        %v3531 = vunpack.c.h.b16 %v3498
        %v3532 = vunpack.c.l.b16 %v3499
        %v3533 = vunpack.c.h.b16 %v3499
        %v3534 = vunpack.c.l.b16 %v3500
        %v3535 = vunpack.c.h.b16 %v3500
        %v3536 = vunpack.c.l.b16 %v3501
        %v3537 = vunpack.c.h.b16 %v3501
        %v3538 = vunpack.c.l.b16 %v3502
        %v3539 = vunpack.c.h.b16 %v3502
        %v3540 = vunpack.c.l.b16 %v3503
        %v3541 = vunpack.c.h.b16 %v3503
        %v3542 = vunpack.c.l.b16 %v3504
        %v3543 = vunpack.c.h.b16 %v3504
        %v3544 = vunpack.c.l.b16 %v3505
        %v3545 = vunpack.c.h.b16 %v3505
        %v3546 = vunpack.c.l.b16 %v3506
        %v3547 = vunpack.c.h.b16 %v3506
        %v3548 = vunpack.c.l.b16 %v3507
        %v3549 = vunpack.c.h.b16 %v3507
        %v3550 = vunpack.c.l.b16 %v3508
        %v3551 = vunpack.c.h.b16 %v3508
        %v3552 = vunpack.c.l.b16 %v3509
        %v3553 = vunpack.c.h.b16 %v3509
        %v3554 = vunpack.c.l.b16 %v3510
        %v3555 = vunpack.c.h.b16 %v3510
        %v3556 = vunpack.c.l.b16 %v3511
        %v3557 = vunpack.c.h.b16 %v3511
        %v3558 = vunpack.c.l.b16 %v3512
        %v3559 = vunpack.c.h.b16 %v3512
        %v3560 = vunpack.c.l.b16 %v3513
        %v3561 = vunpack.c.h.b16 %v3513
        %v3562 = vpack.c.b16 %v3530, %v3530
        %v3563 = vpack.c.b16 %v3531, %v3531
        %v3564 = vpack.c.b16 %v3532, %v3532
        %v3565 = vpack.c.b16 %v3533, %v3533
        %v3566 = vpack.c.b16 %v3534, %v3534
        %v3567 = vpack.c.b16 %v3535, %v3535
        %v3568 = vpack.c.b16 %v3536, %v3536
        %v3569 = vpack.c.b16 %v3537, %v3537
        %v3570 = vpack.c.b16 %v3538, %v3538
        %v3571 = vpack.c.b16 %v3539, %v3539
        %v3572 = vpack.c.b16 %v3540, %v3540
        %v3573 = vpack.c.b16 %v3541, %v3541
        %v3574 = vpack.c.b16 %v3542, %v3542
        %v3575 = vpack.c.b16 %v3543, %v3543
        %v3576 = vpack.c.b16 %v3544, %v3544
        %v3577 = vpack.c.b16 %v3545, %v3545
        %v3578 = vpack.c.b16 %v3546, %v3546
        %v3579 = vpack.c.b16 %v3547, %v3547
        %v3580 = vpack.c.b16 %v3548, %v3548
        %v3581 = vpack.c.b16 %v3549, %v3549
        %v3582 = vpack.c.b16 %v3550, %v3550
        %v3583 = vpack.c.b16 %v3551, %v3551
        %v3584 = vpack.c.b16 %v3552, %v3552
        %v3585 = vpack.c.b16 %v3553, %v3553
        %v3586 = vpack.c.b16 %v3554, %v3554
        %v3587 = vpack.c.b16 %v3555, %v3555
        %v3588 = vpack.c.b16 %v3556, %v3556
        %v3589 = vpack.c.b16 %v3557, %v3557
        %v3590 = vpack.c.b16 %v3558, %v3558
        %v3591 = vpack.c.b16 %v3559, %v3559
        %v3592 = vpack.c.b16 %v3560, %v3560
        %v3593 = vpack.c.b16 %v3561, %v3561
        %3626 = vst [vmem:[%s234] sm:$0xf] %v3562
        %3627 = vst [vmem:[%s234 + $0x4] sm:$0xf] %v3563
        %3628 = vst [vmem:[%s234 + $0x8] sm:$0xf] %v3564
        %3629 = vst [vmem:[%s234 + $0xc] sm:$0xf] %v3565
        %3630 = vst [vmem:[%s234 + $0x10] sm:$0xf] %v3566
        %3631 = vst [vmem:[%s234 + $0x14] sm:$0xf] %v3567
        %3632 = vst [vmem:[%s234 + $0x18] sm:$0xf] %v3568
        %3633 = vst [vmem:[%s234 + $0x1c] sm:$0xf] %v3569
        %3634 = vst [vmem:[%s234 + $0x20] sm:$0xf] %v3570
        %3635 = vst [vmem:[%s234 + $0x24] sm:$0xf] %v3571
        %3636 = vst [vmem:[%s234 + $0x28] sm:$0xf] %v3572
        %3637 = vst [vmem:[%s234 + $0x2c] sm:$0xf] %v3573
        %3638 = vst [vmem:[%s234 + $0x30] sm:$0xf] %v3574
        %3639 = vst [vmem:[%s234 + $0x34] sm:$0xf] %v3575
        %3640 = vst [vmem:[%s234 + $0x38] sm:$0xf] %v3576
        %3641 = vst [vmem:[%s234 + $0x3c] sm:$0xf] %v3577
        %3642 = vst [vmem:[%s234 + $0x40] sm:$0xf] %v3578
        %3643 = vst [vmem:[%s234 + $0x44] sm:$0xf] %v3579
        %3644 = vst [vmem:[%s234 + $0x48] sm:$0xf] %v3580
        %3645 = vst [vmem:[%s234 + $0x4c] sm:$0xf] %v3581
        %3646 = vst [vmem:[%s234 + $0x50] sm:$0xf] %v3582
        %3647 = vst [vmem:[%s234 + $0x54] sm:$0xf] %v3583
        %3648 = vst [vmem:[%s234 + $0x58] sm:$0xf] %v3584
        %3649 = vst [vmem:[%s234 + $0x5c] sm:$0xf] %v3585
        %3650 = vst [vmem:[%s234 + $0x60] sm:$0xf] %v3586
        %3651 = vst [vmem:[%s234 + $0x64] sm:$0xf] %v3587
        %3652 = vst [vmem:[%s234 + $0x68] sm:$0xf] %v3588
        %3653 = vst [vmem:[%s234 + $0x6c] sm:$0xf] %v3589
        %3654 = vst [vmem:[%s234 + $0x70] sm:$0xf] %v3590
        %3655 = vst [vmem:[%s234 + $0x74] sm:$0xf] %v3591
        %3656 = vst [vmem:[%s234 + $0x78] sm:$0xf] %v3592
        %3657 = vst [vmem:[%s234 + $0x7c] sm:$0xf] %v3593
        %v3658 = vunpack.c.l.bf16 %v3498
        %v3659 = vunpack.c.h.bf16 %v3498
        %v3660 = vunpack.c.l.bf16 %v3499
        %v3661 = vunpack.c.h.bf16 %v3499
        %v3662 = vunpack.c.l.bf16 %v3500
        %v3663 = vunpack.c.h.bf16 %v3500
        %v3664 = vunpack.c.l.bf16 %v3501
        %v3665 = vunpack.c.h.bf16 %v3501
        %v3666 = vunpack.c.l.bf16 %v3502
        %v3667 = vunpack.c.h.bf16 %v3502
        %v3668 = vunpack.c.l.bf16 %v3503
        %v3669 = vunpack.c.h.bf16 %v3503
        %v3670 = vunpack.c.l.bf16 %v3504
        %v3671 = vunpack.c.h.bf16 %v3504
        %v3672 = vunpack.c.l.bf16 %v3505
        %v3673 = vunpack.c.h.bf16 %v3505
        %v3674 = vunpack.c.l.bf16 %v3506
        %v3675 = vunpack.c.h.bf16 %v3506
        %v3676 = vunpack.c.l.bf16 %v3507
        %v3677 = vunpack.c.h.bf16 %v3507
        %v3678 = vunpack.c.l.bf16 %v3508
        %v3679 = vunpack.c.h.bf16 %v3508
        %v3680 = vunpack.c.l.bf16 %v3509
        %v3681 = vunpack.c.h.bf16 %v3509
        %v3682 = vunpack.c.l.bf16 %v3510
        %v3683 = vunpack.c.h.bf16 %v3510
        %v3684 = vunpack.c.l.bf16 %v3511
        %v3685 = vunpack.c.h.bf16 %v3511
        %v3686 = vunpack.c.l.bf16 %v3512
        %v3687 = vunpack.c.h.bf16 %v3512
        %v3688 = vunpack.c.l.bf16 %v3513
        %v3689 = vunpack.c.h.bf16 %v3513
        %v3690 = vadd.f32 %v3658, %v3659
        %v3691 = vadd.f32 %v3690, %v3660
        %v3692 = vadd.f32 %v3691, %v3661
        %v3693 = vadd.f32 %v3692, %v3662
        %v3694 = vadd.f32 %v3693, %v3663
        %v3695 = vadd.f32 %v3694, %v3664
        %v3696 = vadd.f32 %v3695, %v3665
        %v3697 = vadd.f32 %v3696, %v3666
        %v3698 = vadd.f32 %v3697, %v3667
        %v3699 = vadd.f32 %v3698, %v3668
        %v3700 = vadd.f32 %v3699, %v3669
        %v3701 = vadd.f32 %v3700, %v3670
        %v3702 = vadd.f32 %v3701, %v3671
        %v3703 = vadd.f32 %v3702, %v3672
        %v3704 = vadd.f32 %v3703, %v3673
        %v3705 = vadd.f32 %v3704, %v3674
        %v3706 = vadd.f32 %v3705, %v3675
        %v3707 = vadd.f32 %v3706, %v3676
        %v3708 = vadd.f32 %v3707, %v3677
        %v3709 = vadd.f32 %v3708, %v3678
        %v3710 = vadd.f32 %v3709, %v3679
        %v3711 = vadd.f32 %v3710, %v3680
        %v3712 = vadd.f32 %v3711, %v3681
        %v3713 = vadd.f32 %v3712, %v3682
        %v3714 = vadd.f32 %v3713, %v3683
        %v3715 = vadd.f32 %v3714, %v3684
        %v3716 = vadd.f32 %v3715, %v3685
        %v3717 = vadd.f32 %v3716, %v3686
        %v3718 = vadd.f32 %v3717, %v3687
        %v3719 = vadd.f32 %v3718, %v3688
        %v3720 = vadd.f32 %v3719, %v3689
        %v3721 = vrot.slane %v3720, 4
        %v3722 = vadd.f32 %v3720, %v3721
        %v3723 = vrot.slane %v3722, 2
        %v3724 = vadd.f32 %v3722, %v3723
        %v3725 = vrot.slane %v3724, 1
        %v3726 = vadd.f32 %v3724, %v3725
        %3727 = vst [vmem:[%s240] sm:$0x1] %v3726
        %v3728 = vmul.f32 %v3658, %v3658
        %v3729 = vmul.f32 %v3659, %v3659
        %v3730 = vmul.f32 %v3660, %v3660
        %v3731 = vmul.f32 %v3661, %v3661
        %v3732 = vmul.f32 %v3662, %v3662
        %v3733 = vmul.f32 %v3663, %v3663
        %v3734 = vmul.f32 %v3664, %v3664
        %v3735 = vmul.f32 %v3665, %v3665
        %v3736 = vmul.f32 %v3666, %v3666
        %v3737 = vmul.f32 %v3667, %v3667
        %v3738 = vmul.f32 %v3668, %v3668
        %v3739 = vmul.f32 %v3669, %v3669
        %v3740 = vmul.f32 %v3670, %v3670
        %v3741 = vmul.f32 %v3671, %v3671
        %v3742 = vmul.f32 %v3672, %v3672
        %v3743 = vmul.f32 %v3673, %v3673
        %v3744 = vmul.f32 %v3674, %v3674
        %v3745 = vmul.f32 %v3675, %v3675
        %v3746 = vmul.f32 %v3676, %v3676
        %v3747 = vmul.f32 %v3677, %v3677
        %v3748 = vmul.f32 %v3678, %v3678
        %v3749 = vmul.f32 %v3679, %v3679
        %v3750 = vmul.f32 %v3680, %v3680
        %v3751 = vmul.f32 %v3681, %v3681
        %v3752 = vmul.f32 %v3682, %v3682
        %v3753 = vmul.f32 %v3683, %v3683
        %v3754 = vmul.f32 %v3684, %v3684
        %v3755 = vmul.f32 %v3685, %v3685
        %v3756 = vmul.f32 %v3686, %v3686
        %v3757 = vmul.f32 %v3687, %v3687
        %v3758 = vmul.f32 %v3688, %v3688
        %v3759 = vmul.f32 %v3689, %v3689
        %v3760 = vadd.f32 %v3728, %v3729
        %v3761 = vadd.f32 %v3760, %v3730
        %v3762 = vadd.f32 %v3761, %v3731
        %v3763 = vadd.f32 %v3762, %v3732
        %v3764 = vadd.f32 %v3763, %v3733
        %v3765 = vadd.f32 %v3764, %v3734
        %v3766 = vadd.f32 %v3765, %v3735
        %v3767 = vadd.f32 %v3766, %v3736
        %v3768 = vadd.f32 %v3767, %v3737
        %v3769 = vadd.f32 %v3768, %v3738
        %v3770 = vadd.f32 %v3769, %v3739
        %v3771 = vadd.f32 %v3770, %v3740
        %v3772 = vadd.f32 %v3771, %v3741
        %v3773 = vadd.f32 %v3772, %v3742
        %v3774 = vadd.f32 %v3773, %v3743
        %v3775 = vadd.f32 %v3774, %v3744
        %v3776 = vadd.f32 %v3775, %v3745
        %v3777 = vadd.f32 %v3776, %v3746
        %v3778 = vadd.f32 %v3777, %v3747
        %v3779 = vadd.f32 %v3778, %v3748
        %v3780 = vadd.f32 %v3779, %v3749
        %v3781 = vadd.f32 %v3780, %v3750
        %v3782 = vadd.f32 %v3781, %v3751
        %v3783 = vadd.f32 %v3782, %v3752
        %v3784 = vadd.f32 %v3783, %v3753
        %v3785 = vadd.f32 %v3784, %v3754
        %v3786 = vadd.f32 %v3785, %v3755
        %v3787 = vadd.f32 %v3786, %v3756
        %v3788 = vadd.f32 %v3787, %v3757
        %v3789 = vadd.f32 %v3788, %v3758
        %v3790 = vadd.f32 %v3789, %v3759
        %v3791 = vrot.slane %v3790, 4
        %v3792 = vadd.f32 %v3790, %v3791
        %v3793 = vrot.slane %v3792, 2
        %v3794 = vadd.f32 %v3792, %v3793
        %v3795 = vrot.slane %v3794, 1
        %v3796 = vadd.f32 %v3794, %v3795
        %3797 = vst [vmem:[%s246] sm:$0x1] %v3796
        %s3798 = sand.u32 %s81, 1
        %s3799 = scalar_lea.sflag [#allocation5], %s3798
        %s3800 = sand.u32 %s81, 1
        %s3801 = smul.addr %s3800, 128
        %s3802 = scalar_lea.vmem [#allocation8], %s3801
        %s3803 = sand.u32 %s26, 1
        %s3804 = scalar_lea.sflag [#allocation10], %s3803
        %s3805 = sand.u32 %s107, 1
        %s3806 = scalar_lea.vmem [#allocation9], %s3805
        %s3807 = sand.u32 %s26, 1
        %s3808 = scalar_lea.sflag [#allocation10], %s3807
        %s3809 = sand.u32 %s133, 1
        %s3810 = scalar_lea.vmem [#allocation11], %s3809
        // Predicated region
        $region37: #{resnet_block_forward.3} parent=27 // pred_check
          %p3811 = pneg %p91
        $region38: #{resnet_block_forward.3} parent=27 // pred_check_branch
          %3813 = sbr.rel (%p3811) target = $region40
        $region39: #{resnet_block_forward.3} parent=27 // pred_region
          %s3815 = ssub.s32 2048, 2048
          %3816 = vsyncadd %s3799, %s3815
          %s3817 = smul.addr %s26, 32
          %s3818 = smul.addr %s3817, 64
          %s3819 = scalar_lea.hbm %s2, %s3818
          %s3820 = sshll.u32 %s3802, 4
          %s3821 = int_to_ptr.vmem [resolvable:$true] %s3820
          %3826 = dma.vmem_to_hbm [thread:$0]  %s3821, 2048, %s3819, %s3799, 64, 64, 4
        $region40: #{resnet_block_forward.3} parent=27 // pred_fallthru
          _
        // Predicated region
        $region41: #{resnet_block_forward.3} parent=27 // pred_check
          %p3827 = pneg %p117
        $region42: #{resnet_block_forward.3} parent=27 // pred_check_branch
          %3829 = sbr.rel (%p3827) target = $region44
        $region43: #{resnet_block_forward.3} parent=27 // pred_region
          %s3831 = ssub.s32 16, 16
          %3832 = vsyncadd %s3804, %s3831
          %s3833 = smul.addr %s26, 16
          %s3834 = scalar_lea.hbm %s3, %s3833
          %s3836 = sshll.u32 %s3806, 4
          %s3837 = int_to_ptr.vmem [resolvable:$true] %s3836
          %3839 = dma.vmem_to_hbm [thread:$0]  %s3837, 16, %s3834, %s3804
        $region44: #{resnet_block_forward.3} parent=27 // pred_fallthru
          _
        // Predicated region
        $region45: #{resnet_block_forward.3} parent=27 // pred_check
          %p3840 = pneg %p143
        $region46: #{resnet_block_forward.3} parent=27 // pred_check_branch
          %3842 = sbr.rel (%p3840) target = $region48
        $region47: #{resnet_block_forward.3} parent=27 // pred_region
          %s3844 = ssub.s32 16, 16
          %3845 = vsyncadd %s3808, %s3844
          %s3846 = smul.addr %s26, 16
          %s3847 = scalar_lea.hbm %s4, %s3846
          %s3849 = sshll.u32 %s3810, 4
          %s3850 = int_to_ptr.vmem [resolvable:$true] %s3849
          %3852 = dma.vmem_to_hbm [thread:$0]  %s3850, 16, %s3847, %s3808
        $region48: #{resnet_block_forward.3} parent=27 // pred_fallthru
          _
      $region28: #{resnet_block_forward.3} parent=5 // pred_fallthru
        _
      %p3853 = scmp.le.s32.totalorder 2, %s21
      // Predicated region
      $region49: #{resnet_block_forward.3} parent=5 // pred_check
        %p3854 = pneg %p3853
      $region50: #{resnet_block_forward.3} parent=5 // pred_check_branch
        %3856 = sbr.rel (%p3854) target = $region52
      $region51: #{resnet_block_forward.3} parent=5 // pred_region
        %s3857 = ssub.s32 %s21, 2
        // Predicated region
        $region53: #{resnet_block_forward.3} parent=51 // pred_check
          %p3858 = pneg %p97
        $region54: #{resnet_block_forward.3} parent=51 // pred_check_branch
          %3860 = sbr.rel (%p3858) target = $region56
        $region55: #{resnet_block_forward.3} parent=51 // pred_region
          %s3861 = sand.u32 %s82, 1
          %s3862 = scalar_lea.sflag [#allocation5], %s3861
          %s3863 = sand.u32 %s82, 1
          %s3864 = smul.addr %s3863, 128
          %s3865 = scalar_lea.vmem [#allocation8], %s3864
          %3866 = dma.done %s3862, 2048
        $region56: #{resnet_block_forward.3} parent=51 // pred_fallthru
          _
        // Predicated region
        $region57: #{resnet_block_forward.3} parent=51 // pred_check
          %p3867 = pneg %p123
        $region58: #{resnet_block_forward.3} parent=51 // pred_check_branch
          %3869 = sbr.rel (%p3867) target = $region60
        $region59: #{resnet_block_forward.3} parent=51 // pred_region
          %s3870 = sand.u32 %s27, 1
          %s3871 = scalar_lea.sflag [#allocation10], %s3870
          %s3872 = sand.u32 %s108, 1
          %s3873 = scalar_lea.vmem [#allocation9], %s3872
          %3874 = dma.done %s3871, 16
        $region60: #{resnet_block_forward.3} parent=51 // pred_fallthru
          _
        // Predicated region
        $region61: #{resnet_block_forward.3} parent=51 // pred_check
          %p3875 = pneg %p149
        $region62: #{resnet_block_forward.3} parent=51 // pred_check_branch
          %3877 = sbr.rel (%p3875) target = $region64
        $region63: #{resnet_block_forward.3} parent=51 // pred_region
          %s3878 = sand.u32 %s27, 1
          %s3879 = scalar_lea.sflag [#allocation10], %s3878
          %s3880 = sand.u32 %s134, 1
          %s3881 = scalar_lea.vmem [#allocation11], %s3880
          %3882 = dma.done %s3879, 16
        $region64: #{resnet_block_forward.3} parent=51 // pred_fallthru
          _
      $region52: #{resnet_block_forward.3} parent=5 // pred_fallthru
        _
    $region6: #{resnet_block_forward.3} parent=1 // loop_footer
      %s25 = sadd.s32 1, %s21
    $region7: #{resnet_block_forward.3} parent=1 // loop_footer_branch
      %20 = sbr.rel target = $region3
    $region8: #{resnet_block_forward.3} parent=1 // loop_exit
      _
    %3883 = vsyncpa [#allocation4], 1
    %s3884 = scalar_lea.sflag [#allocation4], 1
    %3885 = vsyncpa %s3884, 1
    %3886 = vsyncpa [#allocation7], 1
    %3887 = vsyncpa [#allocation5], 1
    %s3888 = scalar_lea.sflag [#allocation5], 1
    %3889 = vsyncpa %s3888, 1
    %3890 = vsyncpa [#allocation10], 1
    %s3891 = scalar_lea.sflag [#allocation10], 1
    %3892 = vsyncpa %s3891, 1

// kernel: resnet_block_forward.4
$region0: #{resnet_block_forward.4}
  #allocation0 [shape = 'u32[]', space=smem, size = 0x4, offset = 0x4, fixed_abs, tag = 'smem constant byte address 0x4 - core index']
  #allocation1 [shape = 'u32[144,128]{1,0:T(1,128)}', space=vmem, size = 0x12000, scoped, tag = 'internal scratch']
  #allocation2 [shape = 'bf16[288,384]{1,0:T(16,128)(2,1)}', space=vmem, size = 0x36000, scoped, tag = 'scratch operand']
  %s0 = inlined_call_operand.hbm [shape: bf16[2,16,16,128], index: 0, kind: input, shape index: {}]
  %s1 = inlined_call_operand.hbm [shape: bf16[3,384,128], index: 1, kind: input, shape index: {}]
  %s2 = inlined_call_operand.hbm [shape: f32[1,128], index: 2, kind: input, shape index: {}]
  %s3 = inlined_call_operand.hbm [shape: f32[1,128], index: 3, kind: input, shape index: {}]
  %s4 = inlined_call_operand.hbm [shape: bf16[2,16,16,128], index: 4, kind: output, shape index: {0}]
  %s5 = inlined_call_operand.hbm [shape: f32[2,1,128], index: 5, kind: output, shape index: {1}]
  %s6 = inlined_call_operand.hbm [shape: f32[2,1,128], index: 6, kind: output, shape index: {2}]
  %7 = xla_tuple %s4, %s5, %s6
  %s8 = sld [smem:[#allocation0]]
  $region81: #{resnet_block_forward.4} parent=0
    _
  %s10 = ssub.s32 1, %s8
  %s11 = scalar_select 0, %s10, %s8
  $region1: #{resnet_block_forward.4} parent=0
    #allocation3 [shape = 'u8[131072]{0}', space=vmem, size = 0x20000, scoped, tag = 'input window, operand 0']
    #allocation4 [shape = 's32[2]{0}', space=sflag, size = 0x8, scoped, tag = 'scoped memory for resnet_block_forward.4']
    #allocation5 [shape = 's32[2]{0}', space=sflag, size = 0x8, scoped, tag = 'scoped memory for resnet_block_forward.4']
    #allocation6 [shape = 'u8[294912]{0}', space=vmem, size = 0x48000, scoped, tag = 'input window, operand 1, single buffered']
    #allocation7 [shape = 's32[1]{0}', space=sflag, size = 0x4, scoped, tag = 'scoped memory for resnet_block_forward.4']
    #allocation8 [shape = 'u8[512]{0}', space=vmem, size = 0x400, scoped, tag = 'input window, operand 2, single buffered']
    #allocation9 [shape = 'u8[512]{0}', space=vmem, size = 0x400, scoped, tag = 'input window, operand 3, single buffered']
    #allocation10 [shape = 's32[1]{0}', space=sflag, size = 0x4, scoped, tag = 'scoped memory for resnet_block_forward.4']
    #allocation11 [shape = 'u8[131072]{0}', space=vmem, size = 0x20000, scoped, tag = 'output window, operand 0']
    #allocation12 [shape = 'u8[1024]{0}', space=vmem, size = 0x400, scoped, tag = 'output window, operand 1']
    #allocation13 [shape = 's32[2]{0}', space=sflag, size = 0x8, scoped, tag = 'scoped memory for resnet_block_forward.4']
    #allocation14 [shape = 'u8[1024]{0}', space=vmem, size = 0x400, scoped, tag = 'output window, operand 2']
    %12 = vsyncpa [#allocation4], 0
    %s13 = scalar_lea.sflag [#allocation4], 1
    %14 = vsyncpa %s13, 0
    %15 = vsyncpa [#allocation7], 0
    %16 = vsyncpa [#allocation10], 0
    %17 = vsyncpa [#allocation5], 0
    %s18 = scalar_lea.sflag [#allocation5], 1
    %19 = vsyncpa %s18, 0
    %20 = vsyncpa [#allocation13], 0
    %s21 = scalar_lea.sflag [#allocation13], 1
    %22 = vsyncpa %s21, 0
    loop: start=0, step=1, limit=4
    $region2: #{resnet_block_forward.4} parent=1 // loop_pre_header
      _
    $region3: #{resnet_block_forward.4} parent=1 // loop_header
      %s24 = sphi 0, %s28
      %p25 = scmp.ge.s32.totalorder %s24, 4
      %s34 = sphi 0, %s36
      %s37 = sphi 0, %s34
      %s38 = sphi 0, %s37
      %s54 = sphi 0, %s38
      %s58 = sphi 0, %s58
      %s60 = sphi 0, %s58
      %s61 = sphi 0, %s60
      %s75 = sphi 0, %s61
      %s79 = sphi 0, %s79
      %s81 = sphi 0, %s79
      %s82 = sphi 0, %s81
      %s96 = sphi 0, %s82
      %s100 = sphi 0, %s100
      %s102 = sphi 0, %s100
      %s103 = sphi 0, %s102
      %s117 = sphi 0, %s103
      %s123 = sphi 0, %s125
      %s126 = sphi 0, %s123
      %s127 = sphi 0, %s126
      %s143 = sphi 0, %s127
      %s149 = sphi 0, %s151
      %s152 = sphi 0, %s149
      %s153 = sphi 0, %s152
      %s169 = sphi 0, %s153
      %s175 = sphi 0, %s177
      %s178 = sphi 0, %s175
      %s179 = sphi 0, %s178
      %s195 = sphi 0, %s179
    $region4: #{resnet_block_forward.4} parent=1 // loop_header_branch
      %27 = sbr.rel (%p25) target = $region8
    $region5: #{resnet_block_forward.4} parent=1 // loop_body
      %s29 = ssub.s32 %s24, 1
      %s30 = ssub.s32 %s24, 2
      %s31 = sadd.s32 %s24, 1
      %s32 = ssub.s32 %s24, %s31
      %p33 = scmp.eq.s32.totalorder %s32, 0
      %s35 = sadd.s32 %s34, 1
      %s36 = scalar_select %p33, %s34, %s35
      %p39 = pneg %p33
      %p40 = scmp.eq.s32.totalorder %s24, 1
      %p41 = por %p39, %p40
      %p42 = scmp.ne.s32.totalorder %s34, %s37
      %p43 = scmp.eq.s32.totalorder %s24, 0
      %p44 = por %p42, %p43
      %p45 = scmp.ne.s32.totalorder %s34, %s37
      %p46 = scmp.eq.s32.totalorder %s29, 1
      %p47 = por %p45, %p46
      %p48 = scmp.ne.s32.totalorder %s37, %s38
      %p49 = scmp.eq.s32.totalorder %s29, 0
      %p50 = por %p48, %p49
      %p51 = scmp.ne.s32.totalorder %s37, %s38
      %p52 = scmp.eq.s32.totalorder %s30, 1
      %p53 = por %p51, %p52
      %p55 = scmp.ne.s32.totalorder %s38, %s54
      %p56 = scmp.eq.s32.totalorder %s30, 0
      %p57 = por %p55, %p56
      %s59 = sadd.s32 %s58, 1
      %p62 = scmp.eq.s32.totalorder %s24, 1
      %p63 = scmp.ne.s32.totalorder %s58, %s60
      %p64 = scmp.eq.s32.totalorder %s24, 0
      %p65 = por %p63, %p64
      %p66 = scmp.ne.s32.totalorder %s58, %s60
      %p67 = scmp.eq.s32.totalorder %s29, 1
      %p68 = por %p66, %p67
      %p69 = scmp.ne.s32.totalorder %s60, %s61
      %p70 = scmp.eq.s32.totalorder %s29, 0
      %p71 = por %p69, %p70
      %p72 = scmp.ne.s32.totalorder %s60, %s61
      %p73 = scmp.eq.s32.totalorder %s30, 1
      %p74 = por %p72, %p73
      %p76 = scmp.ne.s32.totalorder %s61, %s75
      %p77 = scmp.eq.s32.totalorder %s30, 0
      %p78 = por %p76, %p77
      %s80 = sadd.s32 %s79, 1
      %p83 = scmp.eq.s32.totalorder %s24, 1
      %p84 = scmp.ne.s32.totalorder %s79, %s81
      %p85 = scmp.eq.s32.totalorder %s24, 0
      %p86 = por %p84, %p85
      %p87 = scmp.ne.s32.totalorder %s79, %s81
      %p88 = scmp.eq.s32.totalorder %s29, 1
      %p89 = por %p87, %p88
      %p90 = scmp.ne.s32.totalorder %s81, %s82
      %p91 = scmp.eq.s32.totalorder %s29, 0
      %p92 = por %p90, %p91
      %p93 = scmp.ne.s32.totalorder %s81, %s82
      %p94 = scmp.eq.s32.totalorder %s30, 1
      %p95 = por %p93, %p94
      %p97 = scmp.ne.s32.totalorder %s82, %s96
      %p98 = scmp.eq.s32.totalorder %s30, 0
      %p99 = por %p97, %p98
      %s101 = sadd.s32 %s100, 1
      %p104 = scmp.eq.s32.totalorder %s24, 1
      %p105 = scmp.ne.s32.totalorder %s100, %s102
      %p106 = scmp.eq.s32.totalorder %s24, 0
      %p107 = por %p105, %p106
      %p108 = scmp.ne.s32.totalorder %s100, %s102
      %p109 = scmp.eq.s32.totalorder %s29, 1
      %p110 = por %p108, %p109
      %p111 = scmp.ne.s32.totalorder %s102, %s103
      %p112 = scmp.eq.s32.totalorder %s29, 0
      %p113 = por %p111, %p112
      %p114 = scmp.ne.s32.totalorder %s102, %s103
      %p115 = scmp.eq.s32.totalorder %s30, 1
      %p116 = por %p114, %p115
      %p118 = scmp.ne.s32.totalorder %s103, %s117
      %p119 = scmp.eq.s32.totalorder %s30, 0
      %p120 = por %p118, %p119
      %s121 = ssub.s32 %s24, %s31
      %p122 = scmp.eq.s32.totalorder %s121, 0
      %s124 = sadd.s32 %s123, 1
      %s125 = scalar_select %p122, %s123, %s124
      %p128 = pneg %p122
      %p129 = scmp.eq.s32.totalorder %s24, 1
      %p130 = por %p128, %p129
      %p131 = scmp.ne.s32.totalorder %s123, %s126
      %p132 = scmp.eq.s32.totalorder %s24, 0
      %p133 = por %p131, %p132
      %p134 = scmp.ne.s32.totalorder %s123, %s126
      %p135 = scmp.eq.s32.totalorder %s29, 1
      %p136 = por %p134, %p135
      %p137 = scmp.ne.s32.totalorder %s126, %s127
      %p138 = scmp.eq.s32.totalorder %s29, 0
      %p139 = por %p137, %p138
      %p140 = scmp.ne.s32.totalorder %s126, %s127
      %p141 = scmp.eq.s32.totalorder %s30, 1
      %p142 = por %p140, %p141
      %p144 = scmp.ne.s32.totalorder %s127, %s143
      %p145 = scmp.eq.s32.totalorder %s30, 0
      %p146 = por %p144, %p145
      %s147 = ssub.s32 %s24, %s31
      %p148 = scmp.eq.s32.totalorder %s147, 0
      %s150 = sadd.s32 %s149, 1
      %s151 = scalar_select %p148, %s149, %s150
      %p154 = pneg %p148
      %p155 = scmp.eq.s32.totalorder %s24, 1
      %p156 = por %p154, %p155
      %p157 = scmp.ne.s32.totalorder %s149, %s152
      %p158 = scmp.eq.s32.totalorder %s24, 0
      %p159 = por %p157, %p158
      %p160 = scmp.ne.s32.totalorder %s149, %s152
      %p161 = scmp.eq.s32.totalorder %s29, 1
      %p162 = por %p160, %p161
      %p163 = scmp.ne.s32.totalorder %s152, %s153
      %p164 = scmp.eq.s32.totalorder %s29, 0
      %p165 = por %p163, %p164
      %p166 = scmp.ne.s32.totalorder %s152, %s153
      %p167 = scmp.eq.s32.totalorder %s30, 1
      %p168 = por %p166, %p167
      %p170 = scmp.ne.s32.totalorder %s153, %s169
      %p171 = scmp.eq.s32.totalorder %s30, 0
      %p172 = por %p170, %p171
      %s173 = ssub.s32 %s24, %s31
      %p174 = scmp.eq.s32.totalorder %s173, 0
      %s176 = sadd.s32 %s175, 1
      %s177 = scalar_select %p174, %s175, %s176
      %p180 = pneg %p174
      %p181 = scmp.eq.s32.totalorder %s24, 1
      %p182 = por %p180, %p181
      %p183 = scmp.ne.s32.totalorder %s175, %s178
      %p184 = scmp.eq.s32.totalorder %s24, 0
      %p185 = por %p183, %p184
      %p186 = scmp.ne.s32.totalorder %s175, %s178
      %p187 = scmp.eq.s32.totalorder %s29, 1
      %p188 = por %p186, %p187
      %p189 = scmp.ne.s32.totalorder %s178, %s179
      %p190 = scmp.eq.s32.totalorder %s29, 0
      %p191 = por %p189, %p190
      %p192 = scmp.ne.s32.totalorder %s178, %s179
      %p193 = scmp.eq.s32.totalorder %s30, 1
      %p194 = por %p192, %p193
      %p196 = scmp.ne.s32.totalorder %s179, %s195
      %p197 = scmp.eq.s32.totalorder %s30, 0
      %p198 = por %p196, %p197
      %p199 = scmp.le.s32.totalorder 1, %s24
      %p200 = scmp.lt.s32.totalorder %s24, 3
      %p201 = pnand %p199, %p200
      %p202 = pneg %p201
      // Predicated region
      $region9: #{resnet_block_forward.4} parent=5 // pred_check
        _
      $region10: #{resnet_block_forward.4} parent=5 // pred_check_branch
        %204 = sbr.rel (%p201) target = $region12
      $region11: #{resnet_block_forward.4} parent=5 // pred_region
        %s205 = ssub.s32 %s24, 1
        // Predicated region
        $region13: #{resnet_block_forward.4} parent=11 // pred_check
          %p206 = pneg %p71
        $region14: #{resnet_block_forward.4} parent=11 // pred_check_branch
          %208 = sbr.rel (%p206) target = $region16
        $region15: #{resnet_block_forward.4} parent=11 // pred_region
          %s210 = ssub.s32 9216, 9216
          %211 = vsyncadd [#allocation7], %s210
          %s212 = sshll.u32 [#allocation6], 4
          %s213 = int_to_ptr.vmem [resolvable:$true] %s212
          %218 = dma.hbm_to_vmem [thread:$0]  %s1, 9216, %s213, [#allocation7], 64, 64, 4
        $region16: #{resnet_block_forward.4} parent=11 // pred_fallthru
          _
        // Predicated region
        $region17: #{resnet_block_forward.4} parent=11 // pred_check
          %p219 = pneg %p92
        $region18: #{resnet_block_forward.4} parent=11 // pred_check_branch
          %221 = sbr.rel (%p219) target = $region20
        $region19: #{resnet_block_forward.4} parent=11 // pred_region
          %s223 = ssub.s32 16, 16
          %224 = vsyncadd [#allocation7], %s223
          %s226 = sshll.u32 [#allocation8], 4
          %s227 = int_to_ptr.vmem [resolvable:$true] %s226
          %229 = dma.hbm_to_vmem [thread:$0]  %s2, 16, %s227, [#allocation7]
        $region20: #{resnet_block_forward.4} parent=11 // pred_fallthru
          _
        // Predicated region
        $region21: #{resnet_block_forward.4} parent=11 // pred_check
          %p230 = pneg %p113
        $region22: #{resnet_block_forward.4} parent=11 // pred_check_branch
          %232 = sbr.rel (%p230) target = $region24
        $region23: #{resnet_block_forward.4} parent=11 // pred_region
          %s234 = ssub.s32 16, 16
          %235 = vsyncadd [#allocation10], %s234
          %s237 = sshll.u32 [#allocation9], 4
          %s238 = int_to_ptr.vmem [resolvable:$true] %s237
          %240 = dma.hbm_to_vmem [thread:$0]  %s3, 16, %s238, [#allocation10]
        $region24: #{resnet_block_forward.4} parent=11 // pred_fallthru
          _
      $region12: #{resnet_block_forward.4} parent=5 // pred_fallthru
        _
      %p241 = scmp.lt.s32.totalorder %s24, 2
      // Predicated region
      $region25: #{resnet_block_forward.4} parent=5 // pred_check
        %p242 = pneg %p241
      $region26: #{resnet_block_forward.4} parent=5 // pred_check_branch
        %244 = sbr.rel (%p242) target = $region28
      $region27: #{resnet_block_forward.4} parent=5 // pred_region
        // Predicated region
        $region29: #{resnet_block_forward.4} parent=27 // pred_check
          %p245 = pneg %p44
        $region30: #{resnet_block_forward.4} parent=27 // pred_check_branch
          %247 = sbr.rel (%p245) target = $region32
        $region31: #{resnet_block_forward.4} parent=27 // pred_region
          %s248 = sand.u32 %s34, 1
          %s249 = scalar_lea.sflag [#allocation4], %s248
          %s250 = sand.u32 %s34, 1
          %s251 = smul.addr %s250, 128
          %s252 = scalar_lea.vmem [#allocation3], %s251
          %s254 = ssub.s32 2048, 2048
          %255 = vsyncadd %s249, %s254
          %s256 = smul.addr %s24, 32
          %s257 = smul.addr %s256, 64
          %s258 = scalar_lea.hbm %s0, %s257
          %s259 = sshll.u32 %s252, 4
          %s260 = int_to_ptr.vmem [resolvable:$true] %s259
          %265 = dma.hbm_to_vmem [thread:$0]  %s258, 2048, %s260, %s249, 64, 64, 4
        $region32: #{resnet_block_forward.4} parent=27 // pred_fallthru
          _
      $region28: #{resnet_block_forward.4} parent=5 // pred_fallthru
        _
      %p266 = scmp.le.s32.totalorder 1, %s24
      %p267 = scmp.lt.s32.totalorder %s24, 3
      %p268 = pnand %p266, %p267
      %p269 = pneg %p268
      // Predicated region
      $region33: #{resnet_block_forward.4} parent=5 // pred_check
        _
      $region34: #{resnet_block_forward.4} parent=5 // pred_check_branch
        %271 = sbr.rel (%p268) target = $region36
      $region35: #{resnet_block_forward.4} parent=5 // pred_region
        %s272 = ssub.s32 %s24, 1
        %s273 = sand.u32 %s37, 1
        %s274 = scalar_lea.sflag [#allocation4], %s273
        %s275 = sand.u32 %s37, 1
        %s276 = smul.addr %s275, 128
        %s277 = scalar_lea.vmem [#allocation3], %s276
        // Predicated region
        $region37: #{resnet_block_forward.4} parent=35 // pred_check
          %p278 = pneg %p50
        $region38: #{resnet_block_forward.4} parent=35 // pred_check_branch
          %280 = sbr.rel (%p278) target = $region40
        $region39: #{resnet_block_forward.4} parent=35 // pred_region
          %281 = dma.done %s274, 2048
        $region40: #{resnet_block_forward.4} parent=35 // pred_fallthru
          _
        // Predicated region
        $region41: #{resnet_block_forward.4} parent=35 // pred_check
          %p282 = pneg %p71
        $region42: #{resnet_block_forward.4} parent=35 // pred_check_branch
          %284 = sbr.rel (%p282) target = $region44
        $region43: #{resnet_block_forward.4} parent=35 // pred_region
          %285 = dma.done [#allocation7], 9216
        $region44: #{resnet_block_forward.4} parent=35 // pred_fallthru
          _
        // Predicated region
        $region45: #{resnet_block_forward.4} parent=35 // pred_check
          %p286 = pneg %p92
        $region46: #{resnet_block_forward.4} parent=35 // pred_check_branch
          %288 = sbr.rel (%p286) target = $region48
        $region47: #{resnet_block_forward.4} parent=35 // pred_region
          %289 = dma.done [#allocation7], 16
        $region48: #{resnet_block_forward.4} parent=35 // pred_fallthru
          _
        // Predicated region
        $region49: #{resnet_block_forward.4} parent=35 // pred_check
          %p290 = pneg %p113
        $region50: #{resnet_block_forward.4} parent=35 // pred_check_branch
          %292 = sbr.rel (%p290) target = $region52
        $region51: #{resnet_block_forward.4} parent=35 // pred_region
          %293 = dma.done [#allocation10], 16
        $region52: #{resnet_block_forward.4} parent=35 // pred_fallthru
          _
        %s294 = sand.u32 %s37, 1
        %s295 = scalar_lea.sflag [#allocation4], %s294
        %s296 = sand.u32 %s37, 1
        %s297 = smul.addr %s296, 128
        %s298 = scalar_lea.vmem [#allocation3], %s297
        %p299 = pneg %p50
        %p300 = pneg %p47
        %p301 = pneg %p71
        %p302 = pneg %p68
        %p303 = pneg %p92
        %p304 = pneg %p89
        %p305 = pneg %p113
        %p306 = pneg %p110
        %p307 = pneg %p139
        %p308 = pneg %p136
        %s309 = sand.u32 %s126, 1
        %s310 = scalar_lea.sflag [#allocation5], %s309
        %s311 = sand.u32 %s126, 1
        %s312 = smul.addr %s311, 128
        %s313 = scalar_lea.vmem [#allocation11], %s312
        %p314 = pneg %p165
        %p315 = pneg %p162
        %s316 = sand.u32 %s29, 1
        %s317 = scalar_lea.sflag [#allocation13], %s316
        %s318 = sand.u32 %s152, 1
        %s319 = scalar_lea.vmem [#allocation12], %s318
        %p320 = pneg %p191
        %p321 = pneg %p188
        %s322 = sand.u32 %s29, 1
        %s323 = scalar_lea.sflag [#allocation13], %s322
        %s324 = sand.u32 %s178, 1
        %s325 = scalar_lea.vmem [#allocation14], %s324
        %v329 = vld [vmem:[%s277] sm:$0xf]
        %v330 = vld [vmem:[%s277 + $0x4] sm:$0xf]
        %v331 = vld [vmem:[%s277 + $0x8] sm:$0xf]
        %v332 = vld [vmem:[%s277 + $0xc] sm:$0xf]
        %v333 = vld [vmem:[%s277 + $0x10] sm:$0xf]
        %v334 = vld [vmem:[%s277 + $0x14] sm:$0xf]
        %v335 = vld [vmem:[%s277 + $0x18] sm:$0xf]
        %v336 = vld [vmem:[%s277 + $0x1c] sm:$0xf]
        %v337 = vld [vmem:[%s277 + $0x20] sm:$0xf]
        %v338 = vld [vmem:[%s277 + $0x24] sm:$0xf]
        %v339 = vld [vmem:[%s277 + $0x28] sm:$0xf]
        %v340 = vld [vmem:[%s277 + $0x2c] sm:$0xf]
        %v341 = vld [vmem:[%s277 + $0x30] sm:$0xf]
        %v342 = vld [vmem:[%s277 + $0x34] sm:$0xf]
        %v343 = vld [vmem:[%s277 + $0x38] sm:$0xf]
        %v344 = vld [vmem:[%s277 + $0x3c] sm:$0xf]
        %v345 = vld [vmem:[%s277 + $0x40] sm:$0xf]
        %v346 = vld [vmem:[%s277 + $0x44] sm:$0xf]
        %v347 = vld [vmem:[%s277 + $0x48] sm:$0xf]
        %v348 = vld [vmem:[%s277 + $0x4c] sm:$0xf]
        %v349 = vld [vmem:[%s277 + $0x50] sm:$0xf]
        %v350 = vld [vmem:[%s277 + $0x54] sm:$0xf]
        %v351 = vld [vmem:[%s277 + $0x58] sm:$0xf]
        %v352 = vld [vmem:[%s277 + $0x5c] sm:$0xf]
        %v353 = vld [vmem:[%s277 + $0x60] sm:$0xf]
        %v354 = vld [vmem:[%s277 + $0x64] sm:$0xf]
        %v355 = vld [vmem:[%s277 + $0x68] sm:$0xf]
        %v356 = vld [vmem:[%s277 + $0x6c] sm:$0xf]
        %v357 = vld [vmem:[%s277 + $0x70] sm:$0xf]
        %v358 = vld [vmem:[%s277 + $0x74] sm:$0xf]
        %v359 = vld [vmem:[%s277 + $0x78] sm:$0xf]
        %v360 = vld [vmem:[%s277 + $0x7c] sm:$0xf]
        %v361 = vunpack.c.l.bf16 %v329
        %v362 = vunpack.c.l.bf16 %v330
        %v363 = vunpack.c.l.bf16 %v331
        %v364 = vunpack.c.l.bf16 %v332
        %v365 = vunpack.c.l.bf16 %v333
        %v366 = vunpack.c.l.bf16 %v334
        %v367 = vunpack.c.l.bf16 %v335
        %v368 = vunpack.c.l.bf16 %v336
        %v369 = vunpack.c.l.bf16 %v337
        %v370 = vunpack.c.l.bf16 %v338
        %v371 = vunpack.c.l.bf16 %v339
        %v372 = vunpack.c.l.bf16 %v340
        %v373 = vunpack.c.l.bf16 %v341
        %v374 = vunpack.c.l.bf16 %v342
        %v375 = vunpack.c.l.bf16 %v343
        %v376 = vunpack.c.l.bf16 %v344
        %v377 = vunpack.c.l.bf16 %v345
        %v378 = vunpack.c.l.bf16 %v346
        %v379 = vunpack.c.l.bf16 %v347
        %v380 = vunpack.c.l.bf16 %v348
        %v381 = vunpack.c.l.bf16 %v349
        %v382 = vunpack.c.l.bf16 %v350
        %v383 = vunpack.c.l.bf16 %v351
        %v384 = vunpack.c.l.bf16 %v352
        %v385 = vunpack.c.l.bf16 %v353
        %v386 = vunpack.c.l.bf16 %v354
        %v387 = vunpack.c.l.bf16 %v355
        %v388 = vunpack.c.l.bf16 %v356
        %v389 = vunpack.c.l.bf16 %v357
        %v390 = vunpack.c.l.bf16 %v358
        %v391 = vunpack.c.l.bf16 %v359
        %v392 = vunpack.c.l.bf16 %v360
        %v393 = vld [vmem:[#allocation8] sm:$0x1]
        %v395 = vlaneseq
        %v396 = vshrl.u32 %v395, 7
        %v397 = vsub.s32 0, %v396
        %v398 = vrot.slane %v393, %v397
        %v400 = vmul.f32 %v361, %v398
        %v401 = vmul.f32 %v362, %v398
        %v402 = vmul.f32 %v363, %v398
        %v403 = vmul.f32 %v364, %v398
        %v404 = vmul.f32 %v365, %v398
        %v405 = vmul.f32 %v366, %v398
        %v406 = vmul.f32 %v367, %v398
        %v407 = vmul.f32 %v368, %v398
        %v408 = vmul.f32 %v369, %v398
        %v409 = vmul.f32 %v370, %v398
        %v410 = vmul.f32 %v371, %v398
        %v411 = vmul.f32 %v372, %v398
        %v412 = vmul.f32 %v373, %v398
        %v413 = vmul.f32 %v374, %v398
        %v414 = vmul.f32 %v375, %v398
        %v415 = vmul.f32 %v376, %v398
        %v416 = vmul.f32 %v377, %v398
        %v417 = vmul.f32 %v378, %v398
        %v418 = vmul.f32 %v379, %v398
        %v419 = vmul.f32 %v380, %v398
        %v420 = vmul.f32 %v381, %v398
        %v421 = vmul.f32 %v382, %v398
        %v422 = vmul.f32 %v383, %v398
        %v423 = vmul.f32 %v384, %v398
        %v424 = vmul.f32 %v385, %v398
        %v425 = vmul.f32 %v386, %v398
        %v426 = vmul.f32 %v387, %v398
        %v427 = vmul.f32 %v388, %v398
        %v428 = vmul.f32 %v389, %v398
        %v429 = vmul.f32 %v390, %v398
        %v430 = vmul.f32 %v391, %v398
        %v431 = vmul.f32 %v392, %v398
        %v432 = vld [vmem:[#allocation9] sm:$0x1]
        %v434 = vlaneseq
        %v435 = vshrl.u32 %v434, 7
        %v436 = vsub.s32 0, %v435
        %v437 = vrot.slane %v432, %v436
        %v439 = vadd.f32 %v400, %v437
        %v440 = vadd.f32 %v401, %v437
        %v441 = vadd.f32 %v402, %v437
        %v442 = vadd.f32 %v403, %v437
        %v443 = vadd.f32 %v404, %v437
        %v444 = vadd.f32 %v405, %v437
        %v445 = vadd.f32 %v406, %v437
        %v446 = vadd.f32 %v407, %v437
        %v447 = vadd.f32 %v408, %v437
        %v448 = vadd.f32 %v409, %v437
        %v449 = vadd.f32 %v410, %v437
        %v450 = vadd.f32 %v411, %v437
        %v451 = vadd.f32 %v412, %v437
        %v452 = vadd.f32 %v413, %v437
        %v453 = vadd.f32 %v414, %v437
        %v454 = vadd.f32 %v415, %v437
        %v455 = vadd.f32 %v416, %v437
        %v456 = vadd.f32 %v417, %v437
        %v457 = vadd.f32 %v418, %v437
        %v458 = vadd.f32 %v419, %v437
        %v459 = vadd.f32 %v420, %v437
        %v460 = vadd.f32 %v421, %v437
        %v461 = vadd.f32 %v422, %v437
        %v462 = vadd.f32 %v423, %v437
        %v463 = vadd.f32 %v424, %v437
        %v464 = vadd.f32 %v425, %v437
        %v465 = vadd.f32 %v426, %v437
        %v466 = vadd.f32 %v427, %v437
        %v467 = vadd.f32 %v428, %v437
        %v468 = vadd.f32 %v429, %v437
        %v469 = vadd.f32 %v430, %v437
        %v470 = vadd.f32 %v431, %v437
        %v471 = vmax.f32 %v439, 0.0
        %v472 = vmax.f32 %v440, 0.0
        %v473 = vmax.f32 %v441, 0.0
        %v474 = vmax.f32 %v442, 0.0
        %v475 = vmax.f32 %v443, 0.0
        %v476 = vmax.f32 %v444, 0.0
        %v477 = vmax.f32 %v445, 0.0
        %v478 = vmax.f32 %v446, 0.0
        %v479 = vmax.f32 %v447, 0.0
        %v480 = vmax.f32 %v448, 0.0
        %v481 = vmax.f32 %v449, 0.0
        %v482 = vmax.f32 %v450, 0.0
        %v483 = vmax.f32 %v451, 0.0
        %v484 = vmax.f32 %v452, 0.0
        %v485 = vmax.f32 %v453, 0.0
        %v486 = vmax.f32 %v454, 0.0
        %v487 = vmax.f32 %v455, 0.0
        %v488 = vmax.f32 %v456, 0.0
        %v489 = vmax.f32 %v457, 0.0
        %v490 = vmax.f32 %v458, 0.0
        %v491 = vmax.f32 %v459, 0.0
        %v492 = vmax.f32 %v460, 0.0
        %v493 = vmax.f32 %v461, 0.0
        %v494 = vmax.f32 %v462, 0.0
        %v495 = vmax.f32 %v463, 0.0
        %v496 = vmax.f32 %v464, 0.0
        %v497 = vmax.f32 %v465, 0.0
        %v498 = vmax.f32 %v466, 0.0
        %v499 = vmax.f32 %v467, 0.0
        %v500 = vmax.f32 %v468, 0.0
        %v501 = vmax.f32 %v469, 0.0
        %v502 = vmax.f32 %v470, 0.0
        %v503 = vpack.c.bf16 %v472, %v471
        %v504 = vpack.c.bf16 %v474, %v473
        %v505 = vpack.c.bf16 %v476, %v475
        %v506 = vpack.c.bf16 %v478, %v477
        %v507 = vpack.c.bf16 %v480, %v479
        %v508 = vpack.c.bf16 %v482, %v481
        %v509 = vpack.c.bf16 %v484, %v483
        %v510 = vpack.c.bf16 %v486, %v485
        %v511 = vpack.c.bf16 %v488, %v487
        %v512 = vpack.c.bf16 %v490, %v489
        %v513 = vpack.c.bf16 %v492, %v491
        %v514 = vpack.c.bf16 %v494, %v493
        %v515 = vpack.c.bf16 %v496, %v495
        %v516 = vpack.c.bf16 %v498, %v497
        %v517 = vpack.c.bf16 %v500, %v499
        %v518 = vpack.c.bf16 %v502, %v501
        %519 = vst [vmem:[#allocation2] sm:$0xff] 0
        %520 = vst [vmem:[#allocation2 + $0x8] sm:$0xff] 0
        %521 = vst [vmem:[#allocation2 + $0x10] sm:$0xff] 0
        %522 = vst [vmem:[#allocation2 + $0x198] sm:$0xff] 0
        %523 = vst [vmem:[#allocation2 + $0x1a0] sm:$0xff] 0
        %524 = vst [vmem:[#allocation2 + $0x1a8] sm:$0xff] 0
        %525 = vst [vmem:[#allocation2 + $0x20] sm:$0xff] %v503
        %526 = vst [vmem:[#allocation2 + $0x38] sm:$0xff] %v504
        %527 = vst [vmem:[#allocation2 + $0x50] sm:$0xff] %v505
        %528 = vst [vmem:[#allocation2 + $0x68] sm:$0xff] %v506
        %529 = vst [vmem:[#allocation2 + $0x80] sm:$0xff] %v507
        %530 = vst [vmem:[#allocation2 + $0x98] sm:$0xff] %v508
        %531 = vst [vmem:[#allocation2 + $0xb0] sm:$0xff] %v509
        %532 = vst [vmem:[#allocation2 + $0xc8] sm:$0xff] %v510
        %533 = vst [vmem:[#allocation2 + $0xe0] sm:$0xff] %v511
        %534 = vst [vmem:[#allocation2 + $0xf8] sm:$0xff] %v512
        %535 = vst [vmem:[#allocation2 + $0x110] sm:$0xff] %v513
        %536 = vst [vmem:[#allocation2 + $0x128] sm:$0xff] %v514
        %537 = vst [vmem:[#allocation2 + $0x140] sm:$0xff] %v515
        %538 = vst [vmem:[#allocation2 + $0x158] sm:$0xff] %v516
        %539 = vst [vmem:[#allocation2 + $0x170] sm:$0xff] %v517
        %540 = vst [vmem:[#allocation2 + $0x188] sm:$0xff] %v518
        %v541 = vlaneseq
        %v542 = vshrl.u32 %v541, 7
        %v543 = vadd.s32 %v542, 8
        %v544 = vadd.s32 %v542, 16
        %v545 = vadd.s32 %v542, 24
        %v546 = vadd.s32 %v542, 32
        %v547 = vadd.s32 %v542, 40
        %v548 = vadd.s32 %v542, 48
        %v549 = vadd.s32 %v542, 56
        %v550 = vadd.s32 %v542, 64
        %v551 = vadd.s32 %v542, 72
        %v552 = vadd.s32 %v542, 80
        %v553 = vadd.s32 %v542, 88
        %v554 = vadd.s32 %v542, 96
        %v555 = vadd.s32 %v542, 104
        %v556 = vadd.s32 %v542, 112
        %v557 = vadd.s32 %v542, 120
        %v558 = vadd.s32 %v542, 128
        %v559 = vadd.s32 %v542, 136
        %v560 = vadd.s32 %v542, 144
        %v561 = vadd.s32 %v542, 152
        %v562 = vadd.s32 %v542, 160
        %v563 = vadd.s32 %v542, 168
        %v564 = vadd.s32 %v542, 176
        %v565 = vadd.s32 %v542, 184
        %v566 = vadd.s32 %v542, 192
        %v567 = vadd.s32 %v542, 200
        %v568 = vadd.s32 %v542, 208
        %v569 = vadd.s32 %v542, 216
        %v570 = vadd.s32 %v542, 224
        %v571 = vadd.s32 %v542, 232
        %v572 = vadd.s32 %v542, 240
        %v573 = vadd.s32 %v542, 248
        %vm574 = vcmp.lt.s32.totalorder %v542, 0
        %v575 = vsub.s32 0, %v542
        %v576 = vsel %vm574, %v575, %v542
        %v577 = vshrl.u32 %v576, 4
        %v578 = vand.u32 %v576, 15
        %v579 = vsub.s32 0, %v578
        %v580 = vsel %vm574, %v579, %v578
        %vm581 = vcmp.lt.s32.totalorder %v543, 0
        %v582 = vsub.s32 0, %v543
        %v583 = vsel %vm581, %v582, %v543
        %v584 = vshrl.u32 %v583, 4
        %v585 = vand.u32 %v583, 15
        %v586 = vsub.s32 0, %v585
        %v587 = vsel %vm581, %v586, %v585
        %vm588 = vcmp.lt.s32.totalorder %v544, 0
        %v589 = vsub.s32 0, %v544
        %v590 = vsel %vm588, %v589, %v544
        %v591 = vshrl.u32 %v590, 4
        %v592 = vand.u32 %v590, 15
        %v593 = vsub.s32 0, %v592
        %v594 = vsel %vm588, %v593, %v592
        %vm595 = vcmp.lt.s32.totalorder %v545, 0
        %v596 = vsub.s32 0, %v545
        %v597 = vsel %vm595, %v596, %v545
        %v598 = vshrl.u32 %v597, 4
        %v599 = vand.u32 %v597, 15
        %v600 = vsub.s32 0, %v599
        %v601 = vsel %vm595, %v600, %v599
        %vm602 = vcmp.lt.s32.totalorder %v546, 0
        %v603 = vsub.s32 0, %v546
        %v604 = vsel %vm602, %v603, %v546
        %v605 = vshrl.u32 %v604, 4
        %v606 = vand.u32 %v604, 15
        %v607 = vsub.s32 0, %v606
        %v608 = vsel %vm602, %v607, %v606
        %vm609 = vcmp.lt.s32.totalorder %v547, 0
        %v610 = vsub.s32 0, %v547
        %v611 = vsel %vm609, %v610, %v547
        %v612 = vshrl.u32 %v611, 4
        %v613 = vand.u32 %v611, 15
        %v614 = vsub.s32 0, %v613
        %v615 = vsel %vm609, %v614, %v613
        %vm616 = vcmp.lt.s32.totalorder %v548, 0
        %v617 = vsub.s32 0, %v548
        %v618 = vsel %vm616, %v617, %v548
        %v619 = vshrl.u32 %v618, 4
        %v620 = vand.u32 %v618, 15
        %v621 = vsub.s32 0, %v620
        %v622 = vsel %vm616, %v621, %v620
        %vm623 = vcmp.lt.s32.totalorder %v549, 0
        %v624 = vsub.s32 0, %v549
        %v625 = vsel %vm623, %v624, %v549
        %v626 = vshrl.u32 %v625, 4
        %v627 = vand.u32 %v625, 15
        %v628 = vsub.s32 0, %v627
        %v629 = vsel %vm623, %v628, %v627
        %vm630 = vcmp.lt.s32.totalorder %v550, 0
        %v631 = vsub.s32 0, %v550
        %v632 = vsel %vm630, %v631, %v550
        %v633 = vshrl.u32 %v632, 4
        %v634 = vand.u32 %v632, 15
        %v635 = vsub.s32 0, %v634
        %v636 = vsel %vm630, %v635, %v634
        %vm637 = vcmp.lt.s32.totalorder %v551, 0
        %v638 = vsub.s32 0, %v551
        %v639 = vsel %vm637, %v638, %v551
        %v640 = vshrl.u32 %v639, 4
        %v641 = vand.u32 %v639, 15
        %v642 = vsub.s32 0, %v641
        %v643 = vsel %vm637, %v642, %v641
        %vm644 = vcmp.lt.s32.totalorder %v552, 0
        %v645 = vsub.s32 0, %v552
        %v646 = vsel %vm644, %v645, %v552
        %v647 = vshrl.u32 %v646, 4
        %v648 = vand.u32 %v646, 15
        %v649 = vsub.s32 0, %v648
        %v650 = vsel %vm644, %v649, %v648
        %vm651 = vcmp.lt.s32.totalorder %v553, 0
        %v652 = vsub.s32 0, %v553
        %v653 = vsel %vm651, %v652, %v553
        %v654 = vshrl.u32 %v653, 4
        %v655 = vand.u32 %v653, 15
        %v656 = vsub.s32 0, %v655
        %v657 = vsel %vm651, %v656, %v655
        %vm658 = vcmp.lt.s32.totalorder %v554, 0
        %v659 = vsub.s32 0, %v554
        %v660 = vsel %vm658, %v659, %v554
        %v661 = vshrl.u32 %v660, 4
        %v662 = vand.u32 %v660, 15
        %v663 = vsub.s32 0, %v662
        %v664 = vsel %vm658, %v663, %v662
        %vm665 = vcmp.lt.s32.totalorder %v555, 0
        %v666 = vsub.s32 0, %v555
        %v667 = vsel %vm665, %v666, %v555
        %v668 = vshrl.u32 %v667, 4
        %v669 = vand.u32 %v667, 15
        %v670 = vsub.s32 0, %v669
        %v671 = vsel %vm665, %v670, %v669
        %vm672 = vcmp.lt.s32.totalorder %v556, 0
        %v673 = vsub.s32 0, %v556
        %v674 = vsel %vm672, %v673, %v556
        %v675 = vshrl.u32 %v674, 4
        %v676 = vand.u32 %v674, 15
        %v677 = vsub.s32 0, %v676
        %v678 = vsel %vm672, %v677, %v676
        %vm679 = vcmp.lt.s32.totalorder %v557, 0
        %v680 = vsub.s32 0, %v557
        %v681 = vsel %vm679, %v680, %v557
        %v682 = vshrl.u32 %v681, 4
        %v683 = vand.u32 %v681, 15
        %v684 = vsub.s32 0, %v683
        %v685 = vsel %vm679, %v684, %v683
        %vm686 = vcmp.lt.s32.totalorder %v558, 0
        %v687 = vsub.s32 0, %v558
        %v688 = vsel %vm686, %v687, %v558
        %v689 = vshrl.u32 %v688, 4
        %v690 = vand.u32 %v688, 15
        %v691 = vsub.s32 0, %v690
        %v692 = vsel %vm686, %v691, %v690
        %vm693 = vcmp.lt.s32.totalorder %v559, 0
        %v694 = vsub.s32 0, %v559
        %v695 = vsel %vm693, %v694, %v559
        %v696 = vshrl.u32 %v695, 4
        %v697 = vand.u32 %v695, 15
        %v698 = vsub.s32 0, %v697
        %v699 = vsel %vm693, %v698, %v697
        %vm700 = vcmp.lt.s32.totalorder %v560, 0
        %v701 = vsub.s32 0, %v560
        %v702 = vsel %vm700, %v701, %v560
        %v703 = vshrl.u32 %v702, 4
        %v704 = vand.u32 %v702, 15
        %v705 = vsub.s32 0, %v704
        %v706 = vsel %vm700, %v705, %v704
        %vm707 = vcmp.lt.s32.totalorder %v561, 0
        %v708 = vsub.s32 0, %v561
        %v709 = vsel %vm707, %v708, %v561
        %v710 = vshrl.u32 %v709, 4
        %v711 = vand.u32 %v709, 15
        %v712 = vsub.s32 0, %v711
        %v713 = vsel %vm707, %v712, %v711
        %vm714 = vcmp.lt.s32.totalorder %v562, 0
        %v715 = vsub.s32 0, %v562
        %v716 = vsel %vm714, %v715, %v562
        %v717 = vshrl.u32 %v716, 4
        %v718 = vand.u32 %v716, 15
        %v719 = vsub.s32 0, %v718
        %v720 = vsel %vm714, %v719, %v718
        %vm721 = vcmp.lt.s32.totalorder %v563, 0
        %v722 = vsub.s32 0, %v563
        %v723 = vsel %vm721, %v722, %v563
        %v724 = vshrl.u32 %v723, 4
        %v725 = vand.u32 %v723, 15
        %v726 = vsub.s32 0, %v725
        %v727 = vsel %vm721, %v726, %v725
        %vm728 = vcmp.lt.s32.totalorder %v564, 0
        %v729 = vsub.s32 0, %v564
        %v730 = vsel %vm728, %v729, %v564
        %v731 = vshrl.u32 %v730, 4
        %v732 = vand.u32 %v730, 15
        %v733 = vsub.s32 0, %v732
        %v734 = vsel %vm728, %v733, %v732
        %vm735 = vcmp.lt.s32.totalorder %v565, 0
        %v736 = vsub.s32 0, %v565
        %v737 = vsel %vm735, %v736, %v565
        %v738 = vshrl.u32 %v737, 4
        %v739 = vand.u32 %v737, 15
        %v740 = vsub.s32 0, %v739
        %v741 = vsel %vm735, %v740, %v739
        %vm742 = vcmp.lt.s32.totalorder %v566, 0
        %v743 = vsub.s32 0, %v566
        %v744 = vsel %vm742, %v743, %v566
        %v745 = vshrl.u32 %v744, 4
        %v746 = vand.u32 %v744, 15
        %v747 = vsub.s32 0, %v746
        %v748 = vsel %vm742, %v747, %v746
        %vm749 = vcmp.lt.s32.totalorder %v567, 0
        %v750 = vsub.s32 0, %v567
        %v751 = vsel %vm749, %v750, %v567
        %v752 = vshrl.u32 %v751, 4
        %v753 = vand.u32 %v751, 15
        %v754 = vsub.s32 0, %v753
        %v755 = vsel %vm749, %v754, %v753
        %vm756 = vcmp.lt.s32.totalorder %v568, 0
        %v757 = vsub.s32 0, %v568
        %v758 = vsel %vm756, %v757, %v568
        %v759 = vshrl.u32 %v758, 4
        %v760 = vand.u32 %v758, 15
        %v761 = vsub.s32 0, %v760
        %v762 = vsel %vm756, %v761, %v760
        %vm763 = vcmp.lt.s32.totalorder %v569, 0
        %v764 = vsub.s32 0, %v569
        %v765 = vsel %vm763, %v764, %v569
        %v766 = vshrl.u32 %v765, 4
        %v767 = vand.u32 %v765, 15
        %v768 = vsub.s32 0, %v767
        %v769 = vsel %vm763, %v768, %v767
        %vm770 = vcmp.lt.s32.totalorder %v570, 0
        %v771 = vsub.s32 0, %v570
        %v772 = vsel %vm770, %v771, %v570
        %v773 = vshrl.u32 %v772, 4
        %v774 = vand.u32 %v772, 15
        %v775 = vsub.s32 0, %v774
        %v776 = vsel %vm770, %v775, %v774
        %vm777 = vcmp.lt.s32.totalorder %v571, 0
        %v778 = vsub.s32 0, %v571
        %v779 = vsel %vm777, %v778, %v571
        %v780 = vshrl.u32 %v779, 4
        %v781 = vand.u32 %v779, 15
        %v782 = vsub.s32 0, %v781
        %v783 = vsel %vm777, %v782, %v781
        %vm784 = vcmp.lt.s32.totalorder %v572, 0
        %v785 = vsub.s32 0, %v572
        %v786 = vsel %vm784, %v785, %v572
        %v787 = vshrl.u32 %v786, 4
        %v788 = vand.u32 %v786, 15
        %v789 = vsub.s32 0, %v788
        %v790 = vsel %vm784, %v789, %v788
        %vm791 = vcmp.lt.s32.totalorder %v573, 0
        %v792 = vsub.s32 0, %v573
        %v793 = vsel %vm791, %v792, %v573
        %v794 = vshrl.u32 %v793, 4
        %v795 = vand.u32 %v793, 15
        %v796 = vsub.s32 0, %v795
        %v797 = vsel %vm791, %v796, %v795
        %vm798 = vcmp.ne.s32.totalorder %v580, 0
        %vm799 = vcmp.ne.s32.totalorder %v587, 0
        %vm800 = vcmp.ne.s32.totalorder %v594, 0
        %vm801 = vcmp.ne.s32.totalorder %v601, 0
        %vm802 = vcmp.ne.s32.totalorder %v608, 0
        %vm803 = vcmp.ne.s32.totalorder %v615, 0
        %vm804 = vcmp.ne.s32.totalorder %v622, 0
        %vm805 = vcmp.ne.s32.totalorder %v629, 0
        %vm806 = vcmp.ne.s32.totalorder %v636, 0
        %vm807 = vcmp.ne.s32.totalorder %v643, 0
        %vm808 = vcmp.ne.s32.totalorder %v650, 0
        %vm809 = vcmp.ne.s32.totalorder %v657, 0
        %vm810 = vcmp.ne.s32.totalorder %v664, 0
        %vm811 = vcmp.ne.s32.totalorder %v671, 0
        %vm812 = vcmp.ne.s32.totalorder %v678, 0
        %vm813 = vcmp.ne.s32.totalorder %v685, 0
        %vm814 = vcmp.ne.s32.totalorder %v692, 0
        %vm815 = vcmp.ne.s32.totalorder %v699, 0
        %vm816 = vcmp.ne.s32.totalorder %v706, 0
        %vm817 = vcmp.ne.s32.totalorder %v713, 0
        %vm818 = vcmp.ne.s32.totalorder %v720, 0
        %vm819 = vcmp.ne.s32.totalorder %v727, 0
        %vm820 = vcmp.ne.s32.totalorder %v734, 0
        %vm821 = vcmp.ne.s32.totalorder %v741, 0
        %vm822 = vcmp.ne.s32.totalorder %v748, 0
        %vm823 = vcmp.ne.s32.totalorder %v755, 0
        %vm824 = vcmp.ne.s32.totalorder %v762, 0
        %vm825 = vcmp.ne.s32.totalorder %v769, 0
        %vm826 = vcmp.ne.s32.totalorder %v776, 0
        %vm827 = vcmp.ne.s32.totalorder %v783, 0
        %vm828 = vcmp.ne.s32.totalorder %v790, 0
        %vm829 = vcmp.ne.s32.totalorder %v797, 0
        %vm830 = vcmp.lt.s32.totalorder %v580, 0
        %vm831 = vcmp.lt.s32.totalorder %v587, 0
        %vm832 = vcmp.lt.s32.totalorder %v594, 0
        %vm833 = vcmp.lt.s32.totalorder %v601, 0
        %vm834 = vcmp.lt.s32.totalorder %v608, 0
        %vm835 = vcmp.lt.s32.totalorder %v615, 0
        %vm836 = vcmp.lt.s32.totalorder %v622, 0
        %vm837 = vcmp.lt.s32.totalorder %v629, 0
        %vm838 = vcmp.lt.s32.totalorder %v636, 0
        %vm839 = vcmp.lt.s32.totalorder %v643, 0
        %vm840 = vcmp.lt.s32.totalorder %v650, 0
        %vm841 = vcmp.lt.s32.totalorder %v657, 0
        %vm842 = vcmp.lt.s32.totalorder %v664, 0
        %vm843 = vcmp.lt.s32.totalorder %v671, 0
        %vm844 = vcmp.lt.s32.totalorder %v678, 0
        %vm845 = vcmp.lt.s32.totalorder %v685, 0
        %vm846 = vcmp.lt.s32.totalorder %v692, 0
        %vm847 = vcmp.lt.s32.totalorder %v699, 0
        %vm848 = vcmp.lt.s32.totalorder %v706, 0
        %vm849 = vcmp.lt.s32.totalorder %v713, 0
        %vm850 = vcmp.lt.s32.totalorder %v720, 0
        %vm851 = vcmp.lt.s32.totalorder %v727, 0
        %vm852 = vcmp.lt.s32.totalorder %v734, 0
        %vm853 = vcmp.lt.s32.totalorder %v741, 0
        %vm854 = vcmp.lt.s32.totalorder %v748, 0
        %vm855 = vcmp.lt.s32.totalorder %v755, 0
        %vm856 = vcmp.lt.s32.totalorder %v762, 0
        %vm857 = vcmp.lt.s32.totalorder %v769, 0
        %vm858 = vcmp.lt.s32.totalorder %v776, 0
        %vm859 = vcmp.lt.s32.totalorder %v783, 0
        %vm860 = vcmp.lt.s32.totalorder %v790, 0
        %vm861 = vcmp.lt.s32.totalorder %v797, 0
        %vm862 = vmand %vm830, %vm798
        %vm863 = vmand %vm831, %vm799
        %vm864 = vmand %vm832, %vm800
        %vm865 = vmand %vm833, %vm801
        %vm866 = vmand %vm834, %vm802
        %vm867 = vmand %vm835, %vm803
        %vm868 = vmand %vm836, %vm804
        %vm869 = vmand %vm837, %vm805
        %vm870 = vmand %vm838, %vm806
        %vm871 = vmand %vm839, %vm807
        %vm872 = vmand %vm840, %vm808
        %vm873 = vmand %vm841, %vm809
        %vm874 = vmand %vm842, %vm810
        %vm875 = vmand %vm843, %vm811
        %vm876 = vmand %vm844, %vm812
        %vm877 = vmand %vm845, %vm813
        %vm878 = vmand %vm846, %vm814
        %vm879 = vmand %vm847, %vm815
        %vm880 = vmand %vm848, %vm816
        %vm881 = vmand %vm849, %vm817
        %vm882 = vmand %vm850, %vm818
        %vm883 = vmand %vm851, %vm819
        %vm884 = vmand %vm852, %vm820
        %vm885 = vmand %vm853, %vm821
        %vm886 = vmand %vm854, %vm822
        %vm887 = vmand %vm855, %vm823
        %vm888 = vmand %vm856, %vm824
        %vm889 = vmand %vm857, %vm825
        %vm890 = vmand %vm858, %vm826
        %vm891 = vmand %vm859, %vm827
        %vm892 = vmand %vm860, %vm828
        %vm893 = vmand %vm861, %vm829
        %v894 = vadd.s32 %v580, 16
        %v895 = vadd.s32 %v587, 16
        %v896 = vadd.s32 %v594, 16
        %v897 = vadd.s32 %v601, 16
        %v898 = vadd.s32 %v608, 16
        %v899 = vadd.s32 %v615, 16
        %v900 = vadd.s32 %v622, 16
        %v901 = vadd.s32 %v629, 16
        %v902 = vadd.s32 %v636, 16
        %v903 = vadd.s32 %v643, 16
        %v904 = vadd.s32 %v650, 16
        %v905 = vadd.s32 %v657, 16
        %v906 = vadd.s32 %v664, 16
        %v907 = vadd.s32 %v671, 16
        %v908 = vadd.s32 %v678, 16
        %v909 = vadd.s32 %v685, 16
        %v910 = vadd.s32 %v692, 16
        %v911 = vadd.s32 %v699, 16
        %v912 = vadd.s32 %v706, 16
        %v913 = vadd.s32 %v713, 16
        %v914 = vadd.s32 %v720, 16
        %v915 = vadd.s32 %v727, 16
        %v916 = vadd.s32 %v734, 16
        %v917 = vadd.s32 %v741, 16
        %v918 = vadd.s32 %v748, 16
        %v919 = vadd.s32 %v755, 16
        %v920 = vadd.s32 %v762, 16
        %v921 = vadd.s32 %v769, 16
        %v922 = vadd.s32 %v776, 16
        %v923 = vadd.s32 %v783, 16
        %v924 = vadd.s32 %v790, 16
        %v925 = vadd.s32 %v797, 16
        %v926 = vsel %vm862, %v894, %v580
        %v927 = vsel %vm863, %v895, %v587
        %v928 = vsel %vm864, %v896, %v594
        %v929 = vsel %vm865, %v897, %v601
        %v930 = vsel %vm866, %v898, %v608
        %v931 = vsel %vm867, %v899, %v615
        %v932 = vsel %vm868, %v900, %v622
        %v933 = vsel %vm869, %v901, %v629
        %v934 = vsel %vm870, %v902, %v636
        %v935 = vsel %vm871, %v903, %v643
        %v936 = vsel %vm872, %v904, %v650
        %v937 = vsel %vm873, %v905, %v657
        %v938 = vsel %vm874, %v906, %v664
        %v939 = vsel %vm875, %v907, %v671
        %v940 = vsel %vm876, %v908, %v678
        %v941 = vsel %vm877, %v909, %v685
        %v942 = vsel %vm878, %v910, %v692
        %v943 = vsel %vm879, %v911, %v699
        %v944 = vsel %vm880, %v912, %v706
        %v945 = vsel %vm881, %v913, %v713
        %v946 = vsel %vm882, %v914, %v720
        %v947 = vsel %vm883, %v915, %v727
        %v948 = vsel %vm884, %v916, %v734
        %v949 = vsel %vm885, %v917, %v741
        %v950 = vsel %vm886, %v918, %v748
        %v951 = vsel %vm887, %v919, %v755
        %v952 = vsel %vm888, %v920, %v762
        %v953 = vsel %vm889, %v921, %v769
        %v954 = vsel %vm890, %v922, %v776
        %v955 = vsel %vm891, %v923, %v783
        %v956 = vsel %vm892, %v924, %v790
        %v957 = vsel %vm893, %v925, %v797
        %v958 = vld [vmem:[#allocation2 + $0x8] sm:$0x80]
        %v959 = vld [vmem:[#allocation2 + $0x20] sm:$0xff]
        %v960 = vld [vmem:[#allocation2 + $0x38] sm:$0xff]
        %v961 = vld [vmem:[#allocation2 + $0x50] sm:$0xff]
        %v962 = vld [vmem:[#allocation2 + $0x68] sm:$0xff]
        %v963 = vld [vmem:[#allocation2 + $0x80] sm:$0xff]
        %v964 = vld [vmem:[#allocation2 + $0x98] sm:$0xff]
        %v965 = vld [vmem:[#allocation2 + $0xb0] sm:$0xff]
        %v966 = vld [vmem:[#allocation2 + $0xc8] sm:$0xff]
        %v967 = vld [vmem:[#allocation2 + $0xe0] sm:$0xff]
        %v968 = vld [vmem:[#allocation2 + $0xf8] sm:$0xff]
        %v969 = vld [vmem:[#allocation2 + $0x110] sm:$0xff]
        %v970 = vld [vmem:[#allocation2 + $0x128] sm:$0xff]
        %v971 = vld [vmem:[#allocation2 + $0x140] sm:$0xff]
        %v972 = vld [vmem:[#allocation2 + $0x158] sm:$0xff]
        %v973 = vld [vmem:[#allocation2 + $0x170] sm:$0xff]
        %v974 = vld [vmem:[#allocation2 + $0x188] sm:$0xff]
        %v975 = vld [vmem:[#allocation2 + $0x1a0] sm:$0x1]
        %vm976 = vcmp.ne.s32.totalorder %v926, 0
        %vm977 = vcmp.ne.s32.totalorder %v927, 0
        %vm978 = vcmp.ne.s32.totalorder %v928, 0
        %vm979 = vcmp.ne.s32.totalorder %v929, 0
        %vm980 = vcmp.ne.s32.totalorder %v930, 0
        %vm981 = vcmp.ne.s32.totalorder %v931, 0
        %vm982 = vcmp.ne.s32.totalorder %v932, 0
        %vm983 = vcmp.ne.s32.totalorder %v933, 0
        %vm984 = vcmp.ne.s32.totalorder %v934, 0
        %vm985 = vcmp.ne.s32.totalorder %v935, 0
        %vm986 = vcmp.ne.s32.totalorder %v936, 0
        %vm987 = vcmp.ne.s32.totalorder %v937, 0
        %vm988 = vcmp.ne.s32.totalorder %v938, 0
        %vm989 = vcmp.ne.s32.totalorder %v939, 0
        %vm990 = vcmp.ne.s32.totalorder %v940, 0
        %vm991 = vcmp.ne.s32.totalorder %v941, 0
        %vm992 = vcmp.ne.s32.totalorder %v942, 0
        %vm993 = vcmp.ne.s32.totalorder %v943, 0
        %vm994 = vcmp.ne.s32.totalorder %v944, 0
        %vm995 = vcmp.ne.s32.totalorder %v945, 0
        %vm996 = vcmp.ne.s32.totalorder %v946, 0
        %vm997 = vcmp.ne.s32.totalorder %v947, 0
        %vm998 = vcmp.ne.s32.totalorder %v948, 0
        %vm999 = vcmp.ne.s32.totalorder %v949, 0
        %vm1000 = vcmp.ne.s32.totalorder %v950, 0
        %vm1001 = vcmp.ne.s32.totalorder %v951, 0
        %vm1002 = vcmp.ne.s32.totalorder %v952, 0
        %vm1003 = vcmp.ne.s32.totalorder %v953, 0
        %vm1004 = vcmp.ne.s32.totalorder %v954, 0
        %vm1005 = vcmp.ne.s32.totalorder %v955, 0
        %vm1006 = vcmp.ne.s32.totalorder %v956, 0
        %vm1007 = vcmp.ne.s32.totalorder %v957, 0
        %v1008 = vsel %vm976, 1, 0
        %v1009 = vsel %vm977, 1, 0
        %v1010 = vsel %vm978, 1, 0
        %v1011 = vsel %vm979, 1, 0
        %v1012 = vsel %vm980, 1, 0
        %v1013 = vsel %vm981, 1, 0
        %v1014 = vsel %vm982, 1, 0
        %v1015 = vsel %vm983, 1, 0
        %v1016 = vsel %vm984, 1, 0
        %v1017 = vsel %vm985, 1, 0
        %v1018 = vsel %vm986, 1, 0
        %v1019 = vsel %vm987, 1, 0
        %v1020 = vsel %vm988, 1, 0
        %v1021 = vsel %vm989, 1, 0
        %v1022 = vsel %vm990, 1, 0
        %v1023 = vsel %vm991, 1, 0
        %v1024 = vsel %vm992, 1, 0
        %v1025 = vsel %vm993, 1, 0
        %v1026 = vsel %vm994, 1, 0
        %v1027 = vsel %vm995, 1, 0
        %v1028 = vsel %vm996, 1, 0
        %v1029 = vsel %vm997, 1, 0
        %v1030 = vsel %vm998, 1, 0
        %v1031 = vsel %vm999, 1, 0
        %v1032 = vsel %vm1000, 1, 0
        %v1033 = vsel %vm1001, 1, 0
        %v1034 = vsel %vm1002, 1, 0
        %v1035 = vsel %vm1003, 1, 0
        %v1036 = vsel %vm1004, 1, 0
        %v1037 = vsel %vm1005, 1, 0
        %v1038 = vsel %vm1006, 1, 0
        %v1039 = vsel %vm1007, 1, 0
        %vm1040 = vcmp.eq.s32.totalorder %v1008, 1
        %vm1041 = vcmp.eq.s32.totalorder %v1009, 1
        %vm1042 = vcmp.eq.s32.totalorder %v1010, 1
        %vm1043 = vcmp.eq.s32.totalorder %v1011, 1
        %vm1044 = vcmp.eq.s32.totalorder %v1012, 1
        %vm1045 = vcmp.eq.s32.totalorder %v1013, 1
        %vm1046 = vcmp.eq.s32.totalorder %v1014, 1
        %vm1047 = vcmp.eq.s32.totalorder %v1015, 1
        %vm1048 = vcmp.eq.s32.totalorder %v1016, 1
        %vm1049 = vcmp.eq.s32.totalorder %v1017, 1
        %vm1050 = vcmp.eq.s32.totalorder %v1018, 1
        %vm1051 = vcmp.eq.s32.totalorder %v1019, 1
        %vm1052 = vcmp.eq.s32.totalorder %v1020, 1
        %vm1053 = vcmp.eq.s32.totalorder %v1021, 1
        %vm1054 = vcmp.eq.s32.totalorder %v1022, 1
        %vm1055 = vcmp.eq.s32.totalorder %v1023, 1
        %vm1056 = vcmp.eq.s32.totalorder %v1024, 1
        %vm1057 = vcmp.eq.s32.totalorder %v1025, 1
        %vm1058 = vcmp.eq.s32.totalorder %v1026, 1
        %vm1059 = vcmp.eq.s32.totalorder %v1027, 1
        %vm1060 = vcmp.eq.s32.totalorder %v1028, 1
        %vm1061 = vcmp.eq.s32.totalorder %v1029, 1
        %vm1062 = vcmp.eq.s32.totalorder %v1030, 1
        %vm1063 = vcmp.eq.s32.totalorder %v1031, 1
        %vm1064 = vcmp.eq.s32.totalorder %v1032, 1
        %vm1065 = vcmp.eq.s32.totalorder %v1033, 1
        %vm1066 = vcmp.eq.s32.totalorder %v1034, 1
        %vm1067 = vcmp.eq.s32.totalorder %v1035, 1
        %vm1068 = vcmp.eq.s32.totalorder %v1036, 1
        %vm1069 = vcmp.eq.s32.totalorder %v1037, 1
        %vm1070 = vcmp.eq.s32.totalorder %v1038, 1
        %vm1071 = vcmp.eq.s32.totalorder %v1039, 1
        %vm1072 = vmpackc.low %vm1040, %vm1040
        %vm1073 = vmpackc.low %vm1041, %vm1041
        %vm1074 = vmpackc.low %vm1042, %vm1042
        %vm1075 = vmpackc.low %vm1043, %vm1043
        %vm1076 = vmpackc.low %vm1044, %vm1044
        %vm1077 = vmpackc.low %vm1045, %vm1045
        %vm1078 = vmpackc.low %vm1046, %vm1046
        %vm1079 = vmpackc.low %vm1047, %vm1047
        %vm1080 = vmpackc.low %vm1048, %vm1048
        %vm1081 = vmpackc.low %vm1049, %vm1049
        %vm1082 = vmpackc.low %vm1050, %vm1050
        %vm1083 = vmpackc.low %vm1051, %vm1051
        %vm1084 = vmpackc.low %vm1052, %vm1052
        %vm1085 = vmpackc.low %vm1053, %vm1053
        %vm1086 = vmpackc.low %vm1054, %vm1054
        %vm1087 = vmpackc.low %vm1055, %vm1055
        %vm1088 = vmpackc.low %vm1056, %vm1056
        %vm1089 = vmpackc.low %vm1057, %vm1057
        %vm1090 = vmpackc.low %vm1058, %vm1058
        %vm1091 = vmpackc.low %vm1059, %vm1059
        %vm1092 = vmpackc.low %vm1060, %vm1060
        %vm1093 = vmpackc.low %vm1061, %vm1061
        %vm1094 = vmpackc.low %vm1062, %vm1062
        %vm1095 = vmpackc.low %vm1063, %vm1063
        %vm1096 = vmpackc.low %vm1064, %vm1064
        %vm1097 = vmpackc.low %vm1065, %vm1065
        %vm1098 = vmpackc.low %vm1066, %vm1066
        %vm1099 = vmpackc.low %vm1067, %vm1067
        %vm1100 = vmpackc.low %vm1068, %vm1068
        %vm1101 = vmpackc.low %vm1069, %vm1069
        %vm1102 = vmpackc.low %vm1070, %vm1070
        %vm1103 = vmpackc.low %vm1071, %vm1071
        %v1104 = vsel %vm1072, 65537, 0
        %v1105 = vsel %vm1073, 65537, 0
        %v1106 = vsel %vm1074, 65537, 0
        %v1107 = vsel %vm1075, 65537, 0
        %v1108 = vsel %vm1076, 65537, 0
        %v1109 = vsel %vm1077, 65537, 0
        %v1110 = vsel %vm1078, 65537, 0
        %v1111 = vsel %vm1079, 65537, 0
        %v1112 = vsel %vm1080, 65537, 0
        %v1113 = vsel %vm1081, 65537, 0
        %v1114 = vsel %vm1082, 65537, 0
        %v1115 = vsel %vm1083, 65537, 0
        %v1116 = vsel %vm1084, 65537, 0
        %v1117 = vsel %vm1085, 65537, 0
        %v1118 = vsel %vm1086, 65537, 0
        %v1119 = vsel %vm1087, 65537, 0
        %v1120 = vsel %vm1088, 65537, 0
        %v1121 = vsel %vm1089, 65537, 0
        %v1122 = vsel %vm1090, 65537, 0
        %v1123 = vsel %vm1091, 65537, 0
        %v1124 = vsel %vm1092, 65537, 0
        %v1125 = vsel %vm1093, 65537, 0
        %v1126 = vsel %vm1094, 65537, 0
        %v1127 = vsel %vm1095, 65537, 0
        %v1128 = vsel %vm1096, 65537, 0
        %v1129 = vsel %vm1097, 65537, 0
        %v1130 = vsel %vm1098, 65537, 0
        %v1131 = vsel %vm1099, 65537, 0
        %v1132 = vsel %vm1100, 65537, 0
        %v1133 = vsel %vm1101, 65537, 0
        %v1134 = vsel %vm1102, 65537, 0
        %v1135 = vsel %vm1103, 65537, 0
        %v1136 = vunpack.c.l.b16 %v1104
        %v1137 = vunpack.c.l.b16 %v1105
        %v1138 = vunpack.c.l.b16 %v1106
        %v1139 = vunpack.c.l.b16 %v1107
        %v1140 = vunpack.c.l.b16 %v1108
        %v1141 = vunpack.c.l.b16 %v1109
        %v1142 = vunpack.c.l.b16 %v1110
        %v1143 = vunpack.c.l.b16 %v1111
        %v1144 = vunpack.c.l.b16 %v1112
        %v1145 = vunpack.c.l.b16 %v1113
        %v1146 = vunpack.c.l.b16 %v1114
        %v1147 = vunpack.c.l.b16 %v1115
        %v1148 = vunpack.c.l.b16 %v1116
        %v1149 = vunpack.c.l.b16 %v1117
        %v1150 = vunpack.c.l.b16 %v1118
        %v1151 = vunpack.c.l.b16 %v1119
        %v1152 = vunpack.c.l.b16 %v1120
        %v1153 = vunpack.c.l.b16 %v1121
        %v1154 = vunpack.c.l.b16 %v1122
        %v1155 = vunpack.c.l.b16 %v1123
        %v1156 = vunpack.c.l.b16 %v1124
        %v1157 = vunpack.c.l.b16 %v1125
        %v1158 = vunpack.c.l.b16 %v1126
        %v1159 = vunpack.c.l.b16 %v1127
        %v1160 = vunpack.c.l.b16 %v1128
        %v1161 = vunpack.c.l.b16 %v1129
        %v1162 = vunpack.c.l.b16 %v1130
        %v1163 = vunpack.c.l.b16 %v1131
        %v1164 = vunpack.c.l.b16 %v1132
        %v1165 = vunpack.c.l.b16 %v1133
        %v1166 = vunpack.c.l.b16 %v1134
        %v1167 = vunpack.c.l.b16 %v1135
        %v1168 = vpack.c.b16 %v1137, %v1136
        %v1169 = vpack.c.b16 %v1139, %v1138
        %v1170 = vpack.c.b16 %v1141, %v1140
        %v1171 = vpack.c.b16 %v1143, %v1142
        %v1172 = vpack.c.b16 %v1145, %v1144
        %v1173 = vpack.c.b16 %v1147, %v1146
        %v1174 = vpack.c.b16 %v1149, %v1148
        %v1175 = vpack.c.b16 %v1151, %v1150
        %v1176 = vpack.c.b16 %v1153, %v1152
        %v1177 = vpack.c.b16 %v1155, %v1154
        %v1178 = vpack.c.b16 %v1157, %v1156
        %v1179 = vpack.c.b16 %v1159, %v1158
        %v1180 = vpack.c.b16 %v1161, %v1160
        %v1181 = vpack.c.b16 %v1163, %v1162
        %v1182 = vpack.c.b16 %v1165, %v1164
        %v1183 = vpack.c.b16 %v1167, %v1166
        %vm1184 = vsmask.f32 7424
        %v1186 = vshll.u32 %v1168, 16
        %v1188 = vrot.slane %v1186, 1
        %v1189 = vshrl.u32 %v1168, 16
        %v1191 = vor.u32 %v1189, %v1188
        %v1193 = vshll.u32 %v1169, 16
        %v1195 = vrot.slane %v1193, 1
        %v1196 = vsel %vm1184, %v1191, %v1195
        %v1197 = vshrl.u32 %v1169, 16
        %v1199 = vor.u32 %v1197, %v1195
        %v1201 = vshll.u32 %v1170, 16
        %v1203 = vrot.slane %v1201, 1
        %v1204 = vsel %vm1184, %v1199, %v1203
        %v1205 = vshrl.u32 %v1170, 16
        %v1207 = vor.u32 %v1205, %v1203
        %v1209 = vshll.u32 %v1171, 16
        %v1211 = vrot.slane %v1209, 1
        %v1212 = vsel %vm1184, %v1207, %v1211
        %v1213 = vshrl.u32 %v1171, 16
        %v1215 = vor.u32 %v1213, %v1211
        %v1217 = vshll.u32 %v1172, 16
        %v1219 = vrot.slane %v1217, 1
        %v1220 = vsel %vm1184, %v1215, %v1219
        %v1221 = vshrl.u32 %v1172, 16
        %v1223 = vor.u32 %v1221, %v1219
        %v1225 = vshll.u32 %v1173, 16
        %v1227 = vrot.slane %v1225, 1
        %v1228 = vsel %vm1184, %v1223, %v1227
        %v1229 = vshrl.u32 %v1173, 16
        %v1231 = vor.u32 %v1229, %v1227
        %v1233 = vshll.u32 %v1174, 16
        %v1235 = vrot.slane %v1233, 1
        %v1236 = vsel %vm1184, %v1231, %v1235
        %v1237 = vshrl.u32 %v1174, 16
        %v1239 = vor.u32 %v1237, %v1235
        %v1241 = vshll.u32 %v1175, 16
        %v1243 = vrot.slane %v1241, 1
        %v1244 = vsel %vm1184, %v1239, %v1243
        %v1245 = vshrl.u32 %v1175, 16
        %v1247 = vor.u32 %v1245, %v1243
        %v1249 = vshll.u32 %v1176, 16
        %v1251 = vrot.slane %v1249, 1
        %v1252 = vsel %vm1184, %v1247, %v1251
        %v1253 = vshrl.u32 %v1176, 16
        %v1255 = vor.u32 %v1253, %v1251
        %v1257 = vshll.u32 %v1177, 16
        %v1259 = vrot.slane %v1257, 1
        %v1260 = vsel %vm1184, %v1255, %v1259
        %v1261 = vshrl.u32 %v1177, 16
        %v1263 = vor.u32 %v1261, %v1259
        %v1265 = vshll.u32 %v1178, 16
        %v1267 = vrot.slane %v1265, 1
        %v1268 = vsel %vm1184, %v1263, %v1267
        %v1269 = vshrl.u32 %v1178, 16
        %v1271 = vor.u32 %v1269, %v1267
        %v1273 = vshll.u32 %v1179, 16
        %v1275 = vrot.slane %v1273, 1
        %v1276 = vsel %vm1184, %v1271, %v1275
        %v1277 = vshrl.u32 %v1179, 16
        %v1279 = vor.u32 %v1277, %v1275
        %v1281 = vshll.u32 %v1180, 16
        %v1283 = vrot.slane %v1281, 1
        %v1284 = vsel %vm1184, %v1279, %v1283
        %v1285 = vshrl.u32 %v1180, 16
        %v1287 = vor.u32 %v1285, %v1283
        %v1289 = vshll.u32 %v1181, 16
        %v1291 = vrot.slane %v1289, 1
        %v1292 = vsel %vm1184, %v1287, %v1291
        %v1293 = vshrl.u32 %v1181, 16
        %v1295 = vor.u32 %v1293, %v1291
        %v1297 = vshll.u32 %v1182, 16
        %v1299 = vrot.slane %v1297, 1
        %v1300 = vsel %vm1184, %v1295, %v1299
        %v1301 = vshrl.u32 %v1182, 16
        %v1303 = vor.u32 %v1301, %v1299
        %v1305 = vshll.u32 %v1183, 16
        %v1307 = vrot.slane %v1305, 1
        %v1308 = vsel %vm1184, %v1303, %v1307
        %v1309 = vshrl.u32 %v1183, 16
        %v1311 = vor.u32 %v1309, %v1307
        %vm1312 = vcmp.ne.s16.totalorder %v1188, 0
        %vm1313 = vcmp.ne.s16.totalorder %v1196, 0
        %vm1314 = vcmp.ne.s16.totalorder %v1204, 0
        %vm1315 = vcmp.ne.s16.totalorder %v1212, 0
        %vm1316 = vcmp.ne.s16.totalorder %v1220, 0
        %vm1317 = vcmp.ne.s16.totalorder %v1228, 0
        %vm1318 = vcmp.ne.s16.totalorder %v1236, 0
        %vm1319 = vcmp.ne.s16.totalorder %v1244, 0
        %vm1320 = vcmp.ne.s16.totalorder %v1252, 0
        %vm1321 = vcmp.ne.s16.totalorder %v1260, 0
        %vm1322 = vcmp.ne.s16.totalorder %v1268, 0
        %vm1323 = vcmp.ne.s16.totalorder %v1276, 0
        %vm1324 = vcmp.ne.s16.totalorder %v1284, 0
        %vm1325 = vcmp.ne.s16.totalorder %v1292, 0
        %vm1326 = vcmp.ne.s16.totalorder %v1300, 0
        %vm1327 = vcmp.ne.s16.totalorder %v1308, 0
        %vm1328 = vcmp.ne.s16.totalorder %v1311, 0
        %v1329 = vsel %vm1312, %v958, 0
        %v1330 = vsel %vm1313, %v959, 0
        %v1331 = vsel %vm1314, %v960, 0
        %v1332 = vsel %vm1315, %v961, 0
        %v1333 = vsel %vm1316, %v962, 0
        %v1334 = vsel %vm1317, %v963, 0
        %v1335 = vsel %vm1318, %v964, 0
        %v1336 = vsel %vm1319, %v965, 0
        %v1337 = vsel %vm1320, %v966, 0
        %v1338 = vsel %vm1321, %v967, 0
        %v1339 = vsel %vm1322, %v968, 0
        %v1340 = vsel %vm1323, %v969, 0
        %v1341 = vsel %vm1324, %v970, 0
        %v1342 = vsel %vm1325, %v971, 0
        %v1343 = vsel %vm1326, %v972, 0
        %v1344 = vsel %vm1327, %v973, 0
        %v1345 = vsel %vm1328, %v974, 0
        %vm1346 = vsmask.f32 256
        %v1348 = vshrl.u32 %v1329, 16
        %v1350 = vrot.slane %v1348, 7
        %v1352 = vshrl.u32 %v1330, 16
        %v1354 = vrot.slane %v1352, 7
        %v1355 = vshll.u32 %v1330, 16
        %v1357 = vor.u32 %v1354, %v1355
        %v1358 = vsel %vm1346, %v1350, %v1357
        %v1360 = vshrl.u32 %v1331, 16
        %v1362 = vrot.slane %v1360, 7
        %v1363 = vshll.u32 %v1331, 16
        %v1365 = vor.u32 %v1362, %v1363
        %v1366 = vsel %vm1346, %v1354, %v1365
        %v1368 = vshrl.u32 %v1332, 16
        %v1370 = vrot.slane %v1368, 7
        %v1371 = vshll.u32 %v1332, 16
        %v1373 = vor.u32 %v1370, %v1371
        %v1374 = vsel %vm1346, %v1362, %v1373
        %v1376 = vshrl.u32 %v1333, 16
        %v1378 = vrot.slane %v1376, 7
        %v1379 = vshll.u32 %v1333, 16
        %v1381 = vor.u32 %v1378, %v1379
        %v1382 = vsel %vm1346, %v1370, %v1381
        %v1384 = vshrl.u32 %v1334, 16
        %v1386 = vrot.slane %v1384, 7
        %v1387 = vshll.u32 %v1334, 16
        %v1389 = vor.u32 %v1386, %v1387
        %v1390 = vsel %vm1346, %v1378, %v1389
        %v1392 = vshrl.u32 %v1335, 16
        %v1394 = vrot.slane %v1392, 7
        %v1395 = vshll.u32 %v1335, 16
        %v1397 = vor.u32 %v1394, %v1395
        %v1398 = vsel %vm1346, %v1386, %v1397
        %v1400 = vshrl.u32 %v1336, 16
        %v1402 = vrot.slane %v1400, 7
        %v1403 = vshll.u32 %v1336, 16
        %v1405 = vor.u32 %v1402, %v1403
        %v1406 = vsel %vm1346, %v1394, %v1405
        %v1408 = vshrl.u32 %v1337, 16
        %v1410 = vrot.slane %v1408, 7
        %v1411 = vshll.u32 %v1337, 16
        %v1413 = vor.u32 %v1410, %v1411
        %v1414 = vsel %vm1346, %v1402, %v1413
        %v1416 = vshrl.u32 %v1338, 16
        %v1418 = vrot.slane %v1416, 7
        %v1419 = vshll.u32 %v1338, 16
        %v1421 = vor.u32 %v1418, %v1419
        %v1422 = vsel %vm1346, %v1410, %v1421
        %v1424 = vshrl.u32 %v1339, 16
        %v1426 = vrot.slane %v1424, 7
        %v1427 = vshll.u32 %v1339, 16
        %v1429 = vor.u32 %v1426, %v1427
        %v1430 = vsel %vm1346, %v1418, %v1429
        %v1432 = vshrl.u32 %v1340, 16
        %v1434 = vrot.slane %v1432, 7
        %v1435 = vshll.u32 %v1340, 16
        %v1437 = vor.u32 %v1434, %v1435
        %v1438 = vsel %vm1346, %v1426, %v1437
        %v1440 = vshrl.u32 %v1341, 16
        %v1442 = vrot.slane %v1440, 7
        %v1443 = vshll.u32 %v1341, 16
        %v1445 = vor.u32 %v1442, %v1443
        %v1446 = vsel %vm1346, %v1434, %v1445
        %v1448 = vshrl.u32 %v1342, 16
        %v1450 = vrot.slane %v1448, 7
        %v1451 = vshll.u32 %v1342, 16
        %v1453 = vor.u32 %v1450, %v1451
        %v1454 = vsel %vm1346, %v1442, %v1453
        %v1456 = vshrl.u32 %v1343, 16
        %v1458 = vrot.slane %v1456, 7
        %v1459 = vshll.u32 %v1343, 16
        %v1461 = vor.u32 %v1458, %v1459
        %v1462 = vsel %vm1346, %v1450, %v1461
        %v1464 = vshrl.u32 %v1344, 16
        %v1466 = vrot.slane %v1464, 7
        %v1467 = vshll.u32 %v1344, 16
        %v1469 = vor.u32 %v1466, %v1467
        %v1470 = vsel %vm1346, %v1458, %v1469
        %v1472 = vshrl.u32 %v1345, 16
        %v1474 = vrot.slane %v1472, 7
        %v1475 = vshll.u32 %v1345, 16
        %v1477 = vor.u32 %v1474, %v1475
        %v1478 = vsel %vm1346, %v1466, %v1477
        %1495 = vst [vmem:[#allocation2 + $0x18] sm:$0xff] %v1358
        %1496 = vst [vmem:[#allocation2 + $0x30] sm:$0xff] %v1366
        %1497 = vst [vmem:[#allocation2 + $0x48] sm:$0xff] %v1374
        %1498 = vst [vmem:[#allocation2 + $0x60] sm:$0xff] %v1382
        %1499 = vst [vmem:[#allocation2 + $0x78] sm:$0xff] %v1390
        %1500 = vst [vmem:[#allocation2 + $0x90] sm:$0xff] %v1398
        %1501 = vst [vmem:[#allocation2 + $0xa8] sm:$0xff] %v1406
        %1502 = vst [vmem:[#allocation2 + $0xc0] sm:$0xff] %v1414
        %1503 = vst [vmem:[#allocation2 + $0xd8] sm:$0xff] %v1422
        %1504 = vst [vmem:[#allocation2 + $0xf0] sm:$0xff] %v1430
        %1505 = vst [vmem:[#allocation2 + $0x108] sm:$0xff] %v1438
        %1506 = vst [vmem:[#allocation2 + $0x120] sm:$0xff] %v1446
        %1507 = vst [vmem:[#allocation2 + $0x138] sm:$0xff] %v1454
        %1508 = vst [vmem:[#allocation2 + $0x150] sm:$0xff] %v1462
        %1509 = vst [vmem:[#allocation2 + $0x168] sm:$0xff] %v1470
        %1510 = vst [vmem:[#allocation2 + $0x180] sm:$0xff] %v1478
        %vm1511 = vcmp.ne.s32.totalorder %v926, 15
        %vm1512 = vcmp.ne.s32.totalorder %v927, 15
        %vm1513 = vcmp.ne.s32.totalorder %v928, 15
        %vm1514 = vcmp.ne.s32.totalorder %v929, 15
        %vm1515 = vcmp.ne.s32.totalorder %v930, 15
        %vm1516 = vcmp.ne.s32.totalorder %v931, 15
        %vm1517 = vcmp.ne.s32.totalorder %v932, 15
        %vm1518 = vcmp.ne.s32.totalorder %v933, 15
        %vm1519 = vcmp.ne.s32.totalorder %v934, 15
        %vm1520 = vcmp.ne.s32.totalorder %v935, 15
        %vm1521 = vcmp.ne.s32.totalorder %v936, 15
        %vm1522 = vcmp.ne.s32.totalorder %v937, 15
        %vm1523 = vcmp.ne.s32.totalorder %v938, 15
        %vm1524 = vcmp.ne.s32.totalorder %v939, 15
        %vm1525 = vcmp.ne.s32.totalorder %v940, 15
        %vm1526 = vcmp.ne.s32.totalorder %v941, 15
        %vm1527 = vcmp.ne.s32.totalorder %v942, 15
        %vm1528 = vcmp.ne.s32.totalorder %v943, 15
        %vm1529 = vcmp.ne.s32.totalorder %v944, 15
        %vm1530 = vcmp.ne.s32.totalorder %v945, 15
        %vm1531 = vcmp.ne.s32.totalorder %v946, 15
        %vm1532 = vcmp.ne.s32.totalorder %v947, 15
        %vm1533 = vcmp.ne.s32.totalorder %v948, 15
        %vm1534 = vcmp.ne.s32.totalorder %v949, 15
        %vm1535 = vcmp.ne.s32.totalorder %v950, 15
        %vm1536 = vcmp.ne.s32.totalorder %v951, 15
        %vm1537 = vcmp.ne.s32.totalorder %v952, 15
        %vm1538 = vcmp.ne.s32.totalorder %v953, 15
        %vm1539 = vcmp.ne.s32.totalorder %v954, 15
        %vm1540 = vcmp.ne.s32.totalorder %v955, 15
        %vm1541 = vcmp.ne.s32.totalorder %v956, 15
        %vm1542 = vcmp.ne.s32.totalorder %v957, 15
        %v1543 = vsel %vm1511, 1, 0
        %v1544 = vsel %vm1512, 1, 0
        %v1545 = vsel %vm1513, 1, 0
        %v1546 = vsel %vm1514, 1, 0
        %v1547 = vsel %vm1515, 1, 0
        %v1548 = vsel %vm1516, 1, 0
        %v1549 = vsel %vm1517, 1, 0
        %v1550 = vsel %vm1518, 1, 0
        %v1551 = vsel %vm1519, 1, 0
        %v1552 = vsel %vm1520, 1, 0
        %v1553 = vsel %vm1521, 1, 0
        %v1554 = vsel %vm1522, 1, 0
        %v1555 = vsel %vm1523, 1, 0
        %v1556 = vsel %vm1524, 1, 0
        %v1557 = vsel %vm1525, 1, 0
        %v1558 = vsel %vm1526, 1, 0
        %v1559 = vsel %vm1527, 1, 0
        %v1560 = vsel %vm1528, 1, 0
        %v1561 = vsel %vm1529, 1, 0
        %v1562 = vsel %vm1530, 1, 0
        %v1563 = vsel %vm1531, 1, 0
        %v1564 = vsel %vm1532, 1, 0
        %v1565 = vsel %vm1533, 1, 0
        %v1566 = vsel %vm1534, 1, 0
        %v1567 = vsel %vm1535, 1, 0
        %v1568 = vsel %vm1536, 1, 0
        %v1569 = vsel %vm1537, 1, 0
        %v1570 = vsel %vm1538, 1, 0
        %v1571 = vsel %vm1539, 1, 0
        %v1572 = vsel %vm1540, 1, 0
        %v1573 = vsel %vm1541, 1, 0
        %v1574 = vsel %vm1542, 1, 0
        %vm1575 = vcmp.eq.s32.totalorder %v1543, 1
        %vm1576 = vcmp.eq.s32.totalorder %v1544, 1
        %vm1577 = vcmp.eq.s32.totalorder %v1545, 1
        %vm1578 = vcmp.eq.s32.totalorder %v1546, 1
        %vm1579 = vcmp.eq.s32.totalorder %v1547, 1
        %vm1580 = vcmp.eq.s32.totalorder %v1548, 1
        %vm1581 = vcmp.eq.s32.totalorder %v1549, 1
        %vm1582 = vcmp.eq.s32.totalorder %v1550, 1
        %vm1583 = vcmp.eq.s32.totalorder %v1551, 1
        %vm1584 = vcmp.eq.s32.totalorder %v1552, 1
        %vm1585 = vcmp.eq.s32.totalorder %v1553, 1
        %vm1586 = vcmp.eq.s32.totalorder %v1554, 1
        %vm1587 = vcmp.eq.s32.totalorder %v1555, 1
        %vm1588 = vcmp.eq.s32.totalorder %v1556, 1
        %vm1589 = vcmp.eq.s32.totalorder %v1557, 1
        %vm1590 = vcmp.eq.s32.totalorder %v1558, 1
        %vm1591 = vcmp.eq.s32.totalorder %v1559, 1
        %vm1592 = vcmp.eq.s32.totalorder %v1560, 1
        %vm1593 = vcmp.eq.s32.totalorder %v1561, 1
        %vm1594 = vcmp.eq.s32.totalorder %v1562, 1
        %vm1595 = vcmp.eq.s32.totalorder %v1563, 1
        %vm1596 = vcmp.eq.s32.totalorder %v1564, 1
        %vm1597 = vcmp.eq.s32.totalorder %v1565, 1
        %vm1598 = vcmp.eq.s32.totalorder %v1566, 1
        %vm1599 = vcmp.eq.s32.totalorder %v1567, 1
        %vm1600 = vcmp.eq.s32.totalorder %v1568, 1
        %vm1601 = vcmp.eq.s32.totalorder %v1569, 1
        %vm1602 = vcmp.eq.s32.totalorder %v1570, 1
        %vm1603 = vcmp.eq.s32.totalorder %v1571, 1
        %vm1604 = vcmp.eq.s32.totalorder %v1572, 1
        %vm1605 = vcmp.eq.s32.totalorder %v1573, 1
        %vm1606 = vcmp.eq.s32.totalorder %v1574, 1
        %vm1607 = vmpackc.low %vm1575, %vm1575
        %vm1608 = vmpackc.low %vm1576, %vm1576
        %vm1609 = vmpackc.low %vm1577, %vm1577
        %vm1610 = vmpackc.low %vm1578, %vm1578
        %vm1611 = vmpackc.low %vm1579, %vm1579
        %vm1612 = vmpackc.low %vm1580, %vm1580
        %vm1613 = vmpackc.low %vm1581, %vm1581
        %vm1614 = vmpackc.low %vm1582, %vm1582
        %vm1615 = vmpackc.low %vm1583, %vm1583
        %vm1616 = vmpackc.low %vm1584, %vm1584
        %vm1617 = vmpackc.low %vm1585, %vm1585
        %vm1618 = vmpackc.low %vm1586, %vm1586
        %vm1619 = vmpackc.low %vm1587, %vm1587
        %vm1620 = vmpackc.low %vm1588, %vm1588
        %vm1621 = vmpackc.low %vm1589, %vm1589
        %vm1622 = vmpackc.low %vm1590, %vm1590
        %vm1623 = vmpackc.low %vm1591, %vm1591
        %vm1624 = vmpackc.low %vm1592, %vm1592
        %vm1625 = vmpackc.low %vm1593, %vm1593
        %vm1626 = vmpackc.low %vm1594, %vm1594
        %vm1627 = vmpackc.low %vm1595, %vm1595
        %vm1628 = vmpackc.low %vm1596, %vm1596
        %vm1629 = vmpackc.low %vm1597, %vm1597
        %vm1630 = vmpackc.low %vm1598, %vm1598
        %vm1631 = vmpackc.low %vm1599, %vm1599
        %vm1632 = vmpackc.low %vm1600, %vm1600
        %vm1633 = vmpackc.low %vm1601, %vm1601
        %vm1634 = vmpackc.low %vm1602, %vm1602
        %vm1635 = vmpackc.low %vm1603, %vm1603
        %vm1636 = vmpackc.low %vm1604, %vm1604
        %vm1637 = vmpackc.low %vm1605, %vm1605
        %vm1638 = vmpackc.low %vm1606, %vm1606
        %v1639 = vsel %vm1607, 65537, 0
        %v1640 = vsel %vm1608, 65537, 0
        %v1641 = vsel %vm1609, 65537, 0
        %v1642 = vsel %vm1610, 65537, 0
        %v1643 = vsel %vm1611, 65537, 0
        %v1644 = vsel %vm1612, 65537, 0
        %v1645 = vsel %vm1613, 65537, 0
        %v1646 = vsel %vm1614, 65537, 0
        %v1647 = vsel %vm1615, 65537, 0
        %v1648 = vsel %vm1616, 65537, 0
        %v1649 = vsel %vm1617, 65537, 0
        %v1650 = vsel %vm1618, 65537, 0
        %v1651 = vsel %vm1619, 65537, 0
        %v1652 = vsel %vm1620, 65537, 0
        %v1653 = vsel %vm1621, 65537, 0
        %v1654 = vsel %vm1622, 65537, 0
        %v1655 = vsel %vm1623, 65537, 0
        %v1656 = vsel %vm1624, 65537, 0
        %v1657 = vsel %vm1625, 65537, 0
        %v1658 = vsel %vm1626, 65537, 0
        %v1659 = vsel %vm1627, 65537, 0
        %v1660 = vsel %vm1628, 65537, 0
        %v1661 = vsel %vm1629, 65537, 0
        %v1662 = vsel %vm1630, 65537, 0
        %v1663 = vsel %vm1631, 65537, 0
        %v1664 = vsel %vm1632, 65537, 0
        %v1665 = vsel %vm1633, 65537, 0
        %v1666 = vsel %vm1634, 65537, 0
        %v1667 = vsel %vm1635, 65537, 0
        %v1668 = vsel %vm1636, 65537, 0
        %v1669 = vsel %vm1637, 65537, 0
        %v1670 = vsel %vm1638, 65537, 0
        %v1671 = vunpack.c.l.b16 %v1639
        %v1672 = vunpack.c.l.b16 %v1640
        %v1673 = vunpack.c.l.b16 %v1641
        %v1674 = vunpack.c.l.b16 %v1642
        %v1675 = vunpack.c.l.b16 %v1643
        %v1676 = vunpack.c.l.b16 %v1644
        %v1677 = vunpack.c.l.b16 %v1645
        %v1678 = vunpack.c.l.b16 %v1646
        %v1679 = vunpack.c.l.b16 %v1647
        %v1680 = vunpack.c.l.b16 %v1648
        %v1681 = vunpack.c.l.b16 %v1649
        %v1682 = vunpack.c.l.b16 %v1650
        %v1683 = vunpack.c.l.b16 %v1651
        %v1684 = vunpack.c.l.b16 %v1652
        %v1685 = vunpack.c.l.b16 %v1653
        %v1686 = vunpack.c.l.b16 %v1654
        %v1687 = vunpack.c.l.b16 %v1655
        %v1688 = vunpack.c.l.b16 %v1656
        %v1689 = vunpack.c.l.b16 %v1657
        %v1690 = vunpack.c.l.b16 %v1658
        %v1691 = vunpack.c.l.b16 %v1659
        %v1692 = vunpack.c.l.b16 %v1660
        %v1693 = vunpack.c.l.b16 %v1661
        %v1694 = vunpack.c.l.b16 %v1662
        %v1695 = vunpack.c.l.b16 %v1663
        %v1696 = vunpack.c.l.b16 %v1664
        %v1697 = vunpack.c.l.b16 %v1665
        %v1698 = vunpack.c.l.b16 %v1666
        %v1699 = vunpack.c.l.b16 %v1667
        %v1700 = vunpack.c.l.b16 %v1668
        %v1701 = vunpack.c.l.b16 %v1669
        %v1702 = vunpack.c.l.b16 %v1670
        %v1703 = vpack.c.b16 %v1672, %v1671
        %v1704 = vpack.c.b16 %v1674, %v1673
        %v1705 = vpack.c.b16 %v1676, %v1675
        %v1706 = vpack.c.b16 %v1678, %v1677
        %v1707 = vpack.c.b16 %v1680, %v1679
        %v1708 = vpack.c.b16 %v1682, %v1681
        %v1709 = vpack.c.b16 %v1684, %v1683
        %v1710 = vpack.c.b16 %v1686, %v1685
        %v1711 = vpack.c.b16 %v1688, %v1687
        %v1712 = vpack.c.b16 %v1690, %v1689
        %v1713 = vpack.c.b16 %v1692, %v1691
        %v1714 = vpack.c.b16 %v1694, %v1693
        %v1715 = vpack.c.b16 %v1696, %v1695
        %v1716 = vpack.c.b16 %v1698, %v1697
        %v1717 = vpack.c.b16 %v1700, %v1699
        %v1718 = vpack.c.b16 %v1702, %v1701
        %v1720 = vshrl.u32 %v1703, 16
        %v1722 = vrot.slane %v1720, 7
        %v1723 = vshll.u32 %v1703, 16
        %v1725 = vor.u32 %v1722, %v1723
        %v1727 = vshrl.u32 %v1704, 16
        %v1729 = vrot.slane %v1727, 7
        %v1730 = vshll.u32 %v1704, 16
        %v1732 = vor.u32 %v1729, %v1730
        %v1733 = vsel %vm1346, %v1722, %v1732
        %v1735 = vshrl.u32 %v1705, 16
        %v1737 = vrot.slane %v1735, 7
        %v1738 = vshll.u32 %v1705, 16
        %v1740 = vor.u32 %v1737, %v1738
        %v1741 = vsel %vm1346, %v1729, %v1740
        %v1743 = vshrl.u32 %v1706, 16
        %v1745 = vrot.slane %v1743, 7
        %v1746 = vshll.u32 %v1706, 16
        %v1748 = vor.u32 %v1745, %v1746
        %v1749 = vsel %vm1346, %v1737, %v1748
        %v1751 = vshrl.u32 %v1707, 16
        %v1753 = vrot.slane %v1751, 7
        %v1754 = vshll.u32 %v1707, 16
        %v1756 = vor.u32 %v1753, %v1754
        %v1757 = vsel %vm1346, %v1745, %v1756
        %v1759 = vshrl.u32 %v1708, 16
        %v1761 = vrot.slane %v1759, 7
        %v1762 = vshll.u32 %v1708, 16
        %v1764 = vor.u32 %v1761, %v1762
        %v1765 = vsel %vm1346, %v1753, %v1764
        %v1767 = vshrl.u32 %v1709, 16
        %v1769 = vrot.slane %v1767, 7
        %v1770 = vshll.u32 %v1709, 16
        %v1772 = vor.u32 %v1769, %v1770
        %v1773 = vsel %vm1346, %v1761, %v1772
        %v1775 = vshrl.u32 %v1710, 16
        %v1777 = vrot.slane %v1775, 7
        %v1778 = vshll.u32 %v1710, 16
        %v1780 = vor.u32 %v1777, %v1778
        %v1781 = vsel %vm1346, %v1769, %v1780
        %v1783 = vshrl.u32 %v1711, 16
        %v1785 = vrot.slane %v1783, 7
        %v1786 = vshll.u32 %v1711, 16
        %v1788 = vor.u32 %v1785, %v1786
        %v1789 = vsel %vm1346, %v1777, %v1788
        %v1791 = vshrl.u32 %v1712, 16
        %v1793 = vrot.slane %v1791, 7
        %v1794 = vshll.u32 %v1712, 16
        %v1796 = vor.u32 %v1793, %v1794
        %v1797 = vsel %vm1346, %v1785, %v1796
        %v1799 = vshrl.u32 %v1713, 16
        %v1801 = vrot.slane %v1799, 7
        %v1802 = vshll.u32 %v1713, 16
        %v1804 = vor.u32 %v1801, %v1802
        %v1805 = vsel %vm1346, %v1793, %v1804
        %v1807 = vshrl.u32 %v1714, 16
        %v1809 = vrot.slane %v1807, 7
        %v1810 = vshll.u32 %v1714, 16
        %v1812 = vor.u32 %v1809, %v1810
        %v1813 = vsel %vm1346, %v1801, %v1812
        %v1815 = vshrl.u32 %v1715, 16
        %v1817 = vrot.slane %v1815, 7
        %v1818 = vshll.u32 %v1715, 16
        %v1820 = vor.u32 %v1817, %v1818
        %v1821 = vsel %vm1346, %v1809, %v1820
        %v1823 = vshrl.u32 %v1716, 16
        %v1825 = vrot.slane %v1823, 7
        %v1826 = vshll.u32 %v1716, 16
        %v1828 = vor.u32 %v1825, %v1826
        %v1829 = vsel %vm1346, %v1817, %v1828
        %v1831 = vshrl.u32 %v1717, 16
        %v1833 = vrot.slane %v1831, 7
        %v1834 = vshll.u32 %v1717, 16
        %v1836 = vor.u32 %v1833, %v1834
        %v1837 = vsel %vm1346, %v1825, %v1836
        %v1839 = vshrl.u32 %v1718, 16
        %v1841 = vrot.slane %v1839, 7
        %v1842 = vshll.u32 %v1718, 16
        %v1844 = vor.u32 %v1841, %v1842
        %v1845 = vsel %vm1346, %v1833, %v1844
        %vm1846 = vcmp.ne.s16.totalorder %v1725, 0
        %vm1847 = vcmp.ne.s16.totalorder %v1733, 0
        %vm1848 = vcmp.ne.s16.totalorder %v1741, 0
        %vm1849 = vcmp.ne.s16.totalorder %v1749, 0
        %vm1850 = vcmp.ne.s16.totalorder %v1757, 0
        %vm1851 = vcmp.ne.s16.totalorder %v1765, 0
        %vm1852 = vcmp.ne.s16.totalorder %v1773, 0
        %vm1853 = vcmp.ne.s16.totalorder %v1781, 0
        %vm1854 = vcmp.ne.s16.totalorder %v1789, 0
        %vm1855 = vcmp.ne.s16.totalorder %v1797, 0
        %vm1856 = vcmp.ne.s16.totalorder %v1805, 0
        %vm1857 = vcmp.ne.s16.totalorder %v1813, 0
        %vm1858 = vcmp.ne.s16.totalorder %v1821, 0
        %vm1859 = vcmp.ne.s16.totalorder %v1829, 0
        %vm1860 = vcmp.ne.s16.totalorder %v1837, 0
        %vm1861 = vcmp.ne.s16.totalorder %v1845, 0
        %vm1862 = vcmp.ne.s16.totalorder %v1841, 0
        %v1863 = vsel %vm1846, %v959, 0
        %v1864 = vsel %vm1847, %v960, 0
        %v1865 = vsel %vm1848, %v961, 0
        %v1866 = vsel %vm1849, %v962, 0
        %v1867 = vsel %vm1850, %v963, 0
        %v1868 = vsel %vm1851, %v964, 0
        %v1869 = vsel %vm1852, %v965, 0
        %v1870 = vsel %vm1853, %v966, 0
        %v1871 = vsel %vm1854, %v967, 0
        %v1872 = vsel %vm1855, %v968, 0
        %v1873 = vsel %vm1856, %v969, 0
        %v1874 = vsel %vm1857, %v970, 0
        %v1875 = vsel %vm1858, %v971, 0
        %v1876 = vsel %vm1859, %v972, 0
        %v1877 = vsel %vm1860, %v973, 0
        %v1878 = vsel %vm1861, %v974, 0
        %v1879 = vsel %vm1862, %v975, 0
        %v1881 = vshrl.u32 %v1863, 16
        %v1883 = vshll.u32 %v1863, 16
        %v1885 = vrot.slane %v1883, 1
        %v1886 = vor.u32 %v1881, %v1885
        %v1888 = vshll.u32 %v1864, 16
        %v1890 = vrot.slane %v1888, 1
        %v1891 = vsel %vm1184, %v1886, %v1890
        %v1892 = vshrl.u32 %v1864, 16
        %v1894 = vor.u32 %v1892, %v1890
        %v1896 = vshll.u32 %v1865, 16
        %v1898 = vrot.slane %v1896, 1
        %v1899 = vsel %vm1184, %v1894, %v1898
        %v1900 = vshrl.u32 %v1865, 16
        %v1902 = vor.u32 %v1900, %v1898
        %v1904 = vshll.u32 %v1866, 16
        %v1906 = vrot.slane %v1904, 1
        %v1907 = vsel %vm1184, %v1902, %v1906
        %v1908 = vshrl.u32 %v1866, 16
        %v1910 = vor.u32 %v1908, %v1906
        %v1912 = vshll.u32 %v1867, 16
        %v1914 = vrot.slane %v1912, 1
        %v1915 = vsel %vm1184, %v1910, %v1914
        %v1916 = vshrl.u32 %v1867, 16
        %v1918 = vor.u32 %v1916, %v1914
        %v1920 = vshll.u32 %v1868, 16
        %v1922 = vrot.slane %v1920, 1
        %v1923 = vsel %vm1184, %v1918, %v1922
        %v1924 = vshrl.u32 %v1868, 16
        %v1926 = vor.u32 %v1924, %v1922
        %v1928 = vshll.u32 %v1869, 16
        %v1930 = vrot.slane %v1928, 1
        %v1931 = vsel %vm1184, %v1926, %v1930
        %v1932 = vshrl.u32 %v1869, 16
        %v1934 = vor.u32 %v1932, %v1930
        %v1936 = vshll.u32 %v1870, 16
        %v1938 = vrot.slane %v1936, 1
        %v1939 = vsel %vm1184, %v1934, %v1938
        %v1940 = vshrl.u32 %v1870, 16
        %v1942 = vor.u32 %v1940, %v1938
        %v1944 = vshll.u32 %v1871, 16
        %v1946 = vrot.slane %v1944, 1
        %v1947 = vsel %vm1184, %v1942, %v1946
        %v1948 = vshrl.u32 %v1871, 16
        %v1950 = vor.u32 %v1948, %v1946
        %v1952 = vshll.u32 %v1872, 16
        %v1954 = vrot.slane %v1952, 1
        %v1955 = vsel %vm1184, %v1950, %v1954
        %v1956 = vshrl.u32 %v1872, 16
        %v1958 = vor.u32 %v1956, %v1954
        %v1960 = vshll.u32 %v1873, 16
        %v1962 = vrot.slane %v1960, 1
        %v1963 = vsel %vm1184, %v1958, %v1962
        %v1964 = vshrl.u32 %v1873, 16
        %v1966 = vor.u32 %v1964, %v1962
        %v1968 = vshll.u32 %v1874, 16
        %v1970 = vrot.slane %v1968, 1
        %v1971 = vsel %vm1184, %v1966, %v1970
        %v1972 = vshrl.u32 %v1874, 16
        %v1974 = vor.u32 %v1972, %v1970
        %v1976 = vshll.u32 %v1875, 16
        %v1978 = vrot.slane %v1976, 1
        %v1979 = vsel %vm1184, %v1974, %v1978
        %v1980 = vshrl.u32 %v1875, 16
        %v1982 = vor.u32 %v1980, %v1978
        %v1984 = vshll.u32 %v1876, 16
        %v1986 = vrot.slane %v1984, 1
        %v1987 = vsel %vm1184, %v1982, %v1986
        %v1988 = vshrl.u32 %v1876, 16
        %v1990 = vor.u32 %v1988, %v1986
        %v1992 = vshll.u32 %v1877, 16
        %v1994 = vrot.slane %v1992, 1
        %v1995 = vsel %vm1184, %v1990, %v1994
        %v1996 = vshrl.u32 %v1877, 16
        %v1998 = vor.u32 %v1996, %v1994
        %v2000 = vshll.u32 %v1878, 16
        %v2002 = vrot.slane %v2000, 1
        %v2003 = vsel %vm1184, %v1998, %v2002
        %v2004 = vshrl.u32 %v1878, 16
        %v2006 = vor.u32 %v2004, %v2002
        %v2008 = vshll.u32 %v1879, 16
        %v2010 = vrot.slane %v2008, 1
        %v2011 = vsel %vm1184, %v2006, %v2010
        %2028 = vst [vmem:[#allocation2 + $0x28] sm:$0xff] %v1891
        %2029 = vst [vmem:[#allocation2 + $0x40] sm:$0xff] %v1899
        %2030 = vst [vmem:[#allocation2 + $0x58] sm:$0xff] %v1907
        %2031 = vst [vmem:[#allocation2 + $0x70] sm:$0xff] %v1915
        %2032 = vst [vmem:[#allocation2 + $0x88] sm:$0xff] %v1923
        %2033 = vst [vmem:[#allocation2 + $0xa0] sm:$0xff] %v1931
        %2034 = vst [vmem:[#allocation2 + $0xb8] sm:$0xff] %v1939
        %2035 = vst [vmem:[#allocation2 + $0xd0] sm:$0xff] %v1947
        %2036 = vst [vmem:[#allocation2 + $0xe8] sm:$0xff] %v1955
        %2037 = vst [vmem:[#allocation2 + $0x100] sm:$0xff] %v1963
        %2038 = vst [vmem:[#allocation2 + $0x118] sm:$0xff] %v1971
        %2039 = vst [vmem:[#allocation2 + $0x130] sm:$0xff] %v1979
        %2040 = vst [vmem:[#allocation2 + $0x148] sm:$0xff] %v1987
        %2041 = vst [vmem:[#allocation2 + $0x160] sm:$0xff] %v1995
        %2042 = vst [vmem:[#allocation2 + $0x178] sm:$0xff] %v2003
        %2043 = vst [vmem:[#allocation2 + $0x190] sm:$0xff] %v2011
        %v2044 = vld [vmem:[#allocation2] sm:$0xff]
        %v2045 = vld [vmem:[#allocation2 + $0x8] sm:$0xff]
        %v2046 = vld [vmem:[#allocation2 + $0x10] sm:$0xff]
        %v2047 = vld [vmem:[#allocation2 + $0x18] sm:$0xff]
        %v2048 = vld [vmem:[#allocation2 + $0x20] sm:$0xff]
        %v2049 = vld [vmem:[#allocation2 + $0x28] sm:$0xff]
        %v2050 = vld [vmem:[#allocation2 + $0x30] sm:$0xff]
        %v2051 = vld [vmem:[#allocation2 + $0x38] sm:$0xff]
        %v2052 = vld [vmem:[#allocation2 + $0x40] sm:$0xff]
        %v2053 = vld [vmem:[#allocation2 + $0x48] sm:$0xff]
        %v2054 = vld [vmem:[#allocation2 + $0x50] sm:$0xff]
        %v2055 = vld [vmem:[#allocation2 + $0x58] sm:$0xff]
        %v2056 = vld [vmem:[#allocation2 + $0x60] sm:$0xff]
        %v2057 = vld [vmem:[#allocation2 + $0x68] sm:$0xff]
        %v2058 = vld [vmem:[#allocation2 + $0x70] sm:$0xff]
        %v2059 = vld [vmem:[#allocation2 + $0x78] sm:$0xff]
        %v2060 = vld [vmem:[#allocation2 + $0x80] sm:$0xff]
        %v2061 = vld [vmem:[#allocation2 + $0x88] sm:$0xff]
        %v2062 = vld [vmem:[#allocation2 + $0x90] sm:$0xff]
        %v2063 = vld [vmem:[#allocation2 + $0x98] sm:$0xff]
        %v2064 = vld [vmem:[#allocation2 + $0xa0] sm:$0xff]
        %v2065 = vld [vmem:[#allocation2 + $0xa8] sm:$0xff]
        %v2066 = vld [vmem:[#allocation2 + $0xb0] sm:$0xff]
        %v2067 = vld [vmem:[#allocation2 + $0xb8] sm:$0xff]
        %v2068 = vld [vmem:[#allocation2 + $0xc0] sm:$0xff]
        %v2069 = vld [vmem:[#allocation2 + $0xc8] sm:$0xff]
        %v2070 = vld [vmem:[#allocation2 + $0xd0] sm:$0xff]
        %v2071 = vld [vmem:[#allocation2 + $0xd8] sm:$0xff]
        %v2072 = vld [vmem:[#allocation2 + $0xe0] sm:$0xff]
        %v2073 = vld [vmem:[#allocation2 + $0xe8] sm:$0xff]
        %v2074 = vld [vmem:[#allocation2 + $0xf0] sm:$0xff]
        %v2075 = vld [vmem:[#allocation2 + $0xf8] sm:$0xff]
        %v2076 = vld [vmem:[#allocation2 + $0x100] sm:$0xff]
        %v2077 = vld [vmem:[#allocation2 + $0x108] sm:$0xff]
        %v2078 = vld [vmem:[#allocation2 + $0x110] sm:$0xff]
        %v2079 = vld [vmem:[#allocation2 + $0x118] sm:$0xff]
        %v2080 = vld [vmem:[#allocation2 + $0x120] sm:$0xff]
        %v2081 = vld [vmem:[#allocation2 + $0x128] sm:$0xff]
        %v2082 = vld [vmem:[#allocation2 + $0x130] sm:$0xff]
        %v2083 = vld [vmem:[#allocation2 + $0x138] sm:$0xff]
        %v2084 = vld [vmem:[#allocation2 + $0x140] sm:$0xff]
        %v2085 = vld [vmem:[#allocation2 + $0x148] sm:$0xff]
        %v2086 = vld [vmem:[#allocation2 + $0x150] sm:$0xff]
        %v2087 = vld [vmem:[#allocation2 + $0x158] sm:$0xff]
        %v2088 = vld [vmem:[#allocation2 + $0x160] sm:$0xff]
        %v2089 = vld [vmem:[#allocation2 + $0x168] sm:$0xff]
        %v2090 = vld [vmem:[#allocation2 + $0x170] sm:$0xff]
        %v2091 = vld [vmem:[#allocation2 + $0x178] sm:$0xff]
        %v2092 = vld [vmem:[#allocation6] sm:$0xf]
        %v2093 = vld [vmem:[#allocation6 + $0x4] sm:$0xf]
        %v2094 = vld [vmem:[#allocation6 + $0x8] sm:$0xf]
        %v2095 = vld [vmem:[#allocation6 + $0xc] sm:$0xf]
        %v2096 = vld [vmem:[#allocation6 + $0x10] sm:$0xf]
        %v2097 = vld [vmem:[#allocation6 + $0x14] sm:$0xf]
        %v2098 = vld [vmem:[#allocation6 + $0x18] sm:$0xf]
        %v2099 = vld [vmem:[#allocation6 + $0x1c] sm:$0xf]
        %v2100 = vld [vmem:[#allocation6 + $0x20] sm:$0xf]
        %v2101 = vld [vmem:[#allocation6 + $0x24] sm:$0xf]
        %v2102 = vld [vmem:[#allocation6 + $0x28] sm:$0xf]
        %v2103 = vld [vmem:[#allocation6 + $0x2c] sm:$0xf]
        %v2104 = vld [vmem:[#allocation6 + $0x30] sm:$0xf]
        %v2105 = vld [vmem:[#allocation6 + $0x34] sm:$0xf]
        %v2106 = vld [vmem:[#allocation6 + $0x38] sm:$0xf]
        %v2107 = vld [vmem:[#allocation6 + $0x3c] sm:$0xf]
        %v2108 = vld [vmem:[#allocation6 + $0x40] sm:$0xf]
        %v2109 = vld [vmem:[#allocation6 + $0x44] sm:$0xf]
        %v2110 = vld [vmem:[#allocation6 + $0x48] sm:$0xf]
        %v2111 = vld [vmem:[#allocation6 + $0x4c] sm:$0xf]
        %v2112 = vld [vmem:[#allocation6 + $0x50] sm:$0xf]
        %v2113 = vld [vmem:[#allocation6 + $0x54] sm:$0xf]
        %v2114 = vld [vmem:[#allocation6 + $0x58] sm:$0xf]
        %v2115 = vld [vmem:[#allocation6 + $0x5c] sm:$0xf]
        %v2116 = vld [vmem:[#allocation6 + $0x60] sm:$0xf]
        %v2117 = vld [vmem:[#allocation6 + $0x64] sm:$0xf]
        %v2118 = vld [vmem:[#allocation6 + $0x68] sm:$0xf]
        %v2119 = vld [vmem:[#allocation6 + $0x6c] sm:$0xf]
        %v2120 = vld [vmem:[#allocation6 + $0x70] sm:$0xf]
        %v2121 = vld [vmem:[#allocation6 + $0x74] sm:$0xf]
        %v2122 = vld [vmem:[#allocation6 + $0x78] sm:$0xf]
        %v2123 = vld [vmem:[#allocation6 + $0x7c] sm:$0xf]
        %v2124 = vld [vmem:[#allocation6 + $0x80] sm:$0xf]
        %v2125 = vld [vmem:[#allocation6 + $0x84] sm:$0xf]
        %v2126 = vld [vmem:[#allocation6 + $0x88] sm:$0xf]
        %v2127 = vld [vmem:[#allocation6 + $0x8c] sm:$0xf]
        %v2128 = vld [vmem:[#allocation6 + $0x90] sm:$0xf]
        %v2129 = vld [vmem:[#allocation6 + $0x94] sm:$0xf]
        %v2130 = vld [vmem:[#allocation6 + $0x98] sm:$0xf]
        %v2131 = vld [vmem:[#allocation6 + $0x9c] sm:$0xf]
        %v2132 = vld [vmem:[#allocation6 + $0xa0] sm:$0xf]
        %v2133 = vld [vmem:[#allocation6 + $0xa4] sm:$0xf]
        %v2134 = vld [vmem:[#allocation6 + $0xa8] sm:$0xf]
        %v2135 = vld [vmem:[#allocation6 + $0xac] sm:$0xf]
        %v2136 = vld [vmem:[#allocation6 + $0xb0] sm:$0xf]
        %v2137 = vld [vmem:[#allocation6 + $0xb4] sm:$0xf]
        %v2138 = vld [vmem:[#allocation6 + $0xb8] sm:$0xf]
        %v2139 = vld [vmem:[#allocation6 + $0xbc] sm:$0xf]
        %v2140 = vld [vmem:[#allocation2 + $0x180] sm:$0xff]
        %v2141 = vld [vmem:[#allocation2 + $0x188] sm:$0xff]
        %v2142 = vld [vmem:[#allocation2 + $0x190] sm:$0xff]
        %s2143 = scalar_lea.vmem [#allocation6], 192
        %v2144 = vld [vmem:[%s2143] sm:$0xf]
        %v2145 = vld [vmem:[%s2143 + $0x4] sm:$0xf]
        %v2146 = vld [vmem:[%s2143 + $0x8] sm:$0xf]
        %v2147 = vld [vmem:[%s2143 + $0xc] sm:$0xf]
        %v2148 = vld [vmem:[%s2143 + $0x10] sm:$0xf]
        %v2149 = vld [vmem:[%s2143 + $0x14] sm:$0xf]
        %v2150 = vld [vmem:[%s2143 + $0x18] sm:$0xf]
        %v2151 = vld [vmem:[%s2143 + $0x1c] sm:$0xf]
        %v2152 = vld [vmem:[%s2143 + $0x20] sm:$0xf]
        %v2153 = vld [vmem:[%s2143 + $0x24] sm:$0xf]
        %v2154 = vld [vmem:[%s2143 + $0x28] sm:$0xf]
        %v2155 = vld [vmem:[%s2143 + $0x2c] sm:$0xf]
        %v2156 = vld [vmem:[%s2143 + $0x30] sm:$0xf]
        %v2157 = vld [vmem:[%s2143 + $0x34] sm:$0xf]
        %v2158 = vld [vmem:[%s2143 + $0x38] sm:$0xf]
        %v2159 = vld [vmem:[%s2143 + $0x3c] sm:$0xf]
        %v2160 = vld [vmem:[%s2143 + $0x40] sm:$0xf]
        %v2161 = vld [vmem:[%s2143 + $0x44] sm:$0xf]
        %v2162 = vld [vmem:[%s2143 + $0x48] sm:$0xf]
        %v2163 = vld [vmem:[%s2143 + $0x4c] sm:$0xf]
        %v2164 = vld [vmem:[%s2143 + $0x50] sm:$0xf]
        %v2165 = vld [vmem:[%s2143 + $0x54] sm:$0xf]
        %v2166 = vld [vmem:[%s2143 + $0x58] sm:$0xf]
        %v2167 = vld [vmem:[%s2143 + $0x5c] sm:$0xf]
        %v2168 = vld [vmem:[%s2143 + $0x60] sm:$0xf]
        %v2169 = vld [vmem:[%s2143 + $0x64] sm:$0xf]
        %v2170 = vld [vmem:[%s2143 + $0x68] sm:$0xf]
        %v2171 = vld [vmem:[%s2143 + $0x6c] sm:$0xf]
        %v2172 = vld [vmem:[%s2143 + $0x70] sm:$0xf]
        %v2173 = vld [vmem:[%s2143 + $0x74] sm:$0xf]
        %v2174 = vld [vmem:[%s2143 + $0x78] sm:$0xf]
        %v2175 = vld [vmem:[%s2143 + $0x7c] sm:$0xf]
        %v2176 = vld [vmem:[%s2143 + $0x80] sm:$0xf]
        %v2177 = vld [vmem:[%s2143 + $0x84] sm:$0xf]
        %v2178 = vld [vmem:[%s2143 + $0x88] sm:$0xf]
        %v2179 = vld [vmem:[%s2143 + $0x8c] sm:$0xf]
        %v2180 = vld [vmem:[%s2143 + $0x90] sm:$0xf]
        %v2181 = vld [vmem:[%s2143 + $0x94] sm:$0xf]
        %v2182 = vld [vmem:[%s2143 + $0x98] sm:$0xf]
        %v2183 = vld [vmem:[%s2143 + $0x9c] sm:$0xf]
        %v2184 = vld [vmem:[%s2143 + $0xa0] sm:$0xf]
        %v2185 = vld [vmem:[%s2143 + $0xa4] sm:$0xf]
        %v2186 = vld [vmem:[%s2143 + $0xa8] sm:$0xf]
        %v2187 = vld [vmem:[%s2143 + $0xac] sm:$0xf]
        %v2188 = vld [vmem:[%s2143 + $0xb0] sm:$0xf]
        %v2189 = vld [vmem:[%s2143 + $0xb4] sm:$0xf]
        %v2190 = vld [vmem:[%s2143 + $0xb8] sm:$0xf]
        %v2191 = vld [vmem:[%s2143 + $0xbc] sm:$0xf]
        %v2240 = vunpack.c.l.b16 %v2144
        %v2241 = vunpack.c.l.b16 %v2145
        %v2242 = vunpack.c.l.b16 %v2146
        %v2243 = vunpack.c.l.b16 %v2147
        %v2244 = vunpack.c.l.b16 %v2148
        %v2245 = vunpack.c.l.b16 %v2149
        %v2246 = vunpack.c.l.b16 %v2150
        %v2247 = vunpack.c.l.b16 %v2151
        %v2248 = vunpack.c.l.b16 %v2152
        %v2249 = vunpack.c.l.b16 %v2153
        %v2250 = vunpack.c.l.b16 %v2154
        %v2251 = vunpack.c.l.b16 %v2155
        %v2252 = vunpack.c.l.b16 %v2156
        %v2253 = vunpack.c.l.b16 %v2157
        %v2254 = vunpack.c.l.b16 %v2158
        %v2255 = vunpack.c.l.b16 %v2159
        %v2256 = vunpack.c.l.b16 %v2160
        %v2257 = vunpack.c.l.b16 %v2161
        %v2258 = vunpack.c.l.b16 %v2162
        %v2259 = vunpack.c.l.b16 %v2163
        %v2260 = vunpack.c.l.b16 %v2164
        %v2261 = vunpack.c.l.b16 %v2165
        %v2262 = vunpack.c.l.b16 %v2166
        %v2263 = vunpack.c.l.b16 %v2167
        %v2264 = vunpack.c.l.b16 %v2168
        %v2265 = vunpack.c.l.b16 %v2169
        %v2266 = vunpack.c.l.b16 %v2170
        %v2267 = vunpack.c.l.b16 %v2171
        %v2268 = vunpack.c.l.b16 %v2172
        %v2269 = vunpack.c.l.b16 %v2173
        %v2270 = vunpack.c.l.b16 %v2174
        %v2271 = vunpack.c.l.b16 %v2175
        %v2272 = vunpack.c.l.b16 %v2176
        %v2273 = vunpack.c.l.b16 %v2177
        %v2274 = vunpack.c.l.b16 %v2178
        %v2275 = vunpack.c.l.b16 %v2179
        %v2276 = vunpack.c.l.b16 %v2180
        %v2277 = vunpack.c.l.b16 %v2181
        %v2278 = vunpack.c.l.b16 %v2182
        %v2279 = vunpack.c.l.b16 %v2183
        %v2280 = vunpack.c.l.b16 %v2184
        %v2281 = vunpack.c.l.b16 %v2185
        %v2282 = vunpack.c.l.b16 %v2186
        %v2283 = vunpack.c.l.b16 %v2187
        %v2284 = vunpack.c.l.b16 %v2188
        %v2285 = vunpack.c.l.b16 %v2189
        %v2286 = vunpack.c.l.b16 %v2190
        %v2287 = vunpack.c.l.b16 %v2191
        %v2288 = vpack.c.b16 %v2241, %v2240
        %v2289 = vpack.c.b16 %v2243, %v2242
        %v2290 = vpack.c.b16 %v2245, %v2244
        %v2291 = vpack.c.b16 %v2247, %v2246
        %v2292 = vpack.c.b16 %v2249, %v2248
        %v2293 = vpack.c.b16 %v2251, %v2250
        %v2294 = vpack.c.b16 %v2253, %v2252
        %v2295 = vpack.c.b16 %v2255, %v2254
        %v2296 = vpack.c.b16 %v2257, %v2256
        %v2297 = vpack.c.b16 %v2259, %v2258
        %v2298 = vpack.c.b16 %v2261, %v2260
        %v2299 = vpack.c.b16 %v2263, %v2262
        %v2300 = vpack.c.b16 %v2265, %v2264
        %v2301 = vpack.c.b16 %v2267, %v2266
        %v2302 = vpack.c.b16 %v2269, %v2268
        %v2303 = vpack.c.b16 %v2271, %v2270
        %v2304 = vpack.c.b16 %v2273, %v2272
        %v2305 = vpack.c.b16 %v2275, %v2274
        %v2306 = vpack.c.b16 %v2277, %v2276
        %v2307 = vpack.c.b16 %v2279, %v2278
        %v2308 = vpack.c.b16 %v2281, %v2280
        %v2309 = vpack.c.b16 %v2283, %v2282
        %v2310 = vpack.c.b16 %v2285, %v2284
        %v2311 = vpack.c.b16 %v2287, %v2286
        %2336 = vmatprep.subr.bf16.mxu0 0
        %2337 = vmatpush1.bf16.msra.mxu0 %v2288
        %2338 = vmatprep.subr.bf16.mxu0 0
        %2339 = vmatpush1.bf16.msra.mxu0 %v2289
        %2340 = vmatprep.subr.bf16.mxu0 0
        %2341 = vmatpush1.bf16.msra.mxu0 %v2290
        %2342 = vmatprep.subr.bf16.mxu0 0
        %2343 = vmatpush1.bf16.msra.mxu0 %v2291
        %2344 = vmatprep.subr.bf16.mxu0 0
        %2345 = vmatpush1.bf16.msra.mxu0 %v2292
        %2346 = vmatprep.subr.bf16.mxu0 0
        %2347 = vmatpush1.bf16.msra.mxu0 %v2293
        %2348 = vmatprep.subr.bf16.mxu0 0
        %2349 = vmatpush1.bf16.msra.mxu0 %v2294
        %2350 = vmatprep.subr.bf16.mxu0 0
        %2351 = vmatpush1.bf16.msra.mxu0 %v2295
        %2352 = vmatprep.subr.bf16.mxu0 0
        %2353 = vmatpush1.bf16.msra.mxu0 %v2296
        %2354 = vmatprep.subr.bf16.mxu0 0
        %2355 = vmatpush1.bf16.msra.mxu0 %v2297
        %2356 = vmatprep.subr.bf16.mxu0 0
        %2357 = vmatpush1.bf16.msra.mxu0 %v2298
        %2358 = vmatprep.subr.bf16.mxu0 0
        %2359 = vmatpush1.bf16.msra.mxu0 %v2299
        %2360 = vmatprep.subr.bf16.mxu0 0
        %2361 = vmatpush1.bf16.msra.mxu0 %v2300
        %2362 = vmatprep.subr.bf16.mxu0 0
        %2363 = vmatpush1.bf16.msra.mxu0 %v2301
        %2364 = vmatprep.subr.bf16.mxu0 0
        %2365 = vmatpush1.bf16.msra.mxu0 %v2302
        %2366 = vmatprep.subr.bf16.mxu0 0
        %2367 = vmatpush1.bf16.msra.mxu0 %v2303
        %2368 = vmatprep.mubr.bf16.mxu0 %v2048
        %2369 = vmatmul.mubr.bf16.gmra.mrb[0].mxu0 %v2047
        %v2370 = vpop.f32.mrb[0].mxu0
        %v2371 = vadd.f32 0.0, %v2370
        %v2372 = vpop.f32.mrb[0].mxu0
        %v2373 = vpop.f32.mrb[0].mxu0
        %v2374 = vadd.f32 0.0, %v2373
        %v2375 = vpop.f32.mrb[0].mxu0
        %2376 = vmatprep.mubr.bf16.mxu0 %v2051
        %2377 = vmatmul.mubr.bf16.gmra.mrb[0].mxu0 %v2050
        %v2378 = vpop.f32.mrb[0].mxu0
        %v2379 = vadd.f32 0.0, %v2378
        %v2380 = vpop.f32.mrb[0].mxu0
        %v2381 = vpop.f32.mrb[0].mxu0
        %v2382 = vadd.f32 0.0, %v2381
        %v2383 = vpop.f32.mrb[0].mxu0
        %2384 = vmatprep.mubr.bf16.mxu0 %v2054
        %2385 = vmatmul.mubr.bf16.gmra.mrb[0].mxu0 %v2053
        %v2386 = vpop.f32.mrb[0].mxu0
        %v2387 = vadd.f32 0.0, %v2386
        %v2388 = vpop.f32.mrb[0].mxu0
        %v2389 = vpop.f32.mrb[0].mxu0
        %v2390 = vadd.f32 0.0, %v2389
        %v2391 = vpop.f32.mrb[0].mxu0
        %2392 = vmatprep.mubr.bf16.mxu0 %v2057
        %2393 = vmatmul.mubr.bf16.gmra.mrb[0].mxu0 %v2056
        %v2394 = vpop.f32.mrb[0].mxu0
        %v2395 = vadd.f32 0.0, %v2394
        %v2396 = vpop.f32.mrb[0].mxu0
        %v2397 = vpop.f32.mrb[0].mxu0
        %v2398 = vadd.f32 0.0, %v2397
        %v2399 = vpop.f32.mrb[0].mxu0
        %2400 = vmatprep.mubr.bf16.mxu0 %v2060
        %2401 = vmatmul.mubr.bf16.gmra.mrb[0].mxu0 %v2059
        %v2402 = vpop.f32.mrb[0].mxu0
        %v2403 = vadd.f32 0.0, %v2402
        %v2404 = vpop.f32.mrb[0].mxu0
        %v2405 = vpop.f32.mrb[0].mxu0
        %v2406 = vadd.f32 0.0, %v2405
        %v2407 = vpop.f32.mrb[0].mxu0
        %2408 = vmatprep.mubr.bf16.mxu0 %v2063
        %2409 = vmatmul.mubr.bf16.gmra.mrb[0].mxu0 %v2062
        %v2410 = vpop.f32.mrb[0].mxu0
        %v2411 = vadd.f32 0.0, %v2410
        %v2412 = vpop.f32.mrb[0].mxu0
        %v2413 = vpop.f32.mrb[0].mxu0
        %v2414 = vadd.f32 0.0, %v2413
        %v2415 = vpop.f32.mrb[0].mxu0
        %2416 = vmatprep.mubr.bf16.mxu0 %v2066
        %2417 = vmatmul.mubr.bf16.gmra.mrb[0].mxu0 %v2065
        %v2418 = vpop.f32.mrb[0].mxu0
        %v2419 = vadd.f32 0.0, %v2418
        %v2420 = vpop.f32.mrb[0].mxu0
        %v2421 = vpop.f32.mrb[0].mxu0
        %v2422 = vadd.f32 0.0, %v2421
        %v2423 = vpop.f32.mrb[0].mxu0
        %2424 = vmatprep.mubr.bf16.mxu0 %v2069
        %2425 = vmatmul.mubr.bf16.gmra.mrb[0].mxu0 %v2068
        %v2426 = vpop.f32.mrb[0].mxu0
        %v2427 = vadd.f32 0.0, %v2426
        %v2428 = vpop.f32.mrb[0].mxu0
        %v2429 = vpop.f32.mrb[0].mxu0
        %v2430 = vadd.f32 0.0, %v2429
        %v2431 = vpop.f32.mrb[0].mxu0
        %2432 = vmatprep.mubr.bf16.mxu0 %v2072
        %2433 = vmatmul.mubr.bf16.gmra.mrb[0].mxu0 %v2071
        %v2434 = vpop.f32.mrb[0].mxu0
        %v2435 = vadd.f32 0.0, %v2434
        %v2436 = vpop.f32.mrb[0].mxu0
        %v2437 = vpop.f32.mrb[0].mxu0
        %v2438 = vadd.f32 0.0, %v2437
        %v2439 = vpop.f32.mrb[0].mxu0
        %2440 = vmatprep.mubr.bf16.mxu0 %v2075
        %2441 = vmatmul.mubr.bf16.gmra.mrb[0].mxu0 %v2074
        %v2442 = vpop.f32.mrb[0].mxu0
        %v2443 = vadd.f32 0.0, %v2442
        %v2444 = vpop.f32.mrb[0].mxu0
        %v2445 = vpop.f32.mrb[0].mxu0
        %v2446 = vadd.f32 0.0, %v2445
        %v2447 = vpop.f32.mrb[0].mxu0
        %2448 = vmatprep.mubr.bf16.mxu0 %v2078
        %2449 = vmatmul.mubr.bf16.gmra.mrb[0].mxu0 %v2077
        %v2450 = vpop.f32.mrb[0].mxu0
        %v2451 = vadd.f32 0.0, %v2450
        %v2452 = vpop.f32.mrb[0].mxu0
        %v2453 = vpop.f32.mrb[0].mxu0
        %v2454 = vadd.f32 0.0, %v2453
        %v2455 = vpop.f32.mrb[0].mxu0
        %2456 = vmatprep.mubr.bf16.mxu0 %v2081
        %2457 = vmatmul.mubr.bf16.gmra.mrb[0].mxu0 %v2080
        %v2458 = vpop.f32.mrb[0].mxu0
        %v2459 = vadd.f32 0.0, %v2458
        %v2460 = vpop.f32.mrb[0].mxu0
        %v2461 = vpop.f32.mrb[0].mxu0
        %v2462 = vadd.f32 0.0, %v2461
        %v2463 = vpop.f32.mrb[0].mxu0
        %2464 = vmatprep.mubr.bf16.mxu0 %v2084
        %2465 = vmatmul.mubr.bf16.gmra.mrb[0].mxu0 %v2083
        %v2466 = vpop.f32.mrb[0].mxu0
        %v2467 = vadd.f32 0.0, %v2466
        %v2468 = vpop.f32.mrb[0].mxu0
        %v2469 = vpop.f32.mrb[0].mxu0
        %v2470 = vadd.f32 0.0, %v2469
        %v2471 = vpop.f32.mrb[0].mxu0
        %2472 = vmatprep.mubr.bf16.mxu0 %v2087
        %2473 = vmatmul.mubr.bf16.gmra.mrb[0].mxu0 %v2086
        %v2474 = vpop.f32.mrb[0].mxu0
        %v2475 = vadd.f32 0.0, %v2474
        %v2476 = vpop.f32.mrb[0].mxu0
        %v2477 = vpop.f32.mrb[0].mxu0
        %v2478 = vadd.f32 0.0, %v2477
        %v2479 = vpop.f32.mrb[0].mxu0
        %2480 = vmatprep.mubr.bf16.mxu0 %v2090
        %2481 = vmatmul.mubr.bf16.gmra.mrb[0].mxu0 %v2089
        %v2482 = vpop.f32.mrb[0].mxu0
        %v2483 = vadd.f32 0.0, %v2482
        %v2484 = vpop.f32.mrb[0].mxu0
        %v2485 = vpop.f32.mrb[0].mxu0
        %v2486 = vadd.f32 0.0, %v2485
        %v2487 = vpop.f32.mrb[0].mxu0
        %2488 = vmatprep.mubr.bf16.mxu0 %v2141
        %2489 = vmatmul.mubr.bf16.gmra.mrb[0].mxu0 %v2140
        %v2490 = vpop.f32.mrb[0].mxu0
        %v2491 = vadd.f32 0.0, %v2490
        %v2492 = vpop.f32.mrb[0].mxu0
        %v2493 = vpop.f32.mrb[0].mxu0
        %v2494 = vadd.f32 0.0, %v2493
        %v2495 = vpop.f32.mrb[0].mxu0
        %2496 = vdwg.mxu0
        %2497 = vmatprep.subr.bf16.mxu0 0
        %2498 = vmatpush1.bf16.msra.mxu0 %v2304
        %2499 = vmatprep.subr.bf16.mxu0 0
        %2500 = vmatpush1.bf16.msra.mxu0 %v2305
        %2501 = vmatprep.subr.bf16.mxu0 0
        %2502 = vmatpush1.bf16.msra.mxu0 %v2306
        %2503 = vmatprep.subr.bf16.mxu0 0
        %2504 = vmatpush1.bf16.msra.mxu0 %v2307
        %2505 = vmatprep.subr.bf16.mxu0 0
        %2506 = vmatpush1.bf16.msra.mxu0 %v2308
        %2507 = vmatprep.subr.bf16.mxu0 0
        %2508 = vmatpush1.bf16.msra.mxu0 %v2309
        %2509 = vmatprep.subr.bf16.mxu0 0
        %2510 = vmatpush1.bf16.msra.mxu0 %v2310
        %2511 = vmatprep.subr.bf16.mxu0 0
        %2512 = vmatpush1.bf16.msra.mxu0 %v2311
        %2513 = vmatprep.subr.bf16.mxu0 0
        %2514 = vmatpush1.bf16.msra.mxu0 0
        %2515 = vmatprep.subr.bf16.mxu0 0
        %2516 = vmatpush1.bf16.msra.mxu0 0
        %2517 = vmatprep.subr.bf16.mxu0 0
        %2518 = vmatpush1.bf16.msra.mxu0 0
        %2519 = vmatprep.subr.bf16.mxu0 0
        %2520 = vmatpush1.bf16.msra.mxu0 0
        %2521 = vmatprep.subr.bf16.mxu0 0
        %2522 = vmatpush1.bf16.msra.mxu0 0
        %2523 = vmatprep.subr.bf16.mxu0 0
        %2524 = vmatpush1.bf16.msra.mxu0 0
        %2525 = vmatprep.subr.bf16.mxu0 0
        %2526 = vmatpush1.bf16.msra.mxu0 0
        %2527 = vmatprep.subr.bf16.mxu0 0
        %2528 = vmatpush1.bf16.msra.mxu0 0
        %2529 = vmatprep.mubr.bf16.mxu0 0
        %2530 = vmatmul.mubr.bf16.gmra.mrb[0].mxu0 %v2049
        %v2531 = vpop.f32.mrb[0].mxu0
        %v2532 = vadd.f32 %v2371, %v2531
        %v2533 = vpop.f32.mrb[0].mxu0
        %v2534 = vpop.f32.mrb[0].mxu0
        %v2535 = vadd.f32 %v2374, %v2534
        %v2536 = vpop.f32.mrb[0].mxu0
        %2537 = vmatprep.mubr.bf16.mxu0 0
        %2538 = vmatmul.mubr.bf16.gmra.mrb[0].mxu0 %v2052
        %v2539 = vpop.f32.mrb[0].mxu0
        %v2540 = vadd.f32 %v2379, %v2539
        %v2541 = vpop.f32.mrb[0].mxu0
        %v2542 = vpop.f32.mrb[0].mxu0
        %v2543 = vadd.f32 %v2382, %v2542
        %v2544 = vpop.f32.mrb[0].mxu0
        %2545 = vmatprep.mubr.bf16.mxu0 0
        %2546 = vmatmul.mubr.bf16.gmra.mrb[0].mxu0 %v2055
        %v2547 = vpop.f32.mrb[0].mxu0
        %v2548 = vadd.f32 %v2387, %v2547
        %v2549 = vpop.f32.mrb[0].mxu0
        %v2550 = vpop.f32.mrb[0].mxu0
        %v2551 = vadd.f32 %v2390, %v2550
        %v2552 = vpop.f32.mrb[0].mxu0
        %2553 = vmatprep.mubr.bf16.mxu0 0
        %2554 = vmatmul.mubr.bf16.gmra.mrb[0].mxu0 %v2058
        %v2555 = vpop.f32.mrb[0].mxu0
        %v2556 = vadd.f32 %v2395, %v2555
        %v2557 = vpop.f32.mrb[0].mxu0
        %v2558 = vpop.f32.mrb[0].mxu0
        %v2559 = vadd.f32 %v2398, %v2558
        %v2560 = vpop.f32.mrb[0].mxu0
        %2561 = vmatprep.mubr.bf16.mxu0 0
        %2562 = vmatmul.mubr.bf16.gmra.mrb[0].mxu0 %v2061
        %v2563 = vpop.f32.mrb[0].mxu0
        %v2564 = vadd.f32 %v2403, %v2563
        %v2565 = vpop.f32.mrb[0].mxu0
        %v2566 = vpop.f32.mrb[0].mxu0
        %v2567 = vadd.f32 %v2406, %v2566
        %v2568 = vpop.f32.mrb[0].mxu0
        %2569 = vmatprep.mubr.bf16.mxu0 0
        %2570 = vmatmul.mubr.bf16.gmra.mrb[0].mxu0 %v2064
        %v2571 = vpop.f32.mrb[0].mxu0
        %v2572 = vadd.f32 %v2411, %v2571
        %v2573 = vpop.f32.mrb[0].mxu0
        %v2574 = vpop.f32.mrb[0].mxu0
        %v2575 = vadd.f32 %v2414, %v2574
        %v2576 = vpop.f32.mrb[0].mxu0
        %2577 = vmatprep.mubr.bf16.mxu0 0
        %2578 = vmatmul.mubr.bf16.gmra.mrb[0].mxu0 %v2067
        %v2579 = vpop.f32.mrb[0].mxu0
        %v2580 = vadd.f32 %v2419, %v2579
        %v2581 = vpop.f32.mrb[0].mxu0
        %v2582 = vpop.f32.mrb[0].mxu0
        %v2583 = vadd.f32 %v2422, %v2582
        %v2584 = vpop.f32.mrb[0].mxu0
        %2585 = vmatprep.mubr.bf16.mxu0 0
        %2586 = vmatmul.mubr.bf16.gmra.mrb[0].mxu0 %v2070
        %v2587 = vpop.f32.mrb[0].mxu0
        %v2588 = vadd.f32 %v2427, %v2587
        %v2589 = vpop.f32.mrb[0].mxu0
        %v2590 = vpop.f32.mrb[0].mxu0
        %v2591 = vadd.f32 %v2430, %v2590
        %v2592 = vpop.f32.mrb[0].mxu0
        %2593 = vmatprep.mubr.bf16.mxu0 0
        %2594 = vmatmul.mubr.bf16.gmra.mrb[0].mxu0 %v2073
        %v2595 = vpop.f32.mrb[0].mxu0
        %v2596 = vadd.f32 %v2435, %v2595
        %v2597 = vpop.f32.mrb[0].mxu0
        %v2598 = vpop.f32.mrb[0].mxu0
        %v2599 = vadd.f32 %v2438, %v2598
        %v2600 = vpop.f32.mrb[0].mxu0
        %2601 = vmatprep.mubr.bf16.mxu0 0
        %2602 = vmatmul.mubr.bf16.gmra.mrb[0].mxu0 %v2076
        %v2603 = vpop.f32.mrb[0].mxu0
        %v2604 = vadd.f32 %v2443, %v2603
        %v2605 = vpop.f32.mrb[0].mxu0
        %v2606 = vpop.f32.mrb[0].mxu0
        %v2607 = vadd.f32 %v2446, %v2606
        %v2608 = vpop.f32.mrb[0].mxu0
        %2609 = vmatprep.mubr.bf16.mxu0 0
        %2610 = vmatmul.mubr.bf16.gmra.mrb[0].mxu0 %v2079
        %v2611 = vpop.f32.mrb[0].mxu0
        %v2612 = vadd.f32 %v2451, %v2611
        %v2613 = vpop.f32.mrb[0].mxu0
        %v2614 = vpop.f32.mrb[0].mxu0
        %v2615 = vadd.f32 %v2454, %v2614
        %v2616 = vpop.f32.mrb[0].mxu0
        %2617 = vmatprep.mubr.bf16.mxu0 0
        %2618 = vmatmul.mubr.bf16.gmra.mrb[0].mxu0 %v2082
        %v2619 = vpop.f32.mrb[0].mxu0
        %v2620 = vadd.f32 %v2459, %v2619
        %v2621 = vpop.f32.mrb[0].mxu0
        %v2622 = vpop.f32.mrb[0].mxu0
        %v2623 = vadd.f32 %v2462, %v2622
        %v2624 = vpop.f32.mrb[0].mxu0
        %2625 = vmatprep.mubr.bf16.mxu0 0
        %2626 = vmatmul.mubr.bf16.gmra.mrb[0].mxu0 %v2085
        %v2627 = vpop.f32.mrb[0].mxu0
        %v2628 = vadd.f32 %v2467, %v2627
        %v2629 = vpop.f32.mrb[0].mxu0
        %v2630 = vpop.f32.mrb[0].mxu0
        %v2631 = vadd.f32 %v2470, %v2630
        %v2632 = vpop.f32.mrb[0].mxu0
        %2633 = vmatprep.mubr.bf16.mxu0 0
        %2634 = vmatmul.mubr.bf16.gmra.mrb[0].mxu0 %v2088
        %v2635 = vpop.f32.mrb[0].mxu0
        %v2636 = vadd.f32 %v2475, %v2635
        %v2637 = vpop.f32.mrb[0].mxu0
        %v2638 = vpop.f32.mrb[0].mxu0
        %v2639 = vadd.f32 %v2478, %v2638
        %v2640 = vpop.f32.mrb[0].mxu0
        %2641 = vmatprep.mubr.bf16.mxu0 0
        %2642 = vmatmul.mubr.bf16.gmra.mrb[0].mxu0 %v2091
        %v2643 = vpop.f32.mrb[0].mxu0
        %v2644 = vadd.f32 %v2483, %v2643
        %v2645 = vpop.f32.mrb[0].mxu0
        %v2646 = vpop.f32.mrb[0].mxu0
        %v2647 = vadd.f32 %v2486, %v2646
        %v2648 = vpop.f32.mrb[0].mxu0
        %2649 = vmatprep.mubr.bf16.mxu0 0
        %2650 = vmatmul.mubr.bf16.gmra.mrb[0].mxu0 %v2142
        %v2651 = vpop.f32.mrb[0].mxu0
        %v2652 = vadd.f32 %v2491, %v2651
        %v2653 = vpop.f32.mrb[0].mxu0
        %v2654 = vpop.f32.mrb[0].mxu0
        %v2655 = vadd.f32 %v2494, %v2654
        %v2656 = vpop.f32.mrb[0].mxu0
        %2657 = vdwg.mxu0
        %v2706 = vunpack.c.l.b16 %v2092
        %v2707 = vunpack.c.l.b16 %v2093
        %v2708 = vunpack.c.l.b16 %v2094
        %v2709 = vunpack.c.l.b16 %v2095
        %v2710 = vunpack.c.l.b16 %v2096
        %v2711 = vunpack.c.l.b16 %v2097
        %v2712 = vunpack.c.l.b16 %v2098
        %v2713 = vunpack.c.l.b16 %v2099
        %v2714 = vunpack.c.l.b16 %v2100
        %v2715 = vunpack.c.l.b16 %v2101
        %v2716 = vunpack.c.l.b16 %v2102
        %v2717 = vunpack.c.l.b16 %v2103
        %v2718 = vunpack.c.l.b16 %v2104
        %v2719 = vunpack.c.l.b16 %v2105
        %v2720 = vunpack.c.l.b16 %v2106
        %v2721 = vunpack.c.l.b16 %v2107
        %v2722 = vunpack.c.l.b16 %v2108
        %v2723 = vunpack.c.l.b16 %v2109
        %v2724 = vunpack.c.l.b16 %v2110
        %v2725 = vunpack.c.l.b16 %v2111
        %v2726 = vunpack.c.l.b16 %v2112
        %v2727 = vunpack.c.l.b16 %v2113
        %v2728 = vunpack.c.l.b16 %v2114
        %v2729 = vunpack.c.l.b16 %v2115
        %v2730 = vunpack.c.l.b16 %v2116
        %v2731 = vunpack.c.l.b16 %v2117
        %v2732 = vunpack.c.l.b16 %v2118
        %v2733 = vunpack.c.l.b16 %v2119
        %v2734 = vunpack.c.l.b16 %v2120
        %v2735 = vunpack.c.l.b16 %v2121
        %v2736 = vunpack.c.l.b16 %v2122
        %v2737 = vunpack.c.l.b16 %v2123
        %v2738 = vunpack.c.l.b16 %v2124
        %v2739 = vunpack.c.l.b16 %v2125
        %v2740 = vunpack.c.l.b16 %v2126
        %v2741 = vunpack.c.l.b16 %v2127
        %v2742 = vunpack.c.l.b16 %v2128
        %v2743 = vunpack.c.l.b16 %v2129
        %v2744 = vunpack.c.l.b16 %v2130
        %v2745 = vunpack.c.l.b16 %v2131
        %v2746 = vunpack.c.l.b16 %v2132
        %v2747 = vunpack.c.l.b16 %v2133
        %v2748 = vunpack.c.l.b16 %v2134
        %v2749 = vunpack.c.l.b16 %v2135
        %v2750 = vunpack.c.l.b16 %v2136
        %v2751 = vunpack.c.l.b16 %v2137
        %v2752 = vunpack.c.l.b16 %v2138
        %v2753 = vunpack.c.l.b16 %v2139
        %v2754 = vpack.c.b16 %v2707, %v2706
        %v2755 = vpack.c.b16 %v2709, %v2708
        %v2756 = vpack.c.b16 %v2711, %v2710
        %v2757 = vpack.c.b16 %v2713, %v2712
        %v2758 = vpack.c.b16 %v2715, %v2714
        %v2759 = vpack.c.b16 %v2717, %v2716
        %v2760 = vpack.c.b16 %v2719, %v2718
        %v2761 = vpack.c.b16 %v2721, %v2720
        %v2762 = vpack.c.b16 %v2723, %v2722
        %v2763 = vpack.c.b16 %v2725, %v2724
        %v2764 = vpack.c.b16 %v2727, %v2726
        %v2765 = vpack.c.b16 %v2729, %v2728
        %v2766 = vpack.c.b16 %v2731, %v2730
        %v2767 = vpack.c.b16 %v2733, %v2732
        %v2768 = vpack.c.b16 %v2735, %v2734
        %v2769 = vpack.c.b16 %v2737, %v2736
        %v2770 = vpack.c.b16 %v2739, %v2738
        %v2771 = vpack.c.b16 %v2741, %v2740
        %v2772 = vpack.c.b16 %v2743, %v2742
        %v2773 = vpack.c.b16 %v2745, %v2744
        %v2774 = vpack.c.b16 %v2747, %v2746
        %v2775 = vpack.c.b16 %v2749, %v2748
        %v2776 = vpack.c.b16 %v2751, %v2750
        %v2777 = vpack.c.b16 %v2753, %v2752
        %2802 = vmatprep.subr.bf16.mxu0 0
        %2803 = vmatpush1.bf16.msra.mxu0 %v2754
        %2804 = vmatprep.subr.bf16.mxu0 0
        %2805 = vmatpush1.bf16.msra.mxu0 %v2755
        %2806 = vmatprep.subr.bf16.mxu0 0
        %2807 = vmatpush1.bf16.msra.mxu0 %v2756
        %2808 = vmatprep.subr.bf16.mxu0 0
        %2809 = vmatpush1.bf16.msra.mxu0 %v2757
        %2810 = vmatprep.subr.bf16.mxu0 0
        %2811 = vmatpush1.bf16.msra.mxu0 %v2758
        %2812 = vmatprep.subr.bf16.mxu0 0
        %2813 = vmatpush1.bf16.msra.mxu0 %v2759
        %2814 = vmatprep.subr.bf16.mxu0 0
        %2815 = vmatpush1.bf16.msra.mxu0 %v2760
        %2816 = vmatprep.subr.bf16.mxu0 0
        %2817 = vmatpush1.bf16.msra.mxu0 %v2761
        %2818 = vmatprep.subr.bf16.mxu0 0
        %2819 = vmatpush1.bf16.msra.mxu0 %v2762
        %2820 = vmatprep.subr.bf16.mxu0 0
        %2821 = vmatpush1.bf16.msra.mxu0 %v2763
        %2822 = vmatprep.subr.bf16.mxu0 0
        %2823 = vmatpush1.bf16.msra.mxu0 %v2764
        %2824 = vmatprep.subr.bf16.mxu0 0
        %2825 = vmatpush1.bf16.msra.mxu0 %v2765
        %2826 = vmatprep.subr.bf16.mxu0 0
        %2827 = vmatpush1.bf16.msra.mxu0 %v2766
        %2828 = vmatprep.subr.bf16.mxu0 0
        %2829 = vmatpush1.bf16.msra.mxu0 %v2767
        %2830 = vmatprep.subr.bf16.mxu0 0
        %2831 = vmatpush1.bf16.msra.mxu0 %v2768
        %2832 = vmatprep.subr.bf16.mxu0 0
        %2833 = vmatpush1.bf16.msra.mxu0 %v2769
        %2834 = vmatprep.mubr.bf16.mxu0 %v2045
        %2835 = vmatmul.mubr.bf16.gmra.mrb[0].mxu0 %v2044
        %v2836 = vpop.f32.mrb[0].mxu0
        %v2837 = vadd.f32 %v2532, %v2836
        %v2838 = vpop.f32.mrb[0].mxu0
        %v2839 = vpop.f32.mrb[0].mxu0
        %v2840 = vadd.f32 %v2535, %v2839
        %v2841 = vpop.f32.mrb[0].mxu0
        %2842 = vmatprep.mubr.bf16.mxu0 %v2048
        %2843 = vmatmul.mubr.bf16.gmra.mrb[0].mxu0 %v2047
        %v2844 = vpop.f32.mrb[0].mxu0
        %v2845 = vadd.f32 %v2540, %v2844
        %v2846 = vpop.f32.mrb[0].mxu0
        %v2847 = vpop.f32.mrb[0].mxu0
        %v2848 = vadd.f32 %v2543, %v2847
        %v2849 = vpop.f32.mrb[0].mxu0
        %2850 = vmatprep.mubr.bf16.mxu0 %v2051
        %2851 = vmatmul.mubr.bf16.gmra.mrb[0].mxu0 %v2050
        %v2852 = vpop.f32.mrb[0].mxu0
        %v2853 = vadd.f32 %v2548, %v2852
        %v2854 = vpop.f32.mrb[0].mxu0
        %v2855 = vpop.f32.mrb[0].mxu0
        %v2856 = vadd.f32 %v2551, %v2855
        %v2857 = vpop.f32.mrb[0].mxu0
        %2858 = vmatprep.mubr.bf16.mxu0 %v2054
        %2859 = vmatmul.mubr.bf16.gmra.mrb[0].mxu0 %v2053
        %v2860 = vpop.f32.mrb[0].mxu0
        %v2861 = vadd.f32 %v2556, %v2860
        %v2862 = vpop.f32.mrb[0].mxu0
        %v2863 = vpop.f32.mrb[0].mxu0
        %v2864 = vadd.f32 %v2559, %v2863
        %v2865 = vpop.f32.mrb[0].mxu0
        %2866 = vmatprep.mubr.bf16.mxu0 %v2057
        %2867 = vmatmul.mubr.bf16.gmra.mrb[0].mxu0 %v2056
        %v2868 = vpop.f32.mrb[0].mxu0
        %v2869 = vadd.f32 %v2564, %v2868
        %v2870 = vpop.f32.mrb[0].mxu0
        %v2871 = vpop.f32.mrb[0].mxu0
        %v2872 = vadd.f32 %v2567, %v2871
        %v2873 = vpop.f32.mrb[0].mxu0
        %2874 = vmatprep.mubr.bf16.mxu0 %v2060
        %2875 = vmatmul.mubr.bf16.gmra.mrb[0].mxu0 %v2059
        %v2876 = vpop.f32.mrb[0].mxu0
        %v2877 = vadd.f32 %v2572, %v2876
        %v2878 = vpop.f32.mrb[0].mxu0
        %v2879 = vpop.f32.mrb[0].mxu0
        %v2880 = vadd.f32 %v2575, %v2879
        %v2881 = vpop.f32.mrb[0].mxu0
        %2882 = vmatprep.mubr.bf16.mxu0 %v2063
        %2883 = vmatmul.mubr.bf16.gmra.mrb[0].mxu0 %v2062
        %v2884 = vpop.f32.mrb[0].mxu0
        %v2885 = vadd.f32 %v2580, %v2884
        %v2886 = vpop.f32.mrb[0].mxu0
        %v2887 = vpop.f32.mrb[0].mxu0
        %v2888 = vadd.f32 %v2583, %v2887
        %v2889 = vpop.f32.mrb[0].mxu0
        %2890 = vmatprep.mubr.bf16.mxu0 %v2066
        %2891 = vmatmul.mubr.bf16.gmra.mrb[0].mxu0 %v2065
        %v2892 = vpop.f32.mrb[0].mxu0
        %v2893 = vadd.f32 %v2588, %v2892
        %v2894 = vpop.f32.mrb[0].mxu0
        %v2895 = vpop.f32.mrb[0].mxu0
        %v2896 = vadd.f32 %v2591, %v2895
        %v2897 = vpop.f32.mrb[0].mxu0
        %2898 = vmatprep.mubr.bf16.mxu0 %v2069
        %2899 = vmatmul.mubr.bf16.gmra.mrb[0].mxu0 %v2068
        %v2900 = vpop.f32.mrb[0].mxu0
        %v2901 = vadd.f32 %v2596, %v2900
        %v2902 = vpop.f32.mrb[0].mxu0
        %v2903 = vpop.f32.mrb[0].mxu0
        %v2904 = vadd.f32 %v2599, %v2903
        %v2905 = vpop.f32.mrb[0].mxu0
        %2906 = vmatprep.mubr.bf16.mxu0 %v2072
        %2907 = vmatmul.mubr.bf16.gmra.mrb[0].mxu0 %v2071
        %v2908 = vpop.f32.mrb[0].mxu0
        %v2909 = vadd.f32 %v2604, %v2908
        %v2910 = vpop.f32.mrb[0].mxu0
        %v2911 = vpop.f32.mrb[0].mxu0
        %v2912 = vadd.f32 %v2607, %v2911
        %v2913 = vpop.f32.mrb[0].mxu0
        %2914 = vmatprep.mubr.bf16.mxu0 %v2075
        %2915 = vmatmul.mubr.bf16.gmra.mrb[0].mxu0 %v2074
        %v2916 = vpop.f32.mrb[0].mxu0
        %v2917 = vadd.f32 %v2612, %v2916
        %v2918 = vpop.f32.mrb[0].mxu0
        %v2919 = vpop.f32.mrb[0].mxu0
        %v2920 = vadd.f32 %v2615, %v2919
        %v2921 = vpop.f32.mrb[0].mxu0
        %2922 = vmatprep.mubr.bf16.mxu0 %v2078
        %2923 = vmatmul.mubr.bf16.gmra.mrb[0].mxu0 %v2077
        %v2924 = vpop.f32.mrb[0].mxu0
        %v2925 = vadd.f32 %v2620, %v2924
        %v2926 = vpop.f32.mrb[0].mxu0
        %v2927 = vpop.f32.mrb[0].mxu0
        %v2928 = vadd.f32 %v2623, %v2927
        %v2929 = vpop.f32.mrb[0].mxu0
        %2930 = vmatprep.mubr.bf16.mxu0 %v2081
        %2931 = vmatmul.mubr.bf16.gmra.mrb[0].mxu0 %v2080
        %v2932 = vpop.f32.mrb[0].mxu0
        %v2933 = vadd.f32 %v2628, %v2932
        %v2934 = vpop.f32.mrb[0].mxu0
        %v2935 = vpop.f32.mrb[0].mxu0
        %v2936 = vadd.f32 %v2631, %v2935
        %v2937 = vpop.f32.mrb[0].mxu0
        %2938 = vmatprep.mubr.bf16.mxu0 %v2084
        %2939 = vmatmul.mubr.bf16.gmra.mrb[0].mxu0 %v2083
        %v2940 = vpop.f32.mrb[0].mxu0
        %v2941 = vadd.f32 %v2636, %v2940
        %v2942 = vpop.f32.mrb[0].mxu0
        %v2943 = vpop.f32.mrb[0].mxu0
        %v2944 = vadd.f32 %v2639, %v2943
        %v2945 = vpop.f32.mrb[0].mxu0
        %2946 = vmatprep.mubr.bf16.mxu0 %v2087
        %2947 = vmatmul.mubr.bf16.gmra.mrb[0].mxu0 %v2086
        %v2948 = vpop.f32.mrb[0].mxu0
        %v2949 = vadd.f32 %v2644, %v2948
        %v2950 = vpop.f32.mrb[0].mxu0
        %v2951 = vpop.f32.mrb[0].mxu0
        %v2952 = vadd.f32 %v2647, %v2951
        %v2953 = vpop.f32.mrb[0].mxu0
        %2954 = vmatprep.mubr.bf16.mxu0 %v2090
        %2955 = vmatmul.mubr.bf16.gmra.mrb[0].mxu0 %v2089
        %v2956 = vpop.f32.mrb[0].mxu0
        %v2957 = vadd.f32 %v2652, %v2956
        %v2958 = vpop.f32.mrb[0].mxu0
        %v2959 = vpop.f32.mrb[0].mxu0
        %v2960 = vadd.f32 %v2655, %v2959
        %v2961 = vpop.f32.mrb[0].mxu0
        %2962 = vdwg.mxu0
        %2963 = vmatprep.subr.bf16.mxu0 0
        %2964 = vmatpush1.bf16.msra.mxu0 %v2770
        %2965 = vmatprep.subr.bf16.mxu0 0
        %2966 = vmatpush1.bf16.msra.mxu0 %v2771
        %2967 = vmatprep.subr.bf16.mxu0 0
        %2968 = vmatpush1.bf16.msra.mxu0 %v2772
        %2969 = vmatprep.subr.bf16.mxu0 0
        %2970 = vmatpush1.bf16.msra.mxu0 %v2773
        %2971 = vmatprep.subr.bf16.mxu0 0
        %2972 = vmatpush1.bf16.msra.mxu0 %v2774
        %2973 = vmatprep.subr.bf16.mxu0 0
        %2974 = vmatpush1.bf16.msra.mxu0 %v2775
        %2975 = vmatprep.subr.bf16.mxu0 0
        %2976 = vmatpush1.bf16.msra.mxu0 %v2776
        %2977 = vmatprep.subr.bf16.mxu0 0
        %2978 = vmatpush1.bf16.msra.mxu0 %v2777
        %2979 = vmatprep.subr.bf16.mxu0 0
        %2980 = vmatpush1.bf16.msra.mxu0 0
        %2981 = vmatprep.subr.bf16.mxu0 0
        %2982 = vmatpush1.bf16.msra.mxu0 0
        %2983 = vmatprep.subr.bf16.mxu0 0
        %2984 = vmatpush1.bf16.msra.mxu0 0
        %2985 = vmatprep.subr.bf16.mxu0 0
        %2986 = vmatpush1.bf16.msra.mxu0 0
        %2987 = vmatprep.subr.bf16.mxu0 0
        %2988 = vmatpush1.bf16.msra.mxu0 0
        %2989 = vmatprep.subr.bf16.mxu0 0
        %2990 = vmatpush1.bf16.msra.mxu0 0
        %2991 = vmatprep.subr.bf16.mxu0 0
        %2992 = vmatpush1.bf16.msra.mxu0 0
        %2993 = vmatprep.subr.bf16.mxu0 0
        %2994 = vmatpush1.bf16.msra.mxu0 0
        %2995 = vmatprep.mubr.bf16.mxu0 0
        %2996 = vmatmul.mubr.bf16.gmra.mrb[0].mxu0 %v2046
        %v2997 = vpop.f32.mrb[0].mxu0
        %v2998 = vadd.f32 %v2837, %v2997
        %v2999 = vpop.f32.mrb[0].mxu0
        %v3000 = vpop.f32.mrb[0].mxu0
        %v3001 = vadd.f32 %v2840, %v3000
        %v3002 = vpop.f32.mrb[0].mxu0
        %3003 = vmatprep.mubr.bf16.mxu0 0
        %3004 = vmatmul.mubr.bf16.gmra.mrb[0].mxu0 %v2049
        %v3005 = vpop.f32.mrb[0].mxu0
        %v3006 = vadd.f32 %v2845, %v3005
        %v3007 = vpop.f32.mrb[0].mxu0
        %v3008 = vpop.f32.mrb[0].mxu0
        %v3009 = vadd.f32 %v2848, %v3008
        %v3010 = vpop.f32.mrb[0].mxu0
        %3011 = vmatprep.mubr.bf16.mxu0 0
        %3012 = vmatmul.mubr.bf16.gmra.mrb[0].mxu0 %v2052
        %v3013 = vpop.f32.mrb[0].mxu0
        %v3014 = vadd.f32 %v2853, %v3013
        %v3015 = vpop.f32.mrb[0].mxu0
        %v3016 = vpop.f32.mrb[0].mxu0
        %v3017 = vadd.f32 %v2856, %v3016
        %v3018 = vpop.f32.mrb[0].mxu0
        %3019 = vmatprep.mubr.bf16.mxu0 0
        %3020 = vmatmul.mubr.bf16.gmra.mrb[0].mxu0 %v2055
        %v3021 = vpop.f32.mrb[0].mxu0
        %v3022 = vadd.f32 %v2861, %v3021
        %v3023 = vpop.f32.mrb[0].mxu0
        %v3024 = vpop.f32.mrb[0].mxu0
        %v3025 = vadd.f32 %v2864, %v3024
        %v3026 = vpop.f32.mrb[0].mxu0
        %3027 = vmatprep.mubr.bf16.mxu0 0
        %3028 = vmatmul.mubr.bf16.gmra.mrb[0].mxu0 %v2058
        %v3029 = vpop.f32.mrb[0].mxu0
        %v3030 = vadd.f32 %v2869, %v3029
        %v3031 = vpop.f32.mrb[0].mxu0
        %v3032 = vpop.f32.mrb[0].mxu0
        %v3033 = vadd.f32 %v2872, %v3032
        %v3034 = vpop.f32.mrb[0].mxu0
        %3035 = vmatprep.mubr.bf16.mxu0 0
        %3036 = vmatmul.mubr.bf16.gmra.mrb[0].mxu0 %v2061
        %v3037 = vpop.f32.mrb[0].mxu0
        %v3038 = vadd.f32 %v2877, %v3037
        %v3039 = vpop.f32.mrb[0].mxu0
        %v3040 = vpop.f32.mrb[0].mxu0
        %v3041 = vadd.f32 %v2880, %v3040
        %v3042 = vpop.f32.mrb[0].mxu0
        %3043 = vmatprep.mubr.bf16.mxu0 0
        %3044 = vmatmul.mubr.bf16.gmra.mrb[0].mxu0 %v2064
        %v3045 = vpop.f32.mrb[0].mxu0
        %v3046 = vadd.f32 %v2885, %v3045
        %v3047 = vpop.f32.mrb[0].mxu0
        %v3048 = vpop.f32.mrb[0].mxu0
        %v3049 = vadd.f32 %v2888, %v3048
        %v3050 = vpop.f32.mrb[0].mxu0
        %3051 = vmatprep.mubr.bf16.mxu0 0
        %3052 = vmatmul.mubr.bf16.gmra.mrb[0].mxu0 %v2067
        %v3053 = vpop.f32.mrb[0].mxu0
        %v3054 = vadd.f32 %v2893, %v3053
        %v3055 = vpop.f32.mrb[0].mxu0
        %v3056 = vpop.f32.mrb[0].mxu0
        %v3057 = vadd.f32 %v2896, %v3056
        %v3058 = vpop.f32.mrb[0].mxu0
        %3059 = vmatprep.mubr.bf16.mxu0 0
        %3060 = vmatmul.mubr.bf16.gmra.mrb[0].mxu0 %v2070
        %v3061 = vpop.f32.mrb[0].mxu0
        %v3062 = vadd.f32 %v2901, %v3061
        %v3063 = vpop.f32.mrb[0].mxu0
        %v3064 = vpop.f32.mrb[0].mxu0
        %v3065 = vadd.f32 %v2904, %v3064
        %v3066 = vpop.f32.mrb[0].mxu0
        %3067 = vmatprep.mubr.bf16.mxu0 0
        %3068 = vmatmul.mubr.bf16.gmra.mrb[0].mxu0 %v2073
        %v3069 = vpop.f32.mrb[0].mxu0
        %v3070 = vadd.f32 %v2909, %v3069
        %v3071 = vpop.f32.mrb[0].mxu0
        %v3072 = vpop.f32.mrb[0].mxu0
        %v3073 = vadd.f32 %v2912, %v3072
        %v3074 = vpop.f32.mrb[0].mxu0
        %3075 = vmatprep.mubr.bf16.mxu0 0
        %3076 = vmatmul.mubr.bf16.gmra.mrb[0].mxu0 %v2076
        %v3077 = vpop.f32.mrb[0].mxu0
        %v3078 = vadd.f32 %v2917, %v3077
        %v3079 = vpop.f32.mrb[0].mxu0
        %v3080 = vpop.f32.mrb[0].mxu0
        %v3081 = vadd.f32 %v2920, %v3080
        %v3082 = vpop.f32.mrb[0].mxu0
        %3083 = vmatprep.mubr.bf16.mxu0 0
        %3084 = vmatmul.mubr.bf16.gmra.mrb[0].mxu0 %v2079
        %v3085 = vpop.f32.mrb[0].mxu0
        %v3086 = vadd.f32 %v2925, %v3085
        %v3087 = vpop.f32.mrb[0].mxu0
        %v3088 = vpop.f32.mrb[0].mxu0
        %v3089 = vadd.f32 %v2928, %v3088
        %v3090 = vpop.f32.mrb[0].mxu0
        %3091 = vmatprep.mubr.bf16.mxu0 0
        %3092 = vmatmul.mubr.bf16.gmra.mrb[0].mxu0 %v2082
        %v3093 = vpop.f32.mrb[0].mxu0
        %v3094 = vadd.f32 %v2933, %v3093
        %v3095 = vpop.f32.mrb[0].mxu0
        %v3096 = vpop.f32.mrb[0].mxu0
        %v3097 = vadd.f32 %v2936, %v3096
        %v3098 = vpop.f32.mrb[0].mxu0
        %3099 = vmatprep.mubr.bf16.mxu0 0
        %3100 = vmatmul.mubr.bf16.gmra.mrb[0].mxu0 %v2085
        %v3101 = vpop.f32.mrb[0].mxu0
        %v3102 = vadd.f32 %v2941, %v3101
        %v3103 = vpop.f32.mrb[0].mxu0
        %v3104 = vpop.f32.mrb[0].mxu0
        %v3105 = vadd.f32 %v2944, %v3104
        %v3106 = vpop.f32.mrb[0].mxu0
        %3107 = vmatprep.mubr.bf16.mxu0 0
        %3108 = vmatmul.mubr.bf16.gmra.mrb[0].mxu0 %v2088
        %v3109 = vpop.f32.mrb[0].mxu0
        %v3110 = vadd.f32 %v2949, %v3109
        %v3111 = vpop.f32.mrb[0].mxu0
        %v3112 = vpop.f32.mrb[0].mxu0
        %v3113 = vadd.f32 %v2952, %v3112
        %v3114 = vpop.f32.mrb[0].mxu0
        %3115 = vmatprep.mubr.bf16.mxu0 0
        %3116 = vmatmul.mubr.bf16.gmra.mrb[0].mxu0 %v2091
        %v3117 = vpop.f32.mrb[0].mxu0
        %v3118 = vadd.f32 %v2957, %v3117
        %v3119 = vpop.f32.mrb[0].mxu0
        %v3120 = vpop.f32.mrb[0].mxu0
        %v3121 = vadd.f32 %v2960, %v3120
        %v3122 = vpop.f32.mrb[0].mxu0
        %3123 = vdwg.mxu0
        %v3124 = vld [vmem:[#allocation2 + $0x30] sm:$0xff]
        %v3125 = vld [vmem:[#allocation2 + $0x38] sm:$0xff]
        %v3126 = vld [vmem:[#allocation2 + $0x40] sm:$0xff]
        %v3127 = vld [vmem:[#allocation2 + $0x48] sm:$0xff]
        %v3128 = vld [vmem:[#allocation2 + $0x50] sm:$0xff]
        %v3129 = vld [vmem:[#allocation2 + $0x58] sm:$0xff]
        %v3130 = vld [vmem:[#allocation2 + $0x60] sm:$0xff]
        %v3131 = vld [vmem:[#allocation2 + $0x68] sm:$0xff]
        %v3132 = vld [vmem:[#allocation2 + $0x70] sm:$0xff]
        %v3133 = vld [vmem:[#allocation2 + $0x78] sm:$0xff]
        %v3134 = vld [vmem:[#allocation2 + $0x80] sm:$0xff]
        %v3135 = vld [vmem:[#allocation2 + $0x88] sm:$0xff]
        %v3136 = vld [vmem:[#allocation2 + $0x90] sm:$0xff]
        %v3137 = vld [vmem:[#allocation2 + $0x98] sm:$0xff]
        %v3138 = vld [vmem:[#allocation2 + $0xa0] sm:$0xff]
        %v3139 = vld [vmem:[#allocation2 + $0xa8] sm:$0xff]
        %v3140 = vld [vmem:[#allocation2 + $0xb0] sm:$0xff]
        %v3141 = vld [vmem:[#allocation2 + $0xb8] sm:$0xff]
        %v3142 = vld [vmem:[#allocation2 + $0xc0] sm:$0xff]
        %v3143 = vld [vmem:[#allocation2 + $0xc8] sm:$0xff]
        %v3144 = vld [vmem:[#allocation2 + $0xd0] sm:$0xff]
        %v3145 = vld [vmem:[#allocation2 + $0xd8] sm:$0xff]
        %v3146 = vld [vmem:[#allocation2 + $0xe0] sm:$0xff]
        %v3147 = vld [vmem:[#allocation2 + $0xe8] sm:$0xff]
        %v3148 = vld [vmem:[#allocation2 + $0xf0] sm:$0xff]
        %v3149 = vld [vmem:[#allocation2 + $0xf8] sm:$0xff]
        %v3150 = vld [vmem:[#allocation2 + $0x100] sm:$0xff]
        %v3151 = vld [vmem:[#allocation2 + $0x108] sm:$0xff]
        %v3152 = vld [vmem:[#allocation2 + $0x110] sm:$0xff]
        %v3153 = vld [vmem:[#allocation2 + $0x118] sm:$0xff]
        %v3154 = vld [vmem:[#allocation2 + $0x120] sm:$0xff]
        %v3155 = vld [vmem:[#allocation2 + $0x128] sm:$0xff]
        %v3156 = vld [vmem:[#allocation2 + $0x130] sm:$0xff]
        %v3157 = vld [vmem:[#allocation2 + $0x138] sm:$0xff]
        %v3158 = vld [vmem:[#allocation2 + $0x140] sm:$0xff]
        %v3159 = vld [vmem:[#allocation2 + $0x148] sm:$0xff]
        %v3160 = vld [vmem:[#allocation2 + $0x150] sm:$0xff]
        %v3161 = vld [vmem:[#allocation2 + $0x158] sm:$0xff]
        %v3162 = vld [vmem:[#allocation2 + $0x160] sm:$0xff]
        %v3163 = vld [vmem:[#allocation2 + $0x168] sm:$0xff]
        %v3164 = vld [vmem:[#allocation2 + $0x170] sm:$0xff]
        %v3165 = vld [vmem:[#allocation2 + $0x178] sm:$0xff]
        %v3166 = vld [vmem:[#allocation2 + $0x180] sm:$0xff]
        %v3167 = vld [vmem:[#allocation2 + $0x188] sm:$0xff]
        %v3168 = vld [vmem:[#allocation2 + $0x190] sm:$0xff]
        %v3169 = vld [vmem:[#allocation2 + $0x198] sm:$0xff]
        %v3170 = vld [vmem:[#allocation2 + $0x1a0] sm:$0xff]
        %v3171 = vld [vmem:[#allocation2 + $0x1a8] sm:$0xff]
        %s3172 = scalar_lea.vmem [#allocation6], 384
        %v3173 = vld [vmem:[%s3172] sm:$0xf]
        %v3174 = vld [vmem:[%s3172 + $0x4] sm:$0xf]
        %v3175 = vld [vmem:[%s3172 + $0x8] sm:$0xf]
        %v3176 = vld [vmem:[%s3172 + $0xc] sm:$0xf]
        %v3177 = vld [vmem:[%s3172 + $0x10] sm:$0xf]
        %v3178 = vld [vmem:[%s3172 + $0x14] sm:$0xf]
        %v3179 = vld [vmem:[%s3172 + $0x18] sm:$0xf]
        %v3180 = vld [vmem:[%s3172 + $0x1c] sm:$0xf]
        %v3181 = vld [vmem:[%s3172 + $0x20] sm:$0xf]
        %v3182 = vld [vmem:[%s3172 + $0x24] sm:$0xf]
        %v3183 = vld [vmem:[%s3172 + $0x28] sm:$0xf]
        %v3184 = vld [vmem:[%s3172 + $0x2c] sm:$0xf]
        %v3185 = vld [vmem:[%s3172 + $0x30] sm:$0xf]
        %v3186 = vld [vmem:[%s3172 + $0x34] sm:$0xf]
        %v3187 = vld [vmem:[%s3172 + $0x38] sm:$0xf]
        %v3188 = vld [vmem:[%s3172 + $0x3c] sm:$0xf]
        %v3189 = vld [vmem:[%s3172 + $0x40] sm:$0xf]
        %v3190 = vld [vmem:[%s3172 + $0x44] sm:$0xf]
        %v3191 = vld [vmem:[%s3172 + $0x48] sm:$0xf]
        %v3192 = vld [vmem:[%s3172 + $0x4c] sm:$0xf]
        %v3193 = vld [vmem:[%s3172 + $0x50] sm:$0xf]
        %v3194 = vld [vmem:[%s3172 + $0x54] sm:$0xf]
        %v3195 = vld [vmem:[%s3172 + $0x58] sm:$0xf]
        %v3196 = vld [vmem:[%s3172 + $0x5c] sm:$0xf]
        %v3197 = vld [vmem:[%s3172 + $0x60] sm:$0xf]
        %v3198 = vld [vmem:[%s3172 + $0x64] sm:$0xf]
        %v3199 = vld [vmem:[%s3172 + $0x68] sm:$0xf]
        %v3200 = vld [vmem:[%s3172 + $0x6c] sm:$0xf]
        %v3201 = vld [vmem:[%s3172 + $0x70] sm:$0xf]
        %v3202 = vld [vmem:[%s3172 + $0x74] sm:$0xf]
        %v3203 = vld [vmem:[%s3172 + $0x78] sm:$0xf]
        %v3204 = vld [vmem:[%s3172 + $0x7c] sm:$0xf]
        %v3205 = vld [vmem:[%s3172 + $0x80] sm:$0xf]
        %v3206 = vld [vmem:[%s3172 + $0x84] sm:$0xf]
        %v3207 = vld [vmem:[%s3172 + $0x88] sm:$0xf]
        %v3208 = vld [vmem:[%s3172 + $0x8c] sm:$0xf]
        %v3209 = vld [vmem:[%s3172 + $0x90] sm:$0xf]
        %v3210 = vld [vmem:[%s3172 + $0x94] sm:$0xf]
        %v3211 = vld [vmem:[%s3172 + $0x98] sm:$0xf]
        %v3212 = vld [vmem:[%s3172 + $0x9c] sm:$0xf]
        %v3213 = vld [vmem:[%s3172 + $0xa0] sm:$0xf]
        %v3214 = vld [vmem:[%s3172 + $0xa4] sm:$0xf]
        %v3215 = vld [vmem:[%s3172 + $0xa8] sm:$0xf]
        %v3216 = vld [vmem:[%s3172 + $0xac] sm:$0xf]
        %v3217 = vld [vmem:[%s3172 + $0xb0] sm:$0xf]
        %v3218 = vld [vmem:[%s3172 + $0xb4] sm:$0xf]
        %v3219 = vld [vmem:[%s3172 + $0xb8] sm:$0xf]
        %v3220 = vld [vmem:[%s3172 + $0xbc] sm:$0xf]
        %v3269 = vunpack.c.l.b16 %v3173
        %v3270 = vunpack.c.l.b16 %v3174
        %v3271 = vunpack.c.l.b16 %v3175
        %v3272 = vunpack.c.l.b16 %v3176
        %v3273 = vunpack.c.l.b16 %v3177
        %v3274 = vunpack.c.l.b16 %v3178
        %v3275 = vunpack.c.l.b16 %v3179
        %v3276 = vunpack.c.l.b16 %v3180
        %v3277 = vunpack.c.l.b16 %v3181
        %v3278 = vunpack.c.l.b16 %v3182
        %v3279 = vunpack.c.l.b16 %v3183
        %v3280 = vunpack.c.l.b16 %v3184
        %v3281 = vunpack.c.l.b16 %v3185
        %v3282 = vunpack.c.l.b16 %v3186
        %v3283 = vunpack.c.l.b16 %v3187
        %v3284 = vunpack.c.l.b16 %v3188
        %v3285 = vunpack.c.l.b16 %v3189
        %v3286 = vunpack.c.l.b16 %v3190
        %v3287 = vunpack.c.l.b16 %v3191
        %v3288 = vunpack.c.l.b16 %v3192
        %v3289 = vunpack.c.l.b16 %v3193
        %v3290 = vunpack.c.l.b16 %v3194
        %v3291 = vunpack.c.l.b16 %v3195
        %v3292 = vunpack.c.l.b16 %v3196
        %v3293 = vunpack.c.l.b16 %v3197
        %v3294 = vunpack.c.l.b16 %v3198
        %v3295 = vunpack.c.l.b16 %v3199
        %v3296 = vunpack.c.l.b16 %v3200
        %v3297 = vunpack.c.l.b16 %v3201
        %v3298 = vunpack.c.l.b16 %v3202
        %v3299 = vunpack.c.l.b16 %v3203
        %v3300 = vunpack.c.l.b16 %v3204
        %v3301 = vunpack.c.l.b16 %v3205
        %v3302 = vunpack.c.l.b16 %v3206
        %v3303 = vunpack.c.l.b16 %v3207
        %v3304 = vunpack.c.l.b16 %v3208
        %v3305 = vunpack.c.l.b16 %v3209
        %v3306 = vunpack.c.l.b16 %v3210
        %v3307 = vunpack.c.l.b16 %v3211
        %v3308 = vunpack.c.l.b16 %v3212
        %v3309 = vunpack.c.l.b16 %v3213
        %v3310 = vunpack.c.l.b16 %v3214
        %v3311 = vunpack.c.l.b16 %v3215
        %v3312 = vunpack.c.l.b16 %v3216
        %v3313 = vunpack.c.l.b16 %v3217
        %v3314 = vunpack.c.l.b16 %v3218
        %v3315 = vunpack.c.l.b16 %v3219
        %v3316 = vunpack.c.l.b16 %v3220
        %v3317 = vpack.c.b16 %v3270, %v3269
        %v3318 = vpack.c.b16 %v3272, %v3271
        %v3319 = vpack.c.b16 %v3274, %v3273
        %v3320 = vpack.c.b16 %v3276, %v3275
        %v3321 = vpack.c.b16 %v3278, %v3277
        %v3322 = vpack.c.b16 %v3280, %v3279
        %v3323 = vpack.c.b16 %v3282, %v3281
        %v3324 = vpack.c.b16 %v3284, %v3283
        %v3325 = vpack.c.b16 %v3286, %v3285
        %v3326 = vpack.c.b16 %v3288, %v3287
        %v3327 = vpack.c.b16 %v3290, %v3289
        %v3328 = vpack.c.b16 %v3292, %v3291
        %v3329 = vpack.c.b16 %v3294, %v3293
        %v3330 = vpack.c.b16 %v3296, %v3295
        %v3331 = vpack.c.b16 %v3298, %v3297
        %v3332 = vpack.c.b16 %v3300, %v3299
        %v3333 = vpack.c.b16 %v3302, %v3301
        %v3334 = vpack.c.b16 %v3304, %v3303
        %v3335 = vpack.c.b16 %v3306, %v3305
        %v3336 = vpack.c.b16 %v3308, %v3307
        %v3337 = vpack.c.b16 %v3310, %v3309
        %v3338 = vpack.c.b16 %v3312, %v3311
        %v3339 = vpack.c.b16 %v3314, %v3313
        %v3340 = vpack.c.b16 %v3316, %v3315
        %3365 = vmatprep.subr.bf16.mxu0 0
        %3366 = vmatpush1.bf16.msra.mxu0 %v3317
        %3367 = vmatprep.subr.bf16.mxu0 0
        %3368 = vmatpush1.bf16.msra.mxu0 %v3318
        %3369 = vmatprep.subr.bf16.mxu0 0
        %3370 = vmatpush1.bf16.msra.mxu0 %v3319
        %3371 = vmatprep.subr.bf16.mxu0 0
        %3372 = vmatpush1.bf16.msra.mxu0 %v3320
        %3373 = vmatprep.subr.bf16.mxu0 0
        %3374 = vmatpush1.bf16.msra.mxu0 %v3321
        %3375 = vmatprep.subr.bf16.mxu0 0
        %3376 = vmatpush1.bf16.msra.mxu0 %v3322
        %3377 = vmatprep.subr.bf16.mxu0 0
        %3378 = vmatpush1.bf16.msra.mxu0 %v3323
        %3379 = vmatprep.subr.bf16.mxu0 0
        %3380 = vmatpush1.bf16.msra.mxu0 %v3324
        %3381 = vmatprep.subr.bf16.mxu0 0
        %3382 = vmatpush1.bf16.msra.mxu0 %v3325
        %3383 = vmatprep.subr.bf16.mxu0 0
        %3384 = vmatpush1.bf16.msra.mxu0 %v3326
        %3385 = vmatprep.subr.bf16.mxu0 0
        %3386 = vmatpush1.bf16.msra.mxu0 %v3327
        %3387 = vmatprep.subr.bf16.mxu0 0
        %3388 = vmatpush1.bf16.msra.mxu0 %v3328
        %3389 = vmatprep.subr.bf16.mxu0 0
        %3390 = vmatpush1.bf16.msra.mxu0 %v3329
        %3391 = vmatprep.subr.bf16.mxu0 0
        %3392 = vmatpush1.bf16.msra.mxu0 %v3330
        %3393 = vmatprep.subr.bf16.mxu0 0
        %3394 = vmatpush1.bf16.msra.mxu0 %v3331
        %3395 = vmatprep.subr.bf16.mxu0 0
        %3396 = vmatpush1.bf16.msra.mxu0 %v3332
        %3397 = vmatprep.mubr.bf16.mxu0 %v3125
        %3398 = vmatmul.mubr.bf16.gmra.mrb[0].mxu0 %v3124
        %v3399 = vpop.f32.mrb[0].mxu0
        %v3400 = vadd.f32 0.0, %v3399
        %v3401 = vpop.f32.mrb[0].mxu0
        %v3402 = vpop.f32.mrb[0].mxu0
        %v3403 = vadd.f32 0.0, %v3402
        %v3404 = vpop.f32.mrb[0].mxu0
        %3405 = vmatprep.mubr.bf16.mxu0 %v3128
        %3406 = vmatmul.mubr.bf16.gmra.mrb[0].mxu0 %v3127
        %v3407 = vpop.f32.mrb[0].mxu0
        %v3408 = vadd.f32 0.0, %v3407
        %v3409 = vpop.f32.mrb[0].mxu0
        %v3410 = vpop.f32.mrb[0].mxu0
        %v3411 = vadd.f32 0.0, %v3410
        %v3412 = vpop.f32.mrb[0].mxu0
        %3413 = vmatprep.mubr.bf16.mxu0 %v3131
        %3414 = vmatmul.mubr.bf16.gmra.mrb[0].mxu0 %v3130
        %v3415 = vpop.f32.mrb[0].mxu0
        %v3416 = vadd.f32 0.0, %v3415
        %v3417 = vpop.f32.mrb[0].mxu0
        %v3418 = vpop.f32.mrb[0].mxu0
        %v3419 = vadd.f32 0.0, %v3418
        %v3420 = vpop.f32.mrb[0].mxu0
        %3421 = vmatprep.mubr.bf16.mxu0 %v3134
        %3422 = vmatmul.mubr.bf16.gmra.mrb[0].mxu0 %v3133
        %v3423 = vpop.f32.mrb[0].mxu0
        %v3424 = vadd.f32 0.0, %v3423
        %v3425 = vpop.f32.mrb[0].mxu0
        %v3426 = vpop.f32.mrb[0].mxu0
        %v3427 = vadd.f32 0.0, %v3426
        %v3428 = vpop.f32.mrb[0].mxu0
        %3429 = vmatprep.mubr.bf16.mxu0 %v3137
        %3430 = vmatmul.mubr.bf16.gmra.mrb[0].mxu0 %v3136
        %v3431 = vpop.f32.mrb[0].mxu0
        %v3432 = vadd.f32 0.0, %v3431
        %v3433 = vpop.f32.mrb[0].mxu0
        %v3434 = vpop.f32.mrb[0].mxu0
        %v3435 = vadd.f32 0.0, %v3434
        %v3436 = vpop.f32.mrb[0].mxu0
        %3437 = vmatprep.mubr.bf16.mxu0 %v3140
        %3438 = vmatmul.mubr.bf16.gmra.mrb[0].mxu0 %v3139
        %v3439 = vpop.f32.mrb[0].mxu0
        %v3440 = vadd.f32 0.0, %v3439
        %v3441 = vpop.f32.mrb[0].mxu0
        %v3442 = vpop.f32.mrb[0].mxu0
        %v3443 = vadd.f32 0.0, %v3442
        %v3444 = vpop.f32.mrb[0].mxu0
        %3445 = vmatprep.mubr.bf16.mxu0 %v3143
        %3446 = vmatmul.mubr.bf16.gmra.mrb[0].mxu0 %v3142
        %v3447 = vpop.f32.mrb[0].mxu0
        %v3448 = vadd.f32 0.0, %v3447
        %v3449 = vpop.f32.mrb[0].mxu0
        %v3450 = vpop.f32.mrb[0].mxu0
        %v3451 = vadd.f32 0.0, %v3450
        %v3452 = vpop.f32.mrb[0].mxu0
        %3453 = vmatprep.mubr.bf16.mxu0 %v3146
        %3454 = vmatmul.mubr.bf16.gmra.mrb[0].mxu0 %v3145
        %v3455 = vpop.f32.mrb[0].mxu0
        %v3456 = vadd.f32 0.0, %v3455
        %v3457 = vpop.f32.mrb[0].mxu0
        %v3458 = vpop.f32.mrb[0].mxu0
        %v3459 = vadd.f32 0.0, %v3458
        %v3460 = vpop.f32.mrb[0].mxu0
        %3461 = vmatprep.mubr.bf16.mxu0 %v3149
        %3462 = vmatmul.mubr.bf16.gmra.mrb[0].mxu0 %v3148
        %v3463 = vpop.f32.mrb[0].mxu0
        %v3464 = vadd.f32 0.0, %v3463
        %v3465 = vpop.f32.mrb[0].mxu0
        %v3466 = vpop.f32.mrb[0].mxu0
        %v3467 = vadd.f32 0.0, %v3466
        %v3468 = vpop.f32.mrb[0].mxu0
        %3469 = vmatprep.mubr.bf16.mxu0 %v3152
        %3470 = vmatmul.mubr.bf16.gmra.mrb[0].mxu0 %v3151
        %v3471 = vpop.f32.mrb[0].mxu0
        %v3472 = vadd.f32 0.0, %v3471
        %v3473 = vpop.f32.mrb[0].mxu0
        %v3474 = vpop.f32.mrb[0].mxu0
        %v3475 = vadd.f32 0.0, %v3474
        %v3476 = vpop.f32.mrb[0].mxu0
        %3477 = vmatprep.mubr.bf16.mxu0 %v3155
        %3478 = vmatmul.mubr.bf16.gmra.mrb[0].mxu0 %v3154
        %v3479 = vpop.f32.mrb[0].mxu0
        %v3480 = vadd.f32 0.0, %v3479
        %v3481 = vpop.f32.mrb[0].mxu0
        %v3482 = vpop.f32.mrb[0].mxu0
        %v3483 = vadd.f32 0.0, %v3482
        %v3484 = vpop.f32.mrb[0].mxu0
        %3485 = vmatprep.mubr.bf16.mxu0 %v3158
        %3486 = vmatmul.mubr.bf16.gmra.mrb[0].mxu0 %v3157
        %v3487 = vpop.f32.mrb[0].mxu0
        %v3488 = vadd.f32 0.0, %v3487
        %v3489 = vpop.f32.mrb[0].mxu0
        %v3490 = vpop.f32.mrb[0].mxu0
        %v3491 = vadd.f32 0.0, %v3490
        %v3492 = vpop.f32.mrb[0].mxu0
        %3493 = vmatprep.mubr.bf16.mxu0 %v3161
        %3494 = vmatmul.mubr.bf16.gmra.mrb[0].mxu0 %v3160
        %v3495 = vpop.f32.mrb[0].mxu0
        %v3496 = vadd.f32 0.0, %v3495
        %v3497 = vpop.f32.mrb[0].mxu0
        %v3498 = vpop.f32.mrb[0].mxu0
        %v3499 = vadd.f32 0.0, %v3498
        %v3500 = vpop.f32.mrb[0].mxu0
        %3501 = vmatprep.mubr.bf16.mxu0 %v3164
        %3502 = vmatmul.mubr.bf16.gmra.mrb[0].mxu0 %v3163
        %v3503 = vpop.f32.mrb[0].mxu0
        %v3504 = vadd.f32 0.0, %v3503
        %v3505 = vpop.f32.mrb[0].mxu0
        %v3506 = vpop.f32.mrb[0].mxu0
        %v3507 = vadd.f32 0.0, %v3506
        %v3508 = vpop.f32.mrb[0].mxu0
        %3509 = vmatprep.mubr.bf16.mxu0 %v3167
        %3510 = vmatmul.mubr.bf16.gmra.mrb[0].mxu0 %v3166
        %v3511 = vpop.f32.mrb[0].mxu0
        %v3512 = vadd.f32 0.0, %v3511
        %v3513 = vpop.f32.mrb[0].mxu0
        %v3514 = vpop.f32.mrb[0].mxu0
        %v3515 = vadd.f32 0.0, %v3514
        %v3516 = vpop.f32.mrb[0].mxu0
        %3517 = vmatprep.mubr.bf16.mxu0 %v3170
        %3518 = vmatmul.mubr.bf16.gmra.mrb[0].mxu0 %v3169
        %v3519 = vpop.f32.mrb[0].mxu0
        %v3520 = vadd.f32 0.0, %v3519
        %v3521 = vpop.f32.mrb[0].mxu0
        %v3522 = vpop.f32.mrb[0].mxu0
        %v3523 = vadd.f32 0.0, %v3522
        %v3524 = vpop.f32.mrb[0].mxu0
        %3525 = vdwg.mxu0
        %3526 = vmatprep.subr.bf16.mxu0 0
        %3527 = vmatpush1.bf16.msra.mxu0 %v3333
        %3528 = vmatprep.subr.bf16.mxu0 0
        %3529 = vmatpush1.bf16.msra.mxu0 %v3334
        %3530 = vmatprep.subr.bf16.mxu0 0
        %3531 = vmatpush1.bf16.msra.mxu0 %v3335
        %3532 = vmatprep.subr.bf16.mxu0 0
        %3533 = vmatpush1.bf16.msra.mxu0 %v3336
        %3534 = vmatprep.subr.bf16.mxu0 0
        %3535 = vmatpush1.bf16.msra.mxu0 %v3337
        %3536 = vmatprep.subr.bf16.mxu0 0
        %3537 = vmatpush1.bf16.msra.mxu0 %v3338
        %3538 = vmatprep.subr.bf16.mxu0 0
        %3539 = vmatpush1.bf16.msra.mxu0 %v3339
        %3540 = vmatprep.subr.bf16.mxu0 0
        %3541 = vmatpush1.bf16.msra.mxu0 %v3340
        %3542 = vmatprep.subr.bf16.mxu0 0
        %3543 = vmatpush1.bf16.msra.mxu0 0
        %3544 = vmatprep.subr.bf16.mxu0 0
        %3545 = vmatpush1.bf16.msra.mxu0 0
        %3546 = vmatprep.subr.bf16.mxu0 0
        %3547 = vmatpush1.bf16.msra.mxu0 0
        %3548 = vmatprep.subr.bf16.mxu0 0
        %3549 = vmatpush1.bf16.msra.mxu0 0
        %3550 = vmatprep.subr.bf16.mxu0 0
        %3551 = vmatpush1.bf16.msra.mxu0 0
        %3552 = vmatprep.subr.bf16.mxu0 0
        %3553 = vmatpush1.bf16.msra.mxu0 0
        %3554 = vmatprep.subr.bf16.mxu0 0
        %3555 = vmatpush1.bf16.msra.mxu0 0
        %3556 = vmatprep.subr.bf16.mxu0 0
        %3557 = vmatpush1.bf16.msra.mxu0 0
        %3558 = vmatprep.mubr.bf16.mxu0 0
        %3559 = vmatmul.mubr.bf16.gmra.mrb[0].mxu0 %v3126
        %v3560 = vpop.f32.mrb[0].mxu0
        %v3561 = vadd.f32 %v3400, %v3560
        %v3562 = vpop.f32.mrb[0].mxu0
        %v3563 = vpop.f32.mrb[0].mxu0
        %v3564 = vadd.f32 %v3403, %v3563
        %v3565 = vpop.f32.mrb[0].mxu0
        %3566 = vmatprep.mubr.bf16.mxu0 0
        %3567 = vmatmul.mubr.bf16.gmra.mrb[0].mxu0 %v3129
        %v3568 = vpop.f32.mrb[0].mxu0
        %v3569 = vadd.f32 %v3408, %v3568
        %v3570 = vpop.f32.mrb[0].mxu0
        %v3571 = vpop.f32.mrb[0].mxu0
        %v3572 = vadd.f32 %v3411, %v3571
        %v3573 = vpop.f32.mrb[0].mxu0
        %3574 = vmatprep.mubr.bf16.mxu0 0
        %3575 = vmatmul.mubr.bf16.gmra.mrb[0].mxu0 %v3132
        %v3576 = vpop.f32.mrb[0].mxu0
        %v3577 = vadd.f32 %v3416, %v3576
        %v3578 = vpop.f32.mrb[0].mxu0
        %v3579 = vpop.f32.mrb[0].mxu0
        %v3580 = vadd.f32 %v3419, %v3579
        %v3581 = vpop.f32.mrb[0].mxu0
        %3582 = vmatprep.mubr.bf16.mxu0 0
        %3583 = vmatmul.mubr.bf16.gmra.mrb[0].mxu0 %v3135
        %v3584 = vpop.f32.mrb[0].mxu0
        %v3585 = vadd.f32 %v3424, %v3584
        %v3586 = vpop.f32.mrb[0].mxu0
        %v3587 = vpop.f32.mrb[0].mxu0
        %v3588 = vadd.f32 %v3427, %v3587
        %v3589 = vpop.f32.mrb[0].mxu0
        %3590 = vmatprep.mubr.bf16.mxu0 0
        %3591 = vmatmul.mubr.bf16.gmra.mrb[0].mxu0 %v3138
        %v3592 = vpop.f32.mrb[0].mxu0
        %v3593 = vadd.f32 %v3432, %v3592
        %v3594 = vpop.f32.mrb[0].mxu0
        %v3595 = vpop.f32.mrb[0].mxu0
        %v3596 = vadd.f32 %v3435, %v3595
        %v3597 = vpop.f32.mrb[0].mxu0
        %3598 = vmatprep.mubr.bf16.mxu0 0
        %3599 = vmatmul.mubr.bf16.gmra.mrb[0].mxu0 %v3141
        %v3600 = vpop.f32.mrb[0].mxu0
        %v3601 = vadd.f32 %v3440, %v3600
        %v3602 = vpop.f32.mrb[0].mxu0
        %v3603 = vpop.f32.mrb[0].mxu0
        %v3604 = vadd.f32 %v3443, %v3603
        %v3605 = vpop.f32.mrb[0].mxu0
        %3606 = vmatprep.mubr.bf16.mxu0 0
        %3607 = vmatmul.mubr.bf16.gmra.mrb[0].mxu0 %v3144
        %v3608 = vpop.f32.mrb[0].mxu0
        %v3609 = vadd.f32 %v3448, %v3608
        %v3610 = vpop.f32.mrb[0].mxu0
        %v3611 = vpop.f32.mrb[0].mxu0
        %v3612 = vadd.f32 %v3451, %v3611
        %v3613 = vpop.f32.mrb[0].mxu0
        %3614 = vmatprep.mubr.bf16.mxu0 0
        %3615 = vmatmul.mubr.bf16.gmra.mrb[0].mxu0 %v3147
        %v3616 = vpop.f32.mrb[0].mxu0
        %v3617 = vadd.f32 %v3456, %v3616
        %v3618 = vpop.f32.mrb[0].mxu0
        %v3619 = vpop.f32.mrb[0].mxu0
        %v3620 = vadd.f32 %v3459, %v3619
        %v3621 = vpop.f32.mrb[0].mxu0
        %3622 = vmatprep.mubr.bf16.mxu0 0
        %3623 = vmatmul.mubr.bf16.gmra.mrb[0].mxu0 %v3150
        %v3624 = vpop.f32.mrb[0].mxu0
        %v3625 = vadd.f32 %v3464, %v3624
        %v3626 = vpop.f32.mrb[0].mxu0
        %v3627 = vpop.f32.mrb[0].mxu0
        %v3628 = vadd.f32 %v3467, %v3627
        %v3629 = vpop.f32.mrb[0].mxu0
        %3630 = vmatprep.mubr.bf16.mxu0 0
        %3631 = vmatmul.mubr.bf16.gmra.mrb[0].mxu0 %v3153
        %v3632 = vpop.f32.mrb[0].mxu0
        %v3633 = vadd.f32 %v3472, %v3632
        %v3634 = vpop.f32.mrb[0].mxu0
        %v3635 = vpop.f32.mrb[0].mxu0
        %v3636 = vadd.f32 %v3475, %v3635
        %v3637 = vpop.f32.mrb[0].mxu0
        %3638 = vmatprep.mubr.bf16.mxu0 0
        %3639 = vmatmul.mubr.bf16.gmra.mrb[0].mxu0 %v3156
        %v3640 = vpop.f32.mrb[0].mxu0
        %v3641 = vadd.f32 %v3480, %v3640
        %v3642 = vpop.f32.mrb[0].mxu0
        %v3643 = vpop.f32.mrb[0].mxu0
        %v3644 = vadd.f32 %v3483, %v3643
        %v3645 = vpop.f32.mrb[0].mxu0
        %3646 = vmatprep.mubr.bf16.mxu0 0
        %3647 = vmatmul.mubr.bf16.gmra.mrb[0].mxu0 %v3159
        %v3648 = vpop.f32.mrb[0].mxu0
        %v3649 = vadd.f32 %v3488, %v3648
        %v3650 = vpop.f32.mrb[0].mxu0
        %v3651 = vpop.f32.mrb[0].mxu0
        %v3652 = vadd.f32 %v3491, %v3651
        %v3653 = vpop.f32.mrb[0].mxu0
        %3654 = vmatprep.mubr.bf16.mxu0 0
        %3655 = vmatmul.mubr.bf16.gmra.mrb[0].mxu0 %v3162
        %v3656 = vpop.f32.mrb[0].mxu0
        %v3657 = vadd.f32 %v3496, %v3656
        %v3658 = vpop.f32.mrb[0].mxu0
        %v3659 = vpop.f32.mrb[0].mxu0
        %v3660 = vadd.f32 %v3499, %v3659
        %v3661 = vpop.f32.mrb[0].mxu0
        %3662 = vmatprep.mubr.bf16.mxu0 0
        %3663 = vmatmul.mubr.bf16.gmra.mrb[0].mxu0 %v3165
        %v3664 = vpop.f32.mrb[0].mxu0
        %v3665 = vadd.f32 %v3504, %v3664
        %v3666 = vpop.f32.mrb[0].mxu0
        %v3667 = vpop.f32.mrb[0].mxu0
        %v3668 = vadd.f32 %v3507, %v3667
        %v3669 = vpop.f32.mrb[0].mxu0
        %3670 = vmatprep.mubr.bf16.mxu0 0
        %3671 = vmatmul.mubr.bf16.gmra.mrb[0].mxu0 %v3168
        %v3672 = vpop.f32.mrb[0].mxu0
        %v3673 = vadd.f32 %v3512, %v3672
        %v3674 = vpop.f32.mrb[0].mxu0
        %v3675 = vpop.f32.mrb[0].mxu0
        %v3676 = vadd.f32 %v3515, %v3675
        %v3677 = vpop.f32.mrb[0].mxu0
        %3678 = vmatprep.mubr.bf16.mxu0 0
        %3679 = vmatmul.mubr.bf16.gmra.mrb[0].mxu0 %v3171
        %v3680 = vpop.f32.mrb[0].mxu0
        %v3681 = vadd.f32 %v3520, %v3680
        %v3682 = vpop.f32.mrb[0].mxu0
        %v3683 = vpop.f32.mrb[0].mxu0
        %v3684 = vadd.f32 %v3523, %v3683
        %v3685 = vpop.f32.mrb[0].mxu0
        %3686 = vdwg.mxu0
        %v3687 = vadd.f32 %v2998, %v3561
        %v3688 = vadd.f32 %v3001, %v3564
        %v3689 = vadd.f32 %v3006, %v3569
        %v3690 = vadd.f32 %v3009, %v3572
        %v3691 = vadd.f32 %v3014, %v3577
        %v3692 = vadd.f32 %v3017, %v3580
        %v3693 = vadd.f32 %v3022, %v3585
        %v3694 = vadd.f32 %v3025, %v3588
        %v3695 = vadd.f32 %v3030, %v3593
        %v3696 = vadd.f32 %v3033, %v3596
        %v3697 = vadd.f32 %v3038, %v3601
        %v3698 = vadd.f32 %v3041, %v3604
        %v3699 = vadd.f32 %v3046, %v3609
        %v3700 = vadd.f32 %v3049, %v3612
        %v3701 = vadd.f32 %v3054, %v3617
        %v3702 = vadd.f32 %v3057, %v3620
        %v3703 = vadd.f32 %v3062, %v3625
        %v3704 = vadd.f32 %v3065, %v3628
        %v3705 = vadd.f32 %v3070, %v3633
        %v3706 = vadd.f32 %v3073, %v3636
        %v3707 = vadd.f32 %v3078, %v3641
        %v3708 = vadd.f32 %v3081, %v3644
        %v3709 = vadd.f32 %v3086, %v3649
        %v3710 = vadd.f32 %v3089, %v3652
        %v3711 = vadd.f32 %v3094, %v3657
        %v3712 = vadd.f32 %v3097, %v3660
        %v3713 = vadd.f32 %v3102, %v3665
        %v3714 = vadd.f32 %v3105, %v3668
        %v3715 = vadd.f32 %v3110, %v3673
        %v3716 = vadd.f32 %v3113, %v3676
        %v3717 = vadd.f32 %v3118, %v3681
        %v3718 = vadd.f32 %v3121, %v3684
        %v3719 = vpack.c.bf16 %v3688, %v3687
        %v3720 = vpack.c.bf16 %v3690, %v3689
        %v3721 = vpack.c.bf16 %v3692, %v3691
        %v3722 = vpack.c.bf16 %v3694, %v3693
        %v3723 = vpack.c.bf16 %v3696, %v3695
        %v3724 = vpack.c.bf16 %v3698, %v3697
        %v3725 = vpack.c.bf16 %v3700, %v3699
        %v3726 = vpack.c.bf16 %v3702, %v3701
        %v3727 = vpack.c.bf16 %v3704, %v3703
        %v3728 = vpack.c.bf16 %v3706, %v3705
        %v3729 = vpack.c.bf16 %v3708, %v3707
        %v3730 = vpack.c.bf16 %v3710, %v3709
        %v3731 = vpack.c.bf16 %v3712, %v3711
        %v3732 = vpack.c.bf16 %v3714, %v3713
        %v3733 = vpack.c.bf16 %v3716, %v3715
        %v3734 = vpack.c.bf16 %v3718, %v3717
        %v3751 = vunpack.c.l.b16 %v3719
        %v3752 = vunpack.c.h.b16 %v3719
        %v3753 = vunpack.c.l.b16 %v3720
        %v3754 = vunpack.c.h.b16 %v3720
        %v3755 = vunpack.c.l.b16 %v3721
        %v3756 = vunpack.c.h.b16 %v3721
        %v3757 = vunpack.c.l.b16 %v3722
        %v3758 = vunpack.c.h.b16 %v3722
        %v3759 = vunpack.c.l.b16 %v3723
        %v3760 = vunpack.c.h.b16 %v3723
        %v3761 = vunpack.c.l.b16 %v3724
        %v3762 = vunpack.c.h.b16 %v3724
        %v3763 = vunpack.c.l.b16 %v3725
        %v3764 = vunpack.c.h.b16 %v3725
        %v3765 = vunpack.c.l.b16 %v3726
        %v3766 = vunpack.c.h.b16 %v3726
        %v3767 = vunpack.c.l.b16 %v3727
        %v3768 = vunpack.c.h.b16 %v3727
        %v3769 = vunpack.c.l.b16 %v3728
        %v3770 = vunpack.c.h.b16 %v3728
        %v3771 = vunpack.c.l.b16 %v3729
        %v3772 = vunpack.c.h.b16 %v3729
        %v3773 = vunpack.c.l.b16 %v3730
        %v3774 = vunpack.c.h.b16 %v3730
        %v3775 = vunpack.c.l.b16 %v3731
        %v3776 = vunpack.c.h.b16 %v3731
        %v3777 = vunpack.c.l.b16 %v3732
        %v3778 = vunpack.c.h.b16 %v3732
        %v3779 = vunpack.c.l.b16 %v3733
        %v3780 = vunpack.c.h.b16 %v3733
        %v3781 = vunpack.c.l.b16 %v3734
        %v3782 = vunpack.c.h.b16 %v3734
        %v3783 = vpack.c.b16 %v3751, %v3751
        %v3784 = vpack.c.b16 %v3752, %v3752
        %v3785 = vpack.c.b16 %v3753, %v3753
        %v3786 = vpack.c.b16 %v3754, %v3754
        %v3787 = vpack.c.b16 %v3755, %v3755
        %v3788 = vpack.c.b16 %v3756, %v3756
        %v3789 = vpack.c.b16 %v3757, %v3757
        %v3790 = vpack.c.b16 %v3758, %v3758
        %v3791 = vpack.c.b16 %v3759, %v3759
        %v3792 = vpack.c.b16 %v3760, %v3760
        %v3793 = vpack.c.b16 %v3761, %v3761
        %v3794 = vpack.c.b16 %v3762, %v3762
        %v3795 = vpack.c.b16 %v3763, %v3763
        %v3796 = vpack.c.b16 %v3764, %v3764
        %v3797 = vpack.c.b16 %v3765, %v3765
        %v3798 = vpack.c.b16 %v3766, %v3766
        %v3799 = vpack.c.b16 %v3767, %v3767
        %v3800 = vpack.c.b16 %v3768, %v3768
        %v3801 = vpack.c.b16 %v3769, %v3769
        %v3802 = vpack.c.b16 %v3770, %v3770
        %v3803 = vpack.c.b16 %v3771, %v3771
        %v3804 = vpack.c.b16 %v3772, %v3772
        %v3805 = vpack.c.b16 %v3773, %v3773
        %v3806 = vpack.c.b16 %v3774, %v3774
        %v3807 = vpack.c.b16 %v3775, %v3775
        %v3808 = vpack.c.b16 %v3776, %v3776
        %v3809 = vpack.c.b16 %v3777, %v3777
        %v3810 = vpack.c.b16 %v3778, %v3778
        %v3811 = vpack.c.b16 %v3779, %v3779
        %v3812 = vpack.c.b16 %v3780, %v3780
        %v3813 = vpack.c.b16 %v3781, %v3781
        %v3814 = vpack.c.b16 %v3782, %v3782
        %3847 = vst [vmem:[%s313] sm:$0xf] %v3783
        %3848 = vst [vmem:[%s313 + $0x4] sm:$0xf] %v3784
        %3849 = vst [vmem:[%s313 + $0x8] sm:$0xf] %v3785
        %3850 = vst [vmem:[%s313 + $0xc] sm:$0xf] %v3786
        %3851 = vst [vmem:[%s313 + $0x10] sm:$0xf] %v3787
        %3852 = vst [vmem:[%s313 + $0x14] sm:$0xf] %v3788
        %3853 = vst [vmem:[%s313 + $0x18] sm:$0xf] %v3789
        %3854 = vst [vmem:[%s313 + $0x1c] sm:$0xf] %v3790
        %3855 = vst [vmem:[%s313 + $0x20] sm:$0xf] %v3791
        %3856 = vst [vmem:[%s313 + $0x24] sm:$0xf] %v3792
        %3857 = vst [vmem:[%s313 + $0x28] sm:$0xf] %v3793
        %3858 = vst [vmem:[%s313 + $0x2c] sm:$0xf] %v3794
        %3859 = vst [vmem:[%s313 + $0x30] sm:$0xf] %v3795
        %3860 = vst [vmem:[%s313 + $0x34] sm:$0xf] %v3796
        %3861 = vst [vmem:[%s313 + $0x38] sm:$0xf] %v3797
        %3862 = vst [vmem:[%s313 + $0x3c] sm:$0xf] %v3798
        %3863 = vst [vmem:[%s313 + $0x40] sm:$0xf] %v3799
        %3864 = vst [vmem:[%s313 + $0x44] sm:$0xf] %v3800
        %3865 = vst [vmem:[%s313 + $0x48] sm:$0xf] %v3801
        %3866 = vst [vmem:[%s313 + $0x4c] sm:$0xf] %v3802
        %3867 = vst [vmem:[%s313 + $0x50] sm:$0xf] %v3803
        %3868 = vst [vmem:[%s313 + $0x54] sm:$0xf] %v3804
        %3869 = vst [vmem:[%s313 + $0x58] sm:$0xf] %v3805
        %3870 = vst [vmem:[%s313 + $0x5c] sm:$0xf] %v3806
        %3871 = vst [vmem:[%s313 + $0x60] sm:$0xf] %v3807
        %3872 = vst [vmem:[%s313 + $0x64] sm:$0xf] %v3808
        %3873 = vst [vmem:[%s313 + $0x68] sm:$0xf] %v3809
        %3874 = vst [vmem:[%s313 + $0x6c] sm:$0xf] %v3810
        %3875 = vst [vmem:[%s313 + $0x70] sm:$0xf] %v3811
        %3876 = vst [vmem:[%s313 + $0x74] sm:$0xf] %v3812
        %3877 = vst [vmem:[%s313 + $0x78] sm:$0xf] %v3813
        %3878 = vst [vmem:[%s313 + $0x7c] sm:$0xf] %v3814
        %v3879 = vunpack.c.l.bf16 %v3719
        %v3880 = vunpack.c.h.bf16 %v3719
        %v3881 = vunpack.c.l.bf16 %v3720
        %v3882 = vunpack.c.h.bf16 %v3720
        %v3883 = vunpack.c.l.bf16 %v3721
        %v3884 = vunpack.c.h.bf16 %v3721
        %v3885 = vunpack.c.l.bf16 %v3722
        %v3886 = vunpack.c.h.bf16 %v3722
        %v3887 = vunpack.c.l.bf16 %v3723
        %v3888 = vunpack.c.h.bf16 %v3723
        %v3889 = vunpack.c.l.bf16 %v3724
        %v3890 = vunpack.c.h.bf16 %v3724
        %v3891 = vunpack.c.l.bf16 %v3725
        %v3892 = vunpack.c.h.bf16 %v3725
        %v3893 = vunpack.c.l.bf16 %v3726
        %v3894 = vunpack.c.h.bf16 %v3726
        %v3895 = vunpack.c.l.bf16 %v3727
        %v3896 = vunpack.c.h.bf16 %v3727
        %v3897 = vunpack.c.l.bf16 %v3728
        %v3898 = vunpack.c.h.bf16 %v3728
        %v3899 = vunpack.c.l.bf16 %v3729
        %v3900 = vunpack.c.h.bf16 %v3729
        %v3901 = vunpack.c.l.bf16 %v3730
        %v3902 = vunpack.c.h.bf16 %v3730
        %v3903 = vunpack.c.l.bf16 %v3731
        %v3904 = vunpack.c.h.bf16 %v3731
        %v3905 = vunpack.c.l.bf16 %v3732
        %v3906 = vunpack.c.h.bf16 %v3732
        %v3907 = vunpack.c.l.bf16 %v3733
        %v3908 = vunpack.c.h.bf16 %v3733
        %v3909 = vunpack.c.l.bf16 %v3734
        %v3910 = vunpack.c.h.bf16 %v3734
        %v3911 = vadd.f32 %v3879, %v3880
        %v3912 = vadd.f32 %v3911, %v3881
        %v3913 = vadd.f32 %v3912, %v3882
        %v3914 = vadd.f32 %v3913, %v3883
        %v3915 = vadd.f32 %v3914, %v3884
        %v3916 = vadd.f32 %v3915, %v3885
        %v3917 = vadd.f32 %v3916, %v3886
        %v3918 = vadd.f32 %v3917, %v3887
        %v3919 = vadd.f32 %v3918, %v3888
        %v3920 = vadd.f32 %v3919, %v3889
        %v3921 = vadd.f32 %v3920, %v3890
        %v3922 = vadd.f32 %v3921, %v3891
        %v3923 = vadd.f32 %v3922, %v3892
        %v3924 = vadd.f32 %v3923, %v3893
        %v3925 = vadd.f32 %v3924, %v3894
        %v3926 = vadd.f32 %v3925, %v3895
        %v3927 = vadd.f32 %v3926, %v3896
        %v3928 = vadd.f32 %v3927, %v3897
        %v3929 = vadd.f32 %v3928, %v3898
        %v3930 = vadd.f32 %v3929, %v3899
        %v3931 = vadd.f32 %v3930, %v3900
        %v3932 = vadd.f32 %v3931, %v3901
        %v3933 = vadd.f32 %v3932, %v3902
        %v3934 = vadd.f32 %v3933, %v3903
        %v3935 = vadd.f32 %v3934, %v3904
        %v3936 = vadd.f32 %v3935, %v3905
        %v3937 = vadd.f32 %v3936, %v3906
        %v3938 = vadd.f32 %v3937, %v3907
        %v3939 = vadd.f32 %v3938, %v3908
        %v3940 = vadd.f32 %v3939, %v3909
        %v3941 = vadd.f32 %v3940, %v3910
        %v3942 = vrot.slane %v3941, 4
        %v3943 = vadd.f32 %v3941, %v3942
        %v3944 = vrot.slane %v3943, 2
        %v3945 = vadd.f32 %v3943, %v3944
        %v3946 = vrot.slane %v3945, 1
        %v3947 = vadd.f32 %v3945, %v3946
        %3948 = vst [vmem:[%s319] sm:$0x1] %v3947
        %v3949 = vmul.f32 %v3879, %v3879
        %v3950 = vmul.f32 %v3880, %v3880
        %v3951 = vmul.f32 %v3881, %v3881
        %v3952 = vmul.f32 %v3882, %v3882
        %v3953 = vmul.f32 %v3883, %v3883
        %v3954 = vmul.f32 %v3884, %v3884
        %v3955 = vmul.f32 %v3885, %v3885
        %v3956 = vmul.f32 %v3886, %v3886
        %v3957 = vmul.f32 %v3887, %v3887
        %v3958 = vmul.f32 %v3888, %v3888
        %v3959 = vmul.f32 %v3889, %v3889
        %v3960 = vmul.f32 %v3890, %v3890
        %v3961 = vmul.f32 %v3891, %v3891
        %v3962 = vmul.f32 %v3892, %v3892
        %v3963 = vmul.f32 %v3893, %v3893
        %v3964 = vmul.f32 %v3894, %v3894
        %v3965 = vmul.f32 %v3895, %v3895
        %v3966 = vmul.f32 %v3896, %v3896
        %v3967 = vmul.f32 %v3897, %v3897
        %v3968 = vmul.f32 %v3898, %v3898
        %v3969 = vmul.f32 %v3899, %v3899
        %v3970 = vmul.f32 %v3900, %v3900
        %v3971 = vmul.f32 %v3901, %v3901
        %v3972 = vmul.f32 %v3902, %v3902
        %v3973 = vmul.f32 %v3903, %v3903
        %v3974 = vmul.f32 %v3904, %v3904
        %v3975 = vmul.f32 %v3905, %v3905
        %v3976 = vmul.f32 %v3906, %v3906
        %v3977 = vmul.f32 %v3907, %v3907
        %v3978 = vmul.f32 %v3908, %v3908
        %v3979 = vmul.f32 %v3909, %v3909
        %v3980 = vmul.f32 %v3910, %v3910
        %v3981 = vadd.f32 %v3949, %v3950
        %v3982 = vadd.f32 %v3981, %v3951
        %v3983 = vadd.f32 %v3982, %v3952
        %v3984 = vadd.f32 %v3983, %v3953
        %v3985 = vadd.f32 %v3984, %v3954
        %v3986 = vadd.f32 %v3985, %v3955
        %v3987 = vadd.f32 %v3986, %v3956
        %v3988 = vadd.f32 %v3987, %v3957
        %v3989 = vadd.f32 %v3988, %v3958
        %v3990 = vadd.f32 %v3989, %v3959
        %v3991 = vadd.f32 %v3990, %v3960
        %v3992 = vadd.f32 %v3991, %v3961
        %v3993 = vadd.f32 %v3992, %v3962
        %v3994 = vadd.f32 %v3993, %v3963
        %v3995 = vadd.f32 %v3994, %v3964
        %v3996 = vadd.f32 %v3995, %v3965
        %v3997 = vadd.f32 %v3996, %v3966
        %v3998 = vadd.f32 %v3997, %v3967
        %v3999 = vadd.f32 %v3998, %v3968
        %v4000 = vadd.f32 %v3999, %v3969
        %v4001 = vadd.f32 %v4000, %v3970
        %v4002 = vadd.f32 %v4001, %v3971
        %v4003 = vadd.f32 %v4002, %v3972
        %v4004 = vadd.f32 %v4003, %v3973
        %v4005 = vadd.f32 %v4004, %v3974
        %v4006 = vadd.f32 %v4005, %v3975
        %v4007 = vadd.f32 %v4006, %v3976
        %v4008 = vadd.f32 %v4007, %v3977
        %v4009 = vadd.f32 %v4008, %v3978
        %v4010 = vadd.f32 %v4009, %v3979
        %v4011 = vadd.f32 %v4010, %v3980
        %v4012 = vrot.slane %v4011, 4
        %v4013 = vadd.f32 %v4011, %v4012
        %v4014 = vrot.slane %v4013, 2
        %v4015 = vadd.f32 %v4013, %v4014
        %v4016 = vrot.slane %v4015, 1
        %v4017 = vadd.f32 %v4015, %v4016
        %4018 = vst [vmem:[%s325] sm:$0x1] %v4017
        %s4019 = sand.u32 %s126, 1
        %s4020 = scalar_lea.sflag [#allocation5], %s4019
        %s4021 = sand.u32 %s126, 1
        %s4022 = smul.addr %s4021, 128
        %s4023 = scalar_lea.vmem [#allocation11], %s4022
        %s4024 = sand.u32 %s29, 1
        %s4025 = scalar_lea.sflag [#allocation13], %s4024
        %s4026 = sand.u32 %s152, 1
        %s4027 = scalar_lea.vmem [#allocation12], %s4026
        %s4028 = sand.u32 %s29, 1
        %s4029 = scalar_lea.sflag [#allocation13], %s4028
        %s4030 = sand.u32 %s178, 1
        %s4031 = scalar_lea.vmem [#allocation14], %s4030
        // Predicated region
        $region53: #{resnet_block_forward.4} parent=35 // pred_check
          %p4032 = pneg %p136
        $region54: #{resnet_block_forward.4} parent=35 // pred_check_branch
          %4034 = sbr.rel (%p4032) target = $region56
        $region55: #{resnet_block_forward.4} parent=35 // pred_region
          %s4036 = ssub.s32 2048, 2048
          %4037 = vsyncadd %s4020, %s4036
          %s4038 = smul.addr %s29, 32
          %s4039 = smul.addr %s4038, 64
          %s4040 = scalar_lea.hbm %s4, %s4039
          %s4041 = sshll.u32 %s4023, 4
          %s4042 = int_to_ptr.vmem [resolvable:$true] %s4041
          %4047 = dma.vmem_to_hbm [thread:$0]  %s4042, 2048, %s4040, %s4020, 64, 64, 4
        $region56: #{resnet_block_forward.4} parent=35 // pred_fallthru
          _
        // Predicated region
        $region57: #{resnet_block_forward.4} parent=35 // pred_check
          %p4048 = pneg %p162
        $region58: #{resnet_block_forward.4} parent=35 // pred_check_branch
          %4050 = sbr.rel (%p4048) target = $region60
        $region59: #{resnet_block_forward.4} parent=35 // pred_region
          %s4052 = ssub.s32 16, 16
          %4053 = vsyncadd %s4025, %s4052
          %s4054 = smul.addr %s29, 16
          %s4055 = scalar_lea.hbm %s5, %s4054
          %s4057 = sshll.u32 %s4027, 4
          %s4058 = int_to_ptr.vmem [resolvable:$true] %s4057
          %4060 = dma.vmem_to_hbm [thread:$0]  %s4058, 16, %s4055, %s4025
        $region60: #{resnet_block_forward.4} parent=35 // pred_fallthru
          _
        // Predicated region
        $region61: #{resnet_block_forward.4} parent=35 // pred_check
          %p4061 = pneg %p188
        $region62: #{resnet_block_forward.4} parent=35 // pred_check_branch
          %4063 = sbr.rel (%p4061) target = $region64
        $region63: #{resnet_block_forward.4} parent=35 // pred_region
          %s4065 = ssub.s32 16, 16
          %4066 = vsyncadd %s4029, %s4065
          %s4067 = smul.addr %s29, 16
          %s4068 = scalar_lea.hbm %s6, %s4067
          %s4070 = sshll.u32 %s4031, 4
          %s4071 = int_to_ptr.vmem [resolvable:$true] %s4070
          %4073 = dma.vmem_to_hbm [thread:$0]  %s4071, 16, %s4068, %s4029
        $region64: #{resnet_block_forward.4} parent=35 // pred_fallthru
          _
      $region36: #{resnet_block_forward.4} parent=5 // pred_fallthru
        _
      %p4074 = scmp.le.s32.totalorder 2, %s24
      // Predicated region
      $region65: #{resnet_block_forward.4} parent=5 // pred_check
        %p4075 = pneg %p4074
      $region66: #{resnet_block_forward.4} parent=5 // pred_check_branch
        %4077 = sbr.rel (%p4075) target = $region68
      $region67: #{resnet_block_forward.4} parent=5 // pred_region
        %s4078 = ssub.s32 %s24, 2
        // Predicated region
        $region69: #{resnet_block_forward.4} parent=67 // pred_check
          %p4079 = pneg %p142
        $region70: #{resnet_block_forward.4} parent=67 // pred_check_branch
          %4081 = sbr.rel (%p4079) target = $region72
        $region71: #{resnet_block_forward.4} parent=67 // pred_region
          %s4082 = sand.u32 %s127, 1
          %s4083 = scalar_lea.sflag [#allocation5], %s4082
          %s4084 = sand.u32 %s127, 1
          %s4085 = smul.addr %s4084, 128
          %s4086 = scalar_lea.vmem [#allocation11], %s4085
          %4087 = dma.done %s4083, 2048
        $region72: #{resnet_block_forward.4} parent=67 // pred_fallthru
          _
        // Predicated region
        $region73: #{resnet_block_forward.4} parent=67 // pred_check
          %p4088 = pneg %p168
        $region74: #{resnet_block_forward.4} parent=67 // pred_check_branch
          %4090 = sbr.rel (%p4088) target = $region76
        $region75: #{resnet_block_forward.4} parent=67 // pred_region
          %s4091 = sand.u32 %s30, 1
          %s4092 = scalar_lea.sflag [#allocation13], %s4091
          %s4093 = sand.u32 %s153, 1
          %s4094 = scalar_lea.vmem [#allocation12], %s4093
          %4095 = dma.done %s4092, 16
        $region76: #{resnet_block_forward.4} parent=67 // pred_fallthru
          _
        // Predicated region
        $region77: #{resnet_block_forward.4} parent=67 // pred_check
          %p4096 = pneg %p194
        $region78: #{resnet_block_forward.4} parent=67 // pred_check_branch
          %4098 = sbr.rel (%p4096) target = $region80
        $region79: #{resnet_block_forward.4} parent=67 // pred_region
          %s4099 = sand.u32 %s30, 1
          %s4100 = scalar_lea.sflag [#allocation13], %s4099
          %s4101 = sand.u32 %s179, 1
          %s4102 = scalar_lea.vmem [#allocation14], %s4101
          %4103 = dma.done %s4100, 16
        $region80: #{resnet_block_forward.4} parent=67 // pred_fallthru
          _
      $region68: #{resnet_block_forward.4} parent=5 // pred_fallthru
        _
    $region6: #{resnet_block_forward.4} parent=1 // loop_footer
      %s28 = sadd.s32 1, %s24
    $region7: #{resnet_block_forward.4} parent=1 // loop_footer_branch
      %23 = sbr.rel target = $region3
    $region8: #{resnet_block_forward.4} parent=1 // loop_exit
      _
    %4104 = vsyncpa [#allocation4], 1
    %s4105 = scalar_lea.sflag [#allocation4], 1
    %4106 = vsyncpa %s4105, 1
    %4107 = vsyncpa [#allocation7], 1
    %4108 = vsyncpa [#allocation10], 1
    %4109 = vsyncpa [#allocation5], 1
    %s4110 = scalar_lea.sflag [#allocation5], 1
    %4111 = vsyncpa %s4110, 1
    %4112 = vsyncpa [#allocation13], 1
    %s4113 = scalar_lea.sflag [#allocation13], 1
    %4114 = vsyncpa %s4113, 1

</llo_original>
